<compile_context>
chip_gen: v7x
topology: tpu7x:2x2x1
jax: 0.10.0
libtpu: 0.0.40
codegen_flags: <defaults>
</compile_context>

<pallas_src>
import jax
import jax.numpy as jnp
from jax.experimental import pallas as pl
from jax.experimental.pallas import tpu as pltpu

EPS = 1e-5
MXU_DTYPE = jnp.bfloat16  # conv matmul operand dtype (f32 accumulation on MXU)


def basic_block_kernel(xpad_ref, w1_ref, g1_ref, b1_ref, w2_ref, g2_ref, b2_ref,
                       o_ref, pad_ref):
    B, Hp, Wp, C = xpad_ref.shape
    H, W = Hp - 2, Wp - 2
    R = B * H * W

    def im2col(src):
        # src: (B, Hp, Wp, C) padded NHWC value -> (R, 9*C) patch matrix.
        # Column ordering is (ky, kx, ci), matching the weight matrices below.
        # Reshape collapses only major dims (lane dim C preserved) -> cheap.
        taps = [src[:, dy:dy + H, dx:dx + W, :]
                for dy in range(3) for dx in range(3)]
        return jnp.concatenate(taps, axis=-1).reshape(R, 9 * C).astype(MXU_DTYPE)

    xp = xpad_ref[...]  # single copy of x feeds conv1 AND the residual path

    # ---- conv1: one im2col matmul, K = 9*C, f32 accumulation ---------------
    out1 = jnp.dot(im2col(xp), w1_ref[...],
                   preferred_element_type=jnp.float32)              # (R, C) f32

    # ---- bn1 (training-mode batch stats, biased var) + relu ----------------
    # Folded to y = x*scale + shift (one fewer broadcast op per element).
    mean1 = jnp.mean(out1, axis=0, keepdims=True)
    var1 = jnp.mean((out1 - mean1) ** 2, axis=0, keepdims=True)
    scale1 = g1_ref[...] * jax.lax.rsqrt(var1 + EPS)                 # (1, C)
    shift1 = b1_ref[...] - mean1 * scale1                           # (1, C)
    out1 = jnp.maximum(out1 * scale1 + shift1, 0.0)

    # ---- zero-pad out1 for conv2: zero only the 1-px halo, interior once ---
    zrow = jnp.zeros((B, 1, Wp, C), jnp.float32)
    zcol = jnp.zeros((B, Hp, 1, C), jnp.float32)
    pad_ref[:, 0:1, :, :] = zrow
    pad_ref[:, Hp - 1:Hp, :, :] = zrow
    pad_ref[:, :, 0:1, :] = zcol
    pad_ref[:, :, Wp - 1:Wp, :] = zcol
    pad_ref[:, 1:H + 1, 1:W + 1, :] = out1.reshape(B, H, W, C)

    # ---- conv2: trans-B matmul -> output directly in lane-dense (C, R) -----
    out2_t = jax.lax.dot_general(
        w2_ref[...], im2col(pad_ref[...]),
        dimension_numbers=(((1,), (1,)), ((), ())),
        preferred_element_type=jnp.float32)                         # (C, R) f32

    # ---- bn2 in the lane-dense layout (stats over axis 1 = N*H*W) ----------
    mean2 = jnp.mean(out2_t, axis=1, keepdims=True)
    var2 = jnp.mean((out2_t - mean2) ** 2, axis=1, keepdims=True)
    scale2 = g2_ref[...] * jax.lax.rsqrt(var2 + EPS)                 # (C, 1)
    shift2 = b2_ref[...] - mean2 * scale2                           # (C, 1)

    # ---- residual: interior of padded x, moved to (C, R) via an exact ------
    #      identity-matrix matmul on the MXU (HIGHEST precision => f32 exact),
    #      keeping the relayout off the VPU/XLU.
    identity = xp[:, 1:H + 1, 1:W + 1, :].reshape(R, C)
    rows = jax.lax.broadcasted_iota(jnp.int32, (C, C), 0)
    cols = jax.lax.broadcasted_iota(jnp.int32, (C, C), 1)
    eye_c = (rows == cols).astype(jnp.float32)
    id_t = jax.lax.dot_general(
        eye_c, identity,
        dimension_numbers=(((1,), (1,)), ((), ())),
        precision=jax.lax.Precision.HIGHEST,
        preferred_element_type=jnp.float32)                         # (C, R) f32

    # ---- bn2 scale/shift + residual add + relu, all lane-dense -------------
    o_ref[...] = jnp.maximum(out2_t * scale2 + (id_t + shift2),
                             0.0).astype(o_ref.dtype)


def basic_block_forward(x_nchw, w1, g1, b1, w2, g2, b2):
    """x_nchw: (B, C, H, W) f32. Conv weights in PyTorch layout (Cout, Cin, 3, 3)."""
    B, C, H, W = x_nchw.shape
    R = B * H * W

    # NCHW -> NHWC (channels minor), zero-pad spatially once. This single
    # padded array feeds both conv1 and (its interior) the residual path.
    x_nhwc = jnp.transpose(x_nchw, (0, 2, 3, 1)).astype(jnp.float32)
    x_pad = jnp.pad(x_nhwc, ((0, 0), (1, 1), (1, 1), (0, 0)))

    # conv1 weight as an im2col matrix (9*Cin, Cout), row order (ky, kx, ci).
    w1_mat = jnp.transpose(w1, (2, 3, 1, 0)).reshape(9 * C, C).astype(MXU_DTYPE)
    # conv2 weight pre-transposed to (Cout, 9*Cin) so the kernel's trans-B
    # matmul emits the (C, B*H*W) lane-dense result directly.
    w2_mat_t = jnp.transpose(w2, (0, 2, 3, 1)).reshape(C, 9 * C).astype(MXU_DTYPE)

    g1r = g1.reshape(1, C).astype(jnp.float32)
    b1r = b1.reshape(1, C).astype(jnp.float32)
    g2r = g2.reshape(C, 1).astype(jnp.float32)
    b2r = b2.reshape(C, 1).astype(jnp.float32)

    # Advisory cost hint for XLA's scheduler around the custom call.
    conv_flops = 2 * R * (9 * C) * C          # per conv
    total_flops = 2 * conv_flops + 2 * R * C * C + 14 * R * C
    bytes_accessed = (x_pad.size + w1_mat.size + w2_mat_t.size) * 4 + R * C * 4 * 2
    cost = pl.CostEstimate(flops=total_flops, transcendentals=2 * C,
                           bytes_accessed=bytes_accessed)

    vmem = pl.BlockSpec(memory_space=pltpu.MemorySpace.VMEM)
    out_cr = pl.pallas_call(
        basic_block_kernel,
        out_shape=jax.ShapeDtypeStruct((C, R), jnp.float32),
        in_specs=[vmem] * 7,
        out_specs=vmem,
        scratch_shapes=[pltpu.VMEM((B, H + 2, W + 2, C), jnp.float32)],
        cost_estimate=cost,
        compiler_params=pltpu.CompilerParams(
            # explicit VMEM budget (safe on v5e/v6e/v7x; usage here is ~0.2 MiB)
            vmem_limit_bytes=32 * 1024 * 1024),
    )(x_pad, w1_mat, g1r, b1r, w2_mat_t, g2r, b2r)

    # (C, B*H*W) lane-dense kernel output -> NCHW to match the PyTorch module.
    return jnp.transpose(out_cr.reshape(C, B, H, W), (1, 0, 2, 3))


def _reference(x, w1, g1, b1, w2, g2, b2):
    """Pure-JAX (XLA) reference of the PyTorch BasicBlock forward."""
    def conv(a, w):
        return jax.lax.conv_general_dilated(
            a, w, window_strides=(1, 1), padding=((1, 1), (1, 1)),
            dimension_numbers=("NCHW", "OIHW", "NCHW"))

    def bn(y, g, b):
        mean = jnp.mean(y, axis=(0, 2, 3), keepdims=True)
        var = jnp.mean((y - mean) ** 2, axis=(0, 2, 3), keepdims=True)
        return (y - mean) * (g.reshape(1, -1, 1, 1) * jax.lax.rsqrt(var + EPS)) \
            + b.reshape(1, -1, 1, 1)

    out = jnp.maximum(bn(conv(x, w1), g1, b1), 0.0)
    out = bn(conv(out, w2), g2, b2)
    return jnp.maximum(out + x, 0.0)


if __name__ == "__main__":
    # Small shapes consistent with the module: inplanes = planes = 4, stride = 1,
    # downsample = None (identity path).
    B, C, H, W = 2, 4, 16, 16

    key = jax.random.PRNGKey(0)
    kx, kw1, kw2, kg1, kb1, kg2, kb2 = jax.random.split(key, 7)

    x = jax.random.normal(kx, (B, C, H, W), dtype=jnp.float32)
    w1 = 0.1 * jax.random.normal(kw1, (C, C, 3, 3), dtype=jnp.float32)
    w2 = 0.1 * jax.random.normal(kw2, (C, C, 3, 3), dtype=jnp.float32)
    gamma1 = 1.0 + 0.1 * jax.random.normal(kg1, (C,), dtype=jnp.float32)
    beta1 = 0.1 * jax.random.normal(kb1, (C,), dtype=jnp.float32)
    gamma2 = 1.0 + 0.1 * jax.random.normal(kg2, (C,), dtype=jnp.float32)
    beta2 = 0.1 * jax.random.normal(kb2, (C,), dtype=jnp.float32)

    out = basic_block_forward(x, w1, gamma1, beta1, w2, gamma2, beta2)
    out = jax.block_until_ready(out)
    assert out.shape == (B, C, H, W)

    # Correctness vs. pure-JAX reference. Tolerance is loose only because conv
    # operands are cast to bf16 for the MXU; MXU_DTYPE=float32 brings
    # agreement to ~1e-6.
    ref = _reference(x, w1, gamma1, beta1, w2, gamma2, beta2)
    assert bool(jnp.allclose(out, ref, atol=5e-2, rtol=5e-2))

    print("KERNEL_OK")
</pallas_src>

<mosaic_0001>
module attributes {stable_mosaic.version = 11 : i64} {
  func.func @basic_block_kernel(%arg0: memref<2x18x18x4xf32, #tpu.memory_space<vmem>>, %arg1: memref<36x4xbf16, #tpu.memory_space<vmem>>, %arg2: memref<1x4xf32, #tpu.memory_space<vmem>>, %arg3: memref<1x4xf32, #tpu.memory_space<vmem>>, %arg4: memref<4x36xbf16, #tpu.memory_space<vmem>>, %arg5: memref<4x1xf32, #tpu.memory_space<vmem>>, %arg6: memref<4x1xf32, #tpu.memory_space<vmem>>, %arg7: memref<4x512xf32, #tpu.memory_space<vmem>>, %arg8: memref<2x18x18x4xf32, #tpu.memory_space<vmem>>) attributes {dimension_semantics = [], scalar_prefetch = 0 : i64, scratch_operands = 1 : i64, tpu.core_type = #tpu.core_type<tc>} {
    %c0 = arith.constant 0 : index
    %c0_0 = arith.constant 0 : index
    %c0_1 = arith.constant 0 : index
    %c0_2 = arith.constant 0 : index
    %0 = vector.load %arg0[%c0, %c0_0, %c0_1, %c0_2] : memref<2x18x18x4xf32, #tpu.memory_space<vmem>>, vector<2x18x18x4xf32>
    %1 = vector.extract_strided_slice %0 {offsets = [0, 0, 0, 0], sizes = [2, 16, 16, 4], strides = [1, 1, 1, 1]} : vector<2x18x18x4xf32> to vector<2x16x16x4xf32>
    %2 = vector.extract_strided_slice %0 {offsets = [0, 0, 1, 0], sizes = [2, 16, 16, 4], strides = [1, 1, 1, 1]} : vector<2x18x18x4xf32> to vector<2x16x16x4xf32>
    %3 = vector.extract_strided_slice %0 {offsets = [0, 0, 2, 0], sizes = [2, 16, 16, 4], strides = [1, 1, 1, 1]} : vector<2x18x18x4xf32> to vector<2x16x16x4xf32>
    %4 = vector.extract_strided_slice %0 {offsets = [0, 1, 0, 0], sizes = [2, 16, 16, 4], strides = [1, 1, 1, 1]} : vector<2x18x18x4xf32> to vector<2x16x16x4xf32>
    %5 = vector.extract_strided_slice %0 {offsets = [0, 1, 1, 0], sizes = [2, 16, 16, 4], strides = [1, 1, 1, 1]} : vector<2x18x18x4xf32> to vector<2x16x16x4xf32>
    %6 = vector.extract_strided_slice %0 {offsets = [0, 1, 2, 0], sizes = [2, 16, 16, 4], strides = [1, 1, 1, 1]} : vector<2x18x18x4xf32> to vector<2x16x16x4xf32>
    %7 = vector.extract_strided_slice %0 {offsets = [0, 2, 0, 0], sizes = [2, 16, 16, 4], strides = [1, 1, 1, 1]} : vector<2x18x18x4xf32> to vector<2x16x16x4xf32>
    %8 = vector.extract_strided_slice %0 {offsets = [0, 2, 1, 0], sizes = [2, 16, 16, 4], strides = [1, 1, 1, 1]} : vector<2x18x18x4xf32> to vector<2x16x16x4xf32>
    %9 = vector.extract_strided_slice %0 {offsets = [0, 2, 2, 0], sizes = [2, 16, 16, 4], strides = [1, 1, 1, 1]} : vector<2x18x18x4xf32> to vector<2x16x16x4xf32>
    %10 = tpu.concatenate %1, %2, %3, %4, %5, %6, %7, %8, %9 in 3 : vector<2x16x16x4xf32>, vector<2x16x16x4xf32>, vector<2x16x16x4xf32>, vector<2x16x16x4xf32>, vector<2x16x16x4xf32>, vector<2x16x16x4xf32>, vector<2x16x16x4xf32>, vector<2x16x16x4xf32>, vector<2x16x16x4xf32> -> vector<2x16x16x36xf32>
    %11 = vector.shape_cast %10 : vector<2x16x16x36xf32> to vector<512x36xf32>
    %12 = arith.truncf %11 : vector<512x36xf32> to vector<512x36xbf16>
    %c0_3 = arith.constant 0 : index
    %c0_4 = arith.constant 0 : index
    %13 = vector.load %arg1[%c0_3, %c0_4] : memref<36x4xbf16, #tpu.memory_space<vmem>>, vector<36x4xbf16>
    %cst = arith.constant dense<0.000000e+00> : vector<512x4xf32>
    %14 = tpu.matmul %12, %13, %cst {dimension_numbers = #tpu.dot_dimension_numbers<[1], [0], [0], [1], [0, 0, 1, 1], [], []>} : vector<512x36xbf16>, vector<36x4xbf16>, vector<512x4xf32> -> vector<512x4xf32>
    %cst_5 = arith.constant dense<0.000000e+00> : vector<4xf32>
    %15 = vector.multi_reduction <add>, %14, %cst_5 [0] : vector<512x4xf32> to vector<4xf32>
    %16 = vector.shape_cast %15 : vector<4xf32> to vector<1x4xf32>
    %cst_6 = arith.constant 5.120000e+02 : f32
    %17 = vector.broadcast %cst_6 : f32 to vector<1x4xf32>
    %18 = arith.divf %16, %17 : vector<1x4xf32>
    %19 = vector.broadcast %18 : vector<1x4xf32> to vector<512x4xf32>
    %20 = arith.subf %14, %19 : vector<512x4xf32>
    %21 = arith.mulf %20, %20 : vector<512x4xf32>
    %cst_7 = arith.constant dense<0.000000e+00> : vector<4xf32>
    %22 = vector.multi_reduction <add>, %21, %cst_7 [0] : vector<512x4xf32> to vector<4xf32>
    %23 = vector.shape_cast %22 : vector<4xf32> to vector<1x4xf32>
    %cst_8 = arith.constant 5.120000e+02 : f32
    %24 = vector.broadcast %cst_8 : f32 to vector<1x4xf32>
    %25 = arith.divf %23, %24 : vector<1x4xf32>
    %c0_9 = arith.constant 0 : index
    %c0_10 = arith.constant 0 : index
    %26 = vector.load %arg2[%c0_9, %c0_10] : memref<1x4xf32, #tpu.memory_space<vmem>>, vector<1x4xf32>
    %cst_11 = arith.constant 9.99999974E-6 : f32
    %27 = vector.broadcast %cst_11 : f32 to vector<1x4xf32>
    %28 = arith.addf %25, %27 : vector<1x4xf32>
    %29 = math.rsqrt %28 : vector<1x4xf32>
    %30 = arith.mulf %26, %29 : vector<1x4xf32>
    %c0_12 = arith.constant 0 : index
    %c0_13 = arith.constant 0 : index
    %31 = vector.load %arg3[%c0_12, %c0_13] : memref<1x4xf32, #tpu.memory_space<vmem>>, vector<1x4xf32>
    %32 = arith.mulf %18, %30 : vector<1x4xf32>
    %33 = arith.subf %31, %32 : vector<1x4xf32>
    %34 = vector.broadcast %30 : vector<1x4xf32> to vector<512x4xf32>
    %35 = arith.mulf %14, %34 : vector<512x4xf32>
    %36 = vector.broadcast %33 : vector<1x4xf32> to vector<512x4xf32>
    %37 = arith.addf %35, %36 : vector<512x4xf32>
    %cst_14 = arith.constant 0.000000e+00 : f32
    %38 = vector.broadcast %cst_14 : f32 to vector<512x4xf32>
    %39 = arith.maximumf %37, %38 : vector<512x4xf32>
    %cst_15 = arith.constant 0.000000e+00 : f32
    %40 = vector.broadcast %cst_15 : f32 to vector<2x1x18x4xf32>
    %cst_16 = arith.constant 0.000000e+00 : f32
    %41 = vector.broadcast %cst_16 : f32 to vector<2x18x1x4xf32>
    %c0_17 = arith.constant 0 : index
    %c0_18 = arith.constant 0 : index
    %c0_19 = arith.constant 0 : index
    %c0_20 = arith.constant 0 : index
    %42 = vector.load %arg8[%c0_17, %c0_18, %c0_19, %c0_20] : memref<2x18x18x4xf32, #tpu.memory_space<vmem>>, vector<2x1x18x4xf32>
    tpu.vector_store %arg8[%c0_17, %c0_18, %c0_19, %c0_20], %40 {strides = array<i32>} : memref<2x18x18x4xf32, #tpu.memory_space<vmem>>, vector<2x1x18x4xf32>,
    %c0_21 = arith.constant 0 : index
    %c17 = arith.constant 17 : index
    %c0_22 = arith.constant 0 : index
    %c0_23 = arith.constant 0 : index
    %43 = vector.load %arg8[%c0_21, %c17, %c0_22, %c0_23] : memref<2x18x18x4xf32, #tpu.memory_space<vmem>>, vector<2x1x18x4xf32>
    tpu.vector_store %arg8[%c0_21, %c17, %c0_22, %c0_23], %40 {strides = array<i32>} : memref<2x18x18x4xf32, #tpu.memory_space<vmem>>, vector<2x1x18x4xf32>,
    %c0_24 = arith.constant 0 : index
    %c0_25 = arith.constant 0 : index
    %c0_26 = arith.constant 0 : index
    %c0_27 = arith.constant 0 : index
    %44 = vector.load %arg8[%c0_24, %c0_25, %c0_26, %c0_27] : memref<2x18x18x4xf32, #tpu.memory_space<vmem>>, vector<2x18x1x4xf32>
    tpu.vector_store %arg8[%c0_24, %c0_25, %c0_26, %c0_27], %41 {strides = array<i32>} : memref<2x18x18x4xf32, #tpu.memory_space<vmem>>, vector<2x18x1x4xf32>,
    %c0_28 = arith.constant 0 : index
    %c0_29 = arith.constant 0 : index
    %c17_30 = arith.constant 17 : index
    %c0_31 = arith.constant 0 : index
    %45 = vector.load %arg8[%c0_28, %c0_29, %c17_30, %c0_31] : memref<2x18x18x4xf32, #tpu.memory_space<vmem>>, vector<2x18x1x4xf32>
    tpu.vector_store %arg8[%c0_28, %c0_29, %c17_30, %c0_31], %41 {strides = array<i32>} : memref<2x18x18x4xf32, #tpu.memory_space<vmem>>, vector<2x18x1x4xf32>,
    %46 = vector.shape_cast %39 : vector<512x4xf32> to vector<2x16x16x4xf32>
    %c0_32 = arith.constant 0 : index
    %c1 = arith.constant 1 : index
    %c1_33 = arith.constant 1 : index
    %c0_34 = arith.constant 0 : index
    %47 = vector.load %arg8[%c0_32, %c1, %c1_33, %c0_34] : memref<2x18x18x4xf32, #tpu.memory_space<vmem>>, vector<2x16x16x4xf32>
    tpu.vector_store %arg8[%c0_32, %c1, %c1_33, %c0_34], %46 {strides = array<i32>} : memref<2x18x18x4xf32, #tpu.memory_space<vmem>>, vector<2x16x16x4xf32>,
    %c0_35 = arith.constant 0 : index
    %c0_36 = arith.constant 0 : index
    %48 = vector.load %arg4[%c0_35, %c0_36] : memref<4x36xbf16, #tpu.memory_space<vmem>>, vector<4x36xbf16>
    %c0_37 = arith.constant 0 : index
    %c0_38 = arith.constant 0 : index
    %c0_39 = arith.constant 0 : index
    %c0_40 = arith.constant 0 : index
    %49 = vector.load %arg8[%c0_37, %c0_38, %c0_39, %c0_40] : memref<2x18x18x4xf32, #tpu.memory_space<vmem>>, vector<2x18x18x4xf32>
    %50 = vector.extract_strided_slice %49 {offsets = [0, 0, 0, 0], sizes = [2, 16, 16, 4], strides = [1, 1, 1, 1]} : vector<2x18x18x4xf32> to vector<2x16x16x4xf32>
    %51 = vector.extract_strided_slice %49 {offsets = [0, 0, 1, 0], sizes = [2, 16, 16, 4], strides = [1, 1, 1, 1]} : vector<2x18x18x4xf32> to vector<2x16x16x4xf32>
    %52 = vector.extract_strided_slice %49 {offsets = [0, 0, 2, 0], sizes = [2, 16, 16, 4], strides = [1, 1, 1, 1]} : vector<2x18x18x4xf32> to vector<2x16x16x4xf32>
    %53 = vector.extract_strided_slice %49 {offsets = [0, 1, 0, 0], sizes = [2, 16, 16, 4], strides = [1, 1, 1, 1]} : vector<2x18x18x4xf32> to vector<2x16x16x4xf32>
    %54 = vector.extract_strided_slice %49 {offsets = [0, 1, 1, 0], sizes = [2, 16, 16, 4], strides = [1, 1, 1, 1]} : vector<2x18x18x4xf32> to vector<2x16x16x4xf32>
    %55 = vector.extract_strided_slice %49 {offsets = [0, 1, 2, 0], sizes = [2, 16, 16, 4], strides = [1, 1, 1, 1]} : vector<2x18x18x4xf32> to vector<2x16x16x4xf32>
    %56 = vector.extract_strided_slice %49 {offsets = [0, 2, 0, 0], sizes = [2, 16, 16, 4], strides = [1, 1, 1, 1]} : vector<2x18x18x4xf32> to vector<2x16x16x4xf32>
    %57 = vector.extract_strided_slice %49 {offsets = [0, 2, 1, 0], sizes = [2, 16, 16, 4], strides = [1, 1, 1, 1]} : vector<2x18x18x4xf32> to vector<2x16x16x4xf32>
    %58 = vector.extract_strided_slice %49 {offsets = [0, 2, 2, 0], sizes = [2, 16, 16, 4], strides = [1, 1, 1, 1]} : vector<2x18x18x4xf32> to vector<2x16x16x4xf32>
    %59 = tpu.concatenate %50, %51, %52, %53, %54, %55, %56, %57, %58 in 3 : vector<2x16x16x4xf32>, vector<2x16x16x4xf32>, vector<2x16x16x4xf32>, vector<2x16x16x4xf32>, vector<2x16x16x4xf32>, vector<2x16x16x4xf32>, vector<2x16x16x4xf32>, vector<2x16x16x4xf32>, vector<2x16x16x4xf32> -> vector<2x16x16x36xf32>
    %60 = vector.shape_cast %59 : vector<2x16x16x36xf32> to vector<512x36xf32>
    %61 = arith.truncf %60 : vector<512x36xf32> to vector<512x36xbf16>
    %cst_41 = arith.constant dense<0.000000e+00> : vector<4x512xf32>
    %62 = tpu.matmul %48, %61, %cst_41 {dimension_numbers = #tpu.dot_dimension_numbers<[1], [1], [0], [0], [0, 0, 1, 0], [], []>} : vector<4x36xbf16>, vector<512x36xbf16>, vector<4x512xf32> -> vector<4x512xf32>
    %cst_42 = arith.constant dense<0.000000e+00> : vector<4xf32>
    %63 = vector.multi_reduction <add>, %62, %cst_42 [1] : vector<4x512xf32> to vector<4xf32>
    %64 = vector.shape_cast %63 : vector<4xf32> to vector<4x1xf32>
    %cst_43 = arith.constant 5.120000e+02 : f32
    %65 = vector.broadcast %cst_43 : f32 to vector<4x1xf32>
    %66 = arith.divf %64, %65 : vector<4x1xf32>
    %67 = vector.broadcast %66 : vector<4x1xf32> to vector<4x512xf32>
    %68 = arith.subf %62, %67 : vector<4x512xf32>
    %69 = arith.mulf %68, %68 : vector<4x512xf32>
    %cst_44 = arith.constant dense<0.000000e+00> : vector<4xf32>
    %70 = vector.multi_reduction <add>, %69, %cst_44 [1] : vector<4x512xf32> to vector<4xf32>
    %71 = vector.shape_cast %70 : vector<4xf32> to vector<4x1xf32>
    %cst_45 = arith.constant 5.120000e+02 : f32
    %72 = vector.broadcast %cst_45 : f32 to vector<4x1xf32>
    %73 = arith.divf %71, %72 : vector<4x1xf32>
    %c0_46 = arith.constant 0 : index
    %c0_47 = arith.constant 0 : index
    %74 = vector.load %arg5[%c0_46, %c0_47] : memref<4x1xf32, #tpu.memory_space<vmem>>, vector<4x1xf32>
    %cst_48 = arith.constant 9.99999974E-6 : f32
    %75 = vector.broadcast %cst_48 : f32 to vector<4x1xf32>
    %76 = arith.addf %73, %75 : vector<4x1xf32>
    %77 = math.rsqrt %76 : vector<4x1xf32>
    %78 = arith.mulf %74, %77 : vector<4x1xf32>
    %c0_49 = arith.constant 0 : index
    %c0_50 = arith.constant 0 : index
    %79 = vector.load %arg6[%c0_49, %c0_50] : memref<4x1xf32, #tpu.memory_space<vmem>>, vector<4x1xf32>
    %80 = arith.mulf %66, %78 : vector<4x1xf32>
    %81 = arith.subf %79, %80 : vector<4x1xf32>
    %82 = vector.extract_strided_slice %0 {offsets = [0, 1, 1, 0], sizes = [2, 16, 16, 4], strides = [1, 1, 1, 1]} : vector<2x18x18x4xf32> to vector<2x16x16x4xf32>
    %83 = vector.shape_cast %82 : vector<2x16x16x4xf32> to vector<512x4xf32>
    %84 = tpu.iota {dimensions = array<i32: 0>} : vector<4x4xi32>
    %85 = tpu.iota {dimensions = array<i32: 1>} : vector<4x4xi32>
    %86 = arith.cmpi eq, %84, %85 : vector<4x4xi32>
    %87 = arith.extui %86 : vector<4x4xi1> to vector<4x4xi32>
    %88 = arith.sitofp %87 : vector<4x4xi32> to vector<4x4xf32>
    %cst_51 = arith.constant dense<0.000000e+00> : vector<4x512xf32>
    %89 = tpu.matmul %88, %83, %cst_51 {dimension_numbers = #tpu.dot_dimension_numbers<[1], [1], [0], [0], [0, 0, 1, 0], [], []>, precision = #tpu.contract_precision<fp32>} : vector<4x4xf32>, vector<512x4xf32>, vector<4x512xf32> -> vector<4x512xf32>
    %90 = vector.broadcast %78 : vector<4x1xf32> to vector<4x512xf32>
    %91 = arith.mulf %62, %90 : vector<4x512xf32>
    %92 = vector.broadcast %81 : vector<4x1xf32> to vector<4x512xf32>
    %93 = arith.addf %89, %92 : vector<4x512xf32>
    %94 = arith.addf %91, %93 : vector<4x512xf32>
    %cst_52 = arith.constant 0.000000e+00 : f32
    %95 = vector.broadcast %cst_52 : f32 to vector<4x512xf32>
    %96 = arith.maximumf %94, %95 : vector<4x512xf32>
    %c0_53 = arith.constant 0 : index
    %c0_54 = arith.constant 0 : index
    %97 = vector.load %arg7[%c0_53, %c0_54] : memref<4x512xf32, #tpu.memory_space<vmem>>, vector<4x512xf32>
    tpu.vector_store %arg7[%c0_53, %c0_54], %96 {strides = array<i32>} : memref<4x512xf32, #tpu.memory_space<vmem>>, vector<4x512xf32>,
    return
  }
}

</mosaic_0001>

<llo_original>
// kernel: tpu_custom_call.1
$region0: #{tpu_custom_call.1}
  #allocation0 [shape = 'u32[]', space=smem, size = 0x4, offset = 0x4, fixed_abs, tag = 'smem constant byte address 0x4 - core index']
  #allocation1 [shape = 'u32[144,128]{1,0:T(1,128)}', space=vmem, size = 0x12000, scoped, tag = 'internal scratch']
  #allocation2 [shape = 'f32[2,18,18,4]{3,2,1,0:T(8,128)}', space=vmem, size = 0x6c000, scoped, tag = 'scratch operand']
  %s0 = inlined_call_operand.vmem [shape: f32[2,18,18,4], index: 0, kind: input, shape index: {}]
  %s1 = inlined_call_operand.vmem [shape: bf16[36,4], index: 1, kind: input, shape index: {}]
  %s2 = inlined_call_operand.vmem [shape: f32[1,4], index: 2, kind: input, shape index: {}]
  %s3 = inlined_call_operand.vmem [shape: f32[1,4], index: 3, kind: input, shape index: {}]
  %s4 = inlined_call_operand.vmem [shape: bf16[4,36], index: 4, kind: input, shape index: {}]
  %s5 = inlined_call_operand.vmem [shape: f32[4,1], index: 5, kind: input, shape index: {}]
  %s6 = inlined_call_operand.vmem [shape: f32[4,1], index: 6, kind: input, shape index: {}]
  %s7 = inlined_call_operand.hbm [shape: f32[4,512], index: 7, kind: output, shape index: {}]
  %s8 = sld [smem:[#allocation0]]
  $region38: #{tpu_custom_call.1} parent=0
    _
  %s10 = ssub.s32 1, %s8
  %s11 = scalar_select 0, %s10, %s8
  $region1: #{tpu_custom_call.1} parent=0
    #allocation3 [shape = 'u8[8192]{0}', space=vmem, size = 0x2000, scoped, tag = 'output window, operand 0, single buffered']
    #allocation4 [shape = 's32[1]{0}', space=sflag, size = 0x4, scoped, tag = 'scoped memory for tpu_custom_call.1']
    %12 = vsyncpa [#allocation4], 0
    // Predicated region
    $region2: #{tpu_custom_call.1} parent=1 // pred_check
      _
    $region3: #{tpu_custom_call.1} parent=1 // pred_check_branch
      %14 = sbr.rel (0) target = $region5
    $region4: #{tpu_custom_call.1} parent=1 // pred_region
      _
    $region5: #{tpu_custom_call.1} parent=1 // pred_fallthru
      _
    // Predicated region
    $region6: #{tpu_custom_call.1} parent=1 // pred_check
      _
    $region7: #{tpu_custom_call.1} parent=1 // pred_check_branch
      %16 = sbr.rel (0) target = $region9
    $region8: #{tpu_custom_call.1} parent=1 // pred_region
      _
    $region9: #{tpu_custom_call.1} parent=1 // pred_fallthru
      _
    // Predicated region
    $region10: #{tpu_custom_call.1} parent=1 // pred_check
      _
    $region11: #{tpu_custom_call.1} parent=1 // pred_check_branch
      %18 = sbr.rel (0) target = $region13
    $region12: #{tpu_custom_call.1} parent=1 // pred_region
      _
    $region13: #{tpu_custom_call.1} parent=1 // pred_fallthru
      _
    // Predicated region
    $region14: #{tpu_custom_call.1} parent=1 // pred_check
      _
    $region15: #{tpu_custom_call.1} parent=1 // pred_check_branch
      %20 = sbr.rel (0) target = $region17
    $region16: #{tpu_custom_call.1} parent=1 // pred_region
      _
    $region17: #{tpu_custom_call.1} parent=1 // pred_fallthru
      _
    // Predicated region
    $region18: #{tpu_custom_call.1} parent=1 // pred_check
      _
    $region19: #{tpu_custom_call.1} parent=1 // pred_check_branch
      %22 = sbr.rel (0) target = $region21
    $region20: #{tpu_custom_call.1} parent=1 // pred_region
      _
    $region21: #{tpu_custom_call.1} parent=1 // pred_fallthru
      _
    // Predicated region
    $region22: #{tpu_custom_call.1} parent=1 // pred_check
      _
    $region23: #{tpu_custom_call.1} parent=1 // pred_check_branch
      %24 = sbr.rel (0) target = $region25
    $region24: #{tpu_custom_call.1} parent=1 // pred_region
      _
    $region25: #{tpu_custom_call.1} parent=1 // pred_fallthru
      _
    // Predicated region
    $region26: #{tpu_custom_call.1} parent=1 // pred_check
      _
    $region27: #{tpu_custom_call.1} parent=1 // pred_check_branch
      %26 = sbr.rel (0) target = $region29
    $region28: #{tpu_custom_call.1} parent=1 // pred_region
      _
    $region29: #{tpu_custom_call.1} parent=1 // pred_fallthru
      _
    %v28 = vld [vmem:[%s0] sm:$0xff]
    %v29 = vld [vmem:[%s0 + $0x8] sm:$0xff]
    %v30 = vld [vmem:[%s0 + $0x10] sm:$0x3]
    %v31 = vld [vmem:[%s0 + $0x18] sm:$0xff]
    %v32 = vld [vmem:[%s0 + $0x20] sm:$0xff]
    %v33 = vld [vmem:[%s0 + $0x28] sm:$0x3]
    %v34 = vld [vmem:[%s0 + $0x30] sm:$0xff]
    %v35 = vld [vmem:[%s0 + $0x38] sm:$0xff]
    %v36 = vld [vmem:[%s0 + $0x40] sm:$0x3]
    %v37 = vld [vmem:[%s0 + $0x48] sm:$0xff]
    %v38 = vld [vmem:[%s0 + $0x50] sm:$0xff]
    %v39 = vld [vmem:[%s0 + $0x58] sm:$0x3]
    %v40 = vld [vmem:[%s0 + $0x60] sm:$0xff]
    %v41 = vld [vmem:[%s0 + $0x68] sm:$0xff]
    %v42 = vld [vmem:[%s0 + $0x70] sm:$0x3]
    %v43 = vld [vmem:[%s0 + $0x78] sm:$0xff]
    %v44 = vld [vmem:[%s0 + $0x80] sm:$0xff]
    %v45 = vld [vmem:[%s0 + $0x88] sm:$0x3]
    %v46 = vld [vmem:[%s0 + $0x90] sm:$0xff]
    %v47 = vld [vmem:[%s0 + $0x98] sm:$0xff]
    %v48 = vld [vmem:[%s0 + $0xa0] sm:$0x3]
    %v49 = vld [vmem:[%s0 + $0xa8] sm:$0xff]
    %v50 = vld [vmem:[%s0 + $0xb0] sm:$0xff]
    %v51 = vld [vmem:[%s0 + $0xb8] sm:$0x3]
    %v52 = vld [vmem:[%s0 + $0xc0] sm:$0xff]
    %v53 = vld [vmem:[%s0 + $0xc8] sm:$0xff]
    %v54 = vld [vmem:[%s0 + $0xd0] sm:$0x3]
    %v55 = vld [vmem:[%s0 + $0xd8] sm:$0xff]
    %v56 = vld [vmem:[%s0 + $0xe0] sm:$0xff]
    %v57 = vld [vmem:[%s0 + $0xe8] sm:$0x3]
    %v58 = vld [vmem:[%s0 + $0xf0] sm:$0xff]
    %v59 = vld [vmem:[%s0 + $0xf8] sm:$0xff]
    %v60 = vld [vmem:[%s0 + $0x100] sm:$0x3]
    %v61 = vld [vmem:[%s0 + $0x108] sm:$0xff]
    %v62 = vld [vmem:[%s0 + $0x110] sm:$0xff]
    %v63 = vld [vmem:[%s0 + $0x118] sm:$0x3]
    %v64 = vld [vmem:[%s0 + $0x120] sm:$0xff]
    %v65 = vld [vmem:[%s0 + $0x128] sm:$0xff]
    %v66 = vld [vmem:[%s0 + $0x130] sm:$0x3]
    %v67 = vld [vmem:[%s0 + $0x138] sm:$0xff]
    %v68 = vld [vmem:[%s0 + $0x140] sm:$0xff]
    %v69 = vld [vmem:[%s0 + $0x148] sm:$0x3]
    %v70 = vld [vmem:[%s0 + $0x150] sm:$0xff]
    %v71 = vld [vmem:[%s0 + $0x158] sm:$0xff]
    %v72 = vld [vmem:[%s0 + $0x160] sm:$0x3]
    %v73 = vld [vmem:[%s0 + $0x168] sm:$0xff]
    %v74 = vld [vmem:[%s0 + $0x170] sm:$0xff]
    %v75 = vld [vmem:[%s0 + $0x178] sm:$0x3]
    %v76 = vld [vmem:[%s0 + $0x180] sm:$0xff]
    %v77 = vld [vmem:[%s0 + $0x188] sm:$0xff]
    %v78 = vld [vmem:[%s0 + $0x190] sm:$0x3]
    %v79 = vld [vmem:[%s0 + $0x198] sm:$0xff]
    %v80 = vld [vmem:[%s0 + $0x1a0] sm:$0xff]
    %v81 = vld [vmem:[%s0 + $0x1a8] sm:$0x3]
    %v82 = vld [vmem:[%s0 + $0x1b0] sm:$0xff]
    %v83 = vld [vmem:[%s0 + $0x1b8] sm:$0xff]
    %v84 = vld [vmem:[%s0 + $0x1c0] sm:$0x3]
    %v85 = vld [vmem:[%s0 + $0x1c8] sm:$0xff]
    %v86 = vld [vmem:[%s0 + $0x1d0] sm:$0xff]
    %v87 = vld [vmem:[%s0 + $0x1d8] sm:$0x3]
    %v88 = vld [vmem:[%s0 + $0x1e0] sm:$0xff]
    %v89 = vld [vmem:[%s0 + $0x1e8] sm:$0xff]
    %v90 = vld [vmem:[%s0 + $0x1f0] sm:$0x3]
    %v91 = vld [vmem:[%s0 + $0x1f8] sm:$0xff]
    %v92 = vld [vmem:[%s0 + $0x200] sm:$0xff]
    %v93 = vld [vmem:[%s0 + $0x208] sm:$0x3]
    %v94 = vld [vmem:[%s0 + $0x210] sm:$0xff]
    %v95 = vld [vmem:[%s0 + $0x218] sm:$0xff]
    %v96 = vld [vmem:[%s0 + $0x220] sm:$0x3]
    %v97 = vld [vmem:[%s0 + $0x228] sm:$0xff]
    %v98 = vld [vmem:[%s0 + $0x230] sm:$0xff]
    %v99 = vld [vmem:[%s0 + $0x238] sm:$0x3]
    %v100 = vld [vmem:[%s0 + $0x240] sm:$0xff]
    %v101 = vld [vmem:[%s0 + $0x248] sm:$0xff]
    %v102 = vld [vmem:[%s0 + $0x250] sm:$0x3]
    %v103 = vld [vmem:[%s0 + $0x258] sm:$0xff]
    %v104 = vld [vmem:[%s0 + $0x260] sm:$0xff]
    %v105 = vld [vmem:[%s0 + $0x268] sm:$0x3]
    %v106 = vld [vmem:[%s0 + $0x270] sm:$0xff]
    %v107 = vld [vmem:[%s0 + $0x278] sm:$0xff]
    %v108 = vld [vmem:[%s0 + $0x280] sm:$0x3]
    %v109 = vld [vmem:[%s0 + $0x288] sm:$0xff]
    %v110 = vld [vmem:[%s0 + $0x290] sm:$0xff]
    %v111 = vld [vmem:[%s0 + $0x298] sm:$0x3]
    %v112 = vld [vmem:[%s0 + $0x2a0] sm:$0xff]
    %v113 = vld [vmem:[%s0 + $0x2a8] sm:$0xff]
    %v114 = vld [vmem:[%s0 + $0x2b0] sm:$0x3]
    %v115 = vld [vmem:[%s0 + $0x2b8] sm:$0xff]
    %v116 = vld [vmem:[%s0 + $0x2c0] sm:$0xff]
    %v117 = vld [vmem:[%s0 + $0x2c8] sm:$0x3]
    %v118 = vld [vmem:[%s0 + $0x2d0] sm:$0xff]
    %v119 = vld [vmem:[%s0 + $0x2d8] sm:$0xff]
    %v120 = vld [vmem:[%s0 + $0x2e0] sm:$0x3]
    %v121 = vld [vmem:[%s0 + $0x2e8] sm:$0xff]
    %v122 = vld [vmem:[%s0 + $0x2f0] sm:$0xff]
    %v123 = vld [vmem:[%s0 + $0x2f8] sm:$0x3]
    %v124 = vld [vmem:[%s0 + $0x300] sm:$0xff]
    %v125 = vld [vmem:[%s0 + $0x308] sm:$0xff]
    %v126 = vld [vmem:[%s0 + $0x310] sm:$0x3]
    %v127 = vld [vmem:[%s0 + $0x318] sm:$0xff]
    %v128 = vld [vmem:[%s0 + $0x320] sm:$0xff]
    %v129 = vld [vmem:[%s0 + $0x328] sm:$0x3]
    %v130 = vld [vmem:[%s0 + $0x330] sm:$0xff]
    %v131 = vld [vmem:[%s0 + $0x338] sm:$0xff]
    %v132 = vld [vmem:[%s0 + $0x340] sm:$0x3]
    %v133 = vld [vmem:[%s0 + $0x348] sm:$0xff]
    %v134 = vld [vmem:[%s0 + $0x350] sm:$0xff]
    %v135 = vld [vmem:[%s0 + $0x358] sm:$0x3]
    %vm232 = vcmask 1046528
    %v233 = vrot.slane %v28, 1
    %v234 = vrot.slane %v29, 1
    %v235 = vsel %vm232, %v233, %v234
    %v236 = vrot.slane %v30, 1
    %v237 = vsel %vm232, %v234, %v236
    %v238 = vrot.slane %v31, 1
    %v239 = vrot.slane %v32, 1
    %v240 = vsel %vm232, %v238, %v239
    %v241 = vrot.slane %v33, 1
    %v242 = vsel %vm232, %v239, %v241
    %v243 = vrot.slane %v34, 1
    %v244 = vrot.slane %v35, 1
    %v245 = vsel %vm232, %v243, %v244
    %v246 = vrot.slane %v36, 1
    %v247 = vsel %vm232, %v244, %v246
    %v248 = vrot.slane %v37, 1
    %v249 = vrot.slane %v38, 1
    %v250 = vsel %vm232, %v248, %v249
    %v251 = vrot.slane %v39, 1
    %v252 = vsel %vm232, %v249, %v251
    %v253 = vrot.slane %v40, 1
    %v254 = vrot.slane %v41, 1
    %v255 = vsel %vm232, %v253, %v254
    %v256 = vrot.slane %v42, 1
    %v257 = vsel %vm232, %v254, %v256
    %v258 = vrot.slane %v43, 1
    %v259 = vrot.slane %v44, 1
    %v260 = vsel %vm232, %v258, %v259
    %v261 = vrot.slane %v45, 1
    %v262 = vsel %vm232, %v259, %v261
    %v263 = vrot.slane %v46, 1
    %v264 = vrot.slane %v47, 1
    %v265 = vsel %vm232, %v263, %v264
    %v266 = vrot.slane %v48, 1
    %v267 = vsel %vm232, %v264, %v266
    %v268 = vrot.slane %v49, 1
    %v269 = vrot.slane %v50, 1
    %v270 = vsel %vm232, %v268, %v269
    %v271 = vrot.slane %v51, 1
    %v272 = vsel %vm232, %v269, %v271
    %v273 = vrot.slane %v52, 1
    %v274 = vrot.slane %v53, 1
    %v275 = vsel %vm232, %v273, %v274
    %v276 = vrot.slane %v54, 1
    %v277 = vsel %vm232, %v274, %v276
    %v278 = vrot.slane %v55, 1
    %v279 = vrot.slane %v56, 1
    %v280 = vsel %vm232, %v278, %v279
    %v281 = vrot.slane %v57, 1
    %v282 = vsel %vm232, %v279, %v281
    %v283 = vrot.slane %v58, 1
    %v284 = vrot.slane %v59, 1
    %v285 = vsel %vm232, %v283, %v284
    %v286 = vrot.slane %v60, 1
    %v287 = vsel %vm232, %v284, %v286
    %v288 = vrot.slane %v61, 1
    %v289 = vrot.slane %v62, 1
    %v290 = vsel %vm232, %v288, %v289
    %v291 = vrot.slane %v63, 1
    %v292 = vsel %vm232, %v289, %v291
    %v293 = vrot.slane %v64, 1
    %v294 = vrot.slane %v65, 1
    %v295 = vsel %vm232, %v293, %v294
    %v296 = vrot.slane %v66, 1
    %v297 = vsel %vm232, %v294, %v296
    %v298 = vrot.slane %v67, 1
    %v299 = vrot.slane %v68, 1
    %v300 = vsel %vm232, %v298, %v299
    %v301 = vrot.slane %v69, 1
    %v302 = vsel %vm232, %v299, %v301
    %v303 = vrot.slane %v70, 1
    %v304 = vrot.slane %v71, 1
    %v305 = vsel %vm232, %v303, %v304
    %v306 = vrot.slane %v72, 1
    %v307 = vsel %vm232, %v304, %v306
    %v308 = vrot.slane %v73, 1
    %v309 = vrot.slane %v74, 1
    %v310 = vsel %vm232, %v308, %v309
    %v311 = vrot.slane %v75, 1
    %v312 = vsel %vm232, %v309, %v311
    %v313 = vrot.slane %v82, 1
    %v314 = vrot.slane %v83, 1
    %v315 = vsel %vm232, %v313, %v314
    %v316 = vrot.slane %v84, 1
    %v317 = vsel %vm232, %v314, %v316
    %v318 = vrot.slane %v85, 1
    %v319 = vrot.slane %v86, 1
    %v320 = vsel %vm232, %v318, %v319
    %v321 = vrot.slane %v87, 1
    %v322 = vsel %vm232, %v319, %v321
    %v323 = vrot.slane %v88, 1
    %v324 = vrot.slane %v89, 1
    %v325 = vsel %vm232, %v323, %v324
    %v326 = vrot.slane %v90, 1
    %v327 = vsel %vm232, %v324, %v326
    %v328 = vrot.slane %v91, 1
    %v329 = vrot.slane %v92, 1
    %v330 = vsel %vm232, %v328, %v329
    %v331 = vrot.slane %v93, 1
    %v332 = vsel %vm232, %v329, %v331
    %v333 = vrot.slane %v94, 1
    %v334 = vrot.slane %v95, 1
    %v335 = vsel %vm232, %v333, %v334
    %v336 = vrot.slane %v96, 1
    %v337 = vsel %vm232, %v334, %v336
    %v338 = vrot.slane %v97, 1
    %v339 = vrot.slane %v98, 1
    %v340 = vsel %vm232, %v338, %v339
    %v341 = vrot.slane %v99, 1
    %v342 = vsel %vm232, %v339, %v341
    %v343 = vrot.slane %v100, 1
    %v344 = vrot.slane %v101, 1
    %v345 = vsel %vm232, %v343, %v344
    %v346 = vrot.slane %v102, 1
    %v347 = vsel %vm232, %v344, %v346
    %v348 = vrot.slane %v103, 1
    %v349 = vrot.slane %v104, 1
    %v350 = vsel %vm232, %v348, %v349
    %v351 = vrot.slane %v105, 1
    %v352 = vsel %vm232, %v349, %v351
    %v353 = vrot.slane %v106, 1
    %v354 = vrot.slane %v107, 1
    %v355 = vsel %vm232, %v353, %v354
    %v356 = vrot.slane %v108, 1
    %v357 = vsel %vm232, %v354, %v356
    %v358 = vrot.slane %v109, 1
    %v359 = vrot.slane %v110, 1
    %v360 = vsel %vm232, %v358, %v359
    %v361 = vrot.slane %v111, 1
    %v362 = vsel %vm232, %v359, %v361
    %v363 = vrot.slane %v112, 1
    %v364 = vrot.slane %v113, 1
    %v365 = vsel %vm232, %v363, %v364
    %v366 = vrot.slane %v114, 1
    %v367 = vsel %vm232, %v364, %v366
    %v368 = vrot.slane %v115, 1
    %v369 = vrot.slane %v116, 1
    %v370 = vsel %vm232, %v368, %v369
    %v371 = vrot.slane %v117, 1
    %v372 = vsel %vm232, %v369, %v371
    %v373 = vrot.slane %v118, 1
    %v374 = vrot.slane %v119, 1
    %v375 = vsel %vm232, %v373, %v374
    %v376 = vrot.slane %v120, 1
    %v377 = vsel %vm232, %v374, %v376
    %v378 = vrot.slane %v121, 1
    %v379 = vrot.slane %v122, 1
    %v380 = vsel %vm232, %v378, %v379
    %v381 = vrot.slane %v123, 1
    %v382 = vsel %vm232, %v379, %v381
    %v383 = vrot.slane %v124, 1
    %v384 = vrot.slane %v125, 1
    %v385 = vsel %vm232, %v383, %v384
    %v386 = vrot.slane %v126, 1
    %v387 = vsel %vm232, %v384, %v386
    %v388 = vrot.slane %v127, 1
    %v389 = vrot.slane %v128, 1
    %v390 = vsel %vm232, %v388, %v389
    %v391 = vrot.slane %v129, 1
    %v392 = vsel %vm232, %v389, %v391
    %393 = vrot.lane.b32.xlu0 %v235, 4
    %v394 = vpop.permute.xlu0 %393
    %395 = vrot.lane.b32.xlu0 %v237, 4
    %v396 = vpop.permute.xlu0 %395
    %397 = vrot.lane.b32.xlu0 %v240, 4
    %v398 = vpop.permute.xlu0 %397
    %399 = vrot.lane.b32.xlu0 %v242, 4
    %v400 = vpop.permute.xlu0 %399
    %401 = vrot.lane.b32.xlu0 %v245, 4
    %v402 = vpop.permute.xlu0 %401
    %403 = vrot.lane.b32.xlu0 %v247, 4
    %v404 = vpop.permute.xlu0 %403
    %405 = vrot.lane.b32.xlu0 %v250, 4
    %v406 = vpop.permute.xlu0 %405
    %407 = vrot.lane.b32.xlu0 %v252, 4
    %v408 = vpop.permute.xlu0 %407
    %409 = vrot.lane.b32.xlu0 %v255, 4
    %v410 = vpop.permute.xlu0 %409
    %411 = vrot.lane.b32.xlu0 %v257, 4
    %v412 = vpop.permute.xlu0 %411
    %413 = vrot.lane.b32.xlu0 %v260, 4
    %v414 = vpop.permute.xlu0 %413
    %415 = vrot.lane.b32.xlu0 %v262, 4
    %v416 = vpop.permute.xlu0 %415
    %417 = vrot.lane.b32.xlu0 %v265, 4
    %v418 = vpop.permute.xlu0 %417
    %419 = vrot.lane.b32.xlu0 %v267, 4
    %v420 = vpop.permute.xlu0 %419
    %421 = vrot.lane.b32.xlu0 %v270, 4
    %v422 = vpop.permute.xlu0 %421
    %423 = vrot.lane.b32.xlu0 %v272, 4
    %v424 = vpop.permute.xlu0 %423
    %425 = vrot.lane.b32.xlu0 %v275, 4
    %v426 = vpop.permute.xlu0 %425
    %427 = vrot.lane.b32.xlu0 %v277, 4
    %v428 = vpop.permute.xlu0 %427
    %429 = vrot.lane.b32.xlu0 %v280, 4
    %v430 = vpop.permute.xlu0 %429
    %431 = vrot.lane.b32.xlu0 %v282, 4
    %v432 = vpop.permute.xlu0 %431
    %433 = vrot.lane.b32.xlu0 %v285, 4
    %v434 = vpop.permute.xlu0 %433
    %435 = vrot.lane.b32.xlu0 %v287, 4
    %v436 = vpop.permute.xlu0 %435
    %437 = vrot.lane.b32.xlu0 %v290, 4
    %v438 = vpop.permute.xlu0 %437
    %439 = vrot.lane.b32.xlu0 %v292, 4
    %v440 = vpop.permute.xlu0 %439
    %441 = vrot.lane.b32.xlu0 %v295, 4
    %v442 = vpop.permute.xlu0 %441
    %443 = vrot.lane.b32.xlu0 %v297, 4
    %v444 = vpop.permute.xlu0 %443
    %445 = vrot.lane.b32.xlu0 %v300, 4
    %v446 = vpop.permute.xlu0 %445
    %447 = vrot.lane.b32.xlu0 %v302, 4
    %v448 = vpop.permute.xlu0 %447
    %449 = vrot.lane.b32.xlu0 %v305, 4
    %v450 = vpop.permute.xlu0 %449
    %451 = vrot.lane.b32.xlu0 %v307, 4
    %v452 = vpop.permute.xlu0 %451
    %453 = vrot.lane.b32.xlu0 %v310, 4
    %v454 = vpop.permute.xlu0 %453
    %455 = vrot.lane.b32.xlu0 %v312, 4
    %v456 = vpop.permute.xlu0 %455
    %457 = vrot.lane.b32.xlu0 %v315, 4
    %v458 = vpop.permute.xlu0 %457
    %459 = vrot.lane.b32.xlu0 %v317, 4
    %v460 = vpop.permute.xlu0 %459
    %461 = vrot.lane.b32.xlu0 %v320, 4
    %v462 = vpop.permute.xlu0 %461
    %463 = vrot.lane.b32.xlu0 %v322, 4
    %v464 = vpop.permute.xlu0 %463
    %465 = vrot.lane.b32.xlu0 %v325, 4
    %v466 = vpop.permute.xlu0 %465
    %467 = vrot.lane.b32.xlu0 %v327, 4
    %v468 = vpop.permute.xlu0 %467
    %469 = vrot.lane.b32.xlu0 %v330, 4
    %v470 = vpop.permute.xlu0 %469
    %471 = vrot.lane.b32.xlu0 %v332, 4
    %v472 = vpop.permute.xlu0 %471
    %473 = vrot.lane.b32.xlu0 %v335, 4
    %v474 = vpop.permute.xlu0 %473
    %475 = vrot.lane.b32.xlu0 %v337, 4
    %v476 = vpop.permute.xlu0 %475
    %477 = vrot.lane.b32.xlu0 %v340, 4
    %v478 = vpop.permute.xlu0 %477
    %479 = vrot.lane.b32.xlu0 %v342, 4
    %v480 = vpop.permute.xlu0 %479
    %481 = vrot.lane.b32.xlu0 %v345, 4
    %v482 = vpop.permute.xlu0 %481
    %483 = vrot.lane.b32.xlu0 %v347, 4
    %v484 = vpop.permute.xlu0 %483
    %485 = vrot.lane.b32.xlu0 %v350, 4
    %v486 = vpop.permute.xlu0 %485
    %487 = vrot.lane.b32.xlu0 %v352, 4
    %v488 = vpop.permute.xlu0 %487
    %489 = vrot.lane.b32.xlu0 %v355, 4
    %v490 = vpop.permute.xlu0 %489
    %491 = vrot.lane.b32.xlu0 %v357, 4
    %v492 = vpop.permute.xlu0 %491
    %493 = vrot.lane.b32.xlu0 %v360, 4
    %v494 = vpop.permute.xlu0 %493
    %495 = vrot.lane.b32.xlu0 %v362, 4
    %v496 = vpop.permute.xlu0 %495
    %497 = vrot.lane.b32.xlu0 %v365, 4
    %v498 = vpop.permute.xlu0 %497
    %499 = vrot.lane.b32.xlu0 %v367, 4
    %v500 = vpop.permute.xlu0 %499
    %501 = vrot.lane.b32.xlu0 %v370, 4
    %v502 = vpop.permute.xlu0 %501
    %503 = vrot.lane.b32.xlu0 %v372, 4
    %v504 = vpop.permute.xlu0 %503
    %505 = vrot.lane.b32.xlu0 %v375, 4
    %v506 = vpop.permute.xlu0 %505
    %507 = vrot.lane.b32.xlu0 %v377, 4
    %v508 = vpop.permute.xlu0 %507
    %509 = vrot.lane.b32.xlu0 %v380, 4
    %v510 = vpop.permute.xlu0 %509
    %511 = vrot.lane.b32.xlu0 %v382, 4
    %v512 = vpop.permute.xlu0 %511
    %513 = vrot.lane.b32.xlu0 %v385, 4
    %v514 = vpop.permute.xlu0 %513
    %515 = vrot.lane.b32.xlu0 %v387, 4
    %v516 = vpop.permute.xlu0 %515
    %517 = vrot.lane.b32.xlu0 %v390, 4
    %v518 = vpop.permute.xlu0 %517
    %519 = vrot.lane.b32.xlu0 %v392, 4
    %v520 = vpop.permute.xlu0 %519
    %vm585 = vcmask 1045504
    %v586 = vrot.slane %v28, 2
    %v587 = vrot.slane %v29, 2
    %v588 = vsel %vm585, %v586, %v587
    %v589 = vrot.slane %v30, 2
    %v590 = vsel %vm585, %v587, %v589
    %v591 = vrot.slane %v31, 2
    %v592 = vrot.slane %v32, 2
    %v593 = vsel %vm585, %v591, %v592
    %v594 = vrot.slane %v33, 2
    %v595 = vsel %vm585, %v592, %v594
    %v596 = vrot.slane %v34, 2
    %v597 = vrot.slane %v35, 2
    %v598 = vsel %vm585, %v596, %v597
    %v599 = vrot.slane %v36, 2
    %v600 = vsel %vm585, %v597, %v599
    %v601 = vrot.slane %v37, 2
    %v602 = vrot.slane %v38, 2
    %v603 = vsel %vm585, %v601, %v602
    %v604 = vrot.slane %v39, 2
    %v605 = vsel %vm585, %v602, %v604
    %v606 = vrot.slane %v40, 2
    %v607 = vrot.slane %v41, 2
    %v608 = vsel %vm585, %v606, %v607
    %v609 = vrot.slane %v42, 2
    %v610 = vsel %vm585, %v607, %v609
    %v611 = vrot.slane %v43, 2
    %v612 = vrot.slane %v44, 2
    %v613 = vsel %vm585, %v611, %v612
    %v614 = vrot.slane %v45, 2
    %v615 = vsel %vm585, %v612, %v614
    %v616 = vrot.slane %v46, 2
    %v617 = vrot.slane %v47, 2
    %v618 = vsel %vm585, %v616, %v617
    %v619 = vrot.slane %v48, 2
    %v620 = vsel %vm585, %v617, %v619
    %v621 = vrot.slane %v49, 2
    %v622 = vrot.slane %v50, 2
    %v623 = vsel %vm585, %v621, %v622
    %v624 = vrot.slane %v51, 2
    %v625 = vsel %vm585, %v622, %v624
    %v626 = vrot.slane %v52, 2
    %v627 = vrot.slane %v53, 2
    %v628 = vsel %vm585, %v626, %v627
    %v629 = vrot.slane %v54, 2
    %v630 = vsel %vm585, %v627, %v629
    %v631 = vrot.slane %v55, 2
    %v632 = vrot.slane %v56, 2
    %v633 = vsel %vm585, %v631, %v632
    %v634 = vrot.slane %v57, 2
    %v635 = vsel %vm585, %v632, %v634
    %v636 = vrot.slane %v58, 2
    %v637 = vrot.slane %v59, 2
    %v638 = vsel %vm585, %v636, %v637
    %v639 = vrot.slane %v60, 2
    %v640 = vsel %vm585, %v637, %v639
    %v641 = vrot.slane %v61, 2
    %v642 = vrot.slane %v62, 2
    %v643 = vsel %vm585, %v641, %v642
    %v644 = vrot.slane %v63, 2
    %v645 = vsel %vm585, %v642, %v644
    %v646 = vrot.slane %v64, 2
    %v647 = vrot.slane %v65, 2
    %v648 = vsel %vm585, %v646, %v647
    %v649 = vrot.slane %v66, 2
    %v650 = vsel %vm585, %v647, %v649
    %v651 = vrot.slane %v67, 2
    %v652 = vrot.slane %v68, 2
    %v653 = vsel %vm585, %v651, %v652
    %v654 = vrot.slane %v69, 2
    %v655 = vsel %vm585, %v652, %v654
    %v656 = vrot.slane %v70, 2
    %v657 = vrot.slane %v71, 2
    %v658 = vsel %vm585, %v656, %v657
    %v659 = vrot.slane %v72, 2
    %v660 = vsel %vm585, %v657, %v659
    %v661 = vrot.slane %v73, 2
    %v662 = vrot.slane %v74, 2
    %v663 = vsel %vm585, %v661, %v662
    %v664 = vrot.slane %v75, 2
    %v665 = vsel %vm585, %v662, %v664
    %v666 = vrot.slane %v82, 2
    %v667 = vrot.slane %v83, 2
    %v668 = vsel %vm585, %v666, %v667
    %v669 = vrot.slane %v84, 2
    %v670 = vsel %vm585, %v667, %v669
    %v671 = vrot.slane %v85, 2
    %v672 = vrot.slane %v86, 2
    %v673 = vsel %vm585, %v671, %v672
    %v674 = vrot.slane %v87, 2
    %v675 = vsel %vm585, %v672, %v674
    %v676 = vrot.slane %v88, 2
    %v677 = vrot.slane %v89, 2
    %v678 = vsel %vm585, %v676, %v677
    %v679 = vrot.slane %v90, 2
    %v680 = vsel %vm585, %v677, %v679
    %v681 = vrot.slane %v91, 2
    %v682 = vrot.slane %v92, 2
    %v683 = vsel %vm585, %v681, %v682
    %v684 = vrot.slane %v93, 2
    %v685 = vsel %vm585, %v682, %v684
    %v686 = vrot.slane %v94, 2
    %v687 = vrot.slane %v95, 2
    %v688 = vsel %vm585, %v686, %v687
    %v689 = vrot.slane %v96, 2
    %v690 = vsel %vm585, %v687, %v689
    %v691 = vrot.slane %v97, 2
    %v692 = vrot.slane %v98, 2
    %v693 = vsel %vm585, %v691, %v692
    %v694 = vrot.slane %v99, 2
    %v695 = vsel %vm585, %v692, %v694
    %v696 = vrot.slane %v100, 2
    %v697 = vrot.slane %v101, 2
    %v698 = vsel %vm585, %v696, %v697
    %v699 = vrot.slane %v102, 2
    %v700 = vsel %vm585, %v697, %v699
    %v701 = vrot.slane %v103, 2
    %v702 = vrot.slane %v104, 2
    %v703 = vsel %vm585, %v701, %v702
    %v704 = vrot.slane %v105, 2
    %v705 = vsel %vm585, %v702, %v704
    %v706 = vrot.slane %v106, 2
    %v707 = vrot.slane %v107, 2
    %v708 = vsel %vm585, %v706, %v707
    %v709 = vrot.slane %v108, 2
    %v710 = vsel %vm585, %v707, %v709
    %v711 = vrot.slane %v109, 2
    %v712 = vrot.slane %v110, 2
    %v713 = vsel %vm585, %v711, %v712
    %v714 = vrot.slane %v111, 2
    %v715 = vsel %vm585, %v712, %v714
    %v716 = vrot.slane %v112, 2
    %v717 = vrot.slane %v113, 2
    %v718 = vsel %vm585, %v716, %v717
    %v719 = vrot.slane %v114, 2
    %v720 = vsel %vm585, %v717, %v719
    %v721 = vrot.slane %v115, 2
    %v722 = vrot.slane %v116, 2
    %v723 = vsel %vm585, %v721, %v722
    %v724 = vrot.slane %v117, 2
    %v725 = vsel %vm585, %v722, %v724
    %v726 = vrot.slane %v118, 2
    %v727 = vrot.slane %v119, 2
    %v728 = vsel %vm585, %v726, %v727
    %v729 = vrot.slane %v120, 2
    %v730 = vsel %vm585, %v727, %v729
    %v731 = vrot.slane %v121, 2
    %v732 = vrot.slane %v122, 2
    %v733 = vsel %vm585, %v731, %v732
    %v734 = vrot.slane %v123, 2
    %v735 = vsel %vm585, %v732, %v734
    %v736 = vrot.slane %v124, 2
    %v737 = vrot.slane %v125, 2
    %v738 = vsel %vm585, %v736, %v737
    %v739 = vrot.slane %v126, 2
    %v740 = vsel %vm585, %v737, %v739
    %v741 = vrot.slane %v127, 2
    %v742 = vrot.slane %v128, 2
    %v743 = vsel %vm585, %v741, %v742
    %v744 = vrot.slane %v129, 2
    %v745 = vsel %vm585, %v742, %v744
    %746 = vrot.lane.b32.xlu0 %v588, 8
    %v747 = vpop.permute.xlu0 %746
    %748 = vrot.lane.b32.xlu0 %v590, 8
    %v749 = vpop.permute.xlu0 %748
    %750 = vrot.lane.b32.xlu0 %v593, 8
    %v751 = vpop.permute.xlu0 %750
    %752 = vrot.lane.b32.xlu0 %v595, 8
    %v753 = vpop.permute.xlu0 %752
    %754 = vrot.lane.b32.xlu0 %v598, 8
    %v755 = vpop.permute.xlu0 %754
    %756 = vrot.lane.b32.xlu0 %v600, 8
    %v757 = vpop.permute.xlu0 %756
    %758 = vrot.lane.b32.xlu0 %v603, 8
    %v759 = vpop.permute.xlu0 %758
    %760 = vrot.lane.b32.xlu0 %v605, 8
    %v761 = vpop.permute.xlu0 %760
    %762 = vrot.lane.b32.xlu0 %v608, 8
    %v763 = vpop.permute.xlu0 %762
    %764 = vrot.lane.b32.xlu0 %v610, 8
    %v765 = vpop.permute.xlu0 %764
    %766 = vrot.lane.b32.xlu0 %v613, 8
    %v767 = vpop.permute.xlu0 %766
    %768 = vrot.lane.b32.xlu0 %v615, 8
    %v769 = vpop.permute.xlu0 %768
    %770 = vrot.lane.b32.xlu0 %v618, 8
    %v771 = vpop.permute.xlu0 %770
    %772 = vrot.lane.b32.xlu0 %v620, 8
    %v773 = vpop.permute.xlu0 %772
    %774 = vrot.lane.b32.xlu0 %v623, 8
    %v775 = vpop.permute.xlu0 %774
    %776 = vrot.lane.b32.xlu0 %v625, 8
    %v777 = vpop.permute.xlu0 %776
    %778 = vrot.lane.b32.xlu0 %v628, 8
    %v779 = vpop.permute.xlu0 %778
    %780 = vrot.lane.b32.xlu0 %v630, 8
    %v781 = vpop.permute.xlu0 %780
    %782 = vrot.lane.b32.xlu0 %v633, 8
    %v783 = vpop.permute.xlu0 %782
    %784 = vrot.lane.b32.xlu0 %v635, 8
    %v785 = vpop.permute.xlu0 %784
    %786 = vrot.lane.b32.xlu0 %v638, 8
    %v787 = vpop.permute.xlu0 %786
    %788 = vrot.lane.b32.xlu0 %v640, 8
    %v789 = vpop.permute.xlu0 %788
    %790 = vrot.lane.b32.xlu0 %v643, 8
    %v791 = vpop.permute.xlu0 %790
    %792 = vrot.lane.b32.xlu0 %v645, 8
    %v793 = vpop.permute.xlu0 %792
    %794 = vrot.lane.b32.xlu0 %v648, 8
    %v795 = vpop.permute.xlu0 %794
    %796 = vrot.lane.b32.xlu0 %v650, 8
    %v797 = vpop.permute.xlu0 %796
    %798 = vrot.lane.b32.xlu0 %v653, 8
    %v799 = vpop.permute.xlu0 %798
    %800 = vrot.lane.b32.xlu0 %v655, 8
    %v801 = vpop.permute.xlu0 %800
    %802 = vrot.lane.b32.xlu0 %v658, 8
    %v803 = vpop.permute.xlu0 %802
    %804 = vrot.lane.b32.xlu0 %v660, 8
    %v805 = vpop.permute.xlu0 %804
    %806 = vrot.lane.b32.xlu0 %v663, 8
    %v807 = vpop.permute.xlu0 %806
    %808 = vrot.lane.b32.xlu0 %v665, 8
    %v809 = vpop.permute.xlu0 %808
    %810 = vrot.lane.b32.xlu0 %v668, 8
    %v811 = vpop.permute.xlu0 %810
    %812 = vrot.lane.b32.xlu0 %v670, 8
    %v813 = vpop.permute.xlu0 %812
    %814 = vrot.lane.b32.xlu0 %v673, 8
    %v815 = vpop.permute.xlu0 %814
    %816 = vrot.lane.b32.xlu0 %v675, 8
    %v817 = vpop.permute.xlu0 %816
    %818 = vrot.lane.b32.xlu0 %v678, 8
    %v819 = vpop.permute.xlu0 %818
    %820 = vrot.lane.b32.xlu0 %v680, 8
    %v821 = vpop.permute.xlu0 %820
    %822 = vrot.lane.b32.xlu0 %v683, 8
    %v823 = vpop.permute.xlu0 %822
    %824 = vrot.lane.b32.xlu0 %v685, 8
    %v825 = vpop.permute.xlu0 %824
    %826 = vrot.lane.b32.xlu0 %v688, 8
    %v827 = vpop.permute.xlu0 %826
    %828 = vrot.lane.b32.xlu0 %v690, 8
    %v829 = vpop.permute.xlu0 %828
    %830 = vrot.lane.b32.xlu0 %v693, 8
    %v831 = vpop.permute.xlu0 %830
    %832 = vrot.lane.b32.xlu0 %v695, 8
    %v833 = vpop.permute.xlu0 %832
    %834 = vrot.lane.b32.xlu0 %v698, 8
    %v835 = vpop.permute.xlu0 %834
    %836 = vrot.lane.b32.xlu0 %v700, 8
    %v837 = vpop.permute.xlu0 %836
    %838 = vrot.lane.b32.xlu0 %v703, 8
    %v839 = vpop.permute.xlu0 %838
    %840 = vrot.lane.b32.xlu0 %v705, 8
    %v841 = vpop.permute.xlu0 %840
    %842 = vrot.lane.b32.xlu0 %v708, 8
    %v843 = vpop.permute.xlu0 %842
    %844 = vrot.lane.b32.xlu0 %v710, 8
    %v845 = vpop.permute.xlu0 %844
    %846 = vrot.lane.b32.xlu0 %v713, 8
    %v847 = vpop.permute.xlu0 %846
    %848 = vrot.lane.b32.xlu0 %v715, 8
    %v849 = vpop.permute.xlu0 %848
    %850 = vrot.lane.b32.xlu0 %v718, 8
    %v851 = vpop.permute.xlu0 %850
    %852 = vrot.lane.b32.xlu0 %v720, 8
    %v853 = vpop.permute.xlu0 %852
    %854 = vrot.lane.b32.xlu0 %v723, 8
    %v855 = vpop.permute.xlu0 %854
    %856 = vrot.lane.b32.xlu0 %v725, 8
    %v857 = vpop.permute.xlu0 %856
    %858 = vrot.lane.b32.xlu0 %v728, 8
    %v859 = vpop.permute.xlu0 %858
    %860 = vrot.lane.b32.xlu0 %v730, 8
    %v861 = vpop.permute.xlu0 %860
    %862 = vrot.lane.b32.xlu0 %v733, 8
    %v863 = vpop.permute.xlu0 %862
    %864 = vrot.lane.b32.xlu0 %v735, 8
    %v865 = vpop.permute.xlu0 %864
    %866 = vrot.lane.b32.xlu0 %v738, 8
    %v867 = vpop.permute.xlu0 %866
    %868 = vrot.lane.b32.xlu0 %v740, 8
    %v869 = vpop.permute.xlu0 %868
    %870 = vrot.lane.b32.xlu0 %v743, 8
    %v871 = vpop.permute.xlu0 %870
    %872 = vrot.lane.b32.xlu0 %v745, 8
    %v873 = vpop.permute.xlu0 %872
    %942 = vrot.lane.b32.xlu0 %v31, 12
    %v943 = vpop.permute.xlu0 %942
    %944 = vrot.lane.b32.xlu0 %v32, 12
    %v945 = vpop.permute.xlu0 %944
    %946 = vrot.lane.b32.xlu0 %v34, 12
    %v947 = vpop.permute.xlu0 %946
    %948 = vrot.lane.b32.xlu0 %v35, 12
    %v949 = vpop.permute.xlu0 %948
    %950 = vrot.lane.b32.xlu0 %v37, 12
    %v951 = vpop.permute.xlu0 %950
    %952 = vrot.lane.b32.xlu0 %v38, 12
    %v953 = vpop.permute.xlu0 %952
    %954 = vrot.lane.b32.xlu0 %v40, 12
    %v955 = vpop.permute.xlu0 %954
    %956 = vrot.lane.b32.xlu0 %v41, 12
    %v957 = vpop.permute.xlu0 %956
    %958 = vrot.lane.b32.xlu0 %v43, 12
    %v959 = vpop.permute.xlu0 %958
    %960 = vrot.lane.b32.xlu0 %v44, 12
    %v961 = vpop.permute.xlu0 %960
    %962 = vrot.lane.b32.xlu0 %v46, 12
    %v963 = vpop.permute.xlu0 %962
    %964 = vrot.lane.b32.xlu0 %v47, 12
    %v965 = vpop.permute.xlu0 %964
    %966 = vrot.lane.b32.xlu0 %v49, 12
    %v967 = vpop.permute.xlu0 %966
    %968 = vrot.lane.b32.xlu0 %v50, 12
    %v969 = vpop.permute.xlu0 %968
    %970 = vrot.lane.b32.xlu0 %v52, 12
    %v971 = vpop.permute.xlu0 %970
    %972 = vrot.lane.b32.xlu0 %v53, 12
    %v973 = vpop.permute.xlu0 %972
    %974 = vrot.lane.b32.xlu0 %v55, 12
    %v975 = vpop.permute.xlu0 %974
    %976 = vrot.lane.b32.xlu0 %v56, 12
    %v977 = vpop.permute.xlu0 %976
    %978 = vrot.lane.b32.xlu0 %v58, 12
    %v979 = vpop.permute.xlu0 %978
    %980 = vrot.lane.b32.xlu0 %v59, 12
    %v981 = vpop.permute.xlu0 %980
    %982 = vrot.lane.b32.xlu0 %v61, 12
    %v983 = vpop.permute.xlu0 %982
    %984 = vrot.lane.b32.xlu0 %v62, 12
    %v985 = vpop.permute.xlu0 %984
    %986 = vrot.lane.b32.xlu0 %v64, 12
    %v987 = vpop.permute.xlu0 %986
    %988 = vrot.lane.b32.xlu0 %v65, 12
    %v989 = vpop.permute.xlu0 %988
    %990 = vrot.lane.b32.xlu0 %v67, 12
    %v991 = vpop.permute.xlu0 %990
    %992 = vrot.lane.b32.xlu0 %v68, 12
    %v993 = vpop.permute.xlu0 %992
    %994 = vrot.lane.b32.xlu0 %v70, 12
    %v995 = vpop.permute.xlu0 %994
    %996 = vrot.lane.b32.xlu0 %v71, 12
    %v997 = vpop.permute.xlu0 %996
    %998 = vrot.lane.b32.xlu0 %v73, 12
    %v999 = vpop.permute.xlu0 %998
    %1000 = vrot.lane.b32.xlu0 %v74, 12
    %v1001 = vpop.permute.xlu0 %1000
    %1002 = vrot.lane.b32.xlu0 %v76, 12
    %v1003 = vpop.permute.xlu0 %1002
    %1004 = vrot.lane.b32.xlu0 %v77, 12
    %v1005 = vpop.permute.xlu0 %1004
    %1006 = vrot.lane.b32.xlu0 %v85, 12
    %v1007 = vpop.permute.xlu0 %1006
    %1008 = vrot.lane.b32.xlu0 %v86, 12
    %v1009 = vpop.permute.xlu0 %1008
    %1010 = vrot.lane.b32.xlu0 %v88, 12
    %v1011 = vpop.permute.xlu0 %1010
    %1012 = vrot.lane.b32.xlu0 %v89, 12
    %v1013 = vpop.permute.xlu0 %1012
    %1014 = vrot.lane.b32.xlu0 %v91, 12
    %v1015 = vpop.permute.xlu0 %1014
    %1016 = vrot.lane.b32.xlu0 %v92, 12
    %v1017 = vpop.permute.xlu0 %1016
    %1018 = vrot.lane.b32.xlu0 %v94, 12
    %v1019 = vpop.permute.xlu0 %1018
    %1020 = vrot.lane.b32.xlu0 %v95, 12
    %v1021 = vpop.permute.xlu0 %1020
    %1022 = vrot.lane.b32.xlu0 %v97, 12
    %v1023 = vpop.permute.xlu0 %1022
    %1024 = vrot.lane.b32.xlu0 %v98, 12
    %v1025 = vpop.permute.xlu0 %1024
    %1026 = vrot.lane.b32.xlu0 %v100, 12
    %v1027 = vpop.permute.xlu0 %1026
    %1028 = vrot.lane.b32.xlu0 %v101, 12
    %v1029 = vpop.permute.xlu0 %1028
    %1030 = vrot.lane.b32.xlu0 %v103, 12
    %v1031 = vpop.permute.xlu0 %1030
    %1032 = vrot.lane.b32.xlu0 %v104, 12
    %v1033 = vpop.permute.xlu0 %1032
    %1034 = vrot.lane.b32.xlu0 %v106, 12
    %v1035 = vpop.permute.xlu0 %1034
    %1036 = vrot.lane.b32.xlu0 %v107, 12
    %v1037 = vpop.permute.xlu0 %1036
    %1038 = vrot.lane.b32.xlu0 %v109, 12
    %v1039 = vpop.permute.xlu0 %1038
    %1040 = vrot.lane.b32.xlu0 %v110, 12
    %v1041 = vpop.permute.xlu0 %1040
    %1042 = vrot.lane.b32.xlu0 %v112, 12
    %v1043 = vpop.permute.xlu0 %1042
    %1044 = vrot.lane.b32.xlu0 %v113, 12
    %v1045 = vpop.permute.xlu0 %1044
    %1046 = vrot.lane.b32.xlu0 %v115, 12
    %v1047 = vpop.permute.xlu0 %1046
    %1048 = vrot.lane.b32.xlu0 %v116, 12
    %v1049 = vpop.permute.xlu0 %1048
    %1050 = vrot.lane.b32.xlu0 %v118, 12
    %v1051 = vpop.permute.xlu0 %1050
    %1052 = vrot.lane.b32.xlu0 %v119, 12
    %v1053 = vpop.permute.xlu0 %1052
    %1054 = vrot.lane.b32.xlu0 %v121, 12
    %v1055 = vpop.permute.xlu0 %1054
    %1056 = vrot.lane.b32.xlu0 %v122, 12
    %v1057 = vpop.permute.xlu0 %1056
    %1058 = vrot.lane.b32.xlu0 %v124, 12
    %v1059 = vpop.permute.xlu0 %1058
    %1060 = vrot.lane.b32.xlu0 %v125, 12
    %v1061 = vpop.permute.xlu0 %1060
    %1062 = vrot.lane.b32.xlu0 %v127, 12
    %v1063 = vpop.permute.xlu0 %1062
    %1064 = vrot.lane.b32.xlu0 %v128, 12
    %v1065 = vpop.permute.xlu0 %1064
    %1066 = vrot.lane.b32.xlu0 %v130, 12
    %v1067 = vpop.permute.xlu0 %1066
    %1068 = vrot.lane.b32.xlu0 %v131, 12
    %v1069 = vpop.permute.xlu0 %1068
    %v1136 = vrot.slane %v76, 1
    %v1137 = vrot.slane %v77, 1
    %v1138 = vsel %vm232, %v1136, %v1137
    %v1139 = vrot.slane %v78, 1
    %v1140 = vsel %vm232, %v1137, %v1139
    %v1141 = vrot.slane %v130, 1
    %v1142 = vrot.slane %v131, 1
    %v1143 = vsel %vm232, %v1141, %v1142
    %v1144 = vrot.slane %v132, 1
    %v1145 = vsel %vm232, %v1142, %v1144
    %1146 = vrot.lane.b32.xlu0 %v240, 16
    %v1147 = vpop.permute.xlu0 %1146
    %1148 = vrot.lane.b32.xlu0 %v242, 16
    %v1149 = vpop.permute.xlu0 %1148
    %1150 = vrot.lane.b32.xlu0 %v245, 16
    %v1151 = vpop.permute.xlu0 %1150
    %1152 = vrot.lane.b32.xlu0 %v247, 16
    %v1153 = vpop.permute.xlu0 %1152
    %1154 = vrot.lane.b32.xlu0 %v250, 16
    %v1155 = vpop.permute.xlu0 %1154
    %1156 = vrot.lane.b32.xlu0 %v252, 16
    %v1157 = vpop.permute.xlu0 %1156
    %1158 = vrot.lane.b32.xlu0 %v255, 16
    %v1159 = vpop.permute.xlu0 %1158
    %1160 = vrot.lane.b32.xlu0 %v257, 16
    %v1161 = vpop.permute.xlu0 %1160
    %1162 = vrot.lane.b32.xlu0 %v260, 16
    %v1163 = vpop.permute.xlu0 %1162
    %1164 = vrot.lane.b32.xlu0 %v262, 16
    %v1165 = vpop.permute.xlu0 %1164
    %1166 = vrot.lane.b32.xlu0 %v265, 16
    %v1167 = vpop.permute.xlu0 %1166
    %1168 = vrot.lane.b32.xlu0 %v267, 16
    %v1169 = vpop.permute.xlu0 %1168
    %1170 = vrot.lane.b32.xlu0 %v270, 16
    %v1171 = vpop.permute.xlu0 %1170
    %1172 = vrot.lane.b32.xlu0 %v272, 16
    %v1173 = vpop.permute.xlu0 %1172
    %1174 = vrot.lane.b32.xlu0 %v275, 16
    %v1175 = vpop.permute.xlu0 %1174
    %1176 = vrot.lane.b32.xlu0 %v277, 16
    %v1177 = vpop.permute.xlu0 %1176
    %1178 = vrot.lane.b32.xlu0 %v280, 16
    %v1179 = vpop.permute.xlu0 %1178
    %1180 = vrot.lane.b32.xlu0 %v282, 16
    %v1181 = vpop.permute.xlu0 %1180
    %1182 = vrot.lane.b32.xlu0 %v285, 16
    %v1183 = vpop.permute.xlu0 %1182
    %1184 = vrot.lane.b32.xlu0 %v287, 16
    %v1185 = vpop.permute.xlu0 %1184
    %1186 = vrot.lane.b32.xlu0 %v290, 16
    %v1187 = vpop.permute.xlu0 %1186
    %1188 = vrot.lane.b32.xlu0 %v292, 16
    %v1189 = vpop.permute.xlu0 %1188
    %1190 = vrot.lane.b32.xlu0 %v295, 16
    %v1191 = vpop.permute.xlu0 %1190
    %1192 = vrot.lane.b32.xlu0 %v297, 16
    %v1193 = vpop.permute.xlu0 %1192
    %1194 = vrot.lane.b32.xlu0 %v300, 16
    %v1195 = vpop.permute.xlu0 %1194
    %1196 = vrot.lane.b32.xlu0 %v302, 16
    %v1197 = vpop.permute.xlu0 %1196
    %1198 = vrot.lane.b32.xlu0 %v305, 16
    %v1199 = vpop.permute.xlu0 %1198
    %1200 = vrot.lane.b32.xlu0 %v307, 16
    %v1201 = vpop.permute.xlu0 %1200
    %1202 = vrot.lane.b32.xlu0 %v310, 16
    %v1203 = vpop.permute.xlu0 %1202
    %1204 = vrot.lane.b32.xlu0 %v312, 16
    %v1205 = vpop.permute.xlu0 %1204
    %1206 = vrot.lane.b32.xlu0 %v1138, 16
    %v1207 = vpop.permute.xlu0 %1206
    %1208 = vrot.lane.b32.xlu0 %v1140, 16
    %v1209 = vpop.permute.xlu0 %1208
    %1210 = vrot.lane.b32.xlu0 %v320, 16
    %v1211 = vpop.permute.xlu0 %1210
    %1212 = vrot.lane.b32.xlu0 %v322, 16
    %v1213 = vpop.permute.xlu0 %1212
    %1214 = vrot.lane.b32.xlu0 %v325, 16
    %v1215 = vpop.permute.xlu0 %1214
    %1216 = vrot.lane.b32.xlu0 %v327, 16
    %v1217 = vpop.permute.xlu0 %1216
    %1218 = vrot.lane.b32.xlu0 %v330, 16
    %v1219 = vpop.permute.xlu0 %1218
    %1220 = vrot.lane.b32.xlu0 %v332, 16
    %v1221 = vpop.permute.xlu0 %1220
    %1222 = vrot.lane.b32.xlu0 %v335, 16
    %v1223 = vpop.permute.xlu0 %1222
    %1224 = vrot.lane.b32.xlu0 %v337, 16
    %v1225 = vpop.permute.xlu0 %1224
    %1226 = vrot.lane.b32.xlu0 %v340, 16
    %v1227 = vpop.permute.xlu0 %1226
    %1228 = vrot.lane.b32.xlu0 %v342, 16
    %v1229 = vpop.permute.xlu0 %1228
    %1230 = vrot.lane.b32.xlu0 %v345, 16
    %v1231 = vpop.permute.xlu0 %1230
    %1232 = vrot.lane.b32.xlu0 %v347, 16
    %v1233 = vpop.permute.xlu0 %1232
    %1234 = vrot.lane.b32.xlu0 %v350, 16
    %v1235 = vpop.permute.xlu0 %1234
    %1236 = vrot.lane.b32.xlu0 %v352, 16
    %v1237 = vpop.permute.xlu0 %1236
    %1238 = vrot.lane.b32.xlu0 %v355, 16
    %v1239 = vpop.permute.xlu0 %1238
    %1240 = vrot.lane.b32.xlu0 %v357, 16
    %v1241 = vpop.permute.xlu0 %1240
    %1242 = vrot.lane.b32.xlu0 %v360, 16
    %v1243 = vpop.permute.xlu0 %1242
    %1244 = vrot.lane.b32.xlu0 %v362, 16
    %v1245 = vpop.permute.xlu0 %1244
    %1246 = vrot.lane.b32.xlu0 %v365, 16
    %v1247 = vpop.permute.xlu0 %1246
    %1248 = vrot.lane.b32.xlu0 %v367, 16
    %v1249 = vpop.permute.xlu0 %1248
    %1250 = vrot.lane.b32.xlu0 %v370, 16
    %v1251 = vpop.permute.xlu0 %1250
    %1252 = vrot.lane.b32.xlu0 %v372, 16
    %v1253 = vpop.permute.xlu0 %1252
    %1254 = vrot.lane.b32.xlu0 %v375, 16
    %v1255 = vpop.permute.xlu0 %1254
    %1256 = vrot.lane.b32.xlu0 %v377, 16
    %v1257 = vpop.permute.xlu0 %1256
    %1258 = vrot.lane.b32.xlu0 %v380, 16
    %v1259 = vpop.permute.xlu0 %1258
    %1260 = vrot.lane.b32.xlu0 %v382, 16
    %v1261 = vpop.permute.xlu0 %1260
    %1262 = vrot.lane.b32.xlu0 %v385, 16
    %v1263 = vpop.permute.xlu0 %1262
    %1264 = vrot.lane.b32.xlu0 %v387, 16
    %v1265 = vpop.permute.xlu0 %1264
    %1266 = vrot.lane.b32.xlu0 %v390, 16
    %v1267 = vpop.permute.xlu0 %1266
    %1268 = vrot.lane.b32.xlu0 %v392, 16
    %v1269 = vpop.permute.xlu0 %1268
    %1270 = vrot.lane.b32.xlu0 %v1143, 16
    %v1271 = vpop.permute.xlu0 %1270
    %1272 = vrot.lane.b32.xlu0 %v1145, 16
    %v1273 = vpop.permute.xlu0 %1272
    %v1338 = vrot.slane %v76, 2
    %v1339 = vrot.slane %v77, 2
    %v1340 = vsel %vm585, %v1338, %v1339
    %v1341 = vrot.slane %v78, 2
    %v1342 = vsel %vm585, %v1339, %v1341
    %v1343 = vrot.slane %v130, 2
    %v1344 = vrot.slane %v131, 2
    %v1345 = vsel %vm585, %v1343, %v1344
    %v1346 = vrot.slane %v132, 2
    %v1347 = vsel %vm585, %v1344, %v1346
    %1348 = vrot.lane.b32.xlu0 %v593, 20
    %v1349 = vpop.permute.xlu0 %1348
    %1350 = vrot.lane.b32.xlu0 %v595, 20
    %v1351 = vpop.permute.xlu0 %1350
    %1352 = vrot.lane.b32.xlu0 %v598, 20
    %v1353 = vpop.permute.xlu0 %1352
    %1354 = vrot.lane.b32.xlu0 %v600, 20
    %v1355 = vpop.permute.xlu0 %1354
    %1356 = vrot.lane.b32.xlu0 %v603, 20
    %v1357 = vpop.permute.xlu0 %1356
    %1358 = vrot.lane.b32.xlu0 %v605, 20
    %v1359 = vpop.permute.xlu0 %1358
    %1360 = vrot.lane.b32.xlu0 %v608, 20
    %v1361 = vpop.permute.xlu0 %1360
    %1362 = vrot.lane.b32.xlu0 %v610, 20
    %v1363 = vpop.permute.xlu0 %1362
    %1364 = vrot.lane.b32.xlu0 %v613, 20
    %v1365 = vpop.permute.xlu0 %1364
    %1366 = vrot.lane.b32.xlu0 %v615, 20
    %v1367 = vpop.permute.xlu0 %1366
    %1368 = vrot.lane.b32.xlu0 %v618, 20
    %v1369 = vpop.permute.xlu0 %1368
    %1370 = vrot.lane.b32.xlu0 %v620, 20
    %v1371 = vpop.permute.xlu0 %1370
    %1372 = vrot.lane.b32.xlu0 %v623, 20
    %v1373 = vpop.permute.xlu0 %1372
    %1374 = vrot.lane.b32.xlu0 %v625, 20
    %v1375 = vpop.permute.xlu0 %1374
    %1376 = vrot.lane.b32.xlu0 %v628, 20
    %v1377 = vpop.permute.xlu0 %1376
    %1378 = vrot.lane.b32.xlu0 %v630, 20
    %v1379 = vpop.permute.xlu0 %1378
    %1380 = vrot.lane.b32.xlu0 %v633, 20
    %v1381 = vpop.permute.xlu0 %1380
    %1382 = vrot.lane.b32.xlu0 %v635, 20
    %v1383 = vpop.permute.xlu0 %1382
    %1384 = vrot.lane.b32.xlu0 %v638, 20
    %v1385 = vpop.permute.xlu0 %1384
    %1386 = vrot.lane.b32.xlu0 %v640, 20
    %v1387 = vpop.permute.xlu0 %1386
    %1388 = vrot.lane.b32.xlu0 %v643, 20
    %v1389 = vpop.permute.xlu0 %1388
    %1390 = vrot.lane.b32.xlu0 %v645, 20
    %v1391 = vpop.permute.xlu0 %1390
    %1392 = vrot.lane.b32.xlu0 %v648, 20
    %v1393 = vpop.permute.xlu0 %1392
    %1394 = vrot.lane.b32.xlu0 %v650, 20
    %v1395 = vpop.permute.xlu0 %1394
    %1396 = vrot.lane.b32.xlu0 %v653, 20
    %v1397 = vpop.permute.xlu0 %1396
    %1398 = vrot.lane.b32.xlu0 %v655, 20
    %v1399 = vpop.permute.xlu0 %1398
    %1400 = vrot.lane.b32.xlu0 %v658, 20
    %v1401 = vpop.permute.xlu0 %1400
    %1402 = vrot.lane.b32.xlu0 %v660, 20
    %v1403 = vpop.permute.xlu0 %1402
    %1404 = vrot.lane.b32.xlu0 %v663, 20
    %v1405 = vpop.permute.xlu0 %1404
    %1406 = vrot.lane.b32.xlu0 %v665, 20
    %v1407 = vpop.permute.xlu0 %1406
    %1408 = vrot.lane.b32.xlu0 %v1340, 20
    %v1409 = vpop.permute.xlu0 %1408
    %1410 = vrot.lane.b32.xlu0 %v1342, 20
    %v1411 = vpop.permute.xlu0 %1410
    %1412 = vrot.lane.b32.xlu0 %v673, 20
    %v1413 = vpop.permute.xlu0 %1412
    %1414 = vrot.lane.b32.xlu0 %v675, 20
    %v1415 = vpop.permute.xlu0 %1414
    %1416 = vrot.lane.b32.xlu0 %v678, 20
    %v1417 = vpop.permute.xlu0 %1416
    %1418 = vrot.lane.b32.xlu0 %v680, 20
    %v1419 = vpop.permute.xlu0 %1418
    %1420 = vrot.lane.b32.xlu0 %v683, 20
    %v1421 = vpop.permute.xlu0 %1420
    %1422 = vrot.lane.b32.xlu0 %v685, 20
    %v1423 = vpop.permute.xlu0 %1422
    %1424 = vrot.lane.b32.xlu0 %v688, 20
    %v1425 = vpop.permute.xlu0 %1424
    %1426 = vrot.lane.b32.xlu0 %v690, 20
    %v1427 = vpop.permute.xlu0 %1426
    %1428 = vrot.lane.b32.xlu0 %v693, 20
    %v1429 = vpop.permute.xlu0 %1428
    %1430 = vrot.lane.b32.xlu0 %v695, 20
    %v1431 = vpop.permute.xlu0 %1430
    %1432 = vrot.lane.b32.xlu0 %v698, 20
    %v1433 = vpop.permute.xlu0 %1432
    %1434 = vrot.lane.b32.xlu0 %v700, 20
    %v1435 = vpop.permute.xlu0 %1434
    %1436 = vrot.lane.b32.xlu0 %v703, 20
    %v1437 = vpop.permute.xlu0 %1436
    %1438 = vrot.lane.b32.xlu0 %v705, 20
    %v1439 = vpop.permute.xlu0 %1438
    %1440 = vrot.lane.b32.xlu0 %v708, 20
    %v1441 = vpop.permute.xlu0 %1440
    %1442 = vrot.lane.b32.xlu0 %v710, 20
    %v1443 = vpop.permute.xlu0 %1442
    %1444 = vrot.lane.b32.xlu0 %v713, 20
    %v1445 = vpop.permute.xlu0 %1444
    %1446 = vrot.lane.b32.xlu0 %v715, 20
    %v1447 = vpop.permute.xlu0 %1446
    %1448 = vrot.lane.b32.xlu0 %v718, 20
    %v1449 = vpop.permute.xlu0 %1448
    %1450 = vrot.lane.b32.xlu0 %v720, 20
    %v1451 = vpop.permute.xlu0 %1450
    %1452 = vrot.lane.b32.xlu0 %v723, 20
    %v1453 = vpop.permute.xlu0 %1452
    %1454 = vrot.lane.b32.xlu0 %v725, 20
    %v1455 = vpop.permute.xlu0 %1454
    %1456 = vrot.lane.b32.xlu0 %v728, 20
    %v1457 = vpop.permute.xlu0 %1456
    %1458 = vrot.lane.b32.xlu0 %v730, 20
    %v1459 = vpop.permute.xlu0 %1458
    %1460 = vrot.lane.b32.xlu0 %v733, 20
    %v1461 = vpop.permute.xlu0 %1460
    %1462 = vrot.lane.b32.xlu0 %v735, 20
    %v1463 = vpop.permute.xlu0 %1462
    %1464 = vrot.lane.b32.xlu0 %v738, 20
    %v1465 = vpop.permute.xlu0 %1464
    %1466 = vrot.lane.b32.xlu0 %v740, 20
    %v1467 = vpop.permute.xlu0 %1466
    %1468 = vrot.lane.b32.xlu0 %v743, 20
    %v1469 = vpop.permute.xlu0 %1468
    %1470 = vrot.lane.b32.xlu0 %v745, 20
    %v1471 = vpop.permute.xlu0 %1470
    %1472 = vrot.lane.b32.xlu0 %v1345, 20
    %v1473 = vpop.permute.xlu0 %1472
    %1474 = vrot.lane.b32.xlu0 %v1347, 20
    %v1475 = vpop.permute.xlu0 %1474
    %1544 = vrot.lane.b32.xlu0 %v34, 24
    %v1545 = vpop.permute.xlu0 %1544
    %1546 = vrot.lane.b32.xlu0 %v35, 24
    %v1547 = vpop.permute.xlu0 %1546
    %1548 = vrot.lane.b32.xlu0 %v37, 24
    %v1549 = vpop.permute.xlu0 %1548
    %1550 = vrot.lane.b32.xlu0 %v38, 24
    %v1551 = vpop.permute.xlu0 %1550
    %1552 = vrot.lane.b32.xlu0 %v40, 24
    %v1553 = vpop.permute.xlu0 %1552
    %1554 = vrot.lane.b32.xlu0 %v41, 24
    %v1555 = vpop.permute.xlu0 %1554
    %1556 = vrot.lane.b32.xlu0 %v43, 24
    %v1557 = vpop.permute.xlu0 %1556
    %1558 = vrot.lane.b32.xlu0 %v44, 24
    %v1559 = vpop.permute.xlu0 %1558
    %1560 = vrot.lane.b32.xlu0 %v46, 24
    %v1561 = vpop.permute.xlu0 %1560
    %1562 = vrot.lane.b32.xlu0 %v47, 24
    %v1563 = vpop.permute.xlu0 %1562
    %1564 = vrot.lane.b32.xlu0 %v49, 24
    %v1565 = vpop.permute.xlu0 %1564
    %1566 = vrot.lane.b32.xlu0 %v50, 24
    %v1567 = vpop.permute.xlu0 %1566
    %1568 = vrot.lane.b32.xlu0 %v52, 24
    %v1569 = vpop.permute.xlu0 %1568
    %1570 = vrot.lane.b32.xlu0 %v53, 24
    %v1571 = vpop.permute.xlu0 %1570
    %1572 = vrot.lane.b32.xlu0 %v55, 24
    %v1573 = vpop.permute.xlu0 %1572
    %1574 = vrot.lane.b32.xlu0 %v56, 24
    %v1575 = vpop.permute.xlu0 %1574
    %1576 = vrot.lane.b32.xlu0 %v58, 24
    %v1577 = vpop.permute.xlu0 %1576
    %1578 = vrot.lane.b32.xlu0 %v59, 24
    %v1579 = vpop.permute.xlu0 %1578
    %1580 = vrot.lane.b32.xlu0 %v61, 24
    %v1581 = vpop.permute.xlu0 %1580
    %1582 = vrot.lane.b32.xlu0 %v62, 24
    %v1583 = vpop.permute.xlu0 %1582
    %1584 = vrot.lane.b32.xlu0 %v64, 24
    %v1585 = vpop.permute.xlu0 %1584
    %1586 = vrot.lane.b32.xlu0 %v65, 24
    %v1587 = vpop.permute.xlu0 %1586
    %1588 = vrot.lane.b32.xlu0 %v67, 24
    %v1589 = vpop.permute.xlu0 %1588
    %1590 = vrot.lane.b32.xlu0 %v68, 24
    %v1591 = vpop.permute.xlu0 %1590
    %1592 = vrot.lane.b32.xlu0 %v70, 24
    %v1593 = vpop.permute.xlu0 %1592
    %1594 = vrot.lane.b32.xlu0 %v71, 24
    %v1595 = vpop.permute.xlu0 %1594
    %1596 = vrot.lane.b32.xlu0 %v73, 24
    %v1597 = vpop.permute.xlu0 %1596
    %1598 = vrot.lane.b32.xlu0 %v74, 24
    %v1599 = vpop.permute.xlu0 %1598
    %1600 = vrot.lane.b32.xlu0 %v76, 24
    %v1601 = vpop.permute.xlu0 %1600
    %1602 = vrot.lane.b32.xlu0 %v77, 24
    %v1603 = vpop.permute.xlu0 %1602
    %1604 = vrot.lane.b32.xlu0 %v79, 24
    %v1605 = vpop.permute.xlu0 %1604
    %1606 = vrot.lane.b32.xlu0 %v80, 24
    %v1607 = vpop.permute.xlu0 %1606
    %1608 = vrot.lane.b32.xlu0 %v88, 24
    %v1609 = vpop.permute.xlu0 %1608
    %1610 = vrot.lane.b32.xlu0 %v89, 24
    %v1611 = vpop.permute.xlu0 %1610
    %1612 = vrot.lane.b32.xlu0 %v91, 24
    %v1613 = vpop.permute.xlu0 %1612
    %1614 = vrot.lane.b32.xlu0 %v92, 24
    %v1615 = vpop.permute.xlu0 %1614
    %1616 = vrot.lane.b32.xlu0 %v94, 24
    %v1617 = vpop.permute.xlu0 %1616
    %1618 = vrot.lane.b32.xlu0 %v95, 24
    %v1619 = vpop.permute.xlu0 %1618
    %1620 = vrot.lane.b32.xlu0 %v97, 24
    %v1621 = vpop.permute.xlu0 %1620
    %1622 = vrot.lane.b32.xlu0 %v98, 24
    %v1623 = vpop.permute.xlu0 %1622
    %1624 = vrot.lane.b32.xlu0 %v100, 24
    %v1625 = vpop.permute.xlu0 %1624
    %1626 = vrot.lane.b32.xlu0 %v101, 24
    %v1627 = vpop.permute.xlu0 %1626
    %1628 = vrot.lane.b32.xlu0 %v103, 24
    %v1629 = vpop.permute.xlu0 %1628
    %1630 = vrot.lane.b32.xlu0 %v104, 24
    %v1631 = vpop.permute.xlu0 %1630
    %1632 = vrot.lane.b32.xlu0 %v106, 24
    %v1633 = vpop.permute.xlu0 %1632
    %1634 = vrot.lane.b32.xlu0 %v107, 24
    %v1635 = vpop.permute.xlu0 %1634
    %1636 = vrot.lane.b32.xlu0 %v109, 24
    %v1637 = vpop.permute.xlu0 %1636
    %1638 = vrot.lane.b32.xlu0 %v110, 24
    %v1639 = vpop.permute.xlu0 %1638
    %1640 = vrot.lane.b32.xlu0 %v112, 24
    %v1641 = vpop.permute.xlu0 %1640
    %1642 = vrot.lane.b32.xlu0 %v113, 24
    %v1643 = vpop.permute.xlu0 %1642
    %1644 = vrot.lane.b32.xlu0 %v115, 24
    %v1645 = vpop.permute.xlu0 %1644
    %1646 = vrot.lane.b32.xlu0 %v116, 24
    %v1647 = vpop.permute.xlu0 %1646
    %1648 = vrot.lane.b32.xlu0 %v118, 24
    %v1649 = vpop.permute.xlu0 %1648
    %1650 = vrot.lane.b32.xlu0 %v119, 24
    %v1651 = vpop.permute.xlu0 %1650
    %1652 = vrot.lane.b32.xlu0 %v121, 24
    %v1653 = vpop.permute.xlu0 %1652
    %1654 = vrot.lane.b32.xlu0 %v122, 24
    %v1655 = vpop.permute.xlu0 %1654
    %1656 = vrot.lane.b32.xlu0 %v124, 24
    %v1657 = vpop.permute.xlu0 %1656
    %1658 = vrot.lane.b32.xlu0 %v125, 24
    %v1659 = vpop.permute.xlu0 %1658
    %1660 = vrot.lane.b32.xlu0 %v127, 24
    %v1661 = vpop.permute.xlu0 %1660
    %1662 = vrot.lane.b32.xlu0 %v128, 24
    %v1663 = vpop.permute.xlu0 %1662
    %1664 = vrot.lane.b32.xlu0 %v130, 24
    %v1665 = vpop.permute.xlu0 %1664
    %1666 = vrot.lane.b32.xlu0 %v131, 24
    %v1667 = vpop.permute.xlu0 %1666
    %1668 = vrot.lane.b32.xlu0 %v133, 24
    %v1669 = vpop.permute.xlu0 %1668
    %1670 = vrot.lane.b32.xlu0 %v134, 24
    %v1671 = vpop.permute.xlu0 %1670
    %v1738 = vrot.slane %v79, 1
    %v1739 = vrot.slane %v80, 1
    %v1740 = vsel %vm232, %v1738, %v1739
    %v1741 = vrot.slane %v81, 1
    %v1742 = vsel %vm232, %v1739, %v1741
    %v1743 = vrot.slane %v133, 1
    %v1744 = vrot.slane %v134, 1
    %v1745 = vsel %vm232, %v1743, %v1744
    %v1746 = vrot.slane %v135, 1
    %v1747 = vsel %vm232, %v1744, %v1746
    %1748 = vrot.lane.b32.xlu0 %v245, 28
    %v1749 = vpop.permute.xlu0 %1748
    %1750 = vrot.lane.b32.xlu0 %v247, 28
    %v1751 = vpop.permute.xlu0 %1750
    %1752 = vrot.lane.b32.xlu0 %v250, 28
    %v1753 = vpop.permute.xlu0 %1752
    %1754 = vrot.lane.b32.xlu0 %v252, 28
    %v1755 = vpop.permute.xlu0 %1754
    %1756 = vrot.lane.b32.xlu0 %v255, 28
    %v1757 = vpop.permute.xlu0 %1756
    %1758 = vrot.lane.b32.xlu0 %v257, 28
    %v1759 = vpop.permute.xlu0 %1758
    %1760 = vrot.lane.b32.xlu0 %v260, 28
    %v1761 = vpop.permute.xlu0 %1760
    %1762 = vrot.lane.b32.xlu0 %v262, 28
    %v1763 = vpop.permute.xlu0 %1762
    %1764 = vrot.lane.b32.xlu0 %v265, 28
    %v1765 = vpop.permute.xlu0 %1764
    %1766 = vrot.lane.b32.xlu0 %v267, 28
    %v1767 = vpop.permute.xlu0 %1766
    %1768 = vrot.lane.b32.xlu0 %v270, 28
    %v1769 = vpop.permute.xlu0 %1768
    %1770 = vrot.lane.b32.xlu0 %v272, 28
    %v1771 = vpop.permute.xlu0 %1770
    %1772 = vrot.lane.b32.xlu0 %v275, 28
    %v1773 = vpop.permute.xlu0 %1772
    %1774 = vrot.lane.b32.xlu0 %v277, 28
    %v1775 = vpop.permute.xlu0 %1774
    %1776 = vrot.lane.b32.xlu0 %v280, 28
    %v1777 = vpop.permute.xlu0 %1776
    %1778 = vrot.lane.b32.xlu0 %v282, 28
    %v1779 = vpop.permute.xlu0 %1778
    %1780 = vrot.lane.b32.xlu0 %v285, 28
    %v1781 = vpop.permute.xlu0 %1780
    %1782 = vrot.lane.b32.xlu0 %v287, 28
    %v1783 = vpop.permute.xlu0 %1782
    %1784 = vrot.lane.b32.xlu0 %v290, 28
    %v1785 = vpop.permute.xlu0 %1784
    %1786 = vrot.lane.b32.xlu0 %v292, 28
    %v1787 = vpop.permute.xlu0 %1786
    %1788 = vrot.lane.b32.xlu0 %v295, 28
    %v1789 = vpop.permute.xlu0 %1788
    %1790 = vrot.lane.b32.xlu0 %v297, 28
    %v1791 = vpop.permute.xlu0 %1790
    %1792 = vrot.lane.b32.xlu0 %v300, 28
    %v1793 = vpop.permute.xlu0 %1792
    %1794 = vrot.lane.b32.xlu0 %v302, 28
    %v1795 = vpop.permute.xlu0 %1794
    %1796 = vrot.lane.b32.xlu0 %v305, 28
    %v1797 = vpop.permute.xlu0 %1796
    %1798 = vrot.lane.b32.xlu0 %v307, 28
    %v1799 = vpop.permute.xlu0 %1798
    %1800 = vrot.lane.b32.xlu0 %v310, 28
    %v1801 = vpop.permute.xlu0 %1800
    %1802 = vrot.lane.b32.xlu0 %v312, 28
    %v1803 = vpop.permute.xlu0 %1802
    %1804 = vrot.lane.b32.xlu0 %v1138, 28
    %v1805 = vpop.permute.xlu0 %1804
    %1806 = vrot.lane.b32.xlu0 %v1140, 28
    %v1807 = vpop.permute.xlu0 %1806
    %1808 = vrot.lane.b32.xlu0 %v1740, 28
    %v1809 = vpop.permute.xlu0 %1808
    %1810 = vrot.lane.b32.xlu0 %v1742, 28
    %v1811 = vpop.permute.xlu0 %1810
    %1812 = vrot.lane.b32.xlu0 %v325, 28
    %v1813 = vpop.permute.xlu0 %1812
    %1814 = vrot.lane.b32.xlu0 %v327, 28
    %v1815 = vpop.permute.xlu0 %1814
    %1816 = vrot.lane.b32.xlu0 %v330, 28
    %v1817 = vpop.permute.xlu0 %1816
    %1818 = vrot.lane.b32.xlu0 %v332, 28
    %v1819 = vpop.permute.xlu0 %1818
    %1820 = vrot.lane.b32.xlu0 %v335, 28
    %v1821 = vpop.permute.xlu0 %1820
    %1822 = vrot.lane.b32.xlu0 %v337, 28
    %v1823 = vpop.permute.xlu0 %1822
    %1824 = vrot.lane.b32.xlu0 %v340, 28
    %v1825 = vpop.permute.xlu0 %1824
    %1826 = vrot.lane.b32.xlu0 %v342, 28
    %v1827 = vpop.permute.xlu0 %1826
    %1828 = vrot.lane.b32.xlu0 %v345, 28
    %v1829 = vpop.permute.xlu0 %1828
    %1830 = vrot.lane.b32.xlu0 %v347, 28
    %v1831 = vpop.permute.xlu0 %1830
    %1832 = vrot.lane.b32.xlu0 %v350, 28
    %v1833 = vpop.permute.xlu0 %1832
    %1834 = vrot.lane.b32.xlu0 %v352, 28
    %v1835 = vpop.permute.xlu0 %1834
    %1836 = vrot.lane.b32.xlu0 %v355, 28
    %v1837 = vpop.permute.xlu0 %1836
    %1838 = vrot.lane.b32.xlu0 %v357, 28
    %v1839 = vpop.permute.xlu0 %1838
    %1840 = vrot.lane.b32.xlu0 %v360, 28
    %v1841 = vpop.permute.xlu0 %1840
    %1842 = vrot.lane.b32.xlu0 %v362, 28
    %v1843 = vpop.permute.xlu0 %1842
    %1844 = vrot.lane.b32.xlu0 %v365, 28
    %v1845 = vpop.permute.xlu0 %1844
    %1846 = vrot.lane.b32.xlu0 %v367, 28
    %v1847 = vpop.permute.xlu0 %1846
    %1848 = vrot.lane.b32.xlu0 %v370, 28
    %v1849 = vpop.permute.xlu0 %1848
    %1850 = vrot.lane.b32.xlu0 %v372, 28
    %v1851 = vpop.permute.xlu0 %1850
    %1852 = vrot.lane.b32.xlu0 %v375, 28
    %v1853 = vpop.permute.xlu0 %1852
    %1854 = vrot.lane.b32.xlu0 %v377, 28
    %v1855 = vpop.permute.xlu0 %1854
    %1856 = vrot.lane.b32.xlu0 %v380, 28
    %v1857 = vpop.permute.xlu0 %1856
    %1858 = vrot.lane.b32.xlu0 %v382, 28
    %v1859 = vpop.permute.xlu0 %1858
    %1860 = vrot.lane.b32.xlu0 %v385, 28
    %v1861 = vpop.permute.xlu0 %1860
    %1862 = vrot.lane.b32.xlu0 %v387, 28
    %v1863 = vpop.permute.xlu0 %1862
    %1864 = vrot.lane.b32.xlu0 %v390, 28
    %v1865 = vpop.permute.xlu0 %1864
    %1866 = vrot.lane.b32.xlu0 %v392, 28
    %v1867 = vpop.permute.xlu0 %1866
    %1868 = vrot.lane.b32.xlu0 %v1143, 28
    %v1869 = vpop.permute.xlu0 %1868
    %1870 = vrot.lane.b32.xlu0 %v1145, 28
    %v1871 = vpop.permute.xlu0 %1870
    %1872 = vrot.lane.b32.xlu0 %v1745, 28
    %v1873 = vpop.permute.xlu0 %1872
    %1874 = vrot.lane.b32.xlu0 %v1747, 28
    %v1875 = vpop.permute.xlu0 %1874
    %v1940 = vrot.slane %v79, 2
    %v1941 = vrot.slane %v80, 2
    %v1942 = vsel %vm585, %v1940, %v1941
    %v1943 = vrot.slane %v81, 2
    %v1944 = vsel %vm585, %v1941, %v1943
    %v1945 = vrot.slane %v133, 2
    %v1946 = vrot.slane %v134, 2
    %v1947 = vsel %vm585, %v1945, %v1946
    %v1948 = vrot.slane %v135, 2
    %v1949 = vsel %vm585, %v1946, %v1948
    %1950 = vrot.lane.b32.xlu0 %v598, 32
    %v1951 = vpop.permute.xlu0 %1950
    %1952 = vrot.lane.b32.xlu0 %v600, 32
    %v1953 = vpop.permute.xlu0 %1952
    %1954 = vrot.lane.b32.xlu0 %v603, 32
    %v1955 = vpop.permute.xlu0 %1954
    %1956 = vrot.lane.b32.xlu0 %v605, 32
    %v1957 = vpop.permute.xlu0 %1956
    %1958 = vrot.lane.b32.xlu0 %v608, 32
    %v1959 = vpop.permute.xlu0 %1958
    %1960 = vrot.lane.b32.xlu0 %v610, 32
    %v1961 = vpop.permute.xlu0 %1960
    %1962 = vrot.lane.b32.xlu0 %v613, 32
    %v1963 = vpop.permute.xlu0 %1962
    %1964 = vrot.lane.b32.xlu0 %v615, 32
    %v1965 = vpop.permute.xlu0 %1964
    %1966 = vrot.lane.b32.xlu0 %v618, 32
    %v1967 = vpop.permute.xlu0 %1966
    %1968 = vrot.lane.b32.xlu0 %v620, 32
    %v1969 = vpop.permute.xlu0 %1968
    %1970 = vrot.lane.b32.xlu0 %v623, 32
    %v1971 = vpop.permute.xlu0 %1970
    %1972 = vrot.lane.b32.xlu0 %v625, 32
    %v1973 = vpop.permute.xlu0 %1972
    %1974 = vrot.lane.b32.xlu0 %v628, 32
    %v1975 = vpop.permute.xlu0 %1974
    %1976 = vrot.lane.b32.xlu0 %v630, 32
    %v1977 = vpop.permute.xlu0 %1976
    %1978 = vrot.lane.b32.xlu0 %v633, 32
    %v1979 = vpop.permute.xlu0 %1978
    %1980 = vrot.lane.b32.xlu0 %v635, 32
    %v1981 = vpop.permute.xlu0 %1980
    %1982 = vrot.lane.b32.xlu0 %v638, 32
    %v1983 = vpop.permute.xlu0 %1982
    %1984 = vrot.lane.b32.xlu0 %v640, 32
    %v1985 = vpop.permute.xlu0 %1984
    %1986 = vrot.lane.b32.xlu0 %v643, 32
    %v1987 = vpop.permute.xlu0 %1986
    %1988 = vrot.lane.b32.xlu0 %v645, 32
    %v1989 = vpop.permute.xlu0 %1988
    %1990 = vrot.lane.b32.xlu0 %v648, 32
    %v1991 = vpop.permute.xlu0 %1990
    %1992 = vrot.lane.b32.xlu0 %v650, 32
    %v1993 = vpop.permute.xlu0 %1992
    %1994 = vrot.lane.b32.xlu0 %v653, 32
    %v1995 = vpop.permute.xlu0 %1994
    %1996 = vrot.lane.b32.xlu0 %v655, 32
    %v1997 = vpop.permute.xlu0 %1996
    %1998 = vrot.lane.b32.xlu0 %v658, 32
    %v1999 = vpop.permute.xlu0 %1998
    %2000 = vrot.lane.b32.xlu0 %v660, 32
    %v2001 = vpop.permute.xlu0 %2000
    %2002 = vrot.lane.b32.xlu0 %v663, 32
    %v2003 = vpop.permute.xlu0 %2002
    %2004 = vrot.lane.b32.xlu0 %v665, 32
    %v2005 = vpop.permute.xlu0 %2004
    %2006 = vrot.lane.b32.xlu0 %v1340, 32
    %v2007 = vpop.permute.xlu0 %2006
    %2008 = vrot.lane.b32.xlu0 %v1342, 32
    %v2009 = vpop.permute.xlu0 %2008
    %2010 = vrot.lane.b32.xlu0 %v1942, 32
    %v2011 = vpop.permute.xlu0 %2010
    %2012 = vrot.lane.b32.xlu0 %v1944, 32
    %v2013 = vpop.permute.xlu0 %2012
    %2014 = vrot.lane.b32.xlu0 %v678, 32
    %v2015 = vpop.permute.xlu0 %2014
    %2016 = vrot.lane.b32.xlu0 %v680, 32
    %v2017 = vpop.permute.xlu0 %2016
    %2018 = vrot.lane.b32.xlu0 %v683, 32
    %v2019 = vpop.permute.xlu0 %2018
    %2020 = vrot.lane.b32.xlu0 %v685, 32
    %v2021 = vpop.permute.xlu0 %2020
    %2022 = vrot.lane.b32.xlu0 %v688, 32
    %v2023 = vpop.permute.xlu0 %2022
    %2024 = vrot.lane.b32.xlu0 %v690, 32
    %v2025 = vpop.permute.xlu0 %2024
    %2026 = vrot.lane.b32.xlu0 %v693, 32
    %v2027 = vpop.permute.xlu0 %2026
    %2028 = vrot.lane.b32.xlu0 %v695, 32
    %v2029 = vpop.permute.xlu0 %2028
    %2030 = vrot.lane.b32.xlu0 %v698, 32
    %v2031 = vpop.permute.xlu0 %2030
    %2032 = vrot.lane.b32.xlu0 %v700, 32
    %v2033 = vpop.permute.xlu0 %2032
    %2034 = vrot.lane.b32.xlu0 %v703, 32
    %v2035 = vpop.permute.xlu0 %2034
    %2036 = vrot.lane.b32.xlu0 %v705, 32
    %v2037 = vpop.permute.xlu0 %2036
    %2038 = vrot.lane.b32.xlu0 %v708, 32
    %v2039 = vpop.permute.xlu0 %2038
    %2040 = vrot.lane.b32.xlu0 %v710, 32
    %v2041 = vpop.permute.xlu0 %2040
    %2042 = vrot.lane.b32.xlu0 %v713, 32
    %v2043 = vpop.permute.xlu0 %2042
    %2044 = vrot.lane.b32.xlu0 %v715, 32
    %v2045 = vpop.permute.xlu0 %2044
    %2046 = vrot.lane.b32.xlu0 %v718, 32
    %v2047 = vpop.permute.xlu0 %2046
    %2048 = vrot.lane.b32.xlu0 %v720, 32
    %v2049 = vpop.permute.xlu0 %2048
    %2050 = vrot.lane.b32.xlu0 %v723, 32
    %v2051 = vpop.permute.xlu0 %2050
    %2052 = vrot.lane.b32.xlu0 %v725, 32
    %v2053 = vpop.permute.xlu0 %2052
    %2054 = vrot.lane.b32.xlu0 %v728, 32
    %v2055 = vpop.permute.xlu0 %2054
    %2056 = vrot.lane.b32.xlu0 %v730, 32
    %v2057 = vpop.permute.xlu0 %2056
    %2058 = vrot.lane.b32.xlu0 %v733, 32
    %v2059 = vpop.permute.xlu0 %2058
    %2060 = vrot.lane.b32.xlu0 %v735, 32
    %v2061 = vpop.permute.xlu0 %2060
    %2062 = vrot.lane.b32.xlu0 %v738, 32
    %v2063 = vpop.permute.xlu0 %2062
    %2064 = vrot.lane.b32.xlu0 %v740, 32
    %v2065 = vpop.permute.xlu0 %2064
    %2066 = vrot.lane.b32.xlu0 %v743, 32
    %v2067 = vpop.permute.xlu0 %2066
    %2068 = vrot.lane.b32.xlu0 %v745, 32
    %v2069 = vpop.permute.xlu0 %2068
    %2070 = vrot.lane.b32.xlu0 %v1345, 32
    %v2071 = vpop.permute.xlu0 %2070
    %2072 = vrot.lane.b32.xlu0 %v1347, 32
    %v2073 = vpop.permute.xlu0 %2072
    %2074 = vrot.lane.b32.xlu0 %v1947, 32
    %v2075 = vpop.permute.xlu0 %2074
    %2076 = vrot.lane.b32.xlu0 %v1949, 32
    %v2077 = vpop.permute.xlu0 %2076
    %vm2142 = vcmask 31744
    %v2143 = vsel %vm2142, %v28, %v394
    %v2144 = vsel %vm2142, %v29, %v396
    %v2145 = vsel %vm2142, %v31, %v398
    %v2146 = vsel %vm2142, %v32, %v400
    %v2147 = vsel %vm2142, %v34, %v402
    %v2148 = vsel %vm2142, %v35, %v404
    %v2149 = vsel %vm2142, %v37, %v406
    %v2150 = vsel %vm2142, %v38, %v408
    %v2151 = vsel %vm2142, %v40, %v410
    %v2152 = vsel %vm2142, %v41, %v412
    %v2153 = vsel %vm2142, %v43, %v414
    %v2154 = vsel %vm2142, %v44, %v416
    %v2155 = vsel %vm2142, %v46, %v418
    %v2156 = vsel %vm2142, %v47, %v420
    %v2157 = vsel %vm2142, %v49, %v422
    %v2158 = vsel %vm2142, %v50, %v424
    %v2159 = vsel %vm2142, %v52, %v426
    %v2160 = vsel %vm2142, %v53, %v428
    %v2161 = vsel %vm2142, %v55, %v430
    %v2162 = vsel %vm2142, %v56, %v432
    %v2163 = vsel %vm2142, %v58, %v434
    %v2164 = vsel %vm2142, %v59, %v436
    %v2165 = vsel %vm2142, %v61, %v438
    %v2166 = vsel %vm2142, %v62, %v440
    %v2167 = vsel %vm2142, %v64, %v442
    %v2168 = vsel %vm2142, %v65, %v444
    %v2169 = vsel %vm2142, %v67, %v446
    %v2170 = vsel %vm2142, %v68, %v448
    %v2171 = vsel %vm2142, %v70, %v450
    %v2172 = vsel %vm2142, %v71, %v452
    %v2173 = vsel %vm2142, %v73, %v454
    %v2174 = vsel %vm2142, %v74, %v456
    %v2175 = vsel %vm2142, %v82, %v458
    %v2176 = vsel %vm2142, %v83, %v460
    %v2177 = vsel %vm2142, %v85, %v462
    %v2178 = vsel %vm2142, %v86, %v464
    %v2179 = vsel %vm2142, %v88, %v466
    %v2180 = vsel %vm2142, %v89, %v468
    %v2181 = vsel %vm2142, %v91, %v470
    %v2182 = vsel %vm2142, %v92, %v472
    %v2183 = vsel %vm2142, %v94, %v474
    %v2184 = vsel %vm2142, %v95, %v476
    %v2185 = vsel %vm2142, %v97, %v478
    %v2186 = vsel %vm2142, %v98, %v480
    %v2187 = vsel %vm2142, %v100, %v482
    %v2188 = vsel %vm2142, %v101, %v484
    %v2189 = vsel %vm2142, %v103, %v486
    %v2190 = vsel %vm2142, %v104, %v488
    %v2191 = vsel %vm2142, %v106, %v490
    %v2192 = vsel %vm2142, %v107, %v492
    %v2193 = vsel %vm2142, %v109, %v494
    %v2194 = vsel %vm2142, %v110, %v496
    %v2195 = vsel %vm2142, %v112, %v498
    %v2196 = vsel %vm2142, %v113, %v500
    %v2197 = vsel %vm2142, %v115, %v502
    %v2198 = vsel %vm2142, %v116, %v504
    %v2199 = vsel %vm2142, %v118, %v506
    %v2200 = vsel %vm2142, %v119, %v508
    %v2201 = vsel %vm2142, %v121, %v510
    %v2202 = vsel %vm2142, %v122, %v512
    %v2203 = vsel %vm2142, %v124, %v514
    %v2204 = vsel %vm2142, %v125, %v516
    %v2205 = vsel %vm2142, %v127, %v518
    %v2206 = vsel %vm2142, %v128, %v520
    %vm2207 = vcmask 64512
    %v2208 = vsel %vm2207, %v2143, %v747
    %v2209 = vsel %vm2207, %v2144, %v749
    %v2210 = vsel %vm2207, %v2145, %v751
    %v2211 = vsel %vm2207, %v2146, %v753
    %v2212 = vsel %vm2207, %v2147, %v755
    %v2213 = vsel %vm2207, %v2148, %v757
    %v2214 = vsel %vm2207, %v2149, %v759
    %v2215 = vsel %vm2207, %v2150, %v761
    %v2216 = vsel %vm2207, %v2151, %v763
    %v2217 = vsel %vm2207, %v2152, %v765
    %v2218 = vsel %vm2207, %v2153, %v767
    %v2219 = vsel %vm2207, %v2154, %v769
    %v2220 = vsel %vm2207, %v2155, %v771
    %v2221 = vsel %vm2207, %v2156, %v773
    %v2222 = vsel %vm2207, %v2157, %v775
    %v2223 = vsel %vm2207, %v2158, %v777
    %v2224 = vsel %vm2207, %v2159, %v779
    %v2225 = vsel %vm2207, %v2160, %v781
    %v2226 = vsel %vm2207, %v2161, %v783
    %v2227 = vsel %vm2207, %v2162, %v785
    %v2228 = vsel %vm2207, %v2163, %v787
    %v2229 = vsel %vm2207, %v2164, %v789
    %v2230 = vsel %vm2207, %v2165, %v791
    %v2231 = vsel %vm2207, %v2166, %v793
    %v2232 = vsel %vm2207, %v2167, %v795
    %v2233 = vsel %vm2207, %v2168, %v797
    %v2234 = vsel %vm2207, %v2169, %v799
    %v2235 = vsel %vm2207, %v2170, %v801
    %v2236 = vsel %vm2207, %v2171, %v803
    %v2237 = vsel %vm2207, %v2172, %v805
    %v2238 = vsel %vm2207, %v2173, %v807
    %v2239 = vsel %vm2207, %v2174, %v809
    %v2240 = vsel %vm2207, %v2175, %v811
    %v2241 = vsel %vm2207, %v2176, %v813
    %v2242 = vsel %vm2207, %v2177, %v815
    %v2243 = vsel %vm2207, %v2178, %v817
    %v2244 = vsel %vm2207, %v2179, %v819
    %v2245 = vsel %vm2207, %v2180, %v821
    %v2246 = vsel %vm2207, %v2181, %v823
    %v2247 = vsel %vm2207, %v2182, %v825
    %v2248 = vsel %vm2207, %v2183, %v827
    %v2249 = vsel %vm2207, %v2184, %v829
    %v2250 = vsel %vm2207, %v2185, %v831
    %v2251 = vsel %vm2207, %v2186, %v833
    %v2252 = vsel %vm2207, %v2187, %v835
    %v2253 = vsel %vm2207, %v2188, %v837
    %v2254 = vsel %vm2207, %v2189, %v839
    %v2255 = vsel %vm2207, %v2190, %v841
    %v2256 = vsel %vm2207, %v2191, %v843
    %v2257 = vsel %vm2207, %v2192, %v845
    %v2258 = vsel %vm2207, %v2193, %v847
    %v2259 = vsel %vm2207, %v2194, %v849
    %v2260 = vsel %vm2207, %v2195, %v851
    %v2261 = vsel %vm2207, %v2196, %v853
    %v2262 = vsel %vm2207, %v2197, %v855
    %v2263 = vsel %vm2207, %v2198, %v857
    %v2264 = vsel %vm2207, %v2199, %v859
    %v2265 = vsel %vm2207, %v2200, %v861
    %v2266 = vsel %vm2207, %v2201, %v863
    %v2267 = vsel %vm2207, %v2202, %v865
    %v2268 = vsel %vm2207, %v2203, %v867
    %v2269 = vsel %vm2207, %v2204, %v869
    %v2270 = vsel %vm2207, %v2205, %v871
    %v2271 = vsel %vm2207, %v2206, %v873
    %vm2272 = vcmask 97280
    %v2273 = vsel %vm2272, %v2208, %v943
    %v2274 = vsel %vm2272, %v2209, %v945
    %v2275 = vsel %vm2272, %v2210, %v947
    %v2276 = vsel %vm2272, %v2211, %v949
    %v2277 = vsel %vm2272, %v2212, %v951
    %v2278 = vsel %vm2272, %v2213, %v953
    %v2279 = vsel %vm2272, %v2214, %v955
    %v2280 = vsel %vm2272, %v2215, %v957
    %v2281 = vsel %vm2272, %v2216, %v959
    %v2282 = vsel %vm2272, %v2217, %v961
    %v2283 = vsel %vm2272, %v2218, %v963
    %v2284 = vsel %vm2272, %v2219, %v965
    %v2285 = vsel %vm2272, %v2220, %v967
    %v2286 = vsel %vm2272, %v2221, %v969
    %v2287 = vsel %vm2272, %v2222, %v971
    %v2288 = vsel %vm2272, %v2223, %v973
    %v2289 = vsel %vm2272, %v2224, %v975
    %v2290 = vsel %vm2272, %v2225, %v977
    %v2291 = vsel %vm2272, %v2226, %v979
    %v2292 = vsel %vm2272, %v2227, %v981
    %v2293 = vsel %vm2272, %v2228, %v983
    %v2294 = vsel %vm2272, %v2229, %v985
    %v2295 = vsel %vm2272, %v2230, %v987
    %v2296 = vsel %vm2272, %v2231, %v989
    %v2297 = vsel %vm2272, %v2232, %v991
    %v2298 = vsel %vm2272, %v2233, %v993
    %v2299 = vsel %vm2272, %v2234, %v995
    %v2300 = vsel %vm2272, %v2235, %v997
    %v2301 = vsel %vm2272, %v2236, %v999
    %v2302 = vsel %vm2272, %v2237, %v1001
    %v2303 = vsel %vm2272, %v2238, %v1003
    %v2304 = vsel %vm2272, %v2239, %v1005
    %v2305 = vsel %vm2272, %v2240, %v1007
    %v2306 = vsel %vm2272, %v2241, %v1009
    %v2307 = vsel %vm2272, %v2242, %v1011
    %v2308 = vsel %vm2272, %v2243, %v1013
    %v2309 = vsel %vm2272, %v2244, %v1015
    %v2310 = vsel %vm2272, %v2245, %v1017
    %v2311 = vsel %vm2272, %v2246, %v1019
    %v2312 = vsel %vm2272, %v2247, %v1021
    %v2313 = vsel %vm2272, %v2248, %v1023
    %v2314 = vsel %vm2272, %v2249, %v1025
    %v2315 = vsel %vm2272, %v2250, %v1027
    %v2316 = vsel %vm2272, %v2251, %v1029
    %v2317 = vsel %vm2272, %v2252, %v1031
    %v2318 = vsel %vm2272, %v2253, %v1033
    %v2319 = vsel %vm2272, %v2254, %v1035
    %v2320 = vsel %vm2272, %v2255, %v1037
    %v2321 = vsel %vm2272, %v2256, %v1039
    %v2322 = vsel %vm2272, %v2257, %v1041
    %v2323 = vsel %vm2272, %v2258, %v1043
    %v2324 = vsel %vm2272, %v2259, %v1045
    %v2325 = vsel %vm2272, %v2260, %v1047
    %v2326 = vsel %vm2272, %v2261, %v1049
    %v2327 = vsel %vm2272, %v2262, %v1051
    %v2328 = vsel %vm2272, %v2263, %v1053
    %v2329 = vsel %vm2272, %v2264, %v1055
    %v2330 = vsel %vm2272, %v2265, %v1057
    %v2331 = vsel %vm2272, %v2266, %v1059
    %v2332 = vsel %vm2272, %v2267, %v1061
    %v2333 = vsel %vm2272, %v2268, %v1063
    %v2334 = vsel %vm2272, %v2269, %v1065
    %v2335 = vsel %vm2272, %v2270, %v1067
    %v2336 = vsel %vm2272, %v2271, %v1069
    %vm2337 = vcmask 130048
    %v2338 = vsel %vm2337, %v2273, %v1147
    %v2339 = vsel %vm2337, %v2274, %v1149
    %v2340 = vsel %vm2337, %v2275, %v1151
    %v2341 = vsel %vm2337, %v2276, %v1153
    %v2342 = vsel %vm2337, %v2277, %v1155
    %v2343 = vsel %vm2337, %v2278, %v1157
    %v2344 = vsel %vm2337, %v2279, %v1159
    %v2345 = vsel %vm2337, %v2280, %v1161
    %v2346 = vsel %vm2337, %v2281, %v1163
    %v2347 = vsel %vm2337, %v2282, %v1165
    %v2348 = vsel %vm2337, %v2283, %v1167
    %v2349 = vsel %vm2337, %v2284, %v1169
    %v2350 = vsel %vm2337, %v2285, %v1171
    %v2351 = vsel %vm2337, %v2286, %v1173
    %v2352 = vsel %vm2337, %v2287, %v1175
    %v2353 = vsel %vm2337, %v2288, %v1177
    %v2354 = vsel %vm2337, %v2289, %v1179
    %v2355 = vsel %vm2337, %v2290, %v1181
    %v2356 = vsel %vm2337, %v2291, %v1183
    %v2357 = vsel %vm2337, %v2292, %v1185
    %v2358 = vsel %vm2337, %v2293, %v1187
    %v2359 = vsel %vm2337, %v2294, %v1189
    %v2360 = vsel %vm2337, %v2295, %v1191
    %v2361 = vsel %vm2337, %v2296, %v1193
    %v2362 = vsel %vm2337, %v2297, %v1195
    %v2363 = vsel %vm2337, %v2298, %v1197
    %v2364 = vsel %vm2337, %v2299, %v1199
    %v2365 = vsel %vm2337, %v2300, %v1201
    %v2366 = vsel %vm2337, %v2301, %v1203
    %v2367 = vsel %vm2337, %v2302, %v1205
    %v2368 = vsel %vm2337, %v2303, %v1207
    %v2369 = vsel %vm2337, %v2304, %v1209
    %v2370 = vsel %vm2337, %v2305, %v1211
    %v2371 = vsel %vm2337, %v2306, %v1213
    %v2372 = vsel %vm2337, %v2307, %v1215
    %v2373 = vsel %vm2337, %v2308, %v1217
    %v2374 = vsel %vm2337, %v2309, %v1219
    %v2375 = vsel %vm2337, %v2310, %v1221
    %v2376 = vsel %vm2337, %v2311, %v1223
    %v2377 = vsel %vm2337, %v2312, %v1225
    %v2378 = vsel %vm2337, %v2313, %v1227
    %v2379 = vsel %vm2337, %v2314, %v1229
    %v2380 = vsel %vm2337, %v2315, %v1231
    %v2381 = vsel %vm2337, %v2316, %v1233
    %v2382 = vsel %vm2337, %v2317, %v1235
    %v2383 = vsel %vm2337, %v2318, %v1237
    %v2384 = vsel %vm2337, %v2319, %v1239
    %v2385 = vsel %vm2337, %v2320, %v1241
    %v2386 = vsel %vm2337, %v2321, %v1243
    %v2387 = vsel %vm2337, %v2322, %v1245
    %v2388 = vsel %vm2337, %v2323, %v1247
    %v2389 = vsel %vm2337, %v2324, %v1249
    %v2390 = vsel %vm2337, %v2325, %v1251
    %v2391 = vsel %vm2337, %v2326, %v1253
    %v2392 = vsel %vm2337, %v2327, %v1255
    %v2393 = vsel %vm2337, %v2328, %v1257
    %v2394 = vsel %vm2337, %v2329, %v1259
    %v2395 = vsel %vm2337, %v2330, %v1261
    %v2396 = vsel %vm2337, %v2331, %v1263
    %v2397 = vsel %vm2337, %v2332, %v1265
    %v2398 = vsel %vm2337, %v2333, %v1267
    %v2399 = vsel %vm2337, %v2334, %v1269
    %v2400 = vsel %vm2337, %v2335, %v1271
    %v2401 = vsel %vm2337, %v2336, %v1273
    %vm2402 = vcmask 162816
    %v2403 = vsel %vm2402, %v2338, %v1349
    %v2404 = vsel %vm2402, %v2339, %v1351
    %v2405 = vsel %vm2402, %v2340, %v1353
    %v2406 = vsel %vm2402, %v2341, %v1355
    %v2407 = vsel %vm2402, %v2342, %v1357
    %v2408 = vsel %vm2402, %v2343, %v1359
    %v2409 = vsel %vm2402, %v2344, %v1361
    %v2410 = vsel %vm2402, %v2345, %v1363
    %v2411 = vsel %vm2402, %v2346, %v1365
    %v2412 = vsel %vm2402, %v2347, %v1367
    %v2413 = vsel %vm2402, %v2348, %v1369
    %v2414 = vsel %vm2402, %v2349, %v1371
    %v2415 = vsel %vm2402, %v2350, %v1373
    %v2416 = vsel %vm2402, %v2351, %v1375
    %v2417 = vsel %vm2402, %v2352, %v1377
    %v2418 = vsel %vm2402, %v2353, %v1379
    %v2419 = vsel %vm2402, %v2354, %v1381
    %v2420 = vsel %vm2402, %v2355, %v1383
    %v2421 = vsel %vm2402, %v2356, %v1385
    %v2422 = vsel %vm2402, %v2357, %v1387
    %v2423 = vsel %vm2402, %v2358, %v1389
    %v2424 = vsel %vm2402, %v2359, %v1391
    %v2425 = vsel %vm2402, %v2360, %v1393
    %v2426 = vsel %vm2402, %v2361, %v1395
    %v2427 = vsel %vm2402, %v2362, %v1397
    %v2428 = vsel %vm2402, %v2363, %v1399
    %v2429 = vsel %vm2402, %v2364, %v1401
    %v2430 = vsel %vm2402, %v2365, %v1403
    %v2431 = vsel %vm2402, %v2366, %v1405
    %v2432 = vsel %vm2402, %v2367, %v1407
    %v2433 = vsel %vm2402, %v2368, %v1409
    %v2434 = vsel %vm2402, %v2369, %v1411
    %v2435 = vsel %vm2402, %v2370, %v1413
    %v2436 = vsel %vm2402, %v2371, %v1415
    %v2437 = vsel %vm2402, %v2372, %v1417
    %v2438 = vsel %vm2402, %v2373, %v1419
    %v2439 = vsel %vm2402, %v2374, %v1421
    %v2440 = vsel %vm2402, %v2375, %v1423
    %v2441 = vsel %vm2402, %v2376, %v1425
    %v2442 = vsel %vm2402, %v2377, %v1427
    %v2443 = vsel %vm2402, %v2378, %v1429
    %v2444 = vsel %vm2402, %v2379, %v1431
    %v2445 = vsel %vm2402, %v2380, %v1433
    %v2446 = vsel %vm2402, %v2381, %v1435
    %v2447 = vsel %vm2402, %v2382, %v1437
    %v2448 = vsel %vm2402, %v2383, %v1439
    %v2449 = vsel %vm2402, %v2384, %v1441
    %v2450 = vsel %vm2402, %v2385, %v1443
    %v2451 = vsel %vm2402, %v2386, %v1445
    %v2452 = vsel %vm2402, %v2387, %v1447
    %v2453 = vsel %vm2402, %v2388, %v1449
    %v2454 = vsel %vm2402, %v2389, %v1451
    %v2455 = vsel %vm2402, %v2390, %v1453
    %v2456 = vsel %vm2402, %v2391, %v1455
    %v2457 = vsel %vm2402, %v2392, %v1457
    %v2458 = vsel %vm2402, %v2393, %v1459
    %v2459 = vsel %vm2402, %v2394, %v1461
    %v2460 = vsel %vm2402, %v2395, %v1463
    %v2461 = vsel %vm2402, %v2396, %v1465
    %v2462 = vsel %vm2402, %v2397, %v1467
    %v2463 = vsel %vm2402, %v2398, %v1469
    %v2464 = vsel %vm2402, %v2399, %v1471
    %v2465 = vsel %vm2402, %v2400, %v1473
    %v2466 = vsel %vm2402, %v2401, %v1475
    %vm2467 = vcmask 195584
    %v2468 = vsel %vm2467, %v2403, %v1545
    %v2469 = vsel %vm2467, %v2404, %v1547
    %v2470 = vsel %vm2467, %v2405, %v1549
    %v2471 = vsel %vm2467, %v2406, %v1551
    %v2472 = vsel %vm2467, %v2407, %v1553
    %v2473 = vsel %vm2467, %v2408, %v1555
    %v2474 = vsel %vm2467, %v2409, %v1557
    %v2475 = vsel %vm2467, %v2410, %v1559
    %v2476 = vsel %vm2467, %v2411, %v1561
    %v2477 = vsel %vm2467, %v2412, %v1563
    %v2478 = vsel %vm2467, %v2413, %v1565
    %v2479 = vsel %vm2467, %v2414, %v1567
    %v2480 = vsel %vm2467, %v2415, %v1569
    %v2481 = vsel %vm2467, %v2416, %v1571
    %v2482 = vsel %vm2467, %v2417, %v1573
    %v2483 = vsel %vm2467, %v2418, %v1575
    %v2484 = vsel %vm2467, %v2419, %v1577
    %v2485 = vsel %vm2467, %v2420, %v1579
    %v2486 = vsel %vm2467, %v2421, %v1581
    %v2487 = vsel %vm2467, %v2422, %v1583
    %v2488 = vsel %vm2467, %v2423, %v1585
    %v2489 = vsel %vm2467, %v2424, %v1587
    %v2490 = vsel %vm2467, %v2425, %v1589
    %v2491 = vsel %vm2467, %v2426, %v1591
    %v2492 = vsel %vm2467, %v2427, %v1593
    %v2493 = vsel %vm2467, %v2428, %v1595
    %v2494 = vsel %vm2467, %v2429, %v1597
    %v2495 = vsel %vm2467, %v2430, %v1599
    %v2496 = vsel %vm2467, %v2431, %v1601
    %v2497 = vsel %vm2467, %v2432, %v1603
    %v2498 = vsel %vm2467, %v2433, %v1605
    %v2499 = vsel %vm2467, %v2434, %v1607
    %v2500 = vsel %vm2467, %v2435, %v1609
    %v2501 = vsel %vm2467, %v2436, %v1611
    %v2502 = vsel %vm2467, %v2437, %v1613
    %v2503 = vsel %vm2467, %v2438, %v1615
    %v2504 = vsel %vm2467, %v2439, %v1617
    %v2505 = vsel %vm2467, %v2440, %v1619
    %v2506 = vsel %vm2467, %v2441, %v1621
    %v2507 = vsel %vm2467, %v2442, %v1623
    %v2508 = vsel %vm2467, %v2443, %v1625
    %v2509 = vsel %vm2467, %v2444, %v1627
    %v2510 = vsel %vm2467, %v2445, %v1629
    %v2511 = vsel %vm2467, %v2446, %v1631
    %v2512 = vsel %vm2467, %v2447, %v1633
    %v2513 = vsel %vm2467, %v2448, %v1635
    %v2514 = vsel %vm2467, %v2449, %v1637
    %v2515 = vsel %vm2467, %v2450, %v1639
    %v2516 = vsel %vm2467, %v2451, %v1641
    %v2517 = vsel %vm2467, %v2452, %v1643
    %v2518 = vsel %vm2467, %v2453, %v1645
    %v2519 = vsel %vm2467, %v2454, %v1647
    %v2520 = vsel %vm2467, %v2455, %v1649
    %v2521 = vsel %vm2467, %v2456, %v1651
    %v2522 = vsel %vm2467, %v2457, %v1653
    %v2523 = vsel %vm2467, %v2458, %v1655
    %v2524 = vsel %vm2467, %v2459, %v1657
    %v2525 = vsel %vm2467, %v2460, %v1659
    %v2526 = vsel %vm2467, %v2461, %v1661
    %v2527 = vsel %vm2467, %v2462, %v1663
    %v2528 = vsel %vm2467, %v2463, %v1665
    %v2529 = vsel %vm2467, %v2464, %v1667
    %v2530 = vsel %vm2467, %v2465, %v1669
    %v2531 = vsel %vm2467, %v2466, %v1671
    %vm2532 = vcmask 228352
    %v2533 = vsel %vm2532, %v2468, %v1749
    %v2534 = vsel %vm2532, %v2469, %v1751
    %v2535 = vsel %vm2532, %v2470, %v1753
    %v2536 = vsel %vm2532, %v2471, %v1755
    %v2537 = vsel %vm2532, %v2472, %v1757
    %v2538 = vsel %vm2532, %v2473, %v1759
    %v2539 = vsel %vm2532, %v2474, %v1761
    %v2540 = vsel %vm2532, %v2475, %v1763
    %v2541 = vsel %vm2532, %v2476, %v1765
    %v2542 = vsel %vm2532, %v2477, %v1767
    %v2543 = vsel %vm2532, %v2478, %v1769
    %v2544 = vsel %vm2532, %v2479, %v1771
    %v2545 = vsel %vm2532, %v2480, %v1773
    %v2546 = vsel %vm2532, %v2481, %v1775
    %v2547 = vsel %vm2532, %v2482, %v1777
    %v2548 = vsel %vm2532, %v2483, %v1779
    %v2549 = vsel %vm2532, %v2484, %v1781
    %v2550 = vsel %vm2532, %v2485, %v1783
    %v2551 = vsel %vm2532, %v2486, %v1785
    %v2552 = vsel %vm2532, %v2487, %v1787
    %v2553 = vsel %vm2532, %v2488, %v1789
    %v2554 = vsel %vm2532, %v2489, %v1791
    %v2555 = vsel %vm2532, %v2490, %v1793
    %v2556 = vsel %vm2532, %v2491, %v1795
    %v2557 = vsel %vm2532, %v2492, %v1797
    %v2558 = vsel %vm2532, %v2493, %v1799
    %v2559 = vsel %vm2532, %v2494, %v1801
    %v2560 = vsel %vm2532, %v2495, %v1803
    %v2561 = vsel %vm2532, %v2496, %v1805
    %v2562 = vsel %vm2532, %v2497, %v1807
    %v2563 = vsel %vm2532, %v2498, %v1809
    %v2564 = vsel %vm2532, %v2499, %v1811
    %v2565 = vsel %vm2532, %v2500, %v1813
    %v2566 = vsel %vm2532, %v2501, %v1815
    %v2567 = vsel %vm2532, %v2502, %v1817
    %v2568 = vsel %vm2532, %v2503, %v1819
    %v2569 = vsel %vm2532, %v2504, %v1821
    %v2570 = vsel %vm2532, %v2505, %v1823
    %v2571 = vsel %vm2532, %v2506, %v1825
    %v2572 = vsel %vm2532, %v2507, %v1827
    %v2573 = vsel %vm2532, %v2508, %v1829
    %v2574 = vsel %vm2532, %v2509, %v1831
    %v2575 = vsel %vm2532, %v2510, %v1833
    %v2576 = vsel %vm2532, %v2511, %v1835
    %v2577 = vsel %vm2532, %v2512, %v1837
    %v2578 = vsel %vm2532, %v2513, %v1839
    %v2579 = vsel %vm2532, %v2514, %v1841
    %v2580 = vsel %vm2532, %v2515, %v1843
    %v2581 = vsel %vm2532, %v2516, %v1845
    %v2582 = vsel %vm2532, %v2517, %v1847
    %v2583 = vsel %vm2532, %v2518, %v1849
    %v2584 = vsel %vm2532, %v2519, %v1851
    %v2585 = vsel %vm2532, %v2520, %v1853
    %v2586 = vsel %vm2532, %v2521, %v1855
    %v2587 = vsel %vm2532, %v2522, %v1857
    %v2588 = vsel %vm2532, %v2523, %v1859
    %v2589 = vsel %vm2532, %v2524, %v1861
    %v2590 = vsel %vm2532, %v2525, %v1863
    %v2591 = vsel %vm2532, %v2526, %v1865
    %v2592 = vsel %vm2532, %v2527, %v1867
    %v2593 = vsel %vm2532, %v2528, %v1869
    %v2594 = vsel %vm2532, %v2529, %v1871
    %v2595 = vsel %vm2532, %v2530, %v1873
    %v2596 = vsel %vm2532, %v2531, %v1875
    %vm2597 = vcmask 261120
    %v2598 = vsel %vm2597, %v2533, %v1951
    %v2599 = vsel %vm2597, %v2534, %v1953
    %v2600 = vsel %vm2597, %v2535, %v1955
    %v2601 = vsel %vm2597, %v2536, %v1957
    %v2602 = vsel %vm2597, %v2537, %v1959
    %v2603 = vsel %vm2597, %v2538, %v1961
    %v2604 = vsel %vm2597, %v2539, %v1963
    %v2605 = vsel %vm2597, %v2540, %v1965
    %v2606 = vsel %vm2597, %v2541, %v1967
    %v2607 = vsel %vm2597, %v2542, %v1969
    %v2608 = vsel %vm2597, %v2543, %v1971
    %v2609 = vsel %vm2597, %v2544, %v1973
    %v2610 = vsel %vm2597, %v2545, %v1975
    %v2611 = vsel %vm2597, %v2546, %v1977
    %v2612 = vsel %vm2597, %v2547, %v1979
    %v2613 = vsel %vm2597, %v2548, %v1981
    %v2614 = vsel %vm2597, %v2549, %v1983
    %v2615 = vsel %vm2597, %v2550, %v1985
    %v2616 = vsel %vm2597, %v2551, %v1987
    %v2617 = vsel %vm2597, %v2552, %v1989
    %v2618 = vsel %vm2597, %v2553, %v1991
    %v2619 = vsel %vm2597, %v2554, %v1993
    %v2620 = vsel %vm2597, %v2555, %v1995
    %v2621 = vsel %vm2597, %v2556, %v1997
    %v2622 = vsel %vm2597, %v2557, %v1999
    %v2623 = vsel %vm2597, %v2558, %v2001
    %v2624 = vsel %vm2597, %v2559, %v2003
    %v2625 = vsel %vm2597, %v2560, %v2005
    %v2626 = vsel %vm2597, %v2561, %v2007
    %v2627 = vsel %vm2597, %v2562, %v2009
    %v2628 = vsel %vm2597, %v2563, %v2011
    %v2629 = vsel %vm2597, %v2564, %v2013
    %v2630 = vsel %vm2597, %v2565, %v2015
    %v2631 = vsel %vm2597, %v2566, %v2017
    %v2632 = vsel %vm2597, %v2567, %v2019
    %v2633 = vsel %vm2597, %v2568, %v2021
    %v2634 = vsel %vm2597, %v2569, %v2023
    %v2635 = vsel %vm2597, %v2570, %v2025
    %v2636 = vsel %vm2597, %v2571, %v2027
    %v2637 = vsel %vm2597, %v2572, %v2029
    %v2638 = vsel %vm2597, %v2573, %v2031
    %v2639 = vsel %vm2597, %v2574, %v2033
    %v2640 = vsel %vm2597, %v2575, %v2035
    %v2641 = vsel %vm2597, %v2576, %v2037
    %v2642 = vsel %vm2597, %v2577, %v2039
    %v2643 = vsel %vm2597, %v2578, %v2041
    %v2644 = vsel %vm2597, %v2579, %v2043
    %v2645 = vsel %vm2597, %v2580, %v2045
    %v2646 = vsel %vm2597, %v2581, %v2047
    %v2647 = vsel %vm2597, %v2582, %v2049
    %v2648 = vsel %vm2597, %v2583, %v2051
    %v2649 = vsel %vm2597, %v2584, %v2053
    %v2650 = vsel %vm2597, %v2585, %v2055
    %v2651 = vsel %vm2597, %v2586, %v2057
    %v2652 = vsel %vm2597, %v2587, %v2059
    %v2653 = vsel %vm2597, %v2588, %v2061
    %v2654 = vsel %vm2597, %v2589, %v2063
    %v2655 = vsel %vm2597, %v2590, %v2065
    %v2656 = vsel %vm2597, %v2591, %v2067
    %v2657 = vsel %vm2597, %v2592, %v2069
    %v2658 = vsel %vm2597, %v2593, %v2071
    %v2659 = vsel %vm2597, %v2594, %v2073
    %v2660 = vsel %vm2597, %v2595, %v2075
    %v2661 = vsel %vm2597, %v2596, %v2077
    %v2662 = vpack.c.bf16 %v2599, %v2598
    %v2663 = vpack.c.bf16 %v2601, %v2600
    %v2664 = vpack.c.bf16 %v2603, %v2602
    %v2665 = vpack.c.bf16 %v2605, %v2604
    %v2666 = vpack.c.bf16 %v2607, %v2606
    %v2667 = vpack.c.bf16 %v2609, %v2608
    %v2668 = vpack.c.bf16 %v2611, %v2610
    %v2669 = vpack.c.bf16 %v2613, %v2612
    %v2670 = vpack.c.bf16 %v2615, %v2614
    %v2671 = vpack.c.bf16 %v2617, %v2616
    %v2672 = vpack.c.bf16 %v2619, %v2618
    %v2673 = vpack.c.bf16 %v2621, %v2620
    %v2674 = vpack.c.bf16 %v2623, %v2622
    %v2675 = vpack.c.bf16 %v2625, %v2624
    %v2676 = vpack.c.bf16 %v2627, %v2626
    %v2677 = vpack.c.bf16 %v2629, %v2628
    %v2678 = vpack.c.bf16 %v2631, %v2630
    %v2679 = vpack.c.bf16 %v2633, %v2632
    %v2680 = vpack.c.bf16 %v2635, %v2634
    %v2681 = vpack.c.bf16 %v2637, %v2636
    %v2682 = vpack.c.bf16 %v2639, %v2638
    %v2683 = vpack.c.bf16 %v2641, %v2640
    %v2684 = vpack.c.bf16 %v2643, %v2642
    %v2685 = vpack.c.bf16 %v2645, %v2644
    %v2686 = vpack.c.bf16 %v2647, %v2646
    %v2687 = vpack.c.bf16 %v2649, %v2648
    %v2688 = vpack.c.bf16 %v2651, %v2650
    %v2689 = vpack.c.bf16 %v2653, %v2652
    %v2690 = vpack.c.bf16 %v2655, %v2654
    %v2691 = vpack.c.bf16 %v2657, %v2656
    %v2692 = vpack.c.bf16 %v2659, %v2658
    %v2693 = vpack.c.bf16 %v2661, %v2660
    %v2694 = vld [vmem:[%s1] sm:$0xf]
    %v2695 = vld [vmem:[%s1 + $0x4] sm:$0xf]
    %v2696 = vld [vmem:[%s1 + $0x8] sm:$0xf]
    %v2697 = vld [vmem:[%s1 + $0xc] sm:$0xf]
    %v2698 = vld [vmem:[%s1 + $0x10] sm:$0x3]
    %v2704 = vunpack.c.l.b16 %v2694
    %v2705 = vunpack.c.l.b16 %v2695
    %v2706 = vunpack.c.l.b16 %v2696
    %v2707 = vunpack.c.l.b16 %v2697
    %v2708 = vunpack.c.l.b16 %v2698
    %v2709 = vpack.c.b16 %v2705, %v2704
    %v2710 = vpack.c.b16 %v2707, %v2706
    %v2711 = vpack.c.b16 %v2708, %v2708
    %vm2714 = vcmask 293888
    %v2716 = vsel %vm2714, %v2662, 0
    %v2719 = vsel %vm2714, %v2663, 0
    %v2722 = vsel %vm2714, %v2664, 0
    %v2725 = vsel %vm2714, %v2665, 0
    %v2728 = vsel %vm2714, %v2666, 0
    %v2731 = vsel %vm2714, %v2667, 0
    %v2734 = vsel %vm2714, %v2668, 0
    %v2737 = vsel %vm2714, %v2669, 0
    %v2740 = vsel %vm2714, %v2670, 0
    %v2743 = vsel %vm2714, %v2671, 0
    %v2746 = vsel %vm2714, %v2672, 0
    %v2749 = vsel %vm2714, %v2673, 0
    %v2752 = vsel %vm2714, %v2674, 0
    %v2755 = vsel %vm2714, %v2675, 0
    %v2758 = vsel %vm2714, %v2676, 0
    %v2761 = vsel %vm2714, %v2677, 0
    %v2764 = vsel %vm2714, %v2678, 0
    %v2767 = vsel %vm2714, %v2679, 0
    %v2770 = vsel %vm2714, %v2680, 0
    %v2773 = vsel %vm2714, %v2681, 0
    %v2776 = vsel %vm2714, %v2682, 0
    %v2779 = vsel %vm2714, %v2683, 0
    %v2782 = vsel %vm2714, %v2684, 0
    %v2785 = vsel %vm2714, %v2685, 0
    %v2788 = vsel %vm2714, %v2686, 0
    %v2791 = vsel %vm2714, %v2687, 0
    %v2794 = vsel %vm2714, %v2688, 0
    %v2797 = vsel %vm2714, %v2689, 0
    %v2800 = vsel %vm2714, %v2690, 0
    %v2803 = vsel %vm2714, %v2691, 0
    %v2806 = vsel %vm2714, %v2692, 0
    %v2809 = vsel %vm2714, %v2693, 0
    %vm2811 = vcmask 1041408
    %v2813 = vsel %vm2811, %v2711, 0
    %2815 = vmatprep.subr.bf16.mxu0 0
    %2816 = vmatpush1.bf16.msra.mxu0 %v2709
    %2817 = vmatprep.subr.bf16.mxu0 0
    %2818 = vmatpush1.bf16.msra.mxu0 %v2710
    %2819 = vmatprep.subr.bf16.mxu0 0
    %2820 = vmatpush1.bf16.msra.mxu0 %v2813
    %2821 = vmatprep.subr.bf16.mxu0 0
    %2822 = vmatpush1.bf16.msra.mxu0 0
    %2823 = vmatprep.subr.bf16.mxu0 0
    %2824 = vmatpush1.bf16.msra.mxu0 0
    %2825 = vmatprep.subr.bf16.mxu0 0
    %2826 = vmatpush1.bf16.msra.mxu0 0
    %2827 = vmatprep.subr.bf16.mxu0 0
    %2828 = vmatpush1.bf16.msra.mxu0 0
    %2829 = vmatprep.subr.bf16.mxu0 0
    %2830 = vmatpush1.bf16.msra.mxu0 0
    %2831 = vmatprep.subr.bf16.mxu0 0
    %2832 = vmatpush1.bf16.msra.mxu0 0
    %2833 = vmatprep.subr.bf16.mxu0 0
    %2834 = vmatpush1.bf16.msra.mxu0 0
    %2835 = vmatprep.subr.bf16.mxu0 0
    %2836 = vmatpush1.bf16.msra.mxu0 0
    %2837 = vmatprep.subr.bf16.mxu0 0
    %2838 = vmatpush1.bf16.msra.mxu0 0
    %2839 = vmatprep.subr.bf16.mxu0 0
    %2840 = vmatpush1.bf16.msra.mxu0 0
    %2841 = vmatprep.subr.bf16.mxu0 0
    %2842 = vmatpush1.bf16.msra.mxu0 0
    %2843 = vmatprep.subr.bf16.mxu0 0
    %2844 = vmatpush1.bf16.msra.mxu0 0
    %2845 = vmatprep.subr.bf16.mxu0 0
    %2846 = vmatpush1.bf16.msra.mxu0 0
    %2847 = vmatprep.mubr.bf16.mxu0 0
    %2848 = vmatmul.mubr.bf16.gmra.mrb[0].mxu0 %v2716
    %v2849 = vpop.f32.mrb[0].mxu0
    %v2850 = vadd.f32 0.0, %v2849
    %v2851 = vpop.f32.mrb[0].mxu0
    %v2852 = vpop.f32.mrb[0].mxu0
    %v2853 = vadd.f32 0.0, %v2852
    %v2854 = vpop.f32.mrb[0].mxu0
    %2855 = vmatprep.mubr.bf16.mxu0 0
    %2856 = vmatmul.mubr.bf16.gmra.mrb[0].mxu0 %v2719
    %v2857 = vpop.f32.mrb[0].mxu0
    %v2858 = vadd.f32 0.0, %v2857
    %v2859 = vpop.f32.mrb[0].mxu0
    %v2860 = vpop.f32.mrb[0].mxu0
    %v2861 = vadd.f32 0.0, %v2860
    %v2862 = vpop.f32.mrb[0].mxu0
    %2863 = vmatprep.mubr.bf16.mxu0 0
    %2864 = vmatmul.mubr.bf16.gmra.mrb[0].mxu0 %v2722
    %v2865 = vpop.f32.mrb[0].mxu0
    %v2866 = vadd.f32 0.0, %v2865
    %v2867 = vpop.f32.mrb[0].mxu0
    %v2868 = vpop.f32.mrb[0].mxu0
    %v2869 = vadd.f32 0.0, %v2868
    %v2870 = vpop.f32.mrb[0].mxu0
    %2871 = vmatprep.mubr.bf16.mxu0 0
    %2872 = vmatmul.mubr.bf16.gmra.mrb[0].mxu0 %v2725
    %v2873 = vpop.f32.mrb[0].mxu0
    %v2874 = vadd.f32 0.0, %v2873
    %v2875 = vpop.f32.mrb[0].mxu0
    %v2876 = vpop.f32.mrb[0].mxu0
    %v2877 = vadd.f32 0.0, %v2876
    %v2878 = vpop.f32.mrb[0].mxu0
    %2879 = vmatprep.mubr.bf16.mxu0 0
    %2880 = vmatmul.mubr.bf16.gmra.mrb[0].mxu0 %v2728
    %v2881 = vpop.f32.mrb[0].mxu0
    %v2882 = vadd.f32 0.0, %v2881
    %v2883 = vpop.f32.mrb[0].mxu0
    %v2884 = vpop.f32.mrb[0].mxu0
    %v2885 = vadd.f32 0.0, %v2884
    %v2886 = vpop.f32.mrb[0].mxu0
    %2887 = vmatprep.mubr.bf16.mxu0 0
    %2888 = vmatmul.mubr.bf16.gmra.mrb[0].mxu0 %v2731
    %v2889 = vpop.f32.mrb[0].mxu0
    %v2890 = vadd.f32 0.0, %v2889
    %v2891 = vpop.f32.mrb[0].mxu0
    %v2892 = vpop.f32.mrb[0].mxu0
    %v2893 = vadd.f32 0.0, %v2892
    %v2894 = vpop.f32.mrb[0].mxu0
    %2895 = vmatprep.mubr.bf16.mxu0 0
    %2896 = vmatmul.mubr.bf16.gmra.mrb[0].mxu0 %v2734
    %v2897 = vpop.f32.mrb[0].mxu0
    %v2898 = vadd.f32 0.0, %v2897
    %v2899 = vpop.f32.mrb[0].mxu0
    %v2900 = vpop.f32.mrb[0].mxu0
    %v2901 = vadd.f32 0.0, %v2900
    %v2902 = vpop.f32.mrb[0].mxu0
    %2903 = vmatprep.mubr.bf16.mxu0 0
    %2904 = vmatmul.mubr.bf16.gmra.mrb[0].mxu0 %v2737
    %v2905 = vpop.f32.mrb[0].mxu0
    %v2906 = vadd.f32 0.0, %v2905
    %v2907 = vpop.f32.mrb[0].mxu0
    %v2908 = vpop.f32.mrb[0].mxu0
    %v2909 = vadd.f32 0.0, %v2908
    %v2910 = vpop.f32.mrb[0].mxu0
    %2911 = vmatprep.mubr.bf16.mxu0 0
    %2912 = vmatmul.mubr.bf16.gmra.mrb[0].mxu0 %v2740
    %v2913 = vpop.f32.mrb[0].mxu0
    %v2914 = vadd.f32 0.0, %v2913
    %v2915 = vpop.f32.mrb[0].mxu0
    %v2916 = vpop.f32.mrb[0].mxu0
    %v2917 = vadd.f32 0.0, %v2916
    %v2918 = vpop.f32.mrb[0].mxu0
    %2919 = vmatprep.mubr.bf16.mxu0 0
    %2920 = vmatmul.mubr.bf16.gmra.mrb[0].mxu0 %v2743
    %v2921 = vpop.f32.mrb[0].mxu0
    %v2922 = vadd.f32 0.0, %v2921
    %v2923 = vpop.f32.mrb[0].mxu0
    %v2924 = vpop.f32.mrb[0].mxu0
    %v2925 = vadd.f32 0.0, %v2924
    %v2926 = vpop.f32.mrb[0].mxu0
    %2927 = vmatprep.mubr.bf16.mxu0 0
    %2928 = vmatmul.mubr.bf16.gmra.mrb[0].mxu0 %v2746
    %v2929 = vpop.f32.mrb[0].mxu0
    %v2930 = vadd.f32 0.0, %v2929
    %v2931 = vpop.f32.mrb[0].mxu0
    %v2932 = vpop.f32.mrb[0].mxu0
    %v2933 = vadd.f32 0.0, %v2932
    %v2934 = vpop.f32.mrb[0].mxu0
    %2935 = vmatprep.mubr.bf16.mxu0 0
    %2936 = vmatmul.mubr.bf16.gmra.mrb[0].mxu0 %v2749
    %v2937 = vpop.f32.mrb[0].mxu0
    %v2938 = vadd.f32 0.0, %v2937
    %v2939 = vpop.f32.mrb[0].mxu0
    %v2940 = vpop.f32.mrb[0].mxu0
    %v2941 = vadd.f32 0.0, %v2940
    %v2942 = vpop.f32.mrb[0].mxu0
    %2943 = vmatprep.mubr.bf16.mxu0 0
    %2944 = vmatmul.mubr.bf16.gmra.mrb[0].mxu0 %v2752
    %v2945 = vpop.f32.mrb[0].mxu0
    %v2946 = vadd.f32 0.0, %v2945
    %v2947 = vpop.f32.mrb[0].mxu0
    %v2948 = vpop.f32.mrb[0].mxu0
    %v2949 = vadd.f32 0.0, %v2948
    %v2950 = vpop.f32.mrb[0].mxu0
    %2951 = vmatprep.mubr.bf16.mxu0 0
    %2952 = vmatmul.mubr.bf16.gmra.mrb[0].mxu0 %v2755
    %v2953 = vpop.f32.mrb[0].mxu0
    %v2954 = vadd.f32 0.0, %v2953
    %v2955 = vpop.f32.mrb[0].mxu0
    %v2956 = vpop.f32.mrb[0].mxu0
    %v2957 = vadd.f32 0.0, %v2956
    %v2958 = vpop.f32.mrb[0].mxu0
    %2959 = vmatprep.mubr.bf16.mxu0 0
    %2960 = vmatmul.mubr.bf16.gmra.mrb[0].mxu0 %v2758
    %v2961 = vpop.f32.mrb[0].mxu0
    %v2962 = vadd.f32 0.0, %v2961
    %v2963 = vpop.f32.mrb[0].mxu0
    %v2964 = vpop.f32.mrb[0].mxu0
    %v2965 = vadd.f32 0.0, %v2964
    %v2966 = vpop.f32.mrb[0].mxu0
    %2967 = vmatprep.mubr.bf16.mxu0 0
    %2968 = vmatmul.mubr.bf16.gmra.mrb[0].mxu0 %v2761
    %v2969 = vpop.f32.mrb[0].mxu0
    %v2970 = vadd.f32 0.0, %v2969
    %v2971 = vpop.f32.mrb[0].mxu0
    %v2972 = vpop.f32.mrb[0].mxu0
    %v2973 = vadd.f32 0.0, %v2972
    %v2974 = vpop.f32.mrb[0].mxu0
    %2975 = vmatprep.mubr.bf16.mxu0 0
    %2976 = vmatmul.mubr.bf16.gmra.mrb[0].mxu0 %v2764
    %v2977 = vpop.f32.mrb[0].mxu0
    %v2978 = vadd.f32 0.0, %v2977
    %v2979 = vpop.f32.mrb[0].mxu0
    %v2980 = vpop.f32.mrb[0].mxu0
    %v2981 = vadd.f32 0.0, %v2980
    %v2982 = vpop.f32.mrb[0].mxu0
    %2983 = vmatprep.mubr.bf16.mxu0 0
    %2984 = vmatmul.mubr.bf16.gmra.mrb[0].mxu0 %v2767
    %v2985 = vpop.f32.mrb[0].mxu0
    %v2986 = vadd.f32 0.0, %v2985
    %v2987 = vpop.f32.mrb[0].mxu0
    %v2988 = vpop.f32.mrb[0].mxu0
    %v2989 = vadd.f32 0.0, %v2988
    %v2990 = vpop.f32.mrb[0].mxu0
    %2991 = vmatprep.mubr.bf16.mxu0 0
    %2992 = vmatmul.mubr.bf16.gmra.mrb[0].mxu0 %v2770
    %v2993 = vpop.f32.mrb[0].mxu0
    %v2994 = vadd.f32 0.0, %v2993
    %v2995 = vpop.f32.mrb[0].mxu0
    %v2996 = vpop.f32.mrb[0].mxu0
    %v2997 = vadd.f32 0.0, %v2996
    %v2998 = vpop.f32.mrb[0].mxu0
    %2999 = vmatprep.mubr.bf16.mxu0 0
    %3000 = vmatmul.mubr.bf16.gmra.mrb[0].mxu0 %v2773
    %v3001 = vpop.f32.mrb[0].mxu0
    %v3002 = vadd.f32 0.0, %v3001
    %v3003 = vpop.f32.mrb[0].mxu0
    %v3004 = vpop.f32.mrb[0].mxu0
    %v3005 = vadd.f32 0.0, %v3004
    %v3006 = vpop.f32.mrb[0].mxu0
    %3007 = vmatprep.mubr.bf16.mxu0 0
    %3008 = vmatmul.mubr.bf16.gmra.mrb[0].mxu0 %v2776
    %v3009 = vpop.f32.mrb[0].mxu0
    %v3010 = vadd.f32 0.0, %v3009
    %v3011 = vpop.f32.mrb[0].mxu0
    %v3012 = vpop.f32.mrb[0].mxu0
    %v3013 = vadd.f32 0.0, %v3012
    %v3014 = vpop.f32.mrb[0].mxu0
    %3015 = vmatprep.mubr.bf16.mxu0 0
    %3016 = vmatmul.mubr.bf16.gmra.mrb[0].mxu0 %v2779
    %v3017 = vpop.f32.mrb[0].mxu0
    %v3018 = vadd.f32 0.0, %v3017
    %v3019 = vpop.f32.mrb[0].mxu0
    %v3020 = vpop.f32.mrb[0].mxu0
    %v3021 = vadd.f32 0.0, %v3020
    %v3022 = vpop.f32.mrb[0].mxu0
    %3023 = vmatprep.mubr.bf16.mxu0 0
    %3024 = vmatmul.mubr.bf16.gmra.mrb[0].mxu0 %v2782
    %v3025 = vpop.f32.mrb[0].mxu0
    %v3026 = vadd.f32 0.0, %v3025
    %v3027 = vpop.f32.mrb[0].mxu0
    %v3028 = vpop.f32.mrb[0].mxu0
    %v3029 = vadd.f32 0.0, %v3028
    %v3030 = vpop.f32.mrb[0].mxu0
    %3031 = vmatprep.mubr.bf16.mxu0 0
    %3032 = vmatmul.mubr.bf16.gmra.mrb[0].mxu0 %v2785
    %v3033 = vpop.f32.mrb[0].mxu0
    %v3034 = vadd.f32 0.0, %v3033
    %v3035 = vpop.f32.mrb[0].mxu0
    %v3036 = vpop.f32.mrb[0].mxu0
    %v3037 = vadd.f32 0.0, %v3036
    %v3038 = vpop.f32.mrb[0].mxu0
    %3039 = vmatprep.mubr.bf16.mxu0 0
    %3040 = vmatmul.mubr.bf16.gmra.mrb[0].mxu0 %v2788
    %v3041 = vpop.f32.mrb[0].mxu0
    %v3042 = vadd.f32 0.0, %v3041
    %v3043 = vpop.f32.mrb[0].mxu0
    %v3044 = vpop.f32.mrb[0].mxu0
    %v3045 = vadd.f32 0.0, %v3044
    %v3046 = vpop.f32.mrb[0].mxu0
    %3047 = vmatprep.mubr.bf16.mxu0 0
    %3048 = vmatmul.mubr.bf16.gmra.mrb[0].mxu0 %v2791
    %v3049 = vpop.f32.mrb[0].mxu0
    %v3050 = vadd.f32 0.0, %v3049
    %v3051 = vpop.f32.mrb[0].mxu0
    %v3052 = vpop.f32.mrb[0].mxu0
    %v3053 = vadd.f32 0.0, %v3052
    %v3054 = vpop.f32.mrb[0].mxu0
    %3055 = vmatprep.mubr.bf16.mxu0 0
    %3056 = vmatmul.mubr.bf16.gmra.mrb[0].mxu0 %v2794
    %v3057 = vpop.f32.mrb[0].mxu0
    %v3058 = vadd.f32 0.0, %v3057
    %v3059 = vpop.f32.mrb[0].mxu0
    %v3060 = vpop.f32.mrb[0].mxu0
    %v3061 = vadd.f32 0.0, %v3060
    %v3062 = vpop.f32.mrb[0].mxu0
    %3063 = vmatprep.mubr.bf16.mxu0 0
    %3064 = vmatmul.mubr.bf16.gmra.mrb[0].mxu0 %v2797
    %v3065 = vpop.f32.mrb[0].mxu0
    %v3066 = vadd.f32 0.0, %v3065
    %v3067 = vpop.f32.mrb[0].mxu0
    %v3068 = vpop.f32.mrb[0].mxu0
    %v3069 = vadd.f32 0.0, %v3068
    %v3070 = vpop.f32.mrb[0].mxu0
    %3071 = vmatprep.mubr.bf16.mxu0 0
    %3072 = vmatmul.mubr.bf16.gmra.mrb[0].mxu0 %v2800
    %v3073 = vpop.f32.mrb[0].mxu0
    %v3074 = vadd.f32 0.0, %v3073
    %v3075 = vpop.f32.mrb[0].mxu0
    %v3076 = vpop.f32.mrb[0].mxu0
    %v3077 = vadd.f32 0.0, %v3076
    %v3078 = vpop.f32.mrb[0].mxu0
    %3079 = vmatprep.mubr.bf16.mxu0 0
    %3080 = vmatmul.mubr.bf16.gmra.mrb[0].mxu0 %v2803
    %v3081 = vpop.f32.mrb[0].mxu0
    %v3082 = vadd.f32 0.0, %v3081
    %v3083 = vpop.f32.mrb[0].mxu0
    %v3084 = vpop.f32.mrb[0].mxu0
    %v3085 = vadd.f32 0.0, %v3084
    %v3086 = vpop.f32.mrb[0].mxu0
    %3087 = vmatprep.mubr.bf16.mxu0 0
    %3088 = vmatmul.mubr.bf16.gmra.mrb[0].mxu0 %v2806
    %v3089 = vpop.f32.mrb[0].mxu0
    %v3090 = vadd.f32 0.0, %v3089
    %v3091 = vpop.f32.mrb[0].mxu0
    %v3092 = vpop.f32.mrb[0].mxu0
    %v3093 = vadd.f32 0.0, %v3092
    %v3094 = vpop.f32.mrb[0].mxu0
    %3095 = vmatprep.mubr.bf16.mxu0 0
    %3096 = vmatmul.mubr.bf16.gmra.mrb[0].mxu0 %v2809
    %v3097 = vpop.f32.mrb[0].mxu0
    %v3098 = vadd.f32 0.0, %v3097
    %v3099 = vpop.f32.mrb[0].mxu0
    %v3100 = vpop.f32.mrb[0].mxu0
    %v3101 = vadd.f32 0.0, %v3100
    %v3102 = vpop.f32.mrb[0].mxu0
    %3103 = vdwg.mxu0
    %v3104 = vsel %vm2142, %v2850, 0.0
    %v3105 = vsel %vm2142, %v2853, 0.0
    %v3106 = vadd.f32 %v3104, %v3105
    %v3107 = vsel %vm2142, %v2858, 0.0
    %v3108 = vadd.f32 %v3106, %v3107
    %v3109 = vsel %vm2142, %v2861, 0.0
    %v3110 = vadd.f32 %v3108, %v3109
    %v3111 = vsel %vm2142, %v2866, 0.0
    %v3112 = vadd.f32 %v3110, %v3111
    %v3113 = vsel %vm2142, %v2869, 0.0
    %v3114 = vadd.f32 %v3112, %v3113
    %v3115 = vsel %vm2142, %v2874, 0.0
    %v3116 = vadd.f32 %v3114, %v3115
    %v3117 = vsel %vm2142, %v2877, 0.0
    %v3118 = vadd.f32 %v3116, %v3117
    %v3119 = vsel %vm2142, %v2882, 0.0
    %v3120 = vadd.f32 %v3118, %v3119
    %v3121 = vsel %vm2142, %v2885, 0.0
    %v3122 = vadd.f32 %v3120, %v3121
    %v3123 = vsel %vm2142, %v2890, 0.0
    %v3124 = vadd.f32 %v3122, %v3123
    %v3125 = vsel %vm2142, %v2893, 0.0
    %v3126 = vadd.f32 %v3124, %v3125
    %v3127 = vsel %vm2142, %v2898, 0.0
    %v3128 = vadd.f32 %v3126, %v3127
    %v3129 = vsel %vm2142, %v2901, 0.0
    %v3130 = vadd.f32 %v3128, %v3129
    %v3131 = vsel %vm2142, %v2906, 0.0
    %v3132 = vadd.f32 %v3130, %v3131
    %v3133 = vsel %vm2142, %v2909, 0.0
    %v3134 = vadd.f32 %v3132, %v3133
    %v3135 = vsel %vm2142, %v2914, 0.0
    %v3136 = vadd.f32 %v3134, %v3135
    %v3137 = vsel %vm2142, %v2917, 0.0
    %v3138 = vadd.f32 %v3136, %v3137
    %v3139 = vsel %vm2142, %v2922, 0.0
    %v3140 = vadd.f32 %v3138, %v3139
    %v3141 = vsel %vm2142, %v2925, 0.0
    %v3142 = vadd.f32 %v3140, %v3141
    %v3143 = vsel %vm2142, %v2930, 0.0
    %v3144 = vadd.f32 %v3142, %v3143
    %v3145 = vsel %vm2142, %v2933, 0.0
    %v3146 = vadd.f32 %v3144, %v3145
    %v3147 = vsel %vm2142, %v2938, 0.0
    %v3148 = vadd.f32 %v3146, %v3147
    %v3149 = vsel %vm2142, %v2941, 0.0
    %v3150 = vadd.f32 %v3148, %v3149
    %v3151 = vsel %vm2142, %v2946, 0.0
    %v3152 = vadd.f32 %v3150, %v3151
    %v3153 = vsel %vm2142, %v2949, 0.0
    %v3154 = vadd.f32 %v3152, %v3153
    %v3155 = vsel %vm2142, %v2954, 0.0
    %v3156 = vadd.f32 %v3154, %v3155
    %v3157 = vsel %vm2142, %v2957, 0.0
    %v3158 = vadd.f32 %v3156, %v3157
    %v3159 = vsel %vm2142, %v2962, 0.0
    %v3160 = vadd.f32 %v3158, %v3159
    %v3161 = vsel %vm2142, %v2965, 0.0
    %v3162 = vadd.f32 %v3160, %v3161
    %v3163 = vsel %vm2142, %v2970, 0.0
    %v3164 = vadd.f32 %v3162, %v3163
    %v3165 = vsel %vm2142, %v2973, 0.0
    %v3166 = vadd.f32 %v3164, %v3165
    %v3167 = vsel %vm2142, %v2978, 0.0
    %v3168 = vadd.f32 %v3166, %v3167
    %v3169 = vsel %vm2142, %v2981, 0.0
    %v3170 = vadd.f32 %v3168, %v3169
    %v3171 = vsel %vm2142, %v2986, 0.0
    %v3172 = vadd.f32 %v3170, %v3171
    %v3173 = vsel %vm2142, %v2989, 0.0
    %v3174 = vadd.f32 %v3172, %v3173
    %v3175 = vsel %vm2142, %v2994, 0.0
    %v3176 = vadd.f32 %v3174, %v3175
    %v3177 = vsel %vm2142, %v2997, 0.0
    %v3178 = vadd.f32 %v3176, %v3177
    %v3179 = vsel %vm2142, %v3002, 0.0
    %v3180 = vadd.f32 %v3178, %v3179
    %v3181 = vsel %vm2142, %v3005, 0.0
    %v3182 = vadd.f32 %v3180, %v3181
    %v3183 = vsel %vm2142, %v3010, 0.0
    %v3184 = vadd.f32 %v3182, %v3183
    %v3185 = vsel %vm2142, %v3013, 0.0
    %v3186 = vadd.f32 %v3184, %v3185
    %v3187 = vsel %vm2142, %v3018, 0.0
    %v3188 = vadd.f32 %v3186, %v3187
    %v3189 = vsel %vm2142, %v3021, 0.0
    %v3190 = vadd.f32 %v3188, %v3189
    %v3191 = vsel %vm2142, %v3026, 0.0
    %v3192 = vadd.f32 %v3190, %v3191
    %v3193 = vsel %vm2142, %v3029, 0.0
    %v3194 = vadd.f32 %v3192, %v3193
    %v3195 = vsel %vm2142, %v3034, 0.0
    %v3196 = vadd.f32 %v3194, %v3195
    %v3197 = vsel %vm2142, %v3037, 0.0
    %v3198 = vadd.f32 %v3196, %v3197
    %v3199 = vsel %vm2142, %v3042, 0.0
    %v3200 = vadd.f32 %v3198, %v3199
    %v3201 = vsel %vm2142, %v3045, 0.0
    %v3202 = vadd.f32 %v3200, %v3201
    %v3203 = vsel %vm2142, %v3050, 0.0
    %v3204 = vadd.f32 %v3202, %v3203
    %v3205 = vsel %vm2142, %v3053, 0.0
    %v3206 = vadd.f32 %v3204, %v3205
    %v3207 = vsel %vm2142, %v3058, 0.0
    %v3208 = vadd.f32 %v3206, %v3207
    %v3209 = vsel %vm2142, %v3061, 0.0
    %v3210 = vadd.f32 %v3208, %v3209
    %v3211 = vsel %vm2142, %v3066, 0.0
    %v3212 = vadd.f32 %v3210, %v3211
    %v3213 = vsel %vm2142, %v3069, 0.0
    %v3214 = vadd.f32 %v3212, %v3213
    %v3215 = vsel %vm2142, %v3074, 0.0
    %v3216 = vadd.f32 %v3214, %v3215
    %v3217 = vsel %vm2142, %v3077, 0.0
    %v3218 = vadd.f32 %v3216, %v3217
    %v3219 = vsel %vm2142, %v3082, 0.0
    %v3220 = vadd.f32 %v3218, %v3219
    %v3221 = vsel %vm2142, %v3085, 0.0
    %v3222 = vadd.f32 %v3220, %v3221
    %v3223 = vsel %vm2142, %v3090, 0.0
    %v3224 = vadd.f32 %v3222, %v3223
    %v3225 = vsel %vm2142, %v3093, 0.0
    %v3226 = vadd.f32 %v3224, %v3225
    %v3227 = vsel %vm2142, %v3098, 0.0
    %v3228 = vadd.f32 %v3226, %v3227
    %v3229 = vsel %vm2142, %v3101, 0.0
    %v3230 = vadd.f32 %v3228, %v3229
    %v3231 = vrot.slane %v3230, 4
    %v3232 = vadd.f32 %v3230, %v3231
    %v3233 = vrot.slane %v3232, 2
    %v3234 = vadd.f32 %v3232, %v3233
    %v3235 = vrot.slane %v3234, 1
    %v3236 = vadd.f32 %v3234, %v3235
    %v3237 = vrcp.pop 512.0
    %v3238 = vmul.f32 %v3236, %v3237
    %v3239 = vsub.f32 %v2850, %v3238
    %v3240 = vsub.f32 %v2853, %v3238
    %v3241 = vsub.f32 %v2858, %v3238
    %v3242 = vsub.f32 %v2861, %v3238
    %v3243 = vsub.f32 %v2866, %v3238
    %v3244 = vsub.f32 %v2869, %v3238
    %v3245 = vsub.f32 %v2874, %v3238
    %v3246 = vsub.f32 %v2877, %v3238
    %v3247 = vsub.f32 %v2882, %v3238
    %v3248 = vsub.f32 %v2885, %v3238
    %v3249 = vsub.f32 %v2890, %v3238
    %v3250 = vsub.f32 %v2893, %v3238
    %v3251 = vsub.f32 %v2898, %v3238
    %v3252 = vsub.f32 %v2901, %v3238
    %v3253 = vsub.f32 %v2906, %v3238
    %v3254 = vsub.f32 %v2909, %v3238
    %v3255 = vsub.f32 %v2914, %v3238
    %v3256 = vsub.f32 %v2917, %v3238
    %v3257 = vsub.f32 %v2922, %v3238
    %v3258 = vsub.f32 %v2925, %v3238
    %v3259 = vsub.f32 %v2930, %v3238
    %v3260 = vsub.f32 %v2933, %v3238
    %v3261 = vsub.f32 %v2938, %v3238
    %v3262 = vsub.f32 %v2941, %v3238
    %v3263 = vsub.f32 %v2946, %v3238
    %v3264 = vsub.f32 %v2949, %v3238
    %v3265 = vsub.f32 %v2954, %v3238
    %v3266 = vsub.f32 %v2957, %v3238
    %v3267 = vsub.f32 %v2962, %v3238
    %v3268 = vsub.f32 %v2965, %v3238
    %v3269 = vsub.f32 %v2970, %v3238
    %v3270 = vsub.f32 %v2973, %v3238
    %v3271 = vsub.f32 %v2978, %v3238
    %v3272 = vsub.f32 %v2981, %v3238
    %v3273 = vsub.f32 %v2986, %v3238
    %v3274 = vsub.f32 %v2989, %v3238
    %v3275 = vsub.f32 %v2994, %v3238
    %v3276 = vsub.f32 %v2997, %v3238
    %v3277 = vsub.f32 %v3002, %v3238
    %v3278 = vsub.f32 %v3005, %v3238
    %v3279 = vsub.f32 %v3010, %v3238
    %v3280 = vsub.f32 %v3013, %v3238
    %v3281 = vsub.f32 %v3018, %v3238
    %v3282 = vsub.f32 %v3021, %v3238
    %v3283 = vsub.f32 %v3026, %v3238
    %v3284 = vsub.f32 %v3029, %v3238
    %v3285 = vsub.f32 %v3034, %v3238
    %v3286 = vsub.f32 %v3037, %v3238
    %v3287 = vsub.f32 %v3042, %v3238
    %v3288 = vsub.f32 %v3045, %v3238
    %v3289 = vsub.f32 %v3050, %v3238
    %v3290 = vsub.f32 %v3053, %v3238
    %v3291 = vsub.f32 %v3058, %v3238
    %v3292 = vsub.f32 %v3061, %v3238
    %v3293 = vsub.f32 %v3066, %v3238
    %v3294 = vsub.f32 %v3069, %v3238
    %v3295 = vsub.f32 %v3074, %v3238
    %v3296 = vsub.f32 %v3077, %v3238
    %v3297 = vsub.f32 %v3082, %v3238
    %v3298 = vsub.f32 %v3085, %v3238
    %v3299 = vsub.f32 %v3090, %v3238
    %v3300 = vsub.f32 %v3093, %v3238
    %v3301 = vsub.f32 %v3098, %v3238
    %v3302 = vsub.f32 %v3101, %v3238
    %v3303 = vmul.f32 %v3239, %v3239
    %v3304 = vmul.f32 %v3240, %v3240
    %v3305 = vmul.f32 %v3241, %v3241
    %v3306 = vmul.f32 %v3242, %v3242
    %v3307 = vmul.f32 %v3243, %v3243
    %v3308 = vmul.f32 %v3244, %v3244
    %v3309 = vmul.f32 %v3245, %v3245
    %v3310 = vmul.f32 %v3246, %v3246
    %v3311 = vmul.f32 %v3247, %v3247
    %v3312 = vmul.f32 %v3248, %v3248
    %v3313 = vmul.f32 %v3249, %v3249
    %v3314 = vmul.f32 %v3250, %v3250
    %v3315 = vmul.f32 %v3251, %v3251
    %v3316 = vmul.f32 %v3252, %v3252
    %v3317 = vmul.f32 %v3253, %v3253
    %v3318 = vmul.f32 %v3254, %v3254
    %v3319 = vmul.f32 %v3255, %v3255
    %v3320 = vmul.f32 %v3256, %v3256
    %v3321 = vmul.f32 %v3257, %v3257
    %v3322 = vmul.f32 %v3258, %v3258
    %v3323 = vmul.f32 %v3259, %v3259
    %v3324 = vmul.f32 %v3260, %v3260
    %v3325 = vmul.f32 %v3261, %v3261
    %v3326 = vmul.f32 %v3262, %v3262
    %v3327 = vmul.f32 %v3263, %v3263
    %v3328 = vmul.f32 %v3264, %v3264
    %v3329 = vmul.f32 %v3265, %v3265
    %v3330 = vmul.f32 %v3266, %v3266
    %v3331 = vmul.f32 %v3267, %v3267
    %v3332 = vmul.f32 %v3268, %v3268
    %v3333 = vmul.f32 %v3269, %v3269
    %v3334 = vmul.f32 %v3270, %v3270
    %v3335 = vmul.f32 %v3271, %v3271
    %v3336 = vmul.f32 %v3272, %v3272
    %v3337 = vmul.f32 %v3273, %v3273
    %v3338 = vmul.f32 %v3274, %v3274
    %v3339 = vmul.f32 %v3275, %v3275
    %v3340 = vmul.f32 %v3276, %v3276
    %v3341 = vmul.f32 %v3277, %v3277
    %v3342 = vmul.f32 %v3278, %v3278
    %v3343 = vmul.f32 %v3279, %v3279
    %v3344 = vmul.f32 %v3280, %v3280
    %v3345 = vmul.f32 %v3281, %v3281
    %v3346 = vmul.f32 %v3282, %v3282
    %v3347 = vmul.f32 %v3283, %v3283
    %v3348 = vmul.f32 %v3284, %v3284
    %v3349 = vmul.f32 %v3285, %v3285
    %v3350 = vmul.f32 %v3286, %v3286
    %v3351 = vmul.f32 %v3287, %v3287
    %v3352 = vmul.f32 %v3288, %v3288
    %v3353 = vmul.f32 %v3289, %v3289
    %v3354 = vmul.f32 %v3290, %v3290
    %v3355 = vmul.f32 %v3291, %v3291
    %v3356 = vmul.f32 %v3292, %v3292
    %v3357 = vmul.f32 %v3293, %v3293
    %v3358 = vmul.f32 %v3294, %v3294
    %v3359 = vmul.f32 %v3295, %v3295
    %v3360 = vmul.f32 %v3296, %v3296
    %v3361 = vmul.f32 %v3297, %v3297
    %v3362 = vmul.f32 %v3298, %v3298
    %v3363 = vmul.f32 %v3299, %v3299
    %v3364 = vmul.f32 %v3300, %v3300
    %v3365 = vmul.f32 %v3301, %v3301
    %v3366 = vmul.f32 %v3302, %v3302
    %v3367 = vsel %vm2142, %v3303, 0.0
    %v3368 = vsel %vm2142, %v3304, 0.0
    %v3369 = vadd.f32 %v3367, %v3368
    %v3370 = vsel %vm2142, %v3305, 0.0
    %v3371 = vadd.f32 %v3369, %v3370
    %v3372 = vsel %vm2142, %v3306, 0.0
    %v3373 = vadd.f32 %v3371, %v3372
    %v3374 = vsel %vm2142, %v3307, 0.0
    %v3375 = vadd.f32 %v3373, %v3374
    %v3376 = vsel %vm2142, %v3308, 0.0
    %v3377 = vadd.f32 %v3375, %v3376
    %v3378 = vsel %vm2142, %v3309, 0.0
    %v3379 = vadd.f32 %v3377, %v3378
    %v3380 = vsel %vm2142, %v3310, 0.0
    %v3381 = vadd.f32 %v3379, %v3380
    %v3382 = vsel %vm2142, %v3311, 0.0
    %v3383 = vadd.f32 %v3381, %v3382
    %v3384 = vsel %vm2142, %v3312, 0.0
    %v3385 = vadd.f32 %v3383, %v3384
    %v3386 = vsel %vm2142, %v3313, 0.0
    %v3387 = vadd.f32 %v3385, %v3386
    %v3388 = vsel %vm2142, %v3314, 0.0
    %v3389 = vadd.f32 %v3387, %v3388
    %v3390 = vsel %vm2142, %v3315, 0.0
    %v3391 = vadd.f32 %v3389, %v3390
    %v3392 = vsel %vm2142, %v3316, 0.0
    %v3393 = vadd.f32 %v3391, %v3392
    %v3394 = vsel %vm2142, %v3317, 0.0
    %v3395 = vadd.f32 %v3393, %v3394
    %v3396 = vsel %vm2142, %v3318, 0.0
    %v3397 = vadd.f32 %v3395, %v3396
    %v3398 = vsel %vm2142, %v3319, 0.0
    %v3399 = vadd.f32 %v3397, %v3398
    %v3400 = vsel %vm2142, %v3320, 0.0
    %v3401 = vadd.f32 %v3399, %v3400
    %v3402 = vsel %vm2142, %v3321, 0.0
    %v3403 = vadd.f32 %v3401, %v3402
    %v3404 = vsel %vm2142, %v3322, 0.0
    %v3405 = vadd.f32 %v3403, %v3404
    %v3406 = vsel %vm2142, %v3323, 0.0
    %v3407 = vadd.f32 %v3405, %v3406
    %v3408 = vsel %vm2142, %v3324, 0.0
    %v3409 = vadd.f32 %v3407, %v3408
    %v3410 = vsel %vm2142, %v3325, 0.0
    %v3411 = vadd.f32 %v3409, %v3410
    %v3412 = vsel %vm2142, %v3326, 0.0
    %v3413 = vadd.f32 %v3411, %v3412
    %v3414 = vsel %vm2142, %v3327, 0.0
    %v3415 = vadd.f32 %v3413, %v3414
    %v3416 = vsel %vm2142, %v3328, 0.0
    %v3417 = vadd.f32 %v3415, %v3416
    %v3418 = vsel %vm2142, %v3329, 0.0
    %v3419 = vadd.f32 %v3417, %v3418
    %v3420 = vsel %vm2142, %v3330, 0.0
    %v3421 = vadd.f32 %v3419, %v3420
    %v3422 = vsel %vm2142, %v3331, 0.0
    %v3423 = vadd.f32 %v3421, %v3422
    %v3424 = vsel %vm2142, %v3332, 0.0
    %v3425 = vadd.f32 %v3423, %v3424
    %v3426 = vsel %vm2142, %v3333, 0.0
    %v3427 = vadd.f32 %v3425, %v3426
    %v3428 = vsel %vm2142, %v3334, 0.0
    %v3429 = vadd.f32 %v3427, %v3428
    %v3430 = vsel %vm2142, %v3335, 0.0
    %v3431 = vadd.f32 %v3429, %v3430
    %v3432 = vsel %vm2142, %v3336, 0.0
    %v3433 = vadd.f32 %v3431, %v3432
    %v3434 = vsel %vm2142, %v3337, 0.0
    %v3435 = vadd.f32 %v3433, %v3434
    %v3436 = vsel %vm2142, %v3338, 0.0
    %v3437 = vadd.f32 %v3435, %v3436
    %v3438 = vsel %vm2142, %v3339, 0.0
    %v3439 = vadd.f32 %v3437, %v3438
    %v3440 = vsel %vm2142, %v3340, 0.0
    %v3441 = vadd.f32 %v3439, %v3440
    %v3442 = vsel %vm2142, %v3341, 0.0
    %v3443 = vadd.f32 %v3441, %v3442
    %v3444 = vsel %vm2142, %v3342, 0.0
    %v3445 = vadd.f32 %v3443, %v3444
    %v3446 = vsel %vm2142, %v3343, 0.0
    %v3447 = vadd.f32 %v3445, %v3446
    %v3448 = vsel %vm2142, %v3344, 0.0
    %v3449 = vadd.f32 %v3447, %v3448
    %v3450 = vsel %vm2142, %v3345, 0.0
    %v3451 = vadd.f32 %v3449, %v3450
    %v3452 = vsel %vm2142, %v3346, 0.0
    %v3453 = vadd.f32 %v3451, %v3452
    %v3454 = vsel %vm2142, %v3347, 0.0
    %v3455 = vadd.f32 %v3453, %v3454
    %v3456 = vsel %vm2142, %v3348, 0.0
    %v3457 = vadd.f32 %v3455, %v3456
    %v3458 = vsel %vm2142, %v3349, 0.0
    %v3459 = vadd.f32 %v3457, %v3458
    %v3460 = vsel %vm2142, %v3350, 0.0
    %v3461 = vadd.f32 %v3459, %v3460
    %v3462 = vsel %vm2142, %v3351, 0.0
    %v3463 = vadd.f32 %v3461, %v3462
    %v3464 = vsel %vm2142, %v3352, 0.0
    %v3465 = vadd.f32 %v3463, %v3464
    %v3466 = vsel %vm2142, %v3353, 0.0
    %v3467 = vadd.f32 %v3465, %v3466
    %v3468 = vsel %vm2142, %v3354, 0.0
    %v3469 = vadd.f32 %v3467, %v3468
    %v3470 = vsel %vm2142, %v3355, 0.0
    %v3471 = vadd.f32 %v3469, %v3470
    %v3472 = vsel %vm2142, %v3356, 0.0
    %v3473 = vadd.f32 %v3471, %v3472
    %v3474 = vsel %vm2142, %v3357, 0.0
    %v3475 = vadd.f32 %v3473, %v3474
    %v3476 = vsel %vm2142, %v3358, 0.0
    %v3477 = vadd.f32 %v3475, %v3476
    %v3478 = vsel %vm2142, %v3359, 0.0
    %v3479 = vadd.f32 %v3477, %v3478
    %v3480 = vsel %vm2142, %v3360, 0.0
    %v3481 = vadd.f32 %v3479, %v3480
    %v3482 = vsel %vm2142, %v3361, 0.0
    %v3483 = vadd.f32 %v3481, %v3482
    %v3484 = vsel %vm2142, %v3362, 0.0
    %v3485 = vadd.f32 %v3483, %v3484
    %v3486 = vsel %vm2142, %v3363, 0.0
    %v3487 = vadd.f32 %v3485, %v3486
    %v3488 = vsel %vm2142, %v3364, 0.0
    %v3489 = vadd.f32 %v3487, %v3488
    %v3490 = vsel %vm2142, %v3365, 0.0
    %v3491 = vadd.f32 %v3489, %v3490
    %v3492 = vsel %vm2142, %v3366, 0.0
    %v3493 = vadd.f32 %v3491, %v3492
    %v3494 = vrot.slane %v3493, 4
    %v3495 = vadd.f32 %v3493, %v3494
    %v3496 = vrot.slane %v3495, 2
    %v3497 = vadd.f32 %v3495, %v3496
    %v3498 = vrot.slane %v3497, 1
    %v3499 = vadd.f32 %v3497, %v3498
    %v3500 = vmul.f32 %v3499, %v3237
    %v3501 = vld [vmem:[%s2] sm:$0x1]
    %v3502 = vadd.f32 %v3500, 1e-05
    %v3503 = vrsqrt.pop %v3502
    %v3504 = vmul.f32 %v3501, %v3503
    %v3505 = vld [vmem:[%s3] sm:$0x1]
    %v3506 = vmul.f32 %v3238, %v3504
    %v3507 = vsub.f32 %v3505, %v3506
    %v3509 = vlaneseq
    %v3510 = vshrl.u32 %v3509, 7
    %v3511 = vsub.s32 0, %v3510
    %v3512 = vrot.slane %v3504, %v3511
    %v3514 = vmul.f32 %v2850, %v3512
    %v3515 = vmul.f32 %v2853, %v3512
    %v3516 = vmul.f32 %v2858, %v3512
    %v3517 = vmul.f32 %v2861, %v3512
    %v3518 = vmul.f32 %v2866, %v3512
    %v3519 = vmul.f32 %v2869, %v3512
    %v3520 = vmul.f32 %v2874, %v3512
    %v3521 = vmul.f32 %v2877, %v3512
    %v3522 = vmul.f32 %v2882, %v3512
    %v3523 = vmul.f32 %v2885, %v3512
    %v3524 = vmul.f32 %v2890, %v3512
    %v3525 = vmul.f32 %v2893, %v3512
    %v3526 = vmul.f32 %v2898, %v3512
    %v3527 = vmul.f32 %v2901, %v3512
    %v3528 = vmul.f32 %v2906, %v3512
    %v3529 = vmul.f32 %v2909, %v3512
    %v3530 = vmul.f32 %v2914, %v3512
    %v3531 = vmul.f32 %v2917, %v3512
    %v3532 = vmul.f32 %v2922, %v3512
    %v3533 = vmul.f32 %v2925, %v3512
    %v3534 = vmul.f32 %v2930, %v3512
    %v3535 = vmul.f32 %v2933, %v3512
    %v3536 = vmul.f32 %v2938, %v3512
    %v3537 = vmul.f32 %v2941, %v3512
    %v3538 = vmul.f32 %v2946, %v3512
    %v3539 = vmul.f32 %v2949, %v3512
    %v3540 = vmul.f32 %v2954, %v3512
    %v3541 = vmul.f32 %v2957, %v3512
    %v3542 = vmul.f32 %v2962, %v3512
    %v3543 = vmul.f32 %v2965, %v3512
    %v3544 = vmul.f32 %v2970, %v3512
    %v3545 = vmul.f32 %v2973, %v3512
    %v3546 = vmul.f32 %v2978, %v3512
    %v3547 = vmul.f32 %v2981, %v3512
    %v3548 = vmul.f32 %v2986, %v3512
    %v3549 = vmul.f32 %v2989, %v3512
    %v3550 = vmul.f32 %v2994, %v3512
    %v3551 = vmul.f32 %v2997, %v3512
    %v3552 = vmul.f32 %v3002, %v3512
    %v3553 = vmul.f32 %v3005, %v3512
    %v3554 = vmul.f32 %v3010, %v3512
    %v3555 = vmul.f32 %v3013, %v3512
    %v3556 = vmul.f32 %v3018, %v3512
    %v3557 = vmul.f32 %v3021, %v3512
    %v3558 = vmul.f32 %v3026, %v3512
    %v3559 = vmul.f32 %v3029, %v3512
    %v3560 = vmul.f32 %v3034, %v3512
    %v3561 = vmul.f32 %v3037, %v3512
    %v3562 = vmul.f32 %v3042, %v3512
    %v3563 = vmul.f32 %v3045, %v3512
    %v3564 = vmul.f32 %v3050, %v3512
    %v3565 = vmul.f32 %v3053, %v3512
    %v3566 = vmul.f32 %v3058, %v3512
    %v3567 = vmul.f32 %v3061, %v3512
    %v3568 = vmul.f32 %v3066, %v3512
    %v3569 = vmul.f32 %v3069, %v3512
    %v3570 = vmul.f32 %v3074, %v3512
    %v3571 = vmul.f32 %v3077, %v3512
    %v3572 = vmul.f32 %v3082, %v3512
    %v3573 = vmul.f32 %v3085, %v3512
    %v3574 = vmul.f32 %v3090, %v3512
    %v3575 = vmul.f32 %v3093, %v3512
    %v3576 = vmul.f32 %v3098, %v3512
    %v3577 = vmul.f32 %v3101, %v3512
    %v3579 = vlaneseq
    %v3580 = vshrl.u32 %v3579, 7
    %v3581 = vsub.s32 0, %v3580
    %v3582 = vrot.slane %v3507, %v3581
    %v3584 = vadd.f32 %v3514, %v3582
    %v3585 = vadd.f32 %v3515, %v3582
    %v3586 = vadd.f32 %v3516, %v3582
    %v3587 = vadd.f32 %v3517, %v3582
    %v3588 = vadd.f32 %v3518, %v3582
    %v3589 = vadd.f32 %v3519, %v3582
    %v3590 = vadd.f32 %v3520, %v3582
    %v3591 = vadd.f32 %v3521, %v3582
    %v3592 = vadd.f32 %v3522, %v3582
    %v3593 = vadd.f32 %v3523, %v3582
    %v3594 = vadd.f32 %v3524, %v3582
    %v3595 = vadd.f32 %v3525, %v3582
    %v3596 = vadd.f32 %v3526, %v3582
    %v3597 = vadd.f32 %v3527, %v3582
    %v3598 = vadd.f32 %v3528, %v3582
    %v3599 = vadd.f32 %v3529, %v3582
    %v3600 = vadd.f32 %v3530, %v3582
    %v3601 = vadd.f32 %v3531, %v3582
    %v3602 = vadd.f32 %v3532, %v3582
    %v3603 = vadd.f32 %v3533, %v3582
    %v3604 = vadd.f32 %v3534, %v3582
    %v3605 = vadd.f32 %v3535, %v3582
    %v3606 = vadd.f32 %v3536, %v3582
    %v3607 = vadd.f32 %v3537, %v3582
    %v3608 = vadd.f32 %v3538, %v3582
    %v3609 = vadd.f32 %v3539, %v3582
    %v3610 = vadd.f32 %v3540, %v3582
    %v3611 = vadd.f32 %v3541, %v3582
    %v3612 = vadd.f32 %v3542, %v3582
    %v3613 = vadd.f32 %v3543, %v3582
    %v3614 = vadd.f32 %v3544, %v3582
    %v3615 = vadd.f32 %v3545, %v3582
    %v3616 = vadd.f32 %v3546, %v3582
    %v3617 = vadd.f32 %v3547, %v3582
    %v3618 = vadd.f32 %v3548, %v3582
    %v3619 = vadd.f32 %v3549, %v3582
    %v3620 = vadd.f32 %v3550, %v3582
    %v3621 = vadd.f32 %v3551, %v3582
    %v3622 = vadd.f32 %v3552, %v3582
    %v3623 = vadd.f32 %v3553, %v3582
    %v3624 = vadd.f32 %v3554, %v3582
    %v3625 = vadd.f32 %v3555, %v3582
    %v3626 = vadd.f32 %v3556, %v3582
    %v3627 = vadd.f32 %v3557, %v3582
    %v3628 = vadd.f32 %v3558, %v3582
    %v3629 = vadd.f32 %v3559, %v3582
    %v3630 = vadd.f32 %v3560, %v3582
    %v3631 = vadd.f32 %v3561, %v3582
    %v3632 = vadd.f32 %v3562, %v3582
    %v3633 = vadd.f32 %v3563, %v3582
    %v3634 = vadd.f32 %v3564, %v3582
    %v3635 = vadd.f32 %v3565, %v3582
    %v3636 = vadd.f32 %v3566, %v3582
    %v3637 = vadd.f32 %v3567, %v3582
    %v3638 = vadd.f32 %v3568, %v3582
    %v3639 = vadd.f32 %v3569, %v3582
    %v3640 = vadd.f32 %v3570, %v3582
    %v3641 = vadd.f32 %v3571, %v3582
    %v3642 = vadd.f32 %v3572, %v3582
    %v3643 = vadd.f32 %v3573, %v3582
    %v3644 = vadd.f32 %v3574, %v3582
    %v3645 = vadd.f32 %v3575, %v3582
    %v3646 = vadd.f32 %v3576, %v3582
    %v3647 = vadd.f32 %v3577, %v3582
    %v3648 = vmax.f32 %v3584, 0.0
    %v3649 = vmax.f32 %v3585, 0.0
    %v3650 = vmax.f32 %v3586, 0.0
    %v3651 = vmax.f32 %v3587, 0.0
    %v3652 = vmax.f32 %v3588, 0.0
    %v3653 = vmax.f32 %v3589, 0.0
    %v3654 = vmax.f32 %v3590, 0.0
    %v3655 = vmax.f32 %v3591, 0.0
    %v3656 = vmax.f32 %v3592, 0.0
    %v3657 = vmax.f32 %v3593, 0.0
    %v3658 = vmax.f32 %v3594, 0.0
    %v3659 = vmax.f32 %v3595, 0.0
    %v3660 = vmax.f32 %v3596, 0.0
    %v3661 = vmax.f32 %v3597, 0.0
    %v3662 = vmax.f32 %v3598, 0.0
    %v3663 = vmax.f32 %v3599, 0.0
    %v3664 = vmax.f32 %v3600, 0.0
    %v3665 = vmax.f32 %v3601, 0.0
    %v3666 = vmax.f32 %v3602, 0.0
    %v3667 = vmax.f32 %v3603, 0.0
    %v3668 = vmax.f32 %v3604, 0.0
    %v3669 = vmax.f32 %v3605, 0.0
    %v3670 = vmax.f32 %v3606, 0.0
    %v3671 = vmax.f32 %v3607, 0.0
    %v3672 = vmax.f32 %v3608, 0.0
    %v3673 = vmax.f32 %v3609, 0.0
    %v3674 = vmax.f32 %v3610, 0.0
    %v3675 = vmax.f32 %v3611, 0.0
    %v3676 = vmax.f32 %v3612, 0.0
    %v3677 = vmax.f32 %v3613, 0.0
    %v3678 = vmax.f32 %v3614, 0.0
    %v3679 = vmax.f32 %v3615, 0.0
    %v3680 = vmax.f32 %v3616, 0.0
    %v3681 = vmax.f32 %v3617, 0.0
    %v3682 = vmax.f32 %v3618, 0.0
    %v3683 = vmax.f32 %v3619, 0.0
    %v3684 = vmax.f32 %v3620, 0.0
    %v3685 = vmax.f32 %v3621, 0.0
    %v3686 = vmax.f32 %v3622, 0.0
    %v3687 = vmax.f32 %v3623, 0.0
    %v3688 = vmax.f32 %v3624, 0.0
    %v3689 = vmax.f32 %v3625, 0.0
    %v3690 = vmax.f32 %v3626, 0.0
    %v3691 = vmax.f32 %v3627, 0.0
    %v3692 = vmax.f32 %v3628, 0.0
    %v3693 = vmax.f32 %v3629, 0.0
    %v3694 = vmax.f32 %v3630, 0.0
    %v3695 = vmax.f32 %v3631, 0.0
    %v3696 = vmax.f32 %v3632, 0.0
    %v3697 = vmax.f32 %v3633, 0.0
    %v3698 = vmax.f32 %v3634, 0.0
    %v3699 = vmax.f32 %v3635, 0.0
    %v3700 = vmax.f32 %v3636, 0.0
    %v3701 = vmax.f32 %v3637, 0.0
    %v3702 = vmax.f32 %v3638, 0.0
    %v3703 = vmax.f32 %v3639, 0.0
    %v3704 = vmax.f32 %v3640, 0.0
    %v3705 = vmax.f32 %v3641, 0.0
    %v3706 = vmax.f32 %v3642, 0.0
    %v3707 = vmax.f32 %v3643, 0.0
    %v3708 = vmax.f32 %v3644, 0.0
    %v3709 = vmax.f32 %v3645, 0.0
    %v3710 = vmax.f32 %v3646, 0.0
    %v3711 = vmax.f32 %v3647, 0.0
    %3712 = vst.msk [vmem:[#allocation2] sm:$0xff] %vm2142, 0.0
    %3713 = vst.msk [vmem:[#allocation2 + $0x8] sm:$0xff] %vm2142, 0.0
    %vm3714 = vcmask 25600
    %3715 = vst.msk [vmem:[#allocation2 + $0x10] sm:$0x3] %vm3714, 0.0
    %3716 = vst.msk [vmem:[#allocation2 + $0x1b0] sm:$0xff] %vm2142, 0.0
    %3717 = vst.msk [vmem:[#allocation2 + $0x1b8] sm:$0xff] %vm2142, 0.0
    %3718 = vst.msk [vmem:[#allocation2 + $0x1c0] sm:$0x3] %vm3714, 0.0
    %s3719 = scalar_lea.vmem [#allocation2], 408
    %3720 = vst.msk [vmem:[%s3719] sm:$0xff] %vm2142, 0.0
    %3721 = vst.msk [vmem:[%s3719 + $0x8] sm:$0xff] %vm2142, 0.0
    %3722 = vst.msk [vmem:[%s3719 + $0x10] sm:$0x3] %vm3714, 0.0
    %3723 = vst.msk [vmem:[%s3719 + $0x1b0] sm:$0xff] %vm2142, 0.0
    %3724 = vst.msk [vmem:[%s3719 + $0x1b8] sm:$0xff] %vm2142, 0.0
    %3725 = vst.msk [vmem:[%s3719 + $0x1c0] sm:$0x3] %vm3714, 0.0
    %vm3726 = vcmask 24576
    %3727 = vst.msk [vmem:[#allocation2] sm:$0x1] %vm3726, 0.0
    %3728 = vst.msk [vmem:[#allocation2 + $0x18] sm:$0x1] %vm3726, 0.0
    %3729 = vst.msk [vmem:[#allocation2 + $0x30] sm:$0x1] %vm3726, 0.0
    %3730 = vst.msk [vmem:[#allocation2 + $0x48] sm:$0x1] %vm3726, 0.0
    %3731 = vst.msk [vmem:[#allocation2 + $0x60] sm:$0x1] %vm3726, 0.0
    %3732 = vst.msk [vmem:[#allocation2 + $0x78] sm:$0x1] %vm3726, 0.0
    %3733 = vst.msk [vmem:[#allocation2 + $0x90] sm:$0x1] %vm3726, 0.0
    %3734 = vst.msk [vmem:[#allocation2 + $0xa8] sm:$0x1] %vm3726, 0.0
    %3735 = vst.msk [vmem:[#allocation2 + $0xc0] sm:$0x1] %vm3726, 0.0
    %3736 = vst.msk [vmem:[#allocation2 + $0xd8] sm:$0x1] %vm3726, 0.0
    %3737 = vst.msk [vmem:[#allocation2 + $0xf0] sm:$0x1] %vm3726, 0.0
    %3738 = vst.msk [vmem:[#allocation2 + $0x108] sm:$0x1] %vm3726, 0.0
    %3739 = vst.msk [vmem:[#allocation2 + $0x120] sm:$0x1] %vm3726, 0.0
    %3740 = vst.msk [vmem:[#allocation2 + $0x138] sm:$0x1] %vm3726, 0.0
    %3741 = vst.msk [vmem:[#allocation2 + $0x150] sm:$0x1] %vm3726, 0.0
    %3742 = vst.msk [vmem:[#allocation2 + $0x168] sm:$0x1] %vm3726, 0.0
    %3743 = vst.msk [vmem:[#allocation2 + $0x180] sm:$0x1] %vm3726, 0.0
    %3744 = vst.msk [vmem:[#allocation2 + $0x198] sm:$0x1] %vm3726, 0.0
    %3745 = vst.msk [vmem:[#allocation2 + $0x1b0] sm:$0x1] %vm3726, 0.0
    %3746 = vst.msk [vmem:[#allocation2 + $0x1c8] sm:$0x1] %vm3726, 0.0
    %3747 = vst.msk [vmem:[#allocation2 + $0x1e0] sm:$0x1] %vm3726, 0.0
    %3748 = vst.msk [vmem:[#allocation2 + $0x1f8] sm:$0x1] %vm3726, 0.0
    %3749 = vst.msk [vmem:[#allocation2 + $0x210] sm:$0x1] %vm3726, 0.0
    %3750 = vst.msk [vmem:[#allocation2 + $0x228] sm:$0x1] %vm3726, 0.0
    %3751 = vst.msk [vmem:[#allocation2 + $0x240] sm:$0x1] %vm3726, 0.0
    %3752 = vst.msk [vmem:[#allocation2 + $0x258] sm:$0x1] %vm3726, 0.0
    %3753 = vst.msk [vmem:[#allocation2 + $0x270] sm:$0x1] %vm3726, 0.0
    %3754 = vst.msk [vmem:[#allocation2 + $0x288] sm:$0x1] %vm3726, 0.0
    %3755 = vst.msk [vmem:[#allocation2 + $0x2a0] sm:$0x1] %vm3726, 0.0
    %3756 = vst.msk [vmem:[#allocation2 + $0x2b8] sm:$0x1] %vm3726, 0.0
    %3757 = vst.msk [vmem:[#allocation2 + $0x2d0] sm:$0x1] %vm3726, 0.0
    %3758 = vst.msk [vmem:[#allocation2 + $0x2e8] sm:$0x1] %vm3726, 0.0
    %3759 = vst.msk [vmem:[#allocation2 + $0x300] sm:$0x1] %vm3726, 0.0
    %3760 = vst.msk [vmem:[#allocation2 + $0x318] sm:$0x1] %vm3726, 0.0
    %3761 = vst.msk [vmem:[#allocation2 + $0x330] sm:$0x1] %vm3726, 0.0
    %3762 = vst.msk [vmem:[#allocation2 + $0x348] sm:$0x1] %vm3726, 0.0
    %3763 = vst.msk [vmem:[#allocation2 + $0x11] sm:$0x1] %vm3726, 0.0
    %3764 = vst.msk [vmem:[#allocation2 + $0x29] sm:$0x1] %vm3726, 0.0
    %3765 = vst.msk [vmem:[#allocation2 + $0x41] sm:$0x1] %vm3726, 0.0
    %3766 = vst.msk [vmem:[#allocation2 + $0x59] sm:$0x1] %vm3726, 0.0
    %3767 = vst.msk [vmem:[#allocation2 + $0x71] sm:$0x1] %vm3726, 0.0
    %3768 = vst.msk [vmem:[#allocation2 + $0x89] sm:$0x1] %vm3726, 0.0
    %3769 = vst.msk [vmem:[#allocation2 + $0xa1] sm:$0x1] %vm3726, 0.0
    %3770 = vst.msk [vmem:[#allocation2 + $0xb9] sm:$0x1] %vm3726, 0.0
    %3771 = vst.msk [vmem:[#allocation2 + $0xd1] sm:$0x1] %vm3726, 0.0
    %3772 = vst.msk [vmem:[#allocation2 + $0xe9] sm:$0x1] %vm3726, 0.0
    %3773 = vst.msk [vmem:[#allocation2 + $0x101] sm:$0x1] %vm3726, 0.0
    %3774 = vst.msk [vmem:[#allocation2 + $0x119] sm:$0x1] %vm3726, 0.0
    %3775 = vst.msk [vmem:[#allocation2 + $0x131] sm:$0x1] %vm3726, 0.0
    %3776 = vst.msk [vmem:[#allocation2 + $0x149] sm:$0x1] %vm3726, 0.0
    %3777 = vst.msk [vmem:[#allocation2 + $0x161] sm:$0x1] %vm3726, 0.0
    %3778 = vst.msk [vmem:[#allocation2 + $0x179] sm:$0x1] %vm3726, 0.0
    %3779 = vst.msk [vmem:[#allocation2 + $0x191] sm:$0x1] %vm3726, 0.0
    %3780 = vst.msk [vmem:[#allocation2 + $0x1a9] sm:$0x1] %vm3726, 0.0
    %3781 = vst.msk [vmem:[#allocation2 + $0x1c1] sm:$0x1] %vm3726, 0.0
    %3782 = vst.msk [vmem:[#allocation2 + $0x1d9] sm:$0x1] %vm3726, 0.0
    %3783 = vst.msk [vmem:[#allocation2 + $0x1f1] sm:$0x1] %vm3726, 0.0
    %3784 = vst.msk [vmem:[#allocation2 + $0x209] sm:$0x1] %vm3726, 0.0
    %3785 = vst.msk [vmem:[#allocation2 + $0x221] sm:$0x1] %vm3726, 0.0
    %3786 = vst.msk [vmem:[#allocation2 + $0x239] sm:$0x1] %vm3726, 0.0
    %3787 = vst.msk [vmem:[#allocation2 + $0x251] sm:$0x1] %vm3726, 0.0
    %3788 = vst.msk [vmem:[#allocation2 + $0x269] sm:$0x1] %vm3726, 0.0
    %3789 = vst.msk [vmem:[#allocation2 + $0x281] sm:$0x1] %vm3726, 0.0
    %3790 = vst.msk [vmem:[#allocation2 + $0x299] sm:$0x1] %vm3726, 0.0
    %3791 = vst.msk [vmem:[#allocation2 + $0x2b1] sm:$0x1] %vm3726, 0.0
    %3792 = vst.msk [vmem:[#allocation2 + $0x2c9] sm:$0x1] %vm3726, 0.0
    %3793 = vst.msk [vmem:[#allocation2 + $0x2e1] sm:$0x1] %vm3726, 0.0
    %3794 = vst.msk [vmem:[#allocation2 + $0x2f9] sm:$0x1] %vm3726, 0.0
    %3795 = vst.msk [vmem:[#allocation2 + $0x311] sm:$0x1] %vm3726, 0.0
    %3796 = vst.msk [vmem:[#allocation2 + $0x329] sm:$0x1] %vm3726, 0.0
    %3797 = vst.msk [vmem:[#allocation2 + $0x341] sm:$0x1] %vm3726, 0.0
    %3798 = vst.msk [vmem:[#allocation2 + $0x359] sm:$0x1] %vm3726, 0.0
    %s3799 = scalar_lea.vmem [#allocation2], 24
    %3800 = vst.msk [vmem:[%s3799 + $0x1] sm:$0xff] %vm2142, %v3648
    %3801 = vst.msk [vmem:[%s3799 + $0x9] sm:$0xff] %vm2142, %v3649
    %3802 = vst.msk [vmem:[%s3799 + $0x19] sm:$0xff] %vm2142, %v3650
    %3803 = vst.msk [vmem:[%s3799 + $0x21] sm:$0xff] %vm2142, %v3651
    %3804 = vst.msk [vmem:[%s3799 + $0x31] sm:$0xff] %vm2142, %v3652
    %3805 = vst.msk [vmem:[%s3799 + $0x39] sm:$0xff] %vm2142, %v3653
    %3806 = vst.msk [vmem:[%s3799 + $0x49] sm:$0xff] %vm2142, %v3654
    %3807 = vst.msk [vmem:[%s3799 + $0x51] sm:$0xff] %vm2142, %v3655
    %3808 = vst.msk [vmem:[%s3799 + $0x61] sm:$0xff] %vm2142, %v3656
    %3809 = vst.msk [vmem:[%s3799 + $0x69] sm:$0xff] %vm2142, %v3657
    %3810 = vst.msk [vmem:[%s3799 + $0x79] sm:$0xff] %vm2142, %v3658
    %3811 = vst.msk [vmem:[%s3799 + $0x81] sm:$0xff] %vm2142, %v3659
    %3812 = vst.msk [vmem:[%s3799 + $0x91] sm:$0xff] %vm2142, %v3660
    %3813 = vst.msk [vmem:[%s3799 + $0x99] sm:$0xff] %vm2142, %v3661
    %3814 = vst.msk [vmem:[%s3799 + $0xa9] sm:$0xff] %vm2142, %v3662
    %3815 = vst.msk [vmem:[%s3799 + $0xb1] sm:$0xff] %vm2142, %v3663
    %3816 = vst.msk [vmem:[%s3799 + $0xc1] sm:$0xff] %vm2142, %v3664
    %3817 = vst.msk [vmem:[%s3799 + $0xc9] sm:$0xff] %vm2142, %v3665
    %3818 = vst.msk [vmem:[%s3799 + $0xd9] sm:$0xff] %vm2142, %v3666
    %3819 = vst.msk [vmem:[%s3799 + $0xe1] sm:$0xff] %vm2142, %v3667
    %3820 = vst.msk [vmem:[%s3799 + $0xf1] sm:$0xff] %vm2142, %v3668
    %3821 = vst.msk [vmem:[%s3799 + $0xf9] sm:$0xff] %vm2142, %v3669
    %3822 = vst.msk [vmem:[%s3799 + $0x109] sm:$0xff] %vm2142, %v3670
    %3823 = vst.msk [vmem:[%s3799 + $0x111] sm:$0xff] %vm2142, %v3671
    %3824 = vst.msk [vmem:[%s3799 + $0x121] sm:$0xff] %vm2142, %v3672
    %3825 = vst.msk [vmem:[%s3799 + $0x129] sm:$0xff] %vm2142, %v3673
    %3826 = vst.msk [vmem:[%s3799 + $0x139] sm:$0xff] %vm2142, %v3674
    %3827 = vst.msk [vmem:[%s3799 + $0x141] sm:$0xff] %vm2142, %v3675
    %3828 = vst.msk [vmem:[%s3799 + $0x151] sm:$0xff] %vm2142, %v3676
    %3829 = vst.msk [vmem:[%s3799 + $0x159] sm:$0xff] %vm2142, %v3677
    %3830 = vst.msk [vmem:[%s3799 + $0x169] sm:$0xff] %vm2142, %v3678
    %3831 = vst.msk [vmem:[%s3799 + $0x171] sm:$0xff] %vm2142, %v3679
    %3832 = vst.msk [vmem:[%s3799 + $0x1b1] sm:$0xff] %vm2142, %v3680
    %3833 = vst.msk [vmem:[%s3799 + $0x1b9] sm:$0xff] %vm2142, %v3681
    %3834 = vst.msk [vmem:[%s3799 + $0x1c9] sm:$0xff] %vm2142, %v3682
    %3835 = vst.msk [vmem:[%s3799 + $0x1d1] sm:$0xff] %vm2142, %v3683
    %3836 = vst.msk [vmem:[%s3799 + $0x1e1] sm:$0xff] %vm2142, %v3684
    %3837 = vst.msk [vmem:[%s3799 + $0x1e9] sm:$0xff] %vm2142, %v3685
    %3838 = vst.msk [vmem:[%s3799 + $0x1f9] sm:$0xff] %vm2142, %v3686
    %3839 = vst.msk [vmem:[%s3799 + $0x201] sm:$0xff] %vm2142, %v3687
    %3840 = vst.msk [vmem:[%s3799 + $0x211] sm:$0xff] %vm2142, %v3688
    %3841 = vst.msk [vmem:[%s3799 + $0x219] sm:$0xff] %vm2142, %v3689
    %3842 = vst.msk [vmem:[%s3799 + $0x229] sm:$0xff] %vm2142, %v3690
    %3843 = vst.msk [vmem:[%s3799 + $0x231] sm:$0xff] %vm2142, %v3691
    %3844 = vst.msk [vmem:[%s3799 + $0x241] sm:$0xff] %vm2142, %v3692
    %3845 = vst.msk [vmem:[%s3799 + $0x249] sm:$0xff] %vm2142, %v3693
    %3846 = vst.msk [vmem:[%s3799 + $0x259] sm:$0xff] %vm2142, %v3694
    %3847 = vst.msk [vmem:[%s3799 + $0x261] sm:$0xff] %vm2142, %v3695
    %3848 = vst.msk [vmem:[%s3799 + $0x271] sm:$0xff] %vm2142, %v3696
    %3849 = vst.msk [vmem:[%s3799 + $0x279] sm:$0xff] %vm2142, %v3697
    %3850 = vst.msk [vmem:[%s3799 + $0x289] sm:$0xff] %vm2142, %v3698
    %3851 = vst.msk [vmem:[%s3799 + $0x291] sm:$0xff] %vm2142, %v3699
    %3852 = vst.msk [vmem:[%s3799 + $0x2a1] sm:$0xff] %vm2142, %v3700
    %3853 = vst.msk [vmem:[%s3799 + $0x2a9] sm:$0xff] %vm2142, %v3701
    %3854 = vst.msk [vmem:[%s3799 + $0x2b9] sm:$0xff] %vm2142, %v3702
    %3855 = vst.msk [vmem:[%s3799 + $0x2c1] sm:$0xff] %vm2142, %v3703
    %3856 = vst.msk [vmem:[%s3799 + $0x2d1] sm:$0xff] %vm2142, %v3704
    %3857 = vst.msk [vmem:[%s3799 + $0x2d9] sm:$0xff] %vm2142, %v3705
    %3858 = vst.msk [vmem:[%s3799 + $0x2e9] sm:$0xff] %vm2142, %v3706
    %3859 = vst.msk [vmem:[%s3799 + $0x2f1] sm:$0xff] %vm2142, %v3707
    %3860 = vst.msk [vmem:[%s3799 + $0x301] sm:$0xff] %vm2142, %v3708
    %3861 = vst.msk [vmem:[%s3799 + $0x309] sm:$0xff] %vm2142, %v3709
    %3862 = vst.msk [vmem:[%s3799 + $0x319] sm:$0xff] %vm2142, %v3710
    %3863 = vst.msk [vmem:[%s3799 + $0x321] sm:$0xff] %vm2142, %v3711
    %v3864 = vld [vmem:[%s4] sm:$0x3]
    %v3865 = vld [vmem:[#allocation2] sm:$0xff]
    %v3866 = vld [vmem:[#allocation2 + $0x8] sm:$0xff]
    %v3867 = vld [vmem:[#allocation2 + $0x10] sm:$0x3]
    %v3868 = vld [vmem:[#allocation2 + $0x18] sm:$0xff]
    %v3869 = vld [vmem:[#allocation2 + $0x20] sm:$0xff]
    %v3870 = vld [vmem:[#allocation2 + $0x28] sm:$0x3]
    %v3871 = vld [vmem:[#allocation2 + $0x30] sm:$0xff]
    %v3872 = vld [vmem:[#allocation2 + $0x38] sm:$0xff]
    %v3873 = vld [vmem:[#allocation2 + $0x40] sm:$0x3]
    %v3874 = vld [vmem:[#allocation2 + $0x48] sm:$0xff]
    %v3875 = vld [vmem:[#allocation2 + $0x50] sm:$0xff]
    %v3876 = vld [vmem:[#allocation2 + $0x58] sm:$0x3]
    %v3877 = vld [vmem:[#allocation2 + $0x60] sm:$0xff]
    %v3878 = vld [vmem:[#allocation2 + $0x68] sm:$0xff]
    %v3879 = vld [vmem:[#allocation2 + $0x70] sm:$0x3]
    %v3880 = vld [vmem:[#allocation2 + $0x78] sm:$0xff]
    %v3881 = vld [vmem:[#allocation2 + $0x80] sm:$0xff]
    %v3882 = vld [vmem:[#allocation2 + $0x88] sm:$0x3]
    %v3883 = vld [vmem:[#allocation2 + $0x90] sm:$0xff]
    %v3884 = vld [vmem:[#allocation2 + $0x98] sm:$0xff]
    %v3885 = vld [vmem:[#allocation2 + $0xa0] sm:$0x3]
    %v3886 = vld [vmem:[#allocation2 + $0xa8] sm:$0xff]
    %v3887 = vld [vmem:[#allocation2 + $0xb0] sm:$0xff]
    %v3888 = vld [vmem:[#allocation2 + $0xb8] sm:$0x3]
    %v3889 = vld [vmem:[#allocation2 + $0xc0] sm:$0xff]
    %v3890 = vld [vmem:[#allocation2 + $0xc8] sm:$0xff]
    %v3891 = vld [vmem:[#allocation2 + $0xd0] sm:$0x3]
    %v3892 = vld [vmem:[#allocation2 + $0xd8] sm:$0xff]
    %v3893 = vld [vmem:[#allocation2 + $0xe0] sm:$0xff]
    %v3894 = vld [vmem:[#allocation2 + $0xe8] sm:$0x3]
    %v3895 = vld [vmem:[#allocation2 + $0xf0] sm:$0xff]
    %v3896 = vld [vmem:[#allocation2 + $0xf8] sm:$0xff]
    %v3897 = vld [vmem:[#allocation2 + $0x100] sm:$0x3]
    %v3898 = vld [vmem:[#allocation2 + $0x108] sm:$0xff]
    %v3899 = vld [vmem:[#allocation2 + $0x110] sm:$0xff]
    %v3900 = vld [vmem:[#allocation2 + $0x118] sm:$0x3]
    %v3901 = vld [vmem:[#allocation2 + $0x120] sm:$0xff]
    %v3902 = vld [vmem:[#allocation2 + $0x128] sm:$0xff]
    %v3903 = vld [vmem:[#allocation2 + $0x130] sm:$0x3]
    %v3904 = vld [vmem:[#allocation2 + $0x138] sm:$0xff]
    %v3905 = vld [vmem:[#allocation2 + $0x140] sm:$0xff]
    %v3906 = vld [vmem:[#allocation2 + $0x148] sm:$0x3]
    %v3907 = vld [vmem:[#allocation2 + $0x150] sm:$0xff]
    %v3908 = vld [vmem:[#allocation2 + $0x158] sm:$0xff]
    %v3909 = vld [vmem:[#allocation2 + $0x160] sm:$0x3]
    %v3910 = vld [vmem:[#allocation2 + $0x168] sm:$0xff]
    %v3911 = vld [vmem:[#allocation2 + $0x170] sm:$0xff]
    %v3912 = vld [vmem:[#allocation2 + $0x178] sm:$0x3]
    %v3913 = vld [vmem:[#allocation2 + $0x180] sm:$0xff]
    %v3914 = vld [vmem:[#allocation2 + $0x188] sm:$0xff]
    %v3915 = vld [vmem:[#allocation2 + $0x190] sm:$0x3]
    %v3916 = vld [vmem:[#allocation2 + $0x198] sm:$0xff]
    %v3917 = vld [vmem:[#allocation2 + $0x1a0] sm:$0xff]
    %v3918 = vld [vmem:[#allocation2 + $0x1a8] sm:$0x3]
    %v3919 = vld [vmem:[#allocation2 + $0x1b0] sm:$0xff]
    %v3920 = vld [vmem:[#allocation2 + $0x1b8] sm:$0xff]
    %v3921 = vld [vmem:[#allocation2 + $0x1c0] sm:$0x3]
    %v3922 = vld [vmem:[#allocation2 + $0x1c8] sm:$0xff]
    %v3923 = vld [vmem:[#allocation2 + $0x1d0] sm:$0xff]
    %v3924 = vld [vmem:[#allocation2 + $0x1d8] sm:$0x3]
    %v3925 = vld [vmem:[#allocation2 + $0x1e0] sm:$0xff]
    %v3926 = vld [vmem:[#allocation2 + $0x1e8] sm:$0xff]
    %v3927 = vld [vmem:[#allocation2 + $0x1f0] sm:$0x3]
    %v3928 = vld [vmem:[#allocation2 + $0x1f8] sm:$0xff]
    %v3929 = vld [vmem:[#allocation2 + $0x200] sm:$0xff]
    %v3930 = vld [vmem:[#allocation2 + $0x208] sm:$0x3]
    %v3931 = vld [vmem:[#allocation2 + $0x210] sm:$0xff]
    %v3932 = vld [vmem:[#allocation2 + $0x218] sm:$0xff]
    %v3933 = vld [vmem:[#allocation2 + $0x220] sm:$0x3]
    %v3934 = vld [vmem:[#allocation2 + $0x228] sm:$0xff]
    %v3935 = vld [vmem:[#allocation2 + $0x230] sm:$0xff]
    %v3936 = vld [vmem:[#allocation2 + $0x238] sm:$0x3]
    %v3937 = vld [vmem:[#allocation2 + $0x240] sm:$0xff]
    %v3938 = vld [vmem:[#allocation2 + $0x248] sm:$0xff]
    %v3939 = vld [vmem:[#allocation2 + $0x250] sm:$0x3]
    %v3940 = vld [vmem:[#allocation2 + $0x258] sm:$0xff]
    %v3941 = vld [vmem:[#allocation2 + $0x260] sm:$0xff]
    %v3942 = vld [vmem:[#allocation2 + $0x268] sm:$0x3]
    %v3943 = vld [vmem:[#allocation2 + $0x270] sm:$0xff]
    %v3944 = vld [vmem:[#allocation2 + $0x278] sm:$0xff]
    %v3945 = vld [vmem:[#allocation2 + $0x280] sm:$0x3]
    %v3946 = vld [vmem:[#allocation2 + $0x288] sm:$0xff]
    %v3947 = vld [vmem:[#allocation2 + $0x290] sm:$0xff]
    %v3948 = vld [vmem:[#allocation2 + $0x298] sm:$0x3]
    %v3949 = vld [vmem:[#allocation2 + $0x2a0] sm:$0xff]
    %v3950 = vld [vmem:[#allocation2 + $0x2a8] sm:$0xff]
    %v3951 = vld [vmem:[#allocation2 + $0x2b0] sm:$0x3]
    %v3952 = vld [vmem:[#allocation2 + $0x2b8] sm:$0xff]
    %v3953 = vld [vmem:[#allocation2 + $0x2c0] sm:$0xff]
    %v3954 = vld [vmem:[#allocation2 + $0x2c8] sm:$0x3]
    %v3955 = vld [vmem:[#allocation2 + $0x2d0] sm:$0xff]
    %v3956 = vld [vmem:[#allocation2 + $0x2d8] sm:$0xff]
    %v3957 = vld [vmem:[#allocation2 + $0x2e0] sm:$0x3]
    %v3958 = vld [vmem:[#allocation2 + $0x2e8] sm:$0xff]
    %v3959 = vld [vmem:[#allocation2 + $0x2f0] sm:$0xff]
    %v3960 = vld [vmem:[#allocation2 + $0x2f8] sm:$0x3]
    %v3961 = vld [vmem:[#allocation2 + $0x300] sm:$0xff]
    %v3962 = vld [vmem:[#allocation2 + $0x308] sm:$0xff]
    %v3963 = vld [vmem:[#allocation2 + $0x310] sm:$0x3]
    %v3964 = vld [vmem:[#allocation2 + $0x318] sm:$0xff]
    %v3965 = vld [vmem:[#allocation2 + $0x320] sm:$0xff]
    %v3966 = vld [vmem:[#allocation2 + $0x328] sm:$0x3]
    %v3967 = vld [vmem:[#allocation2 + $0x330] sm:$0xff]
    %v3968 = vld [vmem:[#allocation2 + $0x338] sm:$0xff]
    %v3969 = vld [vmem:[#allocation2 + $0x340] sm:$0x3]
    %v3970 = vld [vmem:[#allocation2 + $0x348] sm:$0xff]
    %v3971 = vld [vmem:[#allocation2 + $0x350] sm:$0xff]
    %v3972 = vld [vmem:[#allocation2 + $0x358] sm:$0x3]
    %v4069 = vrot.slane %v3865, 1
    %v4070 = vrot.slane %v3866, 1
    %v4071 = vsel %vm232, %v4069, %v4070
    %v4072 = vrot.slane %v3867, 1
    %v4073 = vsel %vm232, %v4070, %v4072
    %v4074 = vrot.slane %v3868, 1
    %v4075 = vrot.slane %v3869, 1
    %v4076 = vsel %vm232, %v4074, %v4075
    %v4077 = vrot.slane %v3870, 1
    %v4078 = vsel %vm232, %v4075, %v4077
    %v4079 = vrot.slane %v3871, 1
    %v4080 = vrot.slane %v3872, 1
    %v4081 = vsel %vm232, %v4079, %v4080
    %v4082 = vrot.slane %v3873, 1
    %v4083 = vsel %vm232, %v4080, %v4082
    %v4084 = vrot.slane %v3874, 1
    %v4085 = vrot.slane %v3875, 1
    %v4086 = vsel %vm232, %v4084, %v4085
    %v4087 = vrot.slane %v3876, 1
    %v4088 = vsel %vm232, %v4085, %v4087
    %v4089 = vrot.slane %v3877, 1
    %v4090 = vrot.slane %v3878, 1
    %v4091 = vsel %vm232, %v4089, %v4090
    %v4092 = vrot.slane %v3879, 1
    %v4093 = vsel %vm232, %v4090, %v4092
    %v4094 = vrot.slane %v3880, 1
    %v4095 = vrot.slane %v3881, 1
    %v4096 = vsel %vm232, %v4094, %v4095
    %v4097 = vrot.slane %v3882, 1
    %v4098 = vsel %vm232, %v4095, %v4097
    %v4099 = vrot.slane %v3883, 1
    %v4100 = vrot.slane %v3884, 1
    %v4101 = vsel %vm232, %v4099, %v4100
    %v4102 = vrot.slane %v3885, 1
    %v4103 = vsel %vm232, %v4100, %v4102
    %v4104 = vrot.slane %v3886, 1
    %v4105 = vrot.slane %v3887, 1
    %v4106 = vsel %vm232, %v4104, %v4105
    %v4107 = vrot.slane %v3888, 1
    %v4108 = vsel %vm232, %v4105, %v4107
    %v4109 = vrot.slane %v3889, 1
    %v4110 = vrot.slane %v3890, 1
    %v4111 = vsel %vm232, %v4109, %v4110
    %v4112 = vrot.slane %v3891, 1
    %v4113 = vsel %vm232, %v4110, %v4112
    %v4114 = vrot.slane %v3892, 1
    %v4115 = vrot.slane %v3893, 1
    %v4116 = vsel %vm232, %v4114, %v4115
    %v4117 = vrot.slane %v3894, 1
    %v4118 = vsel %vm232, %v4115, %v4117
    %v4119 = vrot.slane %v3895, 1
    %v4120 = vrot.slane %v3896, 1
    %v4121 = vsel %vm232, %v4119, %v4120
    %v4122 = vrot.slane %v3897, 1
    %v4123 = vsel %vm232, %v4120, %v4122
    %v4124 = vrot.slane %v3898, 1
    %v4125 = vrot.slane %v3899, 1
    %v4126 = vsel %vm232, %v4124, %v4125
    %v4127 = vrot.slane %v3900, 1
    %v4128 = vsel %vm232, %v4125, %v4127
    %v4129 = vrot.slane %v3901, 1
    %v4130 = vrot.slane %v3902, 1
    %v4131 = vsel %vm232, %v4129, %v4130
    %v4132 = vrot.slane %v3903, 1
    %v4133 = vsel %vm232, %v4130, %v4132
    %v4134 = vrot.slane %v3904, 1
    %v4135 = vrot.slane %v3905, 1
    %v4136 = vsel %vm232, %v4134, %v4135
    %v4137 = vrot.slane %v3906, 1
    %v4138 = vsel %vm232, %v4135, %v4137
    %v4139 = vrot.slane %v3907, 1
    %v4140 = vrot.slane %v3908, 1
    %v4141 = vsel %vm232, %v4139, %v4140
    %v4142 = vrot.slane %v3909, 1
    %v4143 = vsel %vm232, %v4140, %v4142
    %v4144 = vrot.slane %v3910, 1
    %v4145 = vrot.slane %v3911, 1
    %v4146 = vsel %vm232, %v4144, %v4145
    %v4147 = vrot.slane %v3912, 1
    %v4148 = vsel %vm232, %v4145, %v4147
    %v4149 = vrot.slane %v3919, 1
    %v4150 = vrot.slane %v3920, 1
    %v4151 = vsel %vm232, %v4149, %v4150
    %v4152 = vrot.slane %v3921, 1
    %v4153 = vsel %vm232, %v4150, %v4152
    %v4154 = vrot.slane %v3922, 1
    %v4155 = vrot.slane %v3923, 1
    %v4156 = vsel %vm232, %v4154, %v4155
    %v4157 = vrot.slane %v3924, 1
    %v4158 = vsel %vm232, %v4155, %v4157
    %v4159 = vrot.slane %v3925, 1
    %v4160 = vrot.slane %v3926, 1
    %v4161 = vsel %vm232, %v4159, %v4160
    %v4162 = vrot.slane %v3927, 1
    %v4163 = vsel %vm232, %v4160, %v4162
    %v4164 = vrot.slane %v3928, 1
    %v4165 = vrot.slane %v3929, 1
    %v4166 = vsel %vm232, %v4164, %v4165
    %v4167 = vrot.slane %v3930, 1
    %v4168 = vsel %vm232, %v4165, %v4167
    %v4169 = vrot.slane %v3931, 1
    %v4170 = vrot.slane %v3932, 1
    %v4171 = vsel %vm232, %v4169, %v4170
    %v4172 = vrot.slane %v3933, 1
    %v4173 = vsel %vm232, %v4170, %v4172
    %v4174 = vrot.slane %v3934, 1
    %v4175 = vrot.slane %v3935, 1
    %v4176 = vsel %vm232, %v4174, %v4175
    %v4177 = vrot.slane %v3936, 1
    %v4178 = vsel %vm232, %v4175, %v4177
    %v4179 = vrot.slane %v3937, 1
    %v4180 = vrot.slane %v3938, 1
    %v4181 = vsel %vm232, %v4179, %v4180
    %v4182 = vrot.slane %v3939, 1
    %v4183 = vsel %vm232, %v4180, %v4182
    %v4184 = vrot.slane %v3940, 1
    %v4185 = vrot.slane %v3941, 1
    %v4186 = vsel %vm232, %v4184, %v4185
    %v4187 = vrot.slane %v3942, 1
    %v4188 = vsel %vm232, %v4185, %v4187
    %v4189 = vrot.slane %v3943, 1
    %v4190 = vrot.slane %v3944, 1
    %v4191 = vsel %vm232, %v4189, %v4190
    %v4192 = vrot.slane %v3945, 1
    %v4193 = vsel %vm232, %v4190, %v4192
    %v4194 = vrot.slane %v3946, 1
    %v4195 = vrot.slane %v3947, 1
    %v4196 = vsel %vm232, %v4194, %v4195
    %v4197 = vrot.slane %v3948, 1
    %v4198 = vsel %vm232, %v4195, %v4197
    %v4199 = vrot.slane %v3949, 1
    %v4200 = vrot.slane %v3950, 1
    %v4201 = vsel %vm232, %v4199, %v4200
    %v4202 = vrot.slane %v3951, 1
    %v4203 = vsel %vm232, %v4200, %v4202
    %v4204 = vrot.slane %v3952, 1
    %v4205 = vrot.slane %v3953, 1
    %v4206 = vsel %vm232, %v4204, %v4205
    %v4207 = vrot.slane %v3954, 1
    %v4208 = vsel %vm232, %v4205, %v4207
    %v4209 = vrot.slane %v3955, 1
    %v4210 = vrot.slane %v3956, 1
    %v4211 = vsel %vm232, %v4209, %v4210
    %v4212 = vrot.slane %v3957, 1
    %v4213 = vsel %vm232, %v4210, %v4212
    %v4214 = vrot.slane %v3958, 1
    %v4215 = vrot.slane %v3959, 1
    %v4216 = vsel %vm232, %v4214, %v4215
    %v4217 = vrot.slane %v3960, 1
    %v4218 = vsel %vm232, %v4215, %v4217
    %v4219 = vrot.slane %v3961, 1
    %v4220 = vrot.slane %v3962, 1
    %v4221 = vsel %vm232, %v4219, %v4220
    %v4222 = vrot.slane %v3963, 1
    %v4223 = vsel %vm232, %v4220, %v4222
    %v4224 = vrot.slane %v3964, 1
    %v4225 = vrot.slane %v3965, 1
    %v4226 = vsel %vm232, %v4224, %v4225
    %v4227 = vrot.slane %v3966, 1
    %v4228 = vsel %vm232, %v4225, %v4227
    %4229 = vrot.lane.b32.xlu0 %v4071, 4
    %v4230 = vpop.permute.xlu0 %4229
    %4231 = vrot.lane.b32.xlu0 %v4073, 4
    %v4232 = vpop.permute.xlu0 %4231
    %4233 = vrot.lane.b32.xlu0 %v4076, 4
    %v4234 = vpop.permute.xlu0 %4233
    %4235 = vrot.lane.b32.xlu0 %v4078, 4
    %v4236 = vpop.permute.xlu0 %4235
    %4237 = vrot.lane.b32.xlu0 %v4081, 4
    %v4238 = vpop.permute.xlu0 %4237
    %4239 = vrot.lane.b32.xlu0 %v4083, 4
    %v4240 = vpop.permute.xlu0 %4239
    %4241 = vrot.lane.b32.xlu0 %v4086, 4
    %v4242 = vpop.permute.xlu0 %4241
    %4243 = vrot.lane.b32.xlu0 %v4088, 4
    %v4244 = vpop.permute.xlu0 %4243
    %4245 = vrot.lane.b32.xlu0 %v4091, 4
    %v4246 = vpop.permute.xlu0 %4245
    %4247 = vrot.lane.b32.xlu0 %v4093, 4
    %v4248 = vpop.permute.xlu0 %4247
    %4249 = vrot.lane.b32.xlu0 %v4096, 4
    %v4250 = vpop.permute.xlu0 %4249
    %4251 = vrot.lane.b32.xlu0 %v4098, 4
    %v4252 = vpop.permute.xlu0 %4251
    %4253 = vrot.lane.b32.xlu0 %v4101, 4
    %v4254 = vpop.permute.xlu0 %4253
    %4255 = vrot.lane.b32.xlu0 %v4103, 4
    %v4256 = vpop.permute.xlu0 %4255
    %4257 = vrot.lane.b32.xlu0 %v4106, 4
    %v4258 = vpop.permute.xlu0 %4257
    %4259 = vrot.lane.b32.xlu0 %v4108, 4
    %v4260 = vpop.permute.xlu0 %4259
    %4261 = vrot.lane.b32.xlu0 %v4111, 4
    %v4262 = vpop.permute.xlu0 %4261
    %4263 = vrot.lane.b32.xlu0 %v4113, 4
    %v4264 = vpop.permute.xlu0 %4263
    %4265 = vrot.lane.b32.xlu0 %v4116, 4
    %v4266 = vpop.permute.xlu0 %4265
    %4267 = vrot.lane.b32.xlu0 %v4118, 4
    %v4268 = vpop.permute.xlu0 %4267
    %4269 = vrot.lane.b32.xlu0 %v4121, 4
    %v4270 = vpop.permute.xlu0 %4269
    %4271 = vrot.lane.b32.xlu0 %v4123, 4
    %v4272 = vpop.permute.xlu0 %4271
    %4273 = vrot.lane.b32.xlu0 %v4126, 4
    %v4274 = vpop.permute.xlu0 %4273
    %4275 = vrot.lane.b32.xlu0 %v4128, 4
    %v4276 = vpop.permute.xlu0 %4275
    %4277 = vrot.lane.b32.xlu0 %v4131, 4
    %v4278 = vpop.permute.xlu0 %4277
    %4279 = vrot.lane.b32.xlu0 %v4133, 4
    %v4280 = vpop.permute.xlu0 %4279
    %4281 = vrot.lane.b32.xlu0 %v4136, 4
    %v4282 = vpop.permute.xlu0 %4281
    %4283 = vrot.lane.b32.xlu0 %v4138, 4
    %v4284 = vpop.permute.xlu0 %4283
    %4285 = vrot.lane.b32.xlu0 %v4141, 4
    %v4286 = vpop.permute.xlu0 %4285
    %4287 = vrot.lane.b32.xlu0 %v4143, 4
    %v4288 = vpop.permute.xlu0 %4287
    %4289 = vrot.lane.b32.xlu0 %v4146, 4
    %v4290 = vpop.permute.xlu0 %4289
    %4291 = vrot.lane.b32.xlu0 %v4148, 4
    %v4292 = vpop.permute.xlu0 %4291
    %4293 = vrot.lane.b32.xlu0 %v4151, 4
    %v4294 = vpop.permute.xlu0 %4293
    %4295 = vrot.lane.b32.xlu0 %v4153, 4
    %v4296 = vpop.permute.xlu0 %4295
    %4297 = vrot.lane.b32.xlu0 %v4156, 4
    %v4298 = vpop.permute.xlu0 %4297
    %4299 = vrot.lane.b32.xlu0 %v4158, 4
    %v4300 = vpop.permute.xlu0 %4299
    %4301 = vrot.lane.b32.xlu0 %v4161, 4
    %v4302 = vpop.permute.xlu0 %4301
    %4303 = vrot.lane.b32.xlu0 %v4163, 4
    %v4304 = vpop.permute.xlu0 %4303
    %4305 = vrot.lane.b32.xlu0 %v4166, 4
    %v4306 = vpop.permute.xlu0 %4305
    %4307 = vrot.lane.b32.xlu0 %v4168, 4
    %v4308 = vpop.permute.xlu0 %4307
    %4309 = vrot.lane.b32.xlu0 %v4171, 4
    %v4310 = vpop.permute.xlu0 %4309
    %4311 = vrot.lane.b32.xlu0 %v4173, 4
    %v4312 = vpop.permute.xlu0 %4311
    %4313 = vrot.lane.b32.xlu0 %v4176, 4
    %v4314 = vpop.permute.xlu0 %4313
    %4315 = vrot.lane.b32.xlu0 %v4178, 4
    %v4316 = vpop.permute.xlu0 %4315
    %4317 = vrot.lane.b32.xlu0 %v4181, 4
    %v4318 = vpop.permute.xlu0 %4317
    %4319 = vrot.lane.b32.xlu0 %v4183, 4
    %v4320 = vpop.permute.xlu0 %4319
    %4321 = vrot.lane.b32.xlu0 %v4186, 4
    %v4322 = vpop.permute.xlu0 %4321
    %4323 = vrot.lane.b32.xlu0 %v4188, 4
    %v4324 = vpop.permute.xlu0 %4323
    %4325 = vrot.lane.b32.xlu0 %v4191, 4
    %v4326 = vpop.permute.xlu0 %4325
    %4327 = vrot.lane.b32.xlu0 %v4193, 4
    %v4328 = vpop.permute.xlu0 %4327
    %4329 = vrot.lane.b32.xlu0 %v4196, 4
    %v4330 = vpop.permute.xlu0 %4329
    %4331 = vrot.lane.b32.xlu0 %v4198, 4
    %v4332 = vpop.permute.xlu0 %4331
    %4333 = vrot.lane.b32.xlu0 %v4201, 4
    %v4334 = vpop.permute.xlu0 %4333
    %4335 = vrot.lane.b32.xlu0 %v4203, 4
    %v4336 = vpop.permute.xlu0 %4335
    %4337 = vrot.lane.b32.xlu0 %v4206, 4
    %v4338 = vpop.permute.xlu0 %4337
    %4339 = vrot.lane.b32.xlu0 %v4208, 4
    %v4340 = vpop.permute.xlu0 %4339
    %4341 = vrot.lane.b32.xlu0 %v4211, 4
    %v4342 = vpop.permute.xlu0 %4341
    %4343 = vrot.lane.b32.xlu0 %v4213, 4
    %v4344 = vpop.permute.xlu0 %4343
    %4345 = vrot.lane.b32.xlu0 %v4216, 4
    %v4346 = vpop.permute.xlu0 %4345
    %4347 = vrot.lane.b32.xlu0 %v4218, 4
    %v4348 = vpop.permute.xlu0 %4347
    %4349 = vrot.lane.b32.xlu0 %v4221, 4
    %v4350 = vpop.permute.xlu0 %4349
    %4351 = vrot.lane.b32.xlu0 %v4223, 4
    %v4352 = vpop.permute.xlu0 %4351
    %4353 = vrot.lane.b32.xlu0 %v4226, 4
    %v4354 = vpop.permute.xlu0 %4353
    %4355 = vrot.lane.b32.xlu0 %v4228, 4
    %v4356 = vpop.permute.xlu0 %4355
    %v4421 = vrot.slane %v3865, 2
    %v4422 = vrot.slane %v3866, 2
    %v4423 = vsel %vm585, %v4421, %v4422
    %v4424 = vrot.slane %v3867, 2
    %v4425 = vsel %vm585, %v4422, %v4424
    %v4426 = vrot.slane %v3868, 2
    %v4427 = vrot.slane %v3869, 2
    %v4428 = vsel %vm585, %v4426, %v4427
    %v4429 = vrot.slane %v3870, 2
    %v4430 = vsel %vm585, %v4427, %v4429
    %v4431 = vrot.slane %v3871, 2
    %v4432 = vrot.slane %v3872, 2
    %v4433 = vsel %vm585, %v4431, %v4432
    %v4434 = vrot.slane %v3873, 2
    %v4435 = vsel %vm585, %v4432, %v4434
    %v4436 = vrot.slane %v3874, 2
    %v4437 = vrot.slane %v3875, 2
    %v4438 = vsel %vm585, %v4436, %v4437
    %v4439 = vrot.slane %v3876, 2
    %v4440 = vsel %vm585, %v4437, %v4439
    %v4441 = vrot.slane %v3877, 2
    %v4442 = vrot.slane %v3878, 2
    %v4443 = vsel %vm585, %v4441, %v4442
    %v4444 = vrot.slane %v3879, 2
    %v4445 = vsel %vm585, %v4442, %v4444
    %v4446 = vrot.slane %v3880, 2
    %v4447 = vrot.slane %v3881, 2
    %v4448 = vsel %vm585, %v4446, %v4447
    %v4449 = vrot.slane %v3882, 2
    %v4450 = vsel %vm585, %v4447, %v4449
    %v4451 = vrot.slane %v3883, 2
    %v4452 = vrot.slane %v3884, 2
    %v4453 = vsel %vm585, %v4451, %v4452
    %v4454 = vrot.slane %v3885, 2
    %v4455 = vsel %vm585, %v4452, %v4454
    %v4456 = vrot.slane %v3886, 2
    %v4457 = vrot.slane %v3887, 2
    %v4458 = vsel %vm585, %v4456, %v4457
    %v4459 = vrot.slane %v3888, 2
    %v4460 = vsel %vm585, %v4457, %v4459
    %v4461 = vrot.slane %v3889, 2
    %v4462 = vrot.slane %v3890, 2
    %v4463 = vsel %vm585, %v4461, %v4462
    %v4464 = vrot.slane %v3891, 2
    %v4465 = vsel %vm585, %v4462, %v4464
    %v4466 = vrot.slane %v3892, 2
    %v4467 = vrot.slane %v3893, 2
    %v4468 = vsel %vm585, %v4466, %v4467
    %v4469 = vrot.slane %v3894, 2
    %v4470 = vsel %vm585, %v4467, %v4469
    %v4471 = vrot.slane %v3895, 2
    %v4472 = vrot.slane %v3896, 2
    %v4473 = vsel %vm585, %v4471, %v4472
    %v4474 = vrot.slane %v3897, 2
    %v4475 = vsel %vm585, %v4472, %v4474
    %v4476 = vrot.slane %v3898, 2
    %v4477 = vrot.slane %v3899, 2
    %v4478 = vsel %vm585, %v4476, %v4477
    %v4479 = vrot.slane %v3900, 2
    %v4480 = vsel %vm585, %v4477, %v4479
    %v4481 = vrot.slane %v3901, 2
    %v4482 = vrot.slane %v3902, 2
    %v4483 = vsel %vm585, %v4481, %v4482
    %v4484 = vrot.slane %v3903, 2
    %v4485 = vsel %vm585, %v4482, %v4484
    %v4486 = vrot.slane %v3904, 2
    %v4487 = vrot.slane %v3905, 2
    %v4488 = vsel %vm585, %v4486, %v4487
    %v4489 = vrot.slane %v3906, 2
    %v4490 = vsel %vm585, %v4487, %v4489
    %v4491 = vrot.slane %v3907, 2
    %v4492 = vrot.slane %v3908, 2
    %v4493 = vsel %vm585, %v4491, %v4492
    %v4494 = vrot.slane %v3909, 2
    %v4495 = vsel %vm585, %v4492, %v4494
    %v4496 = vrot.slane %v3910, 2
    %v4497 = vrot.slane %v3911, 2
    %v4498 = vsel %vm585, %v4496, %v4497
    %v4499 = vrot.slane %v3912, 2
    %v4500 = vsel %vm585, %v4497, %v4499
    %v4501 = vrot.slane %v3919, 2
    %v4502 = vrot.slane %v3920, 2
    %v4503 = vsel %vm585, %v4501, %v4502
    %v4504 = vrot.slane %v3921, 2
    %v4505 = vsel %vm585, %v4502, %v4504
    %v4506 = vrot.slane %v3922, 2
    %v4507 = vrot.slane %v3923, 2
    %v4508 = vsel %vm585, %v4506, %v4507
    %v4509 = vrot.slane %v3924, 2
    %v4510 = vsel %vm585, %v4507, %v4509
    %v4511 = vrot.slane %v3925, 2
    %v4512 = vrot.slane %v3926, 2
    %v4513 = vsel %vm585, %v4511, %v4512
    %v4514 = vrot.slane %v3927, 2
    %v4515 = vsel %vm585, %v4512, %v4514
    %v4516 = vrot.slane %v3928, 2
    %v4517 = vrot.slane %v3929, 2
    %v4518 = vsel %vm585, %v4516, %v4517
    %v4519 = vrot.slane %v3930, 2
    %v4520 = vsel %vm585, %v4517, %v4519
    %v4521 = vrot.slane %v3931, 2
    %v4522 = vrot.slane %v3932, 2
    %v4523 = vsel %vm585, %v4521, %v4522
    %v4524 = vrot.slane %v3933, 2
    %v4525 = vsel %vm585, %v4522, %v4524
    %v4526 = vrot.slane %v3934, 2
    %v4527 = vrot.slane %v3935, 2
    %v4528 = vsel %vm585, %v4526, %v4527
    %v4529 = vrot.slane %v3936, 2
    %v4530 = vsel %vm585, %v4527, %v4529
    %v4531 = vrot.slane %v3937, 2
    %v4532 = vrot.slane %v3938, 2
    %v4533 = vsel %vm585, %v4531, %v4532
    %v4534 = vrot.slane %v3939, 2
    %v4535 = vsel %vm585, %v4532, %v4534
    %v4536 = vrot.slane %v3940, 2
    %v4537 = vrot.slane %v3941, 2
    %v4538 = vsel %vm585, %v4536, %v4537
    %v4539 = vrot.slane %v3942, 2
    %v4540 = vsel %vm585, %v4537, %v4539
    %v4541 = vrot.slane %v3943, 2
    %v4542 = vrot.slane %v3944, 2
    %v4543 = vsel %vm585, %v4541, %v4542
    %v4544 = vrot.slane %v3945, 2
    %v4545 = vsel %vm585, %v4542, %v4544
    %v4546 = vrot.slane %v3946, 2
    %v4547 = vrot.slane %v3947, 2
    %v4548 = vsel %vm585, %v4546, %v4547
    %v4549 = vrot.slane %v3948, 2
    %v4550 = vsel %vm585, %v4547, %v4549
    %v4551 = vrot.slane %v3949, 2
    %v4552 = vrot.slane %v3950, 2
    %v4553 = vsel %vm585, %v4551, %v4552
    %v4554 = vrot.slane %v3951, 2
    %v4555 = vsel %vm585, %v4552, %v4554
    %v4556 = vrot.slane %v3952, 2
    %v4557 = vrot.slane %v3953, 2
    %v4558 = vsel %vm585, %v4556, %v4557
    %v4559 = vrot.slane %v3954, 2
    %v4560 = vsel %vm585, %v4557, %v4559
    %v4561 = vrot.slane %v3955, 2
    %v4562 = vrot.slane %v3956, 2
    %v4563 = vsel %vm585, %v4561, %v4562
    %v4564 = vrot.slane %v3957, 2
    %v4565 = vsel %vm585, %v4562, %v4564
    %v4566 = vrot.slane %v3958, 2
    %v4567 = vrot.slane %v3959, 2
    %v4568 = vsel %vm585, %v4566, %v4567
    %v4569 = vrot.slane %v3960, 2
    %v4570 = vsel %vm585, %v4567, %v4569
    %v4571 = vrot.slane %v3961, 2
    %v4572 = vrot.slane %v3962, 2
    %v4573 = vsel %vm585, %v4571, %v4572
    %v4574 = vrot.slane %v3963, 2
    %v4575 = vsel %vm585, %v4572, %v4574
    %v4576 = vrot.slane %v3964, 2
    %v4577 = vrot.slane %v3965, 2
    %v4578 = vsel %vm585, %v4576, %v4577
    %v4579 = vrot.slane %v3966, 2
    %v4580 = vsel %vm585, %v4577, %v4579
    %4581 = vrot.lane.b32.xlu0 %v4423, 8
    %v4582 = vpop.permute.xlu0 %4581
    %4583 = vrot.lane.b32.xlu0 %v4425, 8
    %v4584 = vpop.permute.xlu0 %4583
    %4585 = vrot.lane.b32.xlu0 %v4428, 8
    %v4586 = vpop.permute.xlu0 %4585
    %4587 = vrot.lane.b32.xlu0 %v4430, 8
    %v4588 = vpop.permute.xlu0 %4587
    %4589 = vrot.lane.b32.xlu0 %v4433, 8
    %v4590 = vpop.permute.xlu0 %4589
    %4591 = vrot.lane.b32.xlu0 %v4435, 8
    %v4592 = vpop.permute.xlu0 %4591
    %4593 = vrot.lane.b32.xlu0 %v4438, 8
    %v4594 = vpop.permute.xlu0 %4593
    %4595 = vrot.lane.b32.xlu0 %v4440, 8
    %v4596 = vpop.permute.xlu0 %4595
    %4597 = vrot.lane.b32.xlu0 %v4443, 8
    %v4598 = vpop.permute.xlu0 %4597
    %4599 = vrot.lane.b32.xlu0 %v4445, 8
    %v4600 = vpop.permute.xlu0 %4599
    %4601 = vrot.lane.b32.xlu0 %v4448, 8
    %v4602 = vpop.permute.xlu0 %4601
    %4603 = vrot.lane.b32.xlu0 %v4450, 8
    %v4604 = vpop.permute.xlu0 %4603
    %4605 = vrot.lane.b32.xlu0 %v4453, 8
    %v4606 = vpop.permute.xlu0 %4605
    %4607 = vrot.lane.b32.xlu0 %v4455, 8
    %v4608 = vpop.permute.xlu0 %4607
    %4609 = vrot.lane.b32.xlu0 %v4458, 8
    %v4610 = vpop.permute.xlu0 %4609
    %4611 = vrot.lane.b32.xlu0 %v4460, 8
    %v4612 = vpop.permute.xlu0 %4611
    %4613 = vrot.lane.b32.xlu0 %v4463, 8
    %v4614 = vpop.permute.xlu0 %4613
    %4615 = vrot.lane.b32.xlu0 %v4465, 8
    %v4616 = vpop.permute.xlu0 %4615
    %4617 = vrot.lane.b32.xlu0 %v4468, 8
    %v4618 = vpop.permute.xlu0 %4617
    %4619 = vrot.lane.b32.xlu0 %v4470, 8
    %v4620 = vpop.permute.xlu0 %4619
    %4621 = vrot.lane.b32.xlu0 %v4473, 8
    %v4622 = vpop.permute.xlu0 %4621
    %4623 = vrot.lane.b32.xlu0 %v4475, 8
    %v4624 = vpop.permute.xlu0 %4623
    %4625 = vrot.lane.b32.xlu0 %v4478, 8
    %v4626 = vpop.permute.xlu0 %4625
    %4627 = vrot.lane.b32.xlu0 %v4480, 8
    %v4628 = vpop.permute.xlu0 %4627
    %4629 = vrot.lane.b32.xlu0 %v4483, 8
    %v4630 = vpop.permute.xlu0 %4629
    %4631 = vrot.lane.b32.xlu0 %v4485, 8
    %v4632 = vpop.permute.xlu0 %4631
    %4633 = vrot.lane.b32.xlu0 %v4488, 8
    %v4634 = vpop.permute.xlu0 %4633
    %4635 = vrot.lane.b32.xlu0 %v4490, 8
    %v4636 = vpop.permute.xlu0 %4635
    %4637 = vrot.lane.b32.xlu0 %v4493, 8
    %v4638 = vpop.permute.xlu0 %4637
    %4639 = vrot.lane.b32.xlu0 %v4495, 8
    %v4640 = vpop.permute.xlu0 %4639
    %4641 = vrot.lane.b32.xlu0 %v4498, 8
    %v4642 = vpop.permute.xlu0 %4641
    %4643 = vrot.lane.b32.xlu0 %v4500, 8
    %v4644 = vpop.permute.xlu0 %4643
    %4645 = vrot.lane.b32.xlu0 %v4503, 8
    %v4646 = vpop.permute.xlu0 %4645
    %4647 = vrot.lane.b32.xlu0 %v4505, 8
    %v4648 = vpop.permute.xlu0 %4647
    %4649 = vrot.lane.b32.xlu0 %v4508, 8
    %v4650 = vpop.permute.xlu0 %4649
    %4651 = vrot.lane.b32.xlu0 %v4510, 8
    %v4652 = vpop.permute.xlu0 %4651
    %4653 = vrot.lane.b32.xlu0 %v4513, 8
    %v4654 = vpop.permute.xlu0 %4653
    %4655 = vrot.lane.b32.xlu0 %v4515, 8
    %v4656 = vpop.permute.xlu0 %4655
    %4657 = vrot.lane.b32.xlu0 %v4518, 8
    %v4658 = vpop.permute.xlu0 %4657
    %4659 = vrot.lane.b32.xlu0 %v4520, 8
    %v4660 = vpop.permute.xlu0 %4659
    %4661 = vrot.lane.b32.xlu0 %v4523, 8
    %v4662 = vpop.permute.xlu0 %4661
    %4663 = vrot.lane.b32.xlu0 %v4525, 8
    %v4664 = vpop.permute.xlu0 %4663
    %4665 = vrot.lane.b32.xlu0 %v4528, 8
    %v4666 = vpop.permute.xlu0 %4665
    %4667 = vrot.lane.b32.xlu0 %v4530, 8
    %v4668 = vpop.permute.xlu0 %4667
    %4669 = vrot.lane.b32.xlu0 %v4533, 8
    %v4670 = vpop.permute.xlu0 %4669
    %4671 = vrot.lane.b32.xlu0 %v4535, 8
    %v4672 = vpop.permute.xlu0 %4671
    %4673 = vrot.lane.b32.xlu0 %v4538, 8
    %v4674 = vpop.permute.xlu0 %4673
    %4675 = vrot.lane.b32.xlu0 %v4540, 8
    %v4676 = vpop.permute.xlu0 %4675
    %4677 = vrot.lane.b32.xlu0 %v4543, 8
    %v4678 = vpop.permute.xlu0 %4677
    %4679 = vrot.lane.b32.xlu0 %v4545, 8
    %v4680 = vpop.permute.xlu0 %4679
    %4681 = vrot.lane.b32.xlu0 %v4548, 8
    %v4682 = vpop.permute.xlu0 %4681
    %4683 = vrot.lane.b32.xlu0 %v4550, 8
    %v4684 = vpop.permute.xlu0 %4683
    %4685 = vrot.lane.b32.xlu0 %v4553, 8
    %v4686 = vpop.permute.xlu0 %4685
    %4687 = vrot.lane.b32.xlu0 %v4555, 8
    %v4688 = vpop.permute.xlu0 %4687
    %4689 = vrot.lane.b32.xlu0 %v4558, 8
    %v4690 = vpop.permute.xlu0 %4689
    %4691 = vrot.lane.b32.xlu0 %v4560, 8
    %v4692 = vpop.permute.xlu0 %4691
    %4693 = vrot.lane.b32.xlu0 %v4563, 8
    %v4694 = vpop.permute.xlu0 %4693
    %4695 = vrot.lane.b32.xlu0 %v4565, 8
    %v4696 = vpop.permute.xlu0 %4695
    %4697 = vrot.lane.b32.xlu0 %v4568, 8
    %v4698 = vpop.permute.xlu0 %4697
    %4699 = vrot.lane.b32.xlu0 %v4570, 8
    %v4700 = vpop.permute.xlu0 %4699
    %4701 = vrot.lane.b32.xlu0 %v4573, 8
    %v4702 = vpop.permute.xlu0 %4701
    %4703 = vrot.lane.b32.xlu0 %v4575, 8
    %v4704 = vpop.permute.xlu0 %4703
    %4705 = vrot.lane.b32.xlu0 %v4578, 8
    %v4706 = vpop.permute.xlu0 %4705
    %4707 = vrot.lane.b32.xlu0 %v4580, 8
    %v4708 = vpop.permute.xlu0 %4707
    %4777 = vrot.lane.b32.xlu0 %v3868, 12
    %v4778 = vpop.permute.xlu0 %4777
    %4779 = vrot.lane.b32.xlu0 %v3869, 12
    %v4780 = vpop.permute.xlu0 %4779
    %4781 = vrot.lane.b32.xlu0 %v3871, 12
    %v4782 = vpop.permute.xlu0 %4781
    %4783 = vrot.lane.b32.xlu0 %v3872, 12
    %v4784 = vpop.permute.xlu0 %4783
    %4785 = vrot.lane.b32.xlu0 %v3874, 12
    %v4786 = vpop.permute.xlu0 %4785
    %4787 = vrot.lane.b32.xlu0 %v3875, 12
    %v4788 = vpop.permute.xlu0 %4787
    %4789 = vrot.lane.b32.xlu0 %v3877, 12
    %v4790 = vpop.permute.xlu0 %4789
    %4791 = vrot.lane.b32.xlu0 %v3878, 12
    %v4792 = vpop.permute.xlu0 %4791
    %4793 = vrot.lane.b32.xlu0 %v3880, 12
    %v4794 = vpop.permute.xlu0 %4793
    %4795 = vrot.lane.b32.xlu0 %v3881, 12
    %v4796 = vpop.permute.xlu0 %4795
    %4797 = vrot.lane.b32.xlu0 %v3883, 12
    %v4798 = vpop.permute.xlu0 %4797
    %4799 = vrot.lane.b32.xlu0 %v3884, 12
    %v4800 = vpop.permute.xlu0 %4799
    %4801 = vrot.lane.b32.xlu0 %v3886, 12
    %v4802 = vpop.permute.xlu0 %4801
    %4803 = vrot.lane.b32.xlu0 %v3887, 12
    %v4804 = vpop.permute.xlu0 %4803
    %4805 = vrot.lane.b32.xlu0 %v3889, 12
    %v4806 = vpop.permute.xlu0 %4805
    %4807 = vrot.lane.b32.xlu0 %v3890, 12
    %v4808 = vpop.permute.xlu0 %4807
    %4809 = vrot.lane.b32.xlu0 %v3892, 12
    %v4810 = vpop.permute.xlu0 %4809
    %4811 = vrot.lane.b32.xlu0 %v3893, 12
    %v4812 = vpop.permute.xlu0 %4811
    %4813 = vrot.lane.b32.xlu0 %v3895, 12
    %v4814 = vpop.permute.xlu0 %4813
    %4815 = vrot.lane.b32.xlu0 %v3896, 12
    %v4816 = vpop.permute.xlu0 %4815
    %4817 = vrot.lane.b32.xlu0 %v3898, 12
    %v4818 = vpop.permute.xlu0 %4817
    %4819 = vrot.lane.b32.xlu0 %v3899, 12
    %v4820 = vpop.permute.xlu0 %4819
    %4821 = vrot.lane.b32.xlu0 %v3901, 12
    %v4822 = vpop.permute.xlu0 %4821
    %4823 = vrot.lane.b32.xlu0 %v3902, 12
    %v4824 = vpop.permute.xlu0 %4823
    %4825 = vrot.lane.b32.xlu0 %v3904, 12
    %v4826 = vpop.permute.xlu0 %4825
    %4827 = vrot.lane.b32.xlu0 %v3905, 12
    %v4828 = vpop.permute.xlu0 %4827
    %4829 = vrot.lane.b32.xlu0 %v3907, 12
    %v4830 = vpop.permute.xlu0 %4829
    %4831 = vrot.lane.b32.xlu0 %v3908, 12
    %v4832 = vpop.permute.xlu0 %4831
    %4833 = vrot.lane.b32.xlu0 %v3910, 12
    %v4834 = vpop.permute.xlu0 %4833
    %4835 = vrot.lane.b32.xlu0 %v3911, 12
    %v4836 = vpop.permute.xlu0 %4835
    %4837 = vrot.lane.b32.xlu0 %v3913, 12
    %v4838 = vpop.permute.xlu0 %4837
    %4839 = vrot.lane.b32.xlu0 %v3914, 12
    %v4840 = vpop.permute.xlu0 %4839
    %4841 = vrot.lane.b32.xlu0 %v3922, 12
    %v4842 = vpop.permute.xlu0 %4841
    %4843 = vrot.lane.b32.xlu0 %v3923, 12
    %v4844 = vpop.permute.xlu0 %4843
    %4845 = vrot.lane.b32.xlu0 %v3925, 12
    %v4846 = vpop.permute.xlu0 %4845
    %4847 = vrot.lane.b32.xlu0 %v3926, 12
    %v4848 = vpop.permute.xlu0 %4847
    %4849 = vrot.lane.b32.xlu0 %v3928, 12
    %v4850 = vpop.permute.xlu0 %4849
    %4851 = vrot.lane.b32.xlu0 %v3929, 12
    %v4852 = vpop.permute.xlu0 %4851
    %4853 = vrot.lane.b32.xlu0 %v3931, 12
    %v4854 = vpop.permute.xlu0 %4853
    %4855 = vrot.lane.b32.xlu0 %v3932, 12
    %v4856 = vpop.permute.xlu0 %4855
    %4857 = vrot.lane.b32.xlu0 %v3934, 12
    %v4858 = vpop.permute.xlu0 %4857
    %4859 = vrot.lane.b32.xlu0 %v3935, 12
    %v4860 = vpop.permute.xlu0 %4859
    %4861 = vrot.lane.b32.xlu0 %v3937, 12
    %v4862 = vpop.permute.xlu0 %4861
    %4863 = vrot.lane.b32.xlu0 %v3938, 12
    %v4864 = vpop.permute.xlu0 %4863
    %4865 = vrot.lane.b32.xlu0 %v3940, 12
    %v4866 = vpop.permute.xlu0 %4865
    %4867 = vrot.lane.b32.xlu0 %v3941, 12
    %v4868 = vpop.permute.xlu0 %4867
    %4869 = vrot.lane.b32.xlu0 %v3943, 12
    %v4870 = vpop.permute.xlu0 %4869
    %4871 = vrot.lane.b32.xlu0 %v3944, 12
    %v4872 = vpop.permute.xlu0 %4871
    %4873 = vrot.lane.b32.xlu0 %v3946, 12
    %v4874 = vpop.permute.xlu0 %4873
    %4875 = vrot.lane.b32.xlu0 %v3947, 12
    %v4876 = vpop.permute.xlu0 %4875
    %4877 = vrot.lane.b32.xlu0 %v3949, 12
    %v4878 = vpop.permute.xlu0 %4877
    %4879 = vrot.lane.b32.xlu0 %v3950, 12
    %v4880 = vpop.permute.xlu0 %4879
    %4881 = vrot.lane.b32.xlu0 %v3952, 12
    %v4882 = vpop.permute.xlu0 %4881
    %4883 = vrot.lane.b32.xlu0 %v3953, 12
    %v4884 = vpop.permute.xlu0 %4883
    %4885 = vrot.lane.b32.xlu0 %v3955, 12
    %v4886 = vpop.permute.xlu0 %4885
    %4887 = vrot.lane.b32.xlu0 %v3956, 12
    %v4888 = vpop.permute.xlu0 %4887
    %4889 = vrot.lane.b32.xlu0 %v3958, 12
    %v4890 = vpop.permute.xlu0 %4889
    %4891 = vrot.lane.b32.xlu0 %v3959, 12
    %v4892 = vpop.permute.xlu0 %4891
    %4893 = vrot.lane.b32.xlu0 %v3961, 12
    %v4894 = vpop.permute.xlu0 %4893
    %4895 = vrot.lane.b32.xlu0 %v3962, 12
    %v4896 = vpop.permute.xlu0 %4895
    %4897 = vrot.lane.b32.xlu0 %v3964, 12
    %v4898 = vpop.permute.xlu0 %4897
    %4899 = vrot.lane.b32.xlu0 %v3965, 12
    %v4900 = vpop.permute.xlu0 %4899
    %4901 = vrot.lane.b32.xlu0 %v3967, 12
    %v4902 = vpop.permute.xlu0 %4901
    %4903 = vrot.lane.b32.xlu0 %v3968, 12
    %v4904 = vpop.permute.xlu0 %4903
    %v4971 = vrot.slane %v3913, 1
    %v4972 = vrot.slane %v3914, 1
    %v4973 = vsel %vm232, %v4971, %v4972
    %v4974 = vrot.slane %v3915, 1
    %v4975 = vsel %vm232, %v4972, %v4974
    %v4976 = vrot.slane %v3967, 1
    %v4977 = vrot.slane %v3968, 1
    %v4978 = vsel %vm232, %v4976, %v4977
    %v4979 = vrot.slane %v3969, 1
    %v4980 = vsel %vm232, %v4977, %v4979
    %4981 = vrot.lane.b32.xlu0 %v4076, 16
    %v4982 = vpop.permute.xlu0 %4981
    %4983 = vrot.lane.b32.xlu0 %v4078, 16
    %v4984 = vpop.permute.xlu0 %4983
    %4985 = vrot.lane.b32.xlu0 %v4081, 16
    %v4986 = vpop.permute.xlu0 %4985
    %4987 = vrot.lane.b32.xlu0 %v4083, 16
    %v4988 = vpop.permute.xlu0 %4987
    %4989 = vrot.lane.b32.xlu0 %v4086, 16
    %v4990 = vpop.permute.xlu0 %4989
    %4991 = vrot.lane.b32.xlu0 %v4088, 16
    %v4992 = vpop.permute.xlu0 %4991
    %4993 = vrot.lane.b32.xlu0 %v4091, 16
    %v4994 = vpop.permute.xlu0 %4993
    %4995 = vrot.lane.b32.xlu0 %v4093, 16
    %v4996 = vpop.permute.xlu0 %4995
    %4997 = vrot.lane.b32.xlu0 %v4096, 16
    %v4998 = vpop.permute.xlu0 %4997
    %4999 = vrot.lane.b32.xlu0 %v4098, 16
    %v5000 = vpop.permute.xlu0 %4999
    %5001 = vrot.lane.b32.xlu0 %v4101, 16
    %v5002 = vpop.permute.xlu0 %5001
    %5003 = vrot.lane.b32.xlu0 %v4103, 16
    %v5004 = vpop.permute.xlu0 %5003
    %5005 = vrot.lane.b32.xlu0 %v4106, 16
    %v5006 = vpop.permute.xlu0 %5005
    %5007 = vrot.lane.b32.xlu0 %v4108, 16
    %v5008 = vpop.permute.xlu0 %5007
    %5009 = vrot.lane.b32.xlu0 %v4111, 16
    %v5010 = vpop.permute.xlu0 %5009
    %5011 = vrot.lane.b32.xlu0 %v4113, 16
    %v5012 = vpop.permute.xlu0 %5011
    %5013 = vrot.lane.b32.xlu0 %v4116, 16
    %v5014 = vpop.permute.xlu0 %5013
    %5015 = vrot.lane.b32.xlu0 %v4118, 16
    %v5016 = vpop.permute.xlu0 %5015
    %5017 = vrot.lane.b32.xlu0 %v4121, 16
    %v5018 = vpop.permute.xlu0 %5017
    %5019 = vrot.lane.b32.xlu0 %v4123, 16
    %v5020 = vpop.permute.xlu0 %5019
    %5021 = vrot.lane.b32.xlu0 %v4126, 16
    %v5022 = vpop.permute.xlu0 %5021
    %5023 = vrot.lane.b32.xlu0 %v4128, 16
    %v5024 = vpop.permute.xlu0 %5023
    %5025 = vrot.lane.b32.xlu0 %v4131, 16
    %v5026 = vpop.permute.xlu0 %5025
    %5027 = vrot.lane.b32.xlu0 %v4133, 16
    %v5028 = vpop.permute.xlu0 %5027
    %5029 = vrot.lane.b32.xlu0 %v4136, 16
    %v5030 = vpop.permute.xlu0 %5029
    %5031 = vrot.lane.b32.xlu0 %v4138, 16
    %v5032 = vpop.permute.xlu0 %5031
    %5033 = vrot.lane.b32.xlu0 %v4141, 16
    %v5034 = vpop.permute.xlu0 %5033
    %5035 = vrot.lane.b32.xlu0 %v4143, 16
    %v5036 = vpop.permute.xlu0 %5035
    %5037 = vrot.lane.b32.xlu0 %v4146, 16
    %v5038 = vpop.permute.xlu0 %5037
    %5039 = vrot.lane.b32.xlu0 %v4148, 16
    %v5040 = vpop.permute.xlu0 %5039
    %5041 = vrot.lane.b32.xlu0 %v4973, 16
    %v5042 = vpop.permute.xlu0 %5041
    %5043 = vrot.lane.b32.xlu0 %v4975, 16
    %v5044 = vpop.permute.xlu0 %5043
    %5045 = vrot.lane.b32.xlu0 %v4156, 16
    %v5046 = vpop.permute.xlu0 %5045
    %5047 = vrot.lane.b32.xlu0 %v4158, 16
    %v5048 = vpop.permute.xlu0 %5047
    %5049 = vrot.lane.b32.xlu0 %v4161, 16
    %v5050 = vpop.permute.xlu0 %5049
    %5051 = vrot.lane.b32.xlu0 %v4163, 16
    %v5052 = vpop.permute.xlu0 %5051
    %5053 = vrot.lane.b32.xlu0 %v4166, 16
    %v5054 = vpop.permute.xlu0 %5053
    %5055 = vrot.lane.b32.xlu0 %v4168, 16
    %v5056 = vpop.permute.xlu0 %5055
    %5057 = vrot.lane.b32.xlu0 %v4171, 16
    %v5058 = vpop.permute.xlu0 %5057
    %5059 = vrot.lane.b32.xlu0 %v4173, 16
    %v5060 = vpop.permute.xlu0 %5059
    %5061 = vrot.lane.b32.xlu0 %v4176, 16
    %v5062 = vpop.permute.xlu0 %5061
    %5063 = vrot.lane.b32.xlu0 %v4178, 16
    %v5064 = vpop.permute.xlu0 %5063
    %5065 = vrot.lane.b32.xlu0 %v4181, 16
    %v5066 = vpop.permute.xlu0 %5065
    %5067 = vrot.lane.b32.xlu0 %v4183, 16
    %v5068 = vpop.permute.xlu0 %5067
    %5069 = vrot.lane.b32.xlu0 %v4186, 16
    %v5070 = vpop.permute.xlu0 %5069
    %5071 = vrot.lane.b32.xlu0 %v4188, 16
    %v5072 = vpop.permute.xlu0 %5071
    %5073 = vrot.lane.b32.xlu0 %v4191, 16
    %v5074 = vpop.permute.xlu0 %5073
    %5075 = vrot.lane.b32.xlu0 %v4193, 16
    %v5076 = vpop.permute.xlu0 %5075
    %5077 = vrot.lane.b32.xlu0 %v4196, 16
    %v5078 = vpop.permute.xlu0 %5077
    %5079 = vrot.lane.b32.xlu0 %v4198, 16
    %v5080 = vpop.permute.xlu0 %5079
    %5081 = vrot.lane.b32.xlu0 %v4201, 16
    %v5082 = vpop.permute.xlu0 %5081
    %5083 = vrot.lane.b32.xlu0 %v4203, 16
    %v5084 = vpop.permute.xlu0 %5083
    %5085 = vrot.lane.b32.xlu0 %v4206, 16
    %v5086 = vpop.permute.xlu0 %5085
    %5087 = vrot.lane.b32.xlu0 %v4208, 16
    %v5088 = vpop.permute.xlu0 %5087
    %5089 = vrot.lane.b32.xlu0 %v4211, 16
    %v5090 = vpop.permute.xlu0 %5089
    %5091 = vrot.lane.b32.xlu0 %v4213, 16
    %v5092 = vpop.permute.xlu0 %5091
    %5093 = vrot.lane.b32.xlu0 %v4216, 16
    %v5094 = vpop.permute.xlu0 %5093
    %5095 = vrot.lane.b32.xlu0 %v4218, 16
    %v5096 = vpop.permute.xlu0 %5095
    %5097 = vrot.lane.b32.xlu0 %v4221, 16
    %v5098 = vpop.permute.xlu0 %5097
    %5099 = vrot.lane.b32.xlu0 %v4223, 16
    %v5100 = vpop.permute.xlu0 %5099
    %5101 = vrot.lane.b32.xlu0 %v4226, 16
    %v5102 = vpop.permute.xlu0 %5101
    %5103 = vrot.lane.b32.xlu0 %v4228, 16
    %v5104 = vpop.permute.xlu0 %5103
    %5105 = vrot.lane.b32.xlu0 %v4978, 16
    %v5106 = vpop.permute.xlu0 %5105
    %5107 = vrot.lane.b32.xlu0 %v4980, 16
    %v5108 = vpop.permute.xlu0 %5107
    %v5173 = vrot.slane %v3913, 2
    %v5174 = vrot.slane %v3914, 2
    %v5175 = vsel %vm585, %v5173, %v5174
    %v5176 = vrot.slane %v3915, 2
    %v5177 = vsel %vm585, %v5174, %v5176
    %v5178 = vrot.slane %v3967, 2
    %v5179 = vrot.slane %v3968, 2
    %v5180 = vsel %vm585, %v5178, %v5179
    %v5181 = vrot.slane %v3969, 2
    %v5182 = vsel %vm585, %v5179, %v5181
    %5183 = vrot.lane.b32.xlu0 %v4428, 20
    %v5184 = vpop.permute.xlu0 %5183
    %5185 = vrot.lane.b32.xlu0 %v4430, 20
    %v5186 = vpop.permute.xlu0 %5185
    %5187 = vrot.lane.b32.xlu0 %v4433, 20
    %v5188 = vpop.permute.xlu0 %5187
    %5189 = vrot.lane.b32.xlu0 %v4435, 20
    %v5190 = vpop.permute.xlu0 %5189
    %5191 = vrot.lane.b32.xlu0 %v4438, 20
    %v5192 = vpop.permute.xlu0 %5191
    %5193 = vrot.lane.b32.xlu0 %v4440, 20
    %v5194 = vpop.permute.xlu0 %5193
    %5195 = vrot.lane.b32.xlu0 %v4443, 20
    %v5196 = vpop.permute.xlu0 %5195
    %5197 = vrot.lane.b32.xlu0 %v4445, 20
    %v5198 = vpop.permute.xlu0 %5197
    %5199 = vrot.lane.b32.xlu0 %v4448, 20
    %v5200 = vpop.permute.xlu0 %5199
    %5201 = vrot.lane.b32.xlu0 %v4450, 20
    %v5202 = vpop.permute.xlu0 %5201
    %5203 = vrot.lane.b32.xlu0 %v4453, 20
    %v5204 = vpop.permute.xlu0 %5203
    %5205 = vrot.lane.b32.xlu0 %v4455, 20
    %v5206 = vpop.permute.xlu0 %5205
    %5207 = vrot.lane.b32.xlu0 %v4458, 20
    %v5208 = vpop.permute.xlu0 %5207
    %5209 = vrot.lane.b32.xlu0 %v4460, 20
    %v5210 = vpop.permute.xlu0 %5209
    %5211 = vrot.lane.b32.xlu0 %v4463, 20
    %v5212 = vpop.permute.xlu0 %5211
    %5213 = vrot.lane.b32.xlu0 %v4465, 20
    %v5214 = vpop.permute.xlu0 %5213
    %5215 = vrot.lane.b32.xlu0 %v4468, 20
    %v5216 = vpop.permute.xlu0 %5215
    %5217 = vrot.lane.b32.xlu0 %v4470, 20
    %v5218 = vpop.permute.xlu0 %5217
    %5219 = vrot.lane.b32.xlu0 %v4473, 20
    %v5220 = vpop.permute.xlu0 %5219
    %5221 = vrot.lane.b32.xlu0 %v4475, 20
    %v5222 = vpop.permute.xlu0 %5221
    %5223 = vrot.lane.b32.xlu0 %v4478, 20
    %v5224 = vpop.permute.xlu0 %5223
    %5225 = vrot.lane.b32.xlu0 %v4480, 20
    %v5226 = vpop.permute.xlu0 %5225
    %5227 = vrot.lane.b32.xlu0 %v4483, 20
    %v5228 = vpop.permute.xlu0 %5227
    %5229 = vrot.lane.b32.xlu0 %v4485, 20
    %v5230 = vpop.permute.xlu0 %5229
    %5231 = vrot.lane.b32.xlu0 %v4488, 20
    %v5232 = vpop.permute.xlu0 %5231
    %5233 = vrot.lane.b32.xlu0 %v4490, 20
    %v5234 = vpop.permute.xlu0 %5233
    %5235 = vrot.lane.b32.xlu0 %v4493, 20
    %v5236 = vpop.permute.xlu0 %5235
    %5237 = vrot.lane.b32.xlu0 %v4495, 20
    %v5238 = vpop.permute.xlu0 %5237
    %5239 = vrot.lane.b32.xlu0 %v4498, 20
    %v5240 = vpop.permute.xlu0 %5239
    %5241 = vrot.lane.b32.xlu0 %v4500, 20
    %v5242 = vpop.permute.xlu0 %5241
    %5243 = vrot.lane.b32.xlu0 %v5175, 20
    %v5244 = vpop.permute.xlu0 %5243
    %5245 = vrot.lane.b32.xlu0 %v5177, 20
    %v5246 = vpop.permute.xlu0 %5245
    %5247 = vrot.lane.b32.xlu0 %v4508, 20
    %v5248 = vpop.permute.xlu0 %5247
    %5249 = vrot.lane.b32.xlu0 %v4510, 20
    %v5250 = vpop.permute.xlu0 %5249
    %5251 = vrot.lane.b32.xlu0 %v4513, 20
    %v5252 = vpop.permute.xlu0 %5251
    %5253 = vrot.lane.b32.xlu0 %v4515, 20
    %v5254 = vpop.permute.xlu0 %5253
    %5255 = vrot.lane.b32.xlu0 %v4518, 20
    %v5256 = vpop.permute.xlu0 %5255
    %5257 = vrot.lane.b32.xlu0 %v4520, 20
    %v5258 = vpop.permute.xlu0 %5257
    %5259 = vrot.lane.b32.xlu0 %v4523, 20
    %v5260 = vpop.permute.xlu0 %5259
    %5261 = vrot.lane.b32.xlu0 %v4525, 20
    %v5262 = vpop.permute.xlu0 %5261
    %5263 = vrot.lane.b32.xlu0 %v4528, 20
    %v5264 = vpop.permute.xlu0 %5263
    %5265 = vrot.lane.b32.xlu0 %v4530, 20
    %v5266 = vpop.permute.xlu0 %5265
    %5267 = vrot.lane.b32.xlu0 %v4533, 20
    %v5268 = vpop.permute.xlu0 %5267
    %5269 = vrot.lane.b32.xlu0 %v4535, 20
    %v5270 = vpop.permute.xlu0 %5269
    %5271 = vrot.lane.b32.xlu0 %v4538, 20
    %v5272 = vpop.permute.xlu0 %5271
    %5273 = vrot.lane.b32.xlu0 %v4540, 20
    %v5274 = vpop.permute.xlu0 %5273
    %5275 = vrot.lane.b32.xlu0 %v4543, 20
    %v5276 = vpop.permute.xlu0 %5275
    %5277 = vrot.lane.b32.xlu0 %v4545, 20
    %v5278 = vpop.permute.xlu0 %5277
    %5279 = vrot.lane.b32.xlu0 %v4548, 20
    %v5280 = vpop.permute.xlu0 %5279
    %5281 = vrot.lane.b32.xlu0 %v4550, 20
    %v5282 = vpop.permute.xlu0 %5281
    %5283 = vrot.lane.b32.xlu0 %v4553, 20
    %v5284 = vpop.permute.xlu0 %5283
    %5285 = vrot.lane.b32.xlu0 %v4555, 20
    %v5286 = vpop.permute.xlu0 %5285
    %5287 = vrot.lane.b32.xlu0 %v4558, 20
    %v5288 = vpop.permute.xlu0 %5287
    %5289 = vrot.lane.b32.xlu0 %v4560, 20
    %v5290 = vpop.permute.xlu0 %5289
    %5291 = vrot.lane.b32.xlu0 %v4563, 20
    %v5292 = vpop.permute.xlu0 %5291
    %5293 = vrot.lane.b32.xlu0 %v4565, 20
    %v5294 = vpop.permute.xlu0 %5293
    %5295 = vrot.lane.b32.xlu0 %v4568, 20
    %v5296 = vpop.permute.xlu0 %5295
    %5297 = vrot.lane.b32.xlu0 %v4570, 20
    %v5298 = vpop.permute.xlu0 %5297
    %5299 = vrot.lane.b32.xlu0 %v4573, 20
    %v5300 = vpop.permute.xlu0 %5299
    %5301 = vrot.lane.b32.xlu0 %v4575, 20
    %v5302 = vpop.permute.xlu0 %5301
    %5303 = vrot.lane.b32.xlu0 %v4578, 20
    %v5304 = vpop.permute.xlu0 %5303
    %5305 = vrot.lane.b32.xlu0 %v4580, 20
    %v5306 = vpop.permute.xlu0 %5305
    %5307 = vrot.lane.b32.xlu0 %v5180, 20
    %v5308 = vpop.permute.xlu0 %5307
    %5309 = vrot.lane.b32.xlu0 %v5182, 20
    %v5310 = vpop.permute.xlu0 %5309
    %5379 = vrot.lane.b32.xlu0 %v3871, 24
    %v5380 = vpop.permute.xlu0 %5379
    %5381 = vrot.lane.b32.xlu0 %v3872, 24
    %v5382 = vpop.permute.xlu0 %5381
    %5383 = vrot.lane.b32.xlu0 %v3874, 24
    %v5384 = vpop.permute.xlu0 %5383
    %5385 = vrot.lane.b32.xlu0 %v3875, 24
    %v5386 = vpop.permute.xlu0 %5385
    %5387 = vrot.lane.b32.xlu0 %v3877, 24
    %v5388 = vpop.permute.xlu0 %5387
    %5389 = vrot.lane.b32.xlu0 %v3878, 24
    %v5390 = vpop.permute.xlu0 %5389
    %5391 = vrot.lane.b32.xlu0 %v3880, 24
    %v5392 = vpop.permute.xlu0 %5391
    %5393 = vrot.lane.b32.xlu0 %v3881, 24
    %v5394 = vpop.permute.xlu0 %5393
    %5395 = vrot.lane.b32.xlu0 %v3883, 24
    %v5396 = vpop.permute.xlu0 %5395
    %5397 = vrot.lane.b32.xlu0 %v3884, 24
    %v5398 = vpop.permute.xlu0 %5397
    %5399 = vrot.lane.b32.xlu0 %v3886, 24
    %v5400 = vpop.permute.xlu0 %5399
    %5401 = vrot.lane.b32.xlu0 %v3887, 24
    %v5402 = vpop.permute.xlu0 %5401
    %5403 = vrot.lane.b32.xlu0 %v3889, 24
    %v5404 = vpop.permute.xlu0 %5403
    %5405 = vrot.lane.b32.xlu0 %v3890, 24
    %v5406 = vpop.permute.xlu0 %5405
    %5407 = vrot.lane.b32.xlu0 %v3892, 24
    %v5408 = vpop.permute.xlu0 %5407
    %5409 = vrot.lane.b32.xlu0 %v3893, 24
    %v5410 = vpop.permute.xlu0 %5409
    %5411 = vrot.lane.b32.xlu0 %v3895, 24
    %v5412 = vpop.permute.xlu0 %5411
    %5413 = vrot.lane.b32.xlu0 %v3896, 24
    %v5414 = vpop.permute.xlu0 %5413
    %5415 = vrot.lane.b32.xlu0 %v3898, 24
    %v5416 = vpop.permute.xlu0 %5415
    %5417 = vrot.lane.b32.xlu0 %v3899, 24
    %v5418 = vpop.permute.xlu0 %5417
    %5419 = vrot.lane.b32.xlu0 %v3901, 24
    %v5420 = vpop.permute.xlu0 %5419
    %5421 = vrot.lane.b32.xlu0 %v3902, 24
    %v5422 = vpop.permute.xlu0 %5421
    %5423 = vrot.lane.b32.xlu0 %v3904, 24
    %v5424 = vpop.permute.xlu0 %5423
    %5425 = vrot.lane.b32.xlu0 %v3905, 24
    %v5426 = vpop.permute.xlu0 %5425
    %5427 = vrot.lane.b32.xlu0 %v3907, 24
    %v5428 = vpop.permute.xlu0 %5427
    %5429 = vrot.lane.b32.xlu0 %v3908, 24
    %v5430 = vpop.permute.xlu0 %5429
    %5431 = vrot.lane.b32.xlu0 %v3910, 24
    %v5432 = vpop.permute.xlu0 %5431
    %5433 = vrot.lane.b32.xlu0 %v3911, 24
    %v5434 = vpop.permute.xlu0 %5433
    %5435 = vrot.lane.b32.xlu0 %v3913, 24
    %v5436 = vpop.permute.xlu0 %5435
    %5437 = vrot.lane.b32.xlu0 %v3914, 24
    %v5438 = vpop.permute.xlu0 %5437
    %5439 = vrot.lane.b32.xlu0 %v3916, 24
    %v5440 = vpop.permute.xlu0 %5439
    %5441 = vrot.lane.b32.xlu0 %v3917, 24
    %v5442 = vpop.permute.xlu0 %5441
    %5443 = vrot.lane.b32.xlu0 %v3925, 24
    %v5444 = vpop.permute.xlu0 %5443
    %5445 = vrot.lane.b32.xlu0 %v3926, 24
    %v5446 = vpop.permute.xlu0 %5445
    %5447 = vrot.lane.b32.xlu0 %v3928, 24
    %v5448 = vpop.permute.xlu0 %5447
    %5449 = vrot.lane.b32.xlu0 %v3929, 24
    %v5450 = vpop.permute.xlu0 %5449
    %5451 = vrot.lane.b32.xlu0 %v3931, 24
    %v5452 = vpop.permute.xlu0 %5451
    %5453 = vrot.lane.b32.xlu0 %v3932, 24
    %v5454 = vpop.permute.xlu0 %5453
    %5455 = vrot.lane.b32.xlu0 %v3934, 24
    %v5456 = vpop.permute.xlu0 %5455
    %5457 = vrot.lane.b32.xlu0 %v3935, 24
    %v5458 = vpop.permute.xlu0 %5457
    %5459 = vrot.lane.b32.xlu0 %v3937, 24
    %v5460 = vpop.permute.xlu0 %5459
    %5461 = vrot.lane.b32.xlu0 %v3938, 24
    %v5462 = vpop.permute.xlu0 %5461
    %5463 = vrot.lane.b32.xlu0 %v3940, 24
    %v5464 = vpop.permute.xlu0 %5463
    %5465 = vrot.lane.b32.xlu0 %v3941, 24
    %v5466 = vpop.permute.xlu0 %5465
    %5467 = vrot.lane.b32.xlu0 %v3943, 24
    %v5468 = vpop.permute.xlu0 %5467
    %5469 = vrot.lane.b32.xlu0 %v3944, 24
    %v5470 = vpop.permute.xlu0 %5469
    %5471 = vrot.lane.b32.xlu0 %v3946, 24
    %v5472 = vpop.permute.xlu0 %5471
    %5473 = vrot.lane.b32.xlu0 %v3947, 24
    %v5474 = vpop.permute.xlu0 %5473
    %5475 = vrot.lane.b32.xlu0 %v3949, 24
    %v5476 = vpop.permute.xlu0 %5475
    %5477 = vrot.lane.b32.xlu0 %v3950, 24
    %v5478 = vpop.permute.xlu0 %5477
    %5479 = vrot.lane.b32.xlu0 %v3952, 24
    %v5480 = vpop.permute.xlu0 %5479
    %5481 = vrot.lane.b32.xlu0 %v3953, 24
    %v5482 = vpop.permute.xlu0 %5481
    %5483 = vrot.lane.b32.xlu0 %v3955, 24
    %v5484 = vpop.permute.xlu0 %5483
    %5485 = vrot.lane.b32.xlu0 %v3956, 24
    %v5486 = vpop.permute.xlu0 %5485
    %5487 = vrot.lane.b32.xlu0 %v3958, 24
    %v5488 = vpop.permute.xlu0 %5487
    %5489 = vrot.lane.b32.xlu0 %v3959, 24
    %v5490 = vpop.permute.xlu0 %5489
    %5491 = vrot.lane.b32.xlu0 %v3961, 24
    %v5492 = vpop.permute.xlu0 %5491
    %5493 = vrot.lane.b32.xlu0 %v3962, 24
    %v5494 = vpop.permute.xlu0 %5493
    %5495 = vrot.lane.b32.xlu0 %v3964, 24
    %v5496 = vpop.permute.xlu0 %5495
    %5497 = vrot.lane.b32.xlu0 %v3965, 24
    %v5498 = vpop.permute.xlu0 %5497
    %5499 = vrot.lane.b32.xlu0 %v3967, 24
    %v5500 = vpop.permute.xlu0 %5499
    %5501 = vrot.lane.b32.xlu0 %v3968, 24
    %v5502 = vpop.permute.xlu0 %5501
    %5503 = vrot.lane.b32.xlu0 %v3970, 24
    %v5504 = vpop.permute.xlu0 %5503
    %5505 = vrot.lane.b32.xlu0 %v3971, 24
    %v5506 = vpop.permute.xlu0 %5505
    %v5573 = vrot.slane %v3916, 1
    %v5574 = vrot.slane %v3917, 1
    %v5575 = vsel %vm232, %v5573, %v5574
    %v5576 = vrot.slane %v3918, 1
    %v5577 = vsel %vm232, %v5574, %v5576
    %v5578 = vrot.slane %v3970, 1
    %v5579 = vrot.slane %v3971, 1
    %v5580 = vsel %vm232, %v5578, %v5579
    %v5581 = vrot.slane %v3972, 1
    %v5582 = vsel %vm232, %v5579, %v5581
    %5583 = vrot.lane.b32.xlu0 %v4081, 28
    %v5584 = vpop.permute.xlu0 %5583
    %5585 = vrot.lane.b32.xlu0 %v4083, 28
    %v5586 = vpop.permute.xlu0 %5585
    %5587 = vrot.lane.b32.xlu0 %v4086, 28
    %v5588 = vpop.permute.xlu0 %5587
    %5589 = vrot.lane.b32.xlu0 %v4088, 28
    %v5590 = vpop.permute.xlu0 %5589
    %5591 = vrot.lane.b32.xlu0 %v4091, 28
    %v5592 = vpop.permute.xlu0 %5591
    %5593 = vrot.lane.b32.xlu0 %v4093, 28
    %v5594 = vpop.permute.xlu0 %5593
    %5595 = vrot.lane.b32.xlu0 %v4096, 28
    %v5596 = vpop.permute.xlu0 %5595
    %5597 = vrot.lane.b32.xlu0 %v4098, 28
    %v5598 = vpop.permute.xlu0 %5597
    %5599 = vrot.lane.b32.xlu0 %v4101, 28
    %v5600 = vpop.permute.xlu0 %5599
    %5601 = vrot.lane.b32.xlu0 %v4103, 28
    %v5602 = vpop.permute.xlu0 %5601
    %5603 = vrot.lane.b32.xlu0 %v4106, 28
    %v5604 = vpop.permute.xlu0 %5603
    %5605 = vrot.lane.b32.xlu0 %v4108, 28
    %v5606 = vpop.permute.xlu0 %5605
    %5607 = vrot.lane.b32.xlu0 %v4111, 28
    %v5608 = vpop.permute.xlu0 %5607
    %5609 = vrot.lane.b32.xlu0 %v4113, 28
    %v5610 = vpop.permute.xlu0 %5609
    %5611 = vrot.lane.b32.xlu0 %v4116, 28
    %v5612 = vpop.permute.xlu0 %5611
    %5613 = vrot.lane.b32.xlu0 %v4118, 28
    %v5614 = vpop.permute.xlu0 %5613
    %5615 = vrot.lane.b32.xlu0 %v4121, 28
    %v5616 = vpop.permute.xlu0 %5615
    %5617 = vrot.lane.b32.xlu0 %v4123, 28
    %v5618 = vpop.permute.xlu0 %5617
    %5619 = vrot.lane.b32.xlu0 %v4126, 28
    %v5620 = vpop.permute.xlu0 %5619
    %5621 = vrot.lane.b32.xlu0 %v4128, 28
    %v5622 = vpop.permute.xlu0 %5621
    %5623 = vrot.lane.b32.xlu0 %v4131, 28
    %v5624 = vpop.permute.xlu0 %5623
    %5625 = vrot.lane.b32.xlu0 %v4133, 28
    %v5626 = vpop.permute.xlu0 %5625
    %5627 = vrot.lane.b32.xlu0 %v4136, 28
    %v5628 = vpop.permute.xlu0 %5627
    %5629 = vrot.lane.b32.xlu0 %v4138, 28
    %v5630 = vpop.permute.xlu0 %5629
    %5631 = vrot.lane.b32.xlu0 %v4141, 28
    %v5632 = vpop.permute.xlu0 %5631
    %5633 = vrot.lane.b32.xlu0 %v4143, 28
    %v5634 = vpop.permute.xlu0 %5633
    %5635 = vrot.lane.b32.xlu0 %v4146, 28
    %v5636 = vpop.permute.xlu0 %5635
    %5637 = vrot.lane.b32.xlu0 %v4148, 28
    %v5638 = vpop.permute.xlu0 %5637
    %5639 = vrot.lane.b32.xlu0 %v4973, 28
    %v5640 = vpop.permute.xlu0 %5639
    %5641 = vrot.lane.b32.xlu0 %v4975, 28
    %v5642 = vpop.permute.xlu0 %5641
    %5643 = vrot.lane.b32.xlu0 %v5575, 28
    %v5644 = vpop.permute.xlu0 %5643
    %5645 = vrot.lane.b32.xlu0 %v5577, 28
    %v5646 = vpop.permute.xlu0 %5645
    %5647 = vrot.lane.b32.xlu0 %v4161, 28
    %v5648 = vpop.permute.xlu0 %5647
    %5649 = vrot.lane.b32.xlu0 %v4163, 28
    %v5650 = vpop.permute.xlu0 %5649
    %5651 = vrot.lane.b32.xlu0 %v4166, 28
    %v5652 = vpop.permute.xlu0 %5651
    %5653 = vrot.lane.b32.xlu0 %v4168, 28
    %v5654 = vpop.permute.xlu0 %5653
    %5655 = vrot.lane.b32.xlu0 %v4171, 28
    %v5656 = vpop.permute.xlu0 %5655
    %5657 = vrot.lane.b32.xlu0 %v4173, 28
    %v5658 = vpop.permute.xlu0 %5657
    %5659 = vrot.lane.b32.xlu0 %v4176, 28
    %v5660 = vpop.permute.xlu0 %5659
    %5661 = vrot.lane.b32.xlu0 %v4178, 28
    %v5662 = vpop.permute.xlu0 %5661
    %5663 = vrot.lane.b32.xlu0 %v4181, 28
    %v5664 = vpop.permute.xlu0 %5663
    %5665 = vrot.lane.b32.xlu0 %v4183, 28
    %v5666 = vpop.permute.xlu0 %5665
    %5667 = vrot.lane.b32.xlu0 %v4186, 28
    %v5668 = vpop.permute.xlu0 %5667
    %5669 = vrot.lane.b32.xlu0 %v4188, 28
    %v5670 = vpop.permute.xlu0 %5669
    %5671 = vrot.lane.b32.xlu0 %v4191, 28
    %v5672 = vpop.permute.xlu0 %5671
    %5673 = vrot.lane.b32.xlu0 %v4193, 28
    %v5674 = vpop.permute.xlu0 %5673
    %5675 = vrot.lane.b32.xlu0 %v4196, 28
    %v5676 = vpop.permute.xlu0 %5675
    %5677 = vrot.lane.b32.xlu0 %v4198, 28
    %v5678 = vpop.permute.xlu0 %5677
    %5679 = vrot.lane.b32.xlu0 %v4201, 28
    %v5680 = vpop.permute.xlu0 %5679
    %5681 = vrot.lane.b32.xlu0 %v4203, 28
    %v5682 = vpop.permute.xlu0 %5681
    %5683 = vrot.lane.b32.xlu0 %v4206, 28
    %v5684 = vpop.permute.xlu0 %5683
    %5685 = vrot.lane.b32.xlu0 %v4208, 28
    %v5686 = vpop.permute.xlu0 %5685
    %5687 = vrot.lane.b32.xlu0 %v4211, 28
    %v5688 = vpop.permute.xlu0 %5687
    %5689 = vrot.lane.b32.xlu0 %v4213, 28
    %v5690 = vpop.permute.xlu0 %5689
    %5691 = vrot.lane.b32.xlu0 %v4216, 28
    %v5692 = vpop.permute.xlu0 %5691
    %5693 = vrot.lane.b32.xlu0 %v4218, 28
    %v5694 = vpop.permute.xlu0 %5693
    %5695 = vrot.lane.b32.xlu0 %v4221, 28
    %v5696 = vpop.permute.xlu0 %5695
    %5697 = vrot.lane.b32.xlu0 %v4223, 28
    %v5698 = vpop.permute.xlu0 %5697
    %5699 = vrot.lane.b32.xlu0 %v4226, 28
    %v5700 = vpop.permute.xlu0 %5699
    %5701 = vrot.lane.b32.xlu0 %v4228, 28
    %v5702 = vpop.permute.xlu0 %5701
    %5703 = vrot.lane.b32.xlu0 %v4978, 28
    %v5704 = vpop.permute.xlu0 %5703
    %5705 = vrot.lane.b32.xlu0 %v4980, 28
    %v5706 = vpop.permute.xlu0 %5705
    %5707 = vrot.lane.b32.xlu0 %v5580, 28
    %v5708 = vpop.permute.xlu0 %5707
    %5709 = vrot.lane.b32.xlu0 %v5582, 28
    %v5710 = vpop.permute.xlu0 %5709
    %v5775 = vrot.slane %v3916, 2
    %v5776 = vrot.slane %v3917, 2
    %v5777 = vsel %vm585, %v5775, %v5776
    %v5778 = vrot.slane %v3918, 2
    %v5779 = vsel %vm585, %v5776, %v5778
    %v5780 = vrot.slane %v3970, 2
    %v5781 = vrot.slane %v3971, 2
    %v5782 = vsel %vm585, %v5780, %v5781
    %v5783 = vrot.slane %v3972, 2
    %v5784 = vsel %vm585, %v5781, %v5783
    %5785 = vrot.lane.b32.xlu0 %v4433, 32
    %v5786 = vpop.permute.xlu0 %5785
    %5787 = vrot.lane.b32.xlu0 %v4435, 32
    %v5788 = vpop.permute.xlu0 %5787
    %5789 = vrot.lane.b32.xlu0 %v4438, 32
    %v5790 = vpop.permute.xlu0 %5789
    %5791 = vrot.lane.b32.xlu0 %v4440, 32
    %v5792 = vpop.permute.xlu0 %5791
    %5793 = vrot.lane.b32.xlu0 %v4443, 32
    %v5794 = vpop.permute.xlu0 %5793
    %5795 = vrot.lane.b32.xlu0 %v4445, 32
    %v5796 = vpop.permute.xlu0 %5795
    %5797 = vrot.lane.b32.xlu0 %v4448, 32
    %v5798 = vpop.permute.xlu0 %5797
    %5799 = vrot.lane.b32.xlu0 %v4450, 32
    %v5800 = vpop.permute.xlu0 %5799
    %5801 = vrot.lane.b32.xlu0 %v4453, 32
    %v5802 = vpop.permute.xlu0 %5801
    %5803 = vrot.lane.b32.xlu0 %v4455, 32
    %v5804 = vpop.permute.xlu0 %5803
    %5805 = vrot.lane.b32.xlu0 %v4458, 32
    %v5806 = vpop.permute.xlu0 %5805
    %5807 = vrot.lane.b32.xlu0 %v4460, 32
    %v5808 = vpop.permute.xlu0 %5807
    %5809 = vrot.lane.b32.xlu0 %v4463, 32
    %v5810 = vpop.permute.xlu0 %5809
    %5811 = vrot.lane.b32.xlu0 %v4465, 32
    %v5812 = vpop.permute.xlu0 %5811
    %5813 = vrot.lane.b32.xlu0 %v4468, 32
    %v5814 = vpop.permute.xlu0 %5813
    %5815 = vrot.lane.b32.xlu0 %v4470, 32
    %v5816 = vpop.permute.xlu0 %5815
    %5817 = vrot.lane.b32.xlu0 %v4473, 32
    %v5818 = vpop.permute.xlu0 %5817
    %5819 = vrot.lane.b32.xlu0 %v4475, 32
    %v5820 = vpop.permute.xlu0 %5819
    %5821 = vrot.lane.b32.xlu0 %v4478, 32
    %v5822 = vpop.permute.xlu0 %5821
    %5823 = vrot.lane.b32.xlu0 %v4480, 32
    %v5824 = vpop.permute.xlu0 %5823
    %5825 = vrot.lane.b32.xlu0 %v4483, 32
    %v5826 = vpop.permute.xlu0 %5825
    %5827 = vrot.lane.b32.xlu0 %v4485, 32
    %v5828 = vpop.permute.xlu0 %5827
    %5829 = vrot.lane.b32.xlu0 %v4488, 32
    %v5830 = vpop.permute.xlu0 %5829
    %5831 = vrot.lane.b32.xlu0 %v4490, 32
    %v5832 = vpop.permute.xlu0 %5831
    %5833 = vrot.lane.b32.xlu0 %v4493, 32
    %v5834 = vpop.permute.xlu0 %5833
    %5835 = vrot.lane.b32.xlu0 %v4495, 32
    %v5836 = vpop.permute.xlu0 %5835
    %5837 = vrot.lane.b32.xlu0 %v4498, 32
    %v5838 = vpop.permute.xlu0 %5837
    %5839 = vrot.lane.b32.xlu0 %v4500, 32
    %v5840 = vpop.permute.xlu0 %5839
    %5841 = vrot.lane.b32.xlu0 %v5175, 32
    %v5842 = vpop.permute.xlu0 %5841
    %5843 = vrot.lane.b32.xlu0 %v5177, 32
    %v5844 = vpop.permute.xlu0 %5843
    %5845 = vrot.lane.b32.xlu0 %v5777, 32
    %v5846 = vpop.permute.xlu0 %5845
    %5847 = vrot.lane.b32.xlu0 %v5779, 32
    %v5848 = vpop.permute.xlu0 %5847
    %5849 = vrot.lane.b32.xlu0 %v4513, 32
    %v5850 = vpop.permute.xlu0 %5849
    %5851 = vrot.lane.b32.xlu0 %v4515, 32
    %v5852 = vpop.permute.xlu0 %5851
    %5853 = vrot.lane.b32.xlu0 %v4518, 32
    %v5854 = vpop.permute.xlu0 %5853
    %5855 = vrot.lane.b32.xlu0 %v4520, 32
    %v5856 = vpop.permute.xlu0 %5855
    %5857 = vrot.lane.b32.xlu0 %v4523, 32
    %v5858 = vpop.permute.xlu0 %5857
    %5859 = vrot.lane.b32.xlu0 %v4525, 32
    %v5860 = vpop.permute.xlu0 %5859
    %5861 = vrot.lane.b32.xlu0 %v4528, 32
    %v5862 = vpop.permute.xlu0 %5861
    %5863 = vrot.lane.b32.xlu0 %v4530, 32
    %v5864 = vpop.permute.xlu0 %5863
    %5865 = vrot.lane.b32.xlu0 %v4533, 32
    %v5866 = vpop.permute.xlu0 %5865
    %5867 = vrot.lane.b32.xlu0 %v4535, 32
    %v5868 = vpop.permute.xlu0 %5867
    %5869 = vrot.lane.b32.xlu0 %v4538, 32
    %v5870 = vpop.permute.xlu0 %5869
    %5871 = vrot.lane.b32.xlu0 %v4540, 32
    %v5872 = vpop.permute.xlu0 %5871
    %5873 = vrot.lane.b32.xlu0 %v4543, 32
    %v5874 = vpop.permute.xlu0 %5873
    %5875 = vrot.lane.b32.xlu0 %v4545, 32
    %v5876 = vpop.permute.xlu0 %5875
    %5877 = vrot.lane.b32.xlu0 %v4548, 32
    %v5878 = vpop.permute.xlu0 %5877
    %5879 = vrot.lane.b32.xlu0 %v4550, 32
    %v5880 = vpop.permute.xlu0 %5879
    %5881 = vrot.lane.b32.xlu0 %v4553, 32
    %v5882 = vpop.permute.xlu0 %5881
    %5883 = vrot.lane.b32.xlu0 %v4555, 32
    %v5884 = vpop.permute.xlu0 %5883
    %5885 = vrot.lane.b32.xlu0 %v4558, 32
    %v5886 = vpop.permute.xlu0 %5885
    %5887 = vrot.lane.b32.xlu0 %v4560, 32
    %v5888 = vpop.permute.xlu0 %5887
    %5889 = vrot.lane.b32.xlu0 %v4563, 32
    %v5890 = vpop.permute.xlu0 %5889
    %5891 = vrot.lane.b32.xlu0 %v4565, 32
    %v5892 = vpop.permute.xlu0 %5891
    %5893 = vrot.lane.b32.xlu0 %v4568, 32
    %v5894 = vpop.permute.xlu0 %5893
    %5895 = vrot.lane.b32.xlu0 %v4570, 32
    %v5896 = vpop.permute.xlu0 %5895
    %5897 = vrot.lane.b32.xlu0 %v4573, 32
    %v5898 = vpop.permute.xlu0 %5897
    %5899 = vrot.lane.b32.xlu0 %v4575, 32
    %v5900 = vpop.permute.xlu0 %5899
    %5901 = vrot.lane.b32.xlu0 %v4578, 32
    %v5902 = vpop.permute.xlu0 %5901
    %5903 = vrot.lane.b32.xlu0 %v4580, 32
    %v5904 = vpop.permute.xlu0 %5903
    %5905 = vrot.lane.b32.xlu0 %v5180, 32
    %v5906 = vpop.permute.xlu0 %5905
    %5907 = vrot.lane.b32.xlu0 %v5182, 32
    %v5908 = vpop.permute.xlu0 %5907
    %5909 = vrot.lane.b32.xlu0 %v5782, 32
    %v5910 = vpop.permute.xlu0 %5909
    %5911 = vrot.lane.b32.xlu0 %v5784, 32
    %v5912 = vpop.permute.xlu0 %5911
    %v5977 = vsel %vm2142, %v3865, %v4230
    %v5978 = vsel %vm2142, %v3866, %v4232
    %v5979 = vsel %vm2142, %v3868, %v4234
    %v5980 = vsel %vm2142, %v3869, %v4236
    %v5981 = vsel %vm2142, %v3871, %v4238
    %v5982 = vsel %vm2142, %v3872, %v4240
    %v5983 = vsel %vm2142, %v3874, %v4242
    %v5984 = vsel %vm2142, %v3875, %v4244
    %v5985 = vsel %vm2142, %v3877, %v4246
    %v5986 = vsel %vm2142, %v3878, %v4248
    %v5987 = vsel %vm2142, %v3880, %v4250
    %v5988 = vsel %vm2142, %v3881, %v4252
    %v5989 = vsel %vm2142, %v3883, %v4254
    %v5990 = vsel %vm2142, %v3884, %v4256
    %v5991 = vsel %vm2142, %v3886, %v4258
    %v5992 = vsel %vm2142, %v3887, %v4260
    %v5993 = vsel %vm2142, %v3889, %v4262
    %v5994 = vsel %vm2142, %v3890, %v4264
    %v5995 = vsel %vm2142, %v3892, %v4266
    %v5996 = vsel %vm2142, %v3893, %v4268
    %v5997 = vsel %vm2142, %v3895, %v4270
    %v5998 = vsel %vm2142, %v3896, %v4272
    %v5999 = vsel %vm2142, %v3898, %v4274
    %v6000 = vsel %vm2142, %v3899, %v4276
    %v6001 = vsel %vm2142, %v3901, %v4278
    %v6002 = vsel %vm2142, %v3902, %v4280
    %v6003 = vsel %vm2142, %v3904, %v4282
    %v6004 = vsel %vm2142, %v3905, %v4284
    %v6005 = vsel %vm2142, %v3907, %v4286
    %v6006 = vsel %vm2142, %v3908, %v4288
    %v6007 = vsel %vm2142, %v3910, %v4290
    %v6008 = vsel %vm2142, %v3911, %v4292
    %v6009 = vsel %vm2142, %v3919, %v4294
    %v6010 = vsel %vm2142, %v3920, %v4296
    %v6011 = vsel %vm2142, %v3922, %v4298
    %v6012 = vsel %vm2142, %v3923, %v4300
    %v6013 = vsel %vm2142, %v3925, %v4302
    %v6014 = vsel %vm2142, %v3926, %v4304
    %v6015 = vsel %vm2142, %v3928, %v4306
    %v6016 = vsel %vm2142, %v3929, %v4308
    %v6017 = vsel %vm2142, %v3931, %v4310
    %v6018 = vsel %vm2142, %v3932, %v4312
    %v6019 = vsel %vm2142, %v3934, %v4314
    %v6020 = vsel %vm2142, %v3935, %v4316
    %v6021 = vsel %vm2142, %v3937, %v4318
    %v6022 = vsel %vm2142, %v3938, %v4320
    %v6023 = vsel %vm2142, %v3940, %v4322
    %v6024 = vsel %vm2142, %v3941, %v4324
    %v6025 = vsel %vm2142, %v3943, %v4326
    %v6026 = vsel %vm2142, %v3944, %v4328
    %v6027 = vsel %vm2142, %v3946, %v4330
    %v6028 = vsel %vm2142, %v3947, %v4332
    %v6029 = vsel %vm2142, %v3949, %v4334
    %v6030 = vsel %vm2142, %v3950, %v4336
    %v6031 = vsel %vm2142, %v3952, %v4338
    %v6032 = vsel %vm2142, %v3953, %v4340
    %v6033 = vsel %vm2142, %v3955, %v4342
    %v6034 = vsel %vm2142, %v3956, %v4344
    %v6035 = vsel %vm2142, %v3958, %v4346
    %v6036 = vsel %vm2142, %v3959, %v4348
    %v6037 = vsel %vm2142, %v3961, %v4350
    %v6038 = vsel %vm2142, %v3962, %v4352
    %v6039 = vsel %vm2142, %v3964, %v4354
    %v6040 = vsel %vm2142, %v3965, %v4356
    %v6041 = vsel %vm2207, %v5977, %v4582
    %v6042 = vsel %vm2207, %v5978, %v4584
    %v6043 = vsel %vm2207, %v5979, %v4586
    %v6044 = vsel %vm2207, %v5980, %v4588
    %v6045 = vsel %vm2207, %v5981, %v4590
    %v6046 = vsel %vm2207, %v5982, %v4592
    %v6047 = vsel %vm2207, %v5983, %v4594
    %v6048 = vsel %vm2207, %v5984, %v4596
    %v6049 = vsel %vm2207, %v5985, %v4598
    %v6050 = vsel %vm2207, %v5986, %v4600
    %v6051 = vsel %vm2207, %v5987, %v4602
    %v6052 = vsel %vm2207, %v5988, %v4604
    %v6053 = vsel %vm2207, %v5989, %v4606
    %v6054 = vsel %vm2207, %v5990, %v4608
    %v6055 = vsel %vm2207, %v5991, %v4610
    %v6056 = vsel %vm2207, %v5992, %v4612
    %v6057 = vsel %vm2207, %v5993, %v4614
    %v6058 = vsel %vm2207, %v5994, %v4616
    %v6059 = vsel %vm2207, %v5995, %v4618
    %v6060 = vsel %vm2207, %v5996, %v4620
    %v6061 = vsel %vm2207, %v5997, %v4622
    %v6062 = vsel %vm2207, %v5998, %v4624
    %v6063 = vsel %vm2207, %v5999, %v4626
    %v6064 = vsel %vm2207, %v6000, %v4628
    %v6065 = vsel %vm2207, %v6001, %v4630
    %v6066 = vsel %vm2207, %v6002, %v4632
    %v6067 = vsel %vm2207, %v6003, %v4634
    %v6068 = vsel %vm2207, %v6004, %v4636
    %v6069 = vsel %vm2207, %v6005, %v4638
    %v6070 = vsel %vm2207, %v6006, %v4640
    %v6071 = vsel %vm2207, %v6007, %v4642
    %v6072 = vsel %vm2207, %v6008, %v4644
    %v6073 = vsel %vm2207, %v6009, %v4646
    %v6074 = vsel %vm2207, %v6010, %v4648
    %v6075 = vsel %vm2207, %v6011, %v4650
    %v6076 = vsel %vm2207, %v6012, %v4652
    %v6077 = vsel %vm2207, %v6013, %v4654
    %v6078 = vsel %vm2207, %v6014, %v4656
    %v6079 = vsel %vm2207, %v6015, %v4658
    %v6080 = vsel %vm2207, %v6016, %v4660
    %v6081 = vsel %vm2207, %v6017, %v4662
    %v6082 = vsel %vm2207, %v6018, %v4664
    %v6083 = vsel %vm2207, %v6019, %v4666
    %v6084 = vsel %vm2207, %v6020, %v4668
    %v6085 = vsel %vm2207, %v6021, %v4670
    %v6086 = vsel %vm2207, %v6022, %v4672
    %v6087 = vsel %vm2207, %v6023, %v4674
    %v6088 = vsel %vm2207, %v6024, %v4676
    %v6089 = vsel %vm2207, %v6025, %v4678
    %v6090 = vsel %vm2207, %v6026, %v4680
    %v6091 = vsel %vm2207, %v6027, %v4682
    %v6092 = vsel %vm2207, %v6028, %v4684
    %v6093 = vsel %vm2207, %v6029, %v4686
    %v6094 = vsel %vm2207, %v6030, %v4688
    %v6095 = vsel %vm2207, %v6031, %v4690
    %v6096 = vsel %vm2207, %v6032, %v4692
    %v6097 = vsel %vm2207, %v6033, %v4694
    %v6098 = vsel %vm2207, %v6034, %v4696
    %v6099 = vsel %vm2207, %v6035, %v4698
    %v6100 = vsel %vm2207, %v6036, %v4700
    %v6101 = vsel %vm2207, %v6037, %v4702
    %v6102 = vsel %vm2207, %v6038, %v4704
    %v6103 = vsel %vm2207, %v6039, %v4706
    %v6104 = vsel %vm2207, %v6040, %v4708
    %v6105 = vsel %vm2272, %v6041, %v4778
    %v6106 = vsel %vm2272, %v6042, %v4780
    %v6107 = vsel %vm2272, %v6043, %v4782
    %v6108 = vsel %vm2272, %v6044, %v4784
    %v6109 = vsel %vm2272, %v6045, %v4786
    %v6110 = vsel %vm2272, %v6046, %v4788
    %v6111 = vsel %vm2272, %v6047, %v4790
    %v6112 = vsel %vm2272, %v6048, %v4792
    %v6113 = vsel %vm2272, %v6049, %v4794
    %v6114 = vsel %vm2272, %v6050, %v4796
    %v6115 = vsel %vm2272, %v6051, %v4798
    %v6116 = vsel %vm2272, %v6052, %v4800
    %v6117 = vsel %vm2272, %v6053, %v4802
    %v6118 = vsel %vm2272, %v6054, %v4804
    %v6119 = vsel %vm2272, %v6055, %v4806
    %v6120 = vsel %vm2272, %v6056, %v4808
    %v6121 = vsel %vm2272, %v6057, %v4810
    %v6122 = vsel %vm2272, %v6058, %v4812
    %v6123 = vsel %vm2272, %v6059, %v4814
    %v6124 = vsel %vm2272, %v6060, %v4816
    %v6125 = vsel %vm2272, %v6061, %v4818
    %v6126 = vsel %vm2272, %v6062, %v4820
    %v6127 = vsel %vm2272, %v6063, %v4822
    %v6128 = vsel %vm2272, %v6064, %v4824
    %v6129 = vsel %vm2272, %v6065, %v4826
    %v6130 = vsel %vm2272, %v6066, %v4828
    %v6131 = vsel %vm2272, %v6067, %v4830
    %v6132 = vsel %vm2272, %v6068, %v4832
    %v6133 = vsel %vm2272, %v6069, %v4834
    %v6134 = vsel %vm2272, %v6070, %v4836
    %v6135 = vsel %vm2272, %v6071, %v4838
    %v6136 = vsel %vm2272, %v6072, %v4840
    %v6137 = vsel %vm2272, %v6073, %v4842
    %v6138 = vsel %vm2272, %v6074, %v4844
    %v6139 = vsel %vm2272, %v6075, %v4846
    %v6140 = vsel %vm2272, %v6076, %v4848
    %v6141 = vsel %vm2272, %v6077, %v4850
    %v6142 = vsel %vm2272, %v6078, %v4852
    %v6143 = vsel %vm2272, %v6079, %v4854
    %v6144 = vsel %vm2272, %v6080, %v4856
    %v6145 = vsel %vm2272, %v6081, %v4858
    %v6146 = vsel %vm2272, %v6082, %v4860
    %v6147 = vsel %vm2272, %v6083, %v4862
    %v6148 = vsel %vm2272, %v6084, %v4864
    %v6149 = vsel %vm2272, %v6085, %v4866
    %v6150 = vsel %vm2272, %v6086, %v4868
    %v6151 = vsel %vm2272, %v6087, %v4870
    %v6152 = vsel %vm2272, %v6088, %v4872
    %v6153 = vsel %vm2272, %v6089, %v4874
    %v6154 = vsel %vm2272, %v6090, %v4876
    %v6155 = vsel %vm2272, %v6091, %v4878
    %v6156 = vsel %vm2272, %v6092, %v4880
    %v6157 = vsel %vm2272, %v6093, %v4882
    %v6158 = vsel %vm2272, %v6094, %v4884
    %v6159 = vsel %vm2272, %v6095, %v4886
    %v6160 = vsel %vm2272, %v6096, %v4888
    %v6161 = vsel %vm2272, %v6097, %v4890
    %v6162 = vsel %vm2272, %v6098, %v4892
    %v6163 = vsel %vm2272, %v6099, %v4894
    %v6164 = vsel %vm2272, %v6100, %v4896
    %v6165 = vsel %vm2272, %v6101, %v4898
    %v6166 = vsel %vm2272, %v6102, %v4900
    %v6167 = vsel %vm2272, %v6103, %v4902
    %v6168 = vsel %vm2272, %v6104, %v4904
    %v6169 = vsel %vm2337, %v6105, %v4982
    %v6170 = vsel %vm2337, %v6106, %v4984
    %v6171 = vsel %vm2337, %v6107, %v4986
    %v6172 = vsel %vm2337, %v6108, %v4988
    %v6173 = vsel %vm2337, %v6109, %v4990
    %v6174 = vsel %vm2337, %v6110, %v4992
    %v6175 = vsel %vm2337, %v6111, %v4994
    %v6176 = vsel %vm2337, %v6112, %v4996
    %v6177 = vsel %vm2337, %v6113, %v4998
    %v6178 = vsel %vm2337, %v6114, %v5000
    %v6179 = vsel %vm2337, %v6115, %v5002
    %v6180 = vsel %vm2337, %v6116, %v5004
    %v6181 = vsel %vm2337, %v6117, %v5006
    %v6182 = vsel %vm2337, %v6118, %v5008
    %v6183 = vsel %vm2337, %v6119, %v5010
    %v6184 = vsel %vm2337, %v6120, %v5012
    %v6185 = vsel %vm2337, %v6121, %v5014
    %v6186 = vsel %vm2337, %v6122, %v5016
    %v6187 = vsel %vm2337, %v6123, %v5018
    %v6188 = vsel %vm2337, %v6124, %v5020
    %v6189 = vsel %vm2337, %v6125, %v5022
    %v6190 = vsel %vm2337, %v6126, %v5024
    %v6191 = vsel %vm2337, %v6127, %v5026
    %v6192 = vsel %vm2337, %v6128, %v5028
    %v6193 = vsel %vm2337, %v6129, %v5030
    %v6194 = vsel %vm2337, %v6130, %v5032
    %v6195 = vsel %vm2337, %v6131, %v5034
    %v6196 = vsel %vm2337, %v6132, %v5036
    %v6197 = vsel %vm2337, %v6133, %v5038
    %v6198 = vsel %vm2337, %v6134, %v5040
    %v6199 = vsel %vm2337, %v6135, %v5042
    %v6200 = vsel %vm2337, %v6136, %v5044
    %v6201 = vsel %vm2337, %v6137, %v5046
    %v6202 = vsel %vm2337, %v6138, %v5048
    %v6203 = vsel %vm2337, %v6139, %v5050
    %v6204 = vsel %vm2337, %v6140, %v5052
    %v6205 = vsel %vm2337, %v6141, %v5054
    %v6206 = vsel %vm2337, %v6142, %v5056
    %v6207 = vsel %vm2337, %v6143, %v5058
    %v6208 = vsel %vm2337, %v6144, %v5060
    %v6209 = vsel %vm2337, %v6145, %v5062
    %v6210 = vsel %vm2337, %v6146, %v5064
    %v6211 = vsel %vm2337, %v6147, %v5066
    %v6212 = vsel %vm2337, %v6148, %v5068
    %v6213 = vsel %vm2337, %v6149, %v5070
    %v6214 = vsel %vm2337, %v6150, %v5072
    %v6215 = vsel %vm2337, %v6151, %v5074
    %v6216 = vsel %vm2337, %v6152, %v5076
    %v6217 = vsel %vm2337, %v6153, %v5078
    %v6218 = vsel %vm2337, %v6154, %v5080
    %v6219 = vsel %vm2337, %v6155, %v5082
    %v6220 = vsel %vm2337, %v6156, %v5084
    %v6221 = vsel %vm2337, %v6157, %v5086
    %v6222 = vsel %vm2337, %v6158, %v5088
    %v6223 = vsel %vm2337, %v6159, %v5090
    %v6224 = vsel %vm2337, %v6160, %v5092
    %v6225 = vsel %vm2337, %v6161, %v5094
    %v6226 = vsel %vm2337, %v6162, %v5096
    %v6227 = vsel %vm2337, %v6163, %v5098
    %v6228 = vsel %vm2337, %v6164, %v5100
    %v6229 = vsel %vm2337, %v6165, %v5102
    %v6230 = vsel %vm2337, %v6166, %v5104
    %v6231 = vsel %vm2337, %v6167, %v5106
    %v6232 = vsel %vm2337, %v6168, %v5108
    %v6233 = vsel %vm2402, %v6169, %v5184
    %v6234 = vsel %vm2402, %v6170, %v5186
    %v6235 = vsel %vm2402, %v6171, %v5188
    %v6236 = vsel %vm2402, %v6172, %v5190
    %v6237 = vsel %vm2402, %v6173, %v5192
    %v6238 = vsel %vm2402, %v6174, %v5194
    %v6239 = vsel %vm2402, %v6175, %v5196
    %v6240 = vsel %vm2402, %v6176, %v5198
    %v6241 = vsel %vm2402, %v6177, %v5200
    %v6242 = vsel %vm2402, %v6178, %v5202
    %v6243 = vsel %vm2402, %v6179, %v5204
    %v6244 = vsel %vm2402, %v6180, %v5206
    %v6245 = vsel %vm2402, %v6181, %v5208
    %v6246 = vsel %vm2402, %v6182, %v5210
    %v6247 = vsel %vm2402, %v6183, %v5212
    %v6248 = vsel %vm2402, %v6184, %v5214
    %v6249 = vsel %vm2402, %v6185, %v5216
    %v6250 = vsel %vm2402, %v6186, %v5218
    %v6251 = vsel %vm2402, %v6187, %v5220
    %v6252 = vsel %vm2402, %v6188, %v5222
    %v6253 = vsel %vm2402, %v6189, %v5224
    %v6254 = vsel %vm2402, %v6190, %v5226
    %v6255 = vsel %vm2402, %v6191, %v5228
    %v6256 = vsel %vm2402, %v6192, %v5230
    %v6257 = vsel %vm2402, %v6193, %v5232
    %v6258 = vsel %vm2402, %v6194, %v5234
    %v6259 = vsel %vm2402, %v6195, %v5236
    %v6260 = vsel %vm2402, %v6196, %v5238
    %v6261 = vsel %vm2402, %v6197, %v5240
    %v6262 = vsel %vm2402, %v6198, %v5242
    %v6263 = vsel %vm2402, %v6199, %v5244
    %v6264 = vsel %vm2402, %v6200, %v5246
    %v6265 = vsel %vm2402, %v6201, %v5248
    %v6266 = vsel %vm2402, %v6202, %v5250
    %v6267 = vsel %vm2402, %v6203, %v5252
    %v6268 = vsel %vm2402, %v6204, %v5254
    %v6269 = vsel %vm2402, %v6205, %v5256
    %v6270 = vsel %vm2402, %v6206, %v5258
    %v6271 = vsel %vm2402, %v6207, %v5260
    %v6272 = vsel %vm2402, %v6208, %v5262
    %v6273 = vsel %vm2402, %v6209, %v5264
    %v6274 = vsel %vm2402, %v6210, %v5266
    %v6275 = vsel %vm2402, %v6211, %v5268
    %v6276 = vsel %vm2402, %v6212, %v5270
    %v6277 = vsel %vm2402, %v6213, %v5272
    %v6278 = vsel %vm2402, %v6214, %v5274
    %v6279 = vsel %vm2402, %v6215, %v5276
    %v6280 = vsel %vm2402, %v6216, %v5278
    %v6281 = vsel %vm2402, %v6217, %v5280
    %v6282 = vsel %vm2402, %v6218, %v5282
    %v6283 = vsel %vm2402, %v6219, %v5284
    %v6284 = vsel %vm2402, %v6220, %v5286
    %v6285 = vsel %vm2402, %v6221, %v5288
    %v6286 = vsel %vm2402, %v6222, %v5290
    %v6287 = vsel %vm2402, %v6223, %v5292
    %v6288 = vsel %vm2402, %v6224, %v5294
    %v6289 = vsel %vm2402, %v6225, %v5296
    %v6290 = vsel %vm2402, %v6226, %v5298
    %v6291 = vsel %vm2402, %v6227, %v5300
    %v6292 = vsel %vm2402, %v6228, %v5302
    %v6293 = vsel %vm2402, %v6229, %v5304
    %v6294 = vsel %vm2402, %v6230, %v5306
    %v6295 = vsel %vm2402, %v6231, %v5308
    %v6296 = vsel %vm2402, %v6232, %v5310
    %v6297 = vsel %vm2467, %v6233, %v5380
    %v6298 = vsel %vm2467, %v6234, %v5382
    %v6299 = vsel %vm2467, %v6235, %v5384
    %v6300 = vsel %vm2467, %v6236, %v5386
    %v6301 = vsel %vm2467, %v6237, %v5388
    %v6302 = vsel %vm2467, %v6238, %v5390
    %v6303 = vsel %vm2467, %v6239, %v5392
    %v6304 = vsel %vm2467, %v6240, %v5394
    %v6305 = vsel %vm2467, %v6241, %v5396
    %v6306 = vsel %vm2467, %v6242, %v5398
    %v6307 = vsel %vm2467, %v6243, %v5400
    %v6308 = vsel %vm2467, %v6244, %v5402
    %v6309 = vsel %vm2467, %v6245, %v5404
    %v6310 = vsel %vm2467, %v6246, %v5406
    %v6311 = vsel %vm2467, %v6247, %v5408
    %v6312 = vsel %vm2467, %v6248, %v5410
    %v6313 = vsel %vm2467, %v6249, %v5412
    %v6314 = vsel %vm2467, %v6250, %v5414
    %v6315 = vsel %vm2467, %v6251, %v5416
    %v6316 = vsel %vm2467, %v6252, %v5418
    %v6317 = vsel %vm2467, %v6253, %v5420
    %v6318 = vsel %vm2467, %v6254, %v5422
    %v6319 = vsel %vm2467, %v6255, %v5424
    %v6320 = vsel %vm2467, %v6256, %v5426
    %v6321 = vsel %vm2467, %v6257, %v5428
    %v6322 = vsel %vm2467, %v6258, %v5430
    %v6323 = vsel %vm2467, %v6259, %v5432
    %v6324 = vsel %vm2467, %v6260, %v5434
    %v6325 = vsel %vm2467, %v6261, %v5436
    %v6326 = vsel %vm2467, %v6262, %v5438
    %v6327 = vsel %vm2467, %v6263, %v5440
    %v6328 = vsel %vm2467, %v6264, %v5442
    %v6329 = vsel %vm2467, %v6265, %v5444
    %v6330 = vsel %vm2467, %v6266, %v5446
    %v6331 = vsel %vm2467, %v6267, %v5448
    %v6332 = vsel %vm2467, %v6268, %v5450
    %v6333 = vsel %vm2467, %v6269, %v5452
    %v6334 = vsel %vm2467, %v6270, %v5454
    %v6335 = vsel %vm2467, %v6271, %v5456
    %v6336 = vsel %vm2467, %v6272, %v5458
    %v6337 = vsel %vm2467, %v6273, %v5460
    %v6338 = vsel %vm2467, %v6274, %v5462
    %v6339 = vsel %vm2467, %v6275, %v5464
    %v6340 = vsel %vm2467, %v6276, %v5466
    %v6341 = vsel %vm2467, %v6277, %v5468
    %v6342 = vsel %vm2467, %v6278, %v5470
    %v6343 = vsel %vm2467, %v6279, %v5472
    %v6344 = vsel %vm2467, %v6280, %v5474
    %v6345 = vsel %vm2467, %v6281, %v5476
    %v6346 = vsel %vm2467, %v6282, %v5478
    %v6347 = vsel %vm2467, %v6283, %v5480
    %v6348 = vsel %vm2467, %v6284, %v5482
    %v6349 = vsel %vm2467, %v6285, %v5484
    %v6350 = vsel %vm2467, %v6286, %v5486
    %v6351 = vsel %vm2467, %v6287, %v5488
    %v6352 = vsel %vm2467, %v6288, %v5490
    %v6353 = vsel %vm2467, %v6289, %v5492
    %v6354 = vsel %vm2467, %v6290, %v5494
    %v6355 = vsel %vm2467, %v6291, %v5496
    %v6356 = vsel %vm2467, %v6292, %v5498
    %v6357 = vsel %vm2467, %v6293, %v5500
    %v6358 = vsel %vm2467, %v6294, %v5502
    %v6359 = vsel %vm2467, %v6295, %v5504
    %v6360 = vsel %vm2467, %v6296, %v5506
    %v6361 = vsel %vm2532, %v6297, %v5584
    %v6362 = vsel %vm2532, %v6298, %v5586
    %v6363 = vsel %vm2532, %v6299, %v5588
    %v6364 = vsel %vm2532, %v6300, %v5590
    %v6365 = vsel %vm2532, %v6301, %v5592
    %v6366 = vsel %vm2532, %v6302, %v5594
    %v6367 = vsel %vm2532, %v6303, %v5596
    %v6368 = vsel %vm2532, %v6304, %v5598
    %v6369 = vsel %vm2532, %v6305, %v5600
    %v6370 = vsel %vm2532, %v6306, %v5602
    %v6371 = vsel %vm2532, %v6307, %v5604
    %v6372 = vsel %vm2532, %v6308, %v5606
    %v6373 = vsel %vm2532, %v6309, %v5608
    %v6374 = vsel %vm2532, %v6310, %v5610
    %v6375 = vsel %vm2532, %v6311, %v5612
    %v6376 = vsel %vm2532, %v6312, %v5614
    %v6377 = vsel %vm2532, %v6313, %v5616
    %v6378 = vsel %vm2532, %v6314, %v5618
    %v6379 = vsel %vm2532, %v6315, %v5620
    %v6380 = vsel %vm2532, %v6316, %v5622
    %v6381 = vsel %vm2532, %v6317, %v5624
    %v6382 = vsel %vm2532, %v6318, %v5626
    %v6383 = vsel %vm2532, %v6319, %v5628
    %v6384 = vsel %vm2532, %v6320, %v5630
    %v6385 = vsel %vm2532, %v6321, %v5632
    %v6386 = vsel %vm2532, %v6322, %v5634
    %v6387 = vsel %vm2532, %v6323, %v5636
    %v6388 = vsel %vm2532, %v6324, %v5638
    %v6389 = vsel %vm2532, %v6325, %v5640
    %v6390 = vsel %vm2532, %v6326, %v5642
    %v6391 = vsel %vm2532, %v6327, %v5644
    %v6392 = vsel %vm2532, %v6328, %v5646
    %v6393 = vsel %vm2532, %v6329, %v5648
    %v6394 = vsel %vm2532, %v6330, %v5650
    %v6395 = vsel %vm2532, %v6331, %v5652
    %v6396 = vsel %vm2532, %v6332, %v5654
    %v6397 = vsel %vm2532, %v6333, %v5656
    %v6398 = vsel %vm2532, %v6334, %v5658
    %v6399 = vsel %vm2532, %v6335, %v5660
    %v6400 = vsel %vm2532, %v6336, %v5662
    %v6401 = vsel %vm2532, %v6337, %v5664
    %v6402 = vsel %vm2532, %v6338, %v5666
    %v6403 = vsel %vm2532, %v6339, %v5668
    %v6404 = vsel %vm2532, %v6340, %v5670
    %v6405 = vsel %vm2532, %v6341, %v5672
    %v6406 = vsel %vm2532, %v6342, %v5674
    %v6407 = vsel %vm2532, %v6343, %v5676
    %v6408 = vsel %vm2532, %v6344, %v5678
    %v6409 = vsel %vm2532, %v6345, %v5680
    %v6410 = vsel %vm2532, %v6346, %v5682
    %v6411 = vsel %vm2532, %v6347, %v5684
    %v6412 = vsel %vm2532, %v6348, %v5686
    %v6413 = vsel %vm2532, %v6349, %v5688
    %v6414 = vsel %vm2532, %v6350, %v5690
    %v6415 = vsel %vm2532, %v6351, %v5692
    %v6416 = vsel %vm2532, %v6352, %v5694
    %v6417 = vsel %vm2532, %v6353, %v5696
    %v6418 = vsel %vm2532, %v6354, %v5698
    %v6419 = vsel %vm2532, %v6355, %v5700
    %v6420 = vsel %vm2532, %v6356, %v5702
    %v6421 = vsel %vm2532, %v6357, %v5704
    %v6422 = vsel %vm2532, %v6358, %v5706
    %v6423 = vsel %vm2532, %v6359, %v5708
    %v6424 = vsel %vm2532, %v6360, %v5710
    %v6425 = vsel %vm2597, %v6361, %v5786
    %v6426 = vsel %vm2597, %v6362, %v5788
    %v6427 = vsel %vm2597, %v6363, %v5790
    %v6428 = vsel %vm2597, %v6364, %v5792
    %v6429 = vsel %vm2597, %v6365, %v5794
    %v6430 = vsel %vm2597, %v6366, %v5796
    %v6431 = vsel %vm2597, %v6367, %v5798
    %v6432 = vsel %vm2597, %v6368, %v5800
    %v6433 = vsel %vm2597, %v6369, %v5802
    %v6434 = vsel %vm2597, %v6370, %v5804
    %v6435 = vsel %vm2597, %v6371, %v5806
    %v6436 = vsel %vm2597, %v6372, %v5808
    %v6437 = vsel %vm2597, %v6373, %v5810
    %v6438 = vsel %vm2597, %v6374, %v5812
    %v6439 = vsel %vm2597, %v6375, %v5814
    %v6440 = vsel %vm2597, %v6376, %v5816
    %v6441 = vsel %vm2597, %v6377, %v5818
    %v6442 = vsel %vm2597, %v6378, %v5820
    %v6443 = vsel %vm2597, %v6379, %v5822
    %v6444 = vsel %vm2597, %v6380, %v5824
    %v6445 = vsel %vm2597, %v6381, %v5826
    %v6446 = vsel %vm2597, %v6382, %v5828
    %v6447 = vsel %vm2597, %v6383, %v5830
    %v6448 = vsel %vm2597, %v6384, %v5832
    %v6449 = vsel %vm2597, %v6385, %v5834
    %v6450 = vsel %vm2597, %v6386, %v5836
    %v6451 = vsel %vm2597, %v6387, %v5838
    %v6452 = vsel %vm2597, %v6388, %v5840
    %v6453 = vsel %vm2597, %v6389, %v5842
    %v6454 = vsel %vm2597, %v6390, %v5844
    %v6455 = vsel %vm2597, %v6391, %v5846
    %v6456 = vsel %vm2597, %v6392, %v5848
    %v6457 = vsel %vm2597, %v6393, %v5850
    %v6458 = vsel %vm2597, %v6394, %v5852
    %v6459 = vsel %vm2597, %v6395, %v5854
    %v6460 = vsel %vm2597, %v6396, %v5856
    %v6461 = vsel %vm2597, %v6397, %v5858
    %v6462 = vsel %vm2597, %v6398, %v5860
    %v6463 = vsel %vm2597, %v6399, %v5862
    %v6464 = vsel %vm2597, %v6400, %v5864
    %v6465 = vsel %vm2597, %v6401, %v5866
    %v6466 = vsel %vm2597, %v6402, %v5868
    %v6467 = vsel %vm2597, %v6403, %v5870
    %v6468 = vsel %vm2597, %v6404, %v5872
    %v6469 = vsel %vm2597, %v6405, %v5874
    %v6470 = vsel %vm2597, %v6406, %v5876
    %v6471 = vsel %vm2597, %v6407, %v5878
    %v6472 = vsel %vm2597, %v6408, %v5880
    %v6473 = vsel %vm2597, %v6409, %v5882
    %v6474 = vsel %vm2597, %v6410, %v5884
    %v6475 = vsel %vm2597, %v6411, %v5886
    %v6476 = vsel %vm2597, %v6412, %v5888
    %v6477 = vsel %vm2597, %v6413, %v5890
    %v6478 = vsel %vm2597, %v6414, %v5892
    %v6479 = vsel %vm2597, %v6415, %v5894
    %v6480 = vsel %vm2597, %v6416, %v5896
    %v6481 = vsel %vm2597, %v6417, %v5898
    %v6482 = vsel %vm2597, %v6418, %v5900
    %v6483 = vsel %vm2597, %v6419, %v5902
    %v6484 = vsel %vm2597, %v6420, %v5904
    %v6485 = vsel %vm2597, %v6421, %v5906
    %v6486 = vsel %vm2597, %v6422, %v5908
    %v6487 = vsel %vm2597, %v6423, %v5910
    %v6488 = vsel %vm2597, %v6424, %v5912
    %v6489 = vpack.c.bf16 %v6426, %v6425
    %v6490 = vpack.c.bf16 %v6428, %v6427
    %v6491 = vpack.c.bf16 %v6430, %v6429
    %v6492 = vpack.c.bf16 %v6432, %v6431
    %v6493 = vpack.c.bf16 %v6434, %v6433
    %v6494 = vpack.c.bf16 %v6436, %v6435
    %v6495 = vpack.c.bf16 %v6438, %v6437
    %v6496 = vpack.c.bf16 %v6440, %v6439
    %v6497 = vpack.c.bf16 %v6442, %v6441
    %v6498 = vpack.c.bf16 %v6444, %v6443
    %v6499 = vpack.c.bf16 %v6446, %v6445
    %v6500 = vpack.c.bf16 %v6448, %v6447
    %v6501 = vpack.c.bf16 %v6450, %v6449
    %v6502 = vpack.c.bf16 %v6452, %v6451
    %v6503 = vpack.c.bf16 %v6454, %v6453
    %v6504 = vpack.c.bf16 %v6456, %v6455
    %v6505 = vpack.c.bf16 %v6458, %v6457
    %v6506 = vpack.c.bf16 %v6460, %v6459
    %v6507 = vpack.c.bf16 %v6462, %v6461
    %v6508 = vpack.c.bf16 %v6464, %v6463
    %v6509 = vpack.c.bf16 %v6466, %v6465
    %v6510 = vpack.c.bf16 %v6468, %v6467
    %v6511 = vpack.c.bf16 %v6470, %v6469
    %v6512 = vpack.c.bf16 %v6472, %v6471
    %v6513 = vpack.c.bf16 %v6474, %v6473
    %v6514 = vpack.c.bf16 %v6476, %v6475
    %v6515 = vpack.c.bf16 %v6478, %v6477
    %v6516 = vpack.c.bf16 %v6480, %v6479
    %v6517 = vpack.c.bf16 %v6482, %v6481
    %v6518 = vpack.c.bf16 %v6484, %v6483
    %v6519 = vpack.c.bf16 %v6486, %v6485
    %v6520 = vpack.c.bf16 %v6488, %v6487
    %v6522 = vsel %vm2714, %v3864, 0
    %v6525 = vsel %vm2714, %v6489, 0
    %v6528 = vsel %vm2714, %v6490, 0
    %v6531 = vsel %vm2714, %v6491, 0
    %v6534 = vsel %vm2714, %v6492, 0
    %v6537 = vsel %vm2714, %v6493, 0
    %v6540 = vsel %vm2714, %v6494, 0
    %v6543 = vsel %vm2714, %v6495, 0
    %v6546 = vsel %vm2714, %v6496, 0
    %v6549 = vsel %vm2714, %v6497, 0
    %v6552 = vsel %vm2714, %v6498, 0
    %v6555 = vsel %vm2714, %v6499, 0
    %v6558 = vsel %vm2714, %v6500, 0
    %v6561 = vsel %vm2714, %v6501, 0
    %v6564 = vsel %vm2714, %v6502, 0
    %v6567 = vsel %vm2714, %v6503, 0
    %v6570 = vsel %vm2714, %v6504, 0
    %v6573 = vsel %vm2714, %v6505, 0
    %v6576 = vsel %vm2714, %v6506, 0
    %v6579 = vsel %vm2714, %v6507, 0
    %v6582 = vsel %vm2714, %v6508, 0
    %v6585 = vsel %vm2714, %v6509, 0
    %v6588 = vsel %vm2714, %v6510, 0
    %v6591 = vsel %vm2714, %v6511, 0
    %v6594 = vsel %vm2714, %v6512, 0
    %v6597 = vsel %vm2714, %v6513, 0
    %v6600 = vsel %vm2714, %v6514, 0
    %v6603 = vsel %vm2714, %v6515, 0
    %v6606 = vsel %vm2714, %v6516, 0
    %v6609 = vsel %vm2714, %v6517, 0
    %v6612 = vsel %vm2714, %v6518, 0
    %v6615 = vsel %vm2714, %v6519, 0
    %v6618 = vsel %vm2714, %v6520, 0
    %6620 = vmatprep.subr.bf16.mxu0 0
    %6621 = vmatpush1.bf16.xpose.msra.mxu0 %v6525
    %6622 = vmatprep.subr.bf16.mxu0 0
    %6623 = vmatpush1.bf16.xpose.msra.mxu0 %v6528
    %6624 = vmatprep.subr.bf16.mxu0 0
    %6625 = vmatpush1.bf16.xpose.msra.mxu0 %v6531
    %6626 = vmatprep.subr.bf16.mxu0 0
    %6627 = vmatpush1.bf16.xpose.msra.mxu0 %v6534
    %6628 = vmatprep.subr.bf16.mxu0 0
    %6629 = vmatpush1.bf16.xpose.msra.mxu0 %v6537
    %6630 = vmatprep.subr.bf16.mxu0 0
    %6631 = vmatpush1.bf16.xpose.msra.mxu0 %v6540
    %6632 = vmatprep.subr.bf16.mxu0 0
    %6633 = vmatpush1.bf16.xpose.msra.mxu0 %v6543
    %6634 = vmatprep.subr.bf16.mxu0 0
    %6635 = vmatpush1.bf16.xpose.msra.mxu0 %v6546
    %6636 = vmatprep.subr.bf16.mxu0 0
    %6637 = vmatpush1.bf16.xpose.msra.mxu0 %v6549
    %6638 = vmatprep.subr.bf16.mxu0 0
    %6639 = vmatpush1.bf16.xpose.msra.mxu0 %v6552
    %6640 = vmatprep.subr.bf16.mxu0 0
    %6641 = vmatpush1.bf16.xpose.msra.mxu0 %v6555
    %6642 = vmatprep.subr.bf16.mxu0 0
    %6643 = vmatpush1.bf16.xpose.msra.mxu0 %v6558
    %6644 = vmatprep.subr.bf16.mxu0 0
    %6645 = vmatpush1.bf16.xpose.msra.mxu0 %v6561
    %6646 = vmatprep.subr.bf16.mxu0 0
    %6647 = vmatpush1.bf16.xpose.msra.mxu0 %v6564
    %6648 = vmatprep.subr.bf16.mxu0 0
    %6649 = vmatpush1.bf16.xpose.msra.mxu0 %v6567
    %6650 = vmatprep.subr.bf16.mxu0 0
    %6651 = vmatpush1.bf16.xpose.msra.mxu0 %v6570
    %6652 = vmatprep.mubr.bf16.mxu0 0
    %6653 = vmatmul.mubr.bf16.gmra.mrb[0].mxu0 %v6522
    %v6654 = vpop.f32.mrb[0].mxu0
    %v6655 = vadd.f32 0.0, %v6654
    %v6656 = vpop.f32.mrb[0].mxu0
    %v6657 = vadd.f32 0.0, %v6656
    %v6658 = vpop.f32.mrb[0].mxu0
    %v6659 = vpop.f32.mrb[0].mxu0
    %6660 = vdwg.mxu0
    %6661 = vmatprep.subr.bf16.mxu0 0
    %6662 = vmatpush1.bf16.xpose.msra.mxu0 %v6573
    %6663 = vmatprep.subr.bf16.mxu0 0
    %6664 = vmatpush1.bf16.xpose.msra.mxu0 %v6576
    %6665 = vmatprep.subr.bf16.mxu0 0
    %6666 = vmatpush1.bf16.xpose.msra.mxu0 %v6579
    %6667 = vmatprep.subr.bf16.mxu0 0
    %6668 = vmatpush1.bf16.xpose.msra.mxu0 %v6582
    %6669 = vmatprep.subr.bf16.mxu0 0
    %6670 = vmatpush1.bf16.xpose.msra.mxu0 %v6585
    %6671 = vmatprep.subr.bf16.mxu0 0
    %6672 = vmatpush1.bf16.xpose.msra.mxu0 %v6588
    %6673 = vmatprep.subr.bf16.mxu0 0
    %6674 = vmatpush1.bf16.xpose.msra.mxu0 %v6591
    %6675 = vmatprep.subr.bf16.mxu0 0
    %6676 = vmatpush1.bf16.xpose.msra.mxu0 %v6594
    %6677 = vmatprep.subr.bf16.mxu0 0
    %6678 = vmatpush1.bf16.xpose.msra.mxu0 %v6597
    %6679 = vmatprep.subr.bf16.mxu0 0
    %6680 = vmatpush1.bf16.xpose.msra.mxu0 %v6600
    %6681 = vmatprep.subr.bf16.mxu0 0
    %6682 = vmatpush1.bf16.xpose.msra.mxu0 %v6603
    %6683 = vmatprep.subr.bf16.mxu0 0
    %6684 = vmatpush1.bf16.xpose.msra.mxu0 %v6606
    %6685 = vmatprep.subr.bf16.mxu0 0
    %6686 = vmatpush1.bf16.xpose.msra.mxu0 %v6609
    %6687 = vmatprep.subr.bf16.mxu0 0
    %6688 = vmatpush1.bf16.xpose.msra.mxu0 %v6612
    %6689 = vmatprep.subr.bf16.mxu0 0
    %6690 = vmatpush1.bf16.xpose.msra.mxu0 %v6615
    %6691 = vmatprep.subr.bf16.mxu0 0
    %6692 = vmatpush1.bf16.xpose.msra.mxu0 %v6618
    %6693 = vmatprep.mubr.bf16.mxu0 0
    %6694 = vmatmul.mubr.bf16.gmra.mrb[0].mxu0 %v6522
    %v6695 = vpop.f32.mrb[0].mxu0
    %v6696 = vadd.f32 0.0, %v6695
    %v6697 = vpop.f32.mrb[0].mxu0
    %v6698 = vadd.f32 0.0, %v6697
    %v6699 = vpop.f32.mrb[0].mxu0
    %v6700 = vpop.f32.mrb[0].mxu0
    %6701 = vdwg.mxu0
    %vm6702 = vcmask 1043456
    %v6703 = vsel %vm6702, %v6655, 0.0
    %v6704 = vsel %vm6702, %v6657, 0.0
    %v6705 = vadd.f32 %v6703, %v6704
    %v6706 = vsel %vm6702, %v6696, 0.0
    %v6707 = vadd.f32 %v6705, %v6706
    %v6708 = vsel %vm6702, %v6698, 0.0
    %v6709 = vadd.f32 %v6707, %v6708
    %6710 = vadd.xlane.f32.xlu0 %v6709
    %v6711 = vpop.xlane.xlu0 %6710
    %v6712 = vmul.f32 %v6711, %v3237
    %v6713 = vsub.f32 %v6655, %v6712
    %v6714 = vsub.f32 %v6657, %v6712
    %v6715 = vsub.f32 %v6696, %v6712
    %v6716 = vsub.f32 %v6698, %v6712
    %v6717 = vmul.f32 %v6713, %v6713
    %v6718 = vmul.f32 %v6714, %v6714
    %v6719 = vmul.f32 %v6715, %v6715
    %v6720 = vmul.f32 %v6716, %v6716
    %v6721 = vsel %vm6702, %v6717, 0.0
    %v6722 = vsel %vm6702, %v6718, 0.0
    %v6723 = vadd.f32 %v6721, %v6722
    %v6724 = vsel %vm6702, %v6719, 0.0
    %v6725 = vadd.f32 %v6723, %v6724
    %v6726 = vsel %vm6702, %v6720, 0.0
    %v6727 = vadd.f32 %v6725, %v6726
    %6728 = vadd.xlane.f32.xlu0 %v6727
    %v6729 = vpop.xlane.xlu0 %6728
    %v6730 = vmul.f32 %v6729, %v3237
    %v6731 = vld [vmem:[%s5] sm:$0xf]
    %v6732 = vadd.f32 %v6730, 1e-05
    %v6733 = vrsqrt.pop %v6732
    %v6734 = vmul.f32 %v6731, %v6733
    %v6735 = vld [vmem:[%s6] sm:$0xf]
    %v6736 = vmul.f32 %v6712, %v6734
    %v6737 = vsub.f32 %v6735, %v6736
    %v6738 = vlaneseq
    %v6739 = vshrl.u32 %v6738, 7
    %v6740 = vlaneseq
    %v6741 = vand.u32 %v6740, 127
    %vm6742 = vcmp.eq.s32.totalorder %v6739, %v6741
    %v6743 = vsel %vm6742, 1, 0
    %v6744 = vcvt.s32.f32 %v6743
    %6746 = vset.pattern.permute.xlu0 0
    %6747 = vperm.xlu0 %6746, %v6734
    %v6748 = vpop.permute.xlu0 %6747
    %v6750 = vmul.f32 %v6655, %v6748
    %v6751 = vmul.f32 %v6657, %v6748
    %v6752 = vmul.f32 %v6696, %v6748
    %v6753 = vmul.f32 %v6698, %v6748
    %6755 = vset.pattern.permute.xlu0 0
    %6756 = vperm.xlu0 %6755, %v6737
    %v6757 = vpop.permute.xlu0 %6756
    %v6760 = vsel %vm2142, %v6744, 0
    %v6762 = vsel %vm2142, %v240, 0
    %v6764 = vsel %vm2142, %v242, 0
    %v6766 = vsel %vm2142, %v245, 0
    %v6768 = vsel %vm2142, %v247, 0
    %v6770 = vsel %vm2142, %v250, 0
    %v6772 = vsel %vm2142, %v252, 0
    %v6774 = vsel %vm2142, %v255, 0
    %v6776 = vsel %vm2142, %v257, 0
    %v6778 = vsel %vm2142, %v260, 0
    %v6780 = vsel %vm2142, %v262, 0
    %v6782 = vsel %vm2142, %v265, 0
    %v6784 = vsel %vm2142, %v267, 0
    %v6786 = vsel %vm2142, %v270, 0
    %v6788 = vsel %vm2142, %v272, 0
    %v6790 = vsel %vm2142, %v275, 0
    %v6792 = vsel %vm2142, %v277, 0
    %v6794 = vsel %vm2142, %v280, 0
    %v6796 = vsel %vm2142, %v282, 0
    %v6798 = vsel %vm2142, %v285, 0
    %v6800 = vsel %vm2142, %v287, 0
    %v6802 = vsel %vm2142, %v290, 0
    %v6804 = vsel %vm2142, %v292, 0
    %v6806 = vsel %vm2142, %v295, 0
    %v6808 = vsel %vm2142, %v297, 0
    %v6810 = vsel %vm2142, %v300, 0
    %v6812 = vsel %vm2142, %v302, 0
    %v6814 = vsel %vm2142, %v305, 0
    %v6816 = vsel %vm2142, %v307, 0
    %v6818 = vsel %vm2142, %v310, 0
    %v6820 = vsel %vm2142, %v312, 0
    %v6822 = vsel %vm2142, %v1138, 0
    %v6824 = vsel %vm2142, %v1140, 0
    %v6826 = vsel %vm2142, %v320, 0
    %v6828 = vsel %vm2142, %v322, 0
    %v6830 = vsel %vm2142, %v325, 0
    %v6832 = vsel %vm2142, %v327, 0
    %v6834 = vsel %vm2142, %v330, 0
    %v6836 = vsel %vm2142, %v332, 0
    %v6838 = vsel %vm2142, %v335, 0
    %v6840 = vsel %vm2142, %v337, 0
    %v6842 = vsel %vm2142, %v340, 0
    %v6844 = vsel %vm2142, %v342, 0
    %v6846 = vsel %vm2142, %v345, 0
    %v6848 = vsel %vm2142, %v347, 0
    %v6850 = vsel %vm2142, %v350, 0
    %v6852 = vsel %vm2142, %v352, 0
    %v6854 = vsel %vm2142, %v355, 0
    %v6856 = vsel %vm2142, %v357, 0
    %v6858 = vsel %vm2142, %v360, 0
    %v6860 = vsel %vm2142, %v362, 0
    %v6862 = vsel %vm2142, %v365, 0
    %v6864 = vsel %vm2142, %v367, 0
    %v6866 = vsel %vm2142, %v370, 0
    %v6868 = vsel %vm2142, %v372, 0
    %v6870 = vsel %vm2142, %v375, 0
    %v6872 = vsel %vm2142, %v377, 0
    %v6874 = vsel %vm2142, %v380, 0
    %v6876 = vsel %vm2142, %v382, 0
    %v6878 = vsel %vm2142, %v385, 0
    %v6880 = vsel %vm2142, %v387, 0
    %v6882 = vsel %vm2142, %v390, 0
    %v6884 = vsel %vm2142, %v392, 0
    %v6886 = vsel %vm2142, %v1143, 0
    %v6888 = vsel %vm2142, %v1145, 0
    %6890 = vmatprep.subr.mxu0 0.0
    %v6891 = vand.u32 %v6762, 4294901760
    %6892 = vmatpush1.xpose.msra.mxu0 %v6891
    %6893 = vmatprep.subr.mxu0 0.0
    %v6894 = vand.u32 %v6764, 4294901760
    %6895 = vmatpush1.xpose.msra.mxu0 %v6894
    %6896 = vmatprep.subr.mxu0 0.0
    %v6897 = vand.u32 %v6766, 4294901760
    %6898 = vmatpush1.xpose.msra.mxu0 %v6897
    %6899 = vmatprep.subr.mxu0 0.0
    %v6900 = vand.u32 %v6768, 4294901760
    %6901 = vmatpush1.xpose.msra.mxu0 %v6900
    %6902 = vmatprep.subr.mxu0 0.0
    %v6903 = vand.u32 %v6770, 4294901760
    %6904 = vmatpush1.xpose.msra.mxu0 %v6903
    %6905 = vmatprep.subr.mxu0 0.0
    %v6906 = vand.u32 %v6772, 4294901760
    %6907 = vmatpush1.xpose.msra.mxu0 %v6906
    %6908 = vmatprep.subr.mxu0 0.0
    %v6909 = vand.u32 %v6774, 4294901760
    %6910 = vmatpush1.xpose.msra.mxu0 %v6909
    %6911 = vmatprep.subr.mxu0 0.0
    %v6912 = vand.u32 %v6776, 4294901760
    %6913 = vmatpush1.xpose.msra.mxu0 %v6912
    %6914 = vmatprep.subr.mxu0 0.0
    %v6915 = vand.u32 %v6778, 4294901760
    %6916 = vmatpush1.xpose.msra.mxu0 %v6915
    %6917 = vmatprep.subr.mxu0 0.0
    %v6918 = vand.u32 %v6780, 4294901760
    %6919 = vmatpush1.xpose.msra.mxu0 %v6918
    %6920 = vmatprep.subr.mxu0 0.0
    %v6921 = vand.u32 %v6782, 4294901760
    %6922 = vmatpush1.xpose.msra.mxu0 %v6921
    %6923 = vmatprep.subr.mxu0 0.0
    %v6924 = vand.u32 %v6784, 4294901760
    %6925 = vmatpush1.xpose.msra.mxu0 %v6924
    %6926 = vmatprep.subr.mxu0 0.0
    %v6927 = vand.u32 %v6786, 4294901760
    %6928 = vmatpush1.xpose.msra.mxu0 %v6927
    %6929 = vmatprep.subr.mxu0 0.0
    %v6930 = vand.u32 %v6788, 4294901760
    %6931 = vmatpush1.xpose.msra.mxu0 %v6930
    %6932 = vmatprep.subr.mxu0 0.0
    %v6933 = vand.u32 %v6790, 4294901760
    %6934 = vmatpush1.xpose.msra.mxu0 %v6933
    %6935 = vmatprep.subr.mxu0 0.0
    %v6936 = vand.u32 %v6792, 4294901760
    %6937 = vmatpush1.xpose.msra.mxu0 %v6936
    %6938 = vmatprep.subr.mxu0 0.0
    %v6939 = vand.u32 %v6794, 4294901760
    %6940 = vmatpush1.xpose.msra.mxu0 %v6939
    %6941 = vmatprep.subr.mxu0 0.0
    %v6942 = vand.u32 %v6796, 4294901760
    %6943 = vmatpush1.xpose.msra.mxu0 %v6942
    %6944 = vmatprep.subr.mxu0 0.0
    %v6945 = vand.u32 %v6798, 4294901760
    %6946 = vmatpush1.xpose.msra.mxu0 %v6945
    %6947 = vmatprep.subr.mxu0 0.0
    %v6948 = vand.u32 %v6800, 4294901760
    %6949 = vmatpush1.xpose.msra.mxu0 %v6948
    %6950 = vmatprep.subr.mxu0 0.0
    %v6951 = vand.u32 %v6802, 4294901760
    %6952 = vmatpush1.xpose.msra.mxu0 %v6951
    %6953 = vmatprep.subr.mxu0 0.0
    %v6954 = vand.u32 %v6804, 4294901760
    %6955 = vmatpush1.xpose.msra.mxu0 %v6954
    %6956 = vmatprep.subr.mxu0 0.0
    %v6957 = vand.u32 %v6806, 4294901760
    %6958 = vmatpush1.xpose.msra.mxu0 %v6957
    %6959 = vmatprep.subr.mxu0 0.0
    %v6960 = vand.u32 %v6808, 4294901760
    %6961 = vmatpush1.xpose.msra.mxu0 %v6960
    %6962 = vmatprep.subr.mxu0 0.0
    %v6963 = vand.u32 %v6810, 4294901760
    %6964 = vmatpush1.xpose.msra.mxu0 %v6963
    %6965 = vmatprep.subr.mxu0 0.0
    %v6966 = vand.u32 %v6812, 4294901760
    %6967 = vmatpush1.xpose.msra.mxu0 %v6966
    %6968 = vmatprep.subr.mxu0 0.0
    %v6969 = vand.u32 %v6814, 4294901760
    %6970 = vmatpush1.xpose.msra.mxu0 %v6969
    %6971 = vmatprep.subr.mxu0 0.0
    %v6972 = vand.u32 %v6816, 4294901760
    %6973 = vmatpush1.xpose.msra.mxu0 %v6972
    %6974 = vmatprep.subr.mxu0 0.0
    %v6975 = vand.u32 %v6818, 4294901760
    %6976 = vmatpush1.xpose.msra.mxu0 %v6975
    %6977 = vmatprep.subr.mxu0 0.0
    %v6978 = vand.u32 %v6820, 4294901760
    %6979 = vmatpush1.xpose.msra.mxu0 %v6978
    %6980 = vmatprep.subr.mxu0 0.0
    %v6981 = vand.u32 %v6822, 4294901760
    %6982 = vmatpush1.xpose.msra.mxu0 %v6981
    %6983 = vmatprep.subr.mxu0 0.0
    %v6984 = vand.u32 %v6824, 4294901760
    %6985 = vmatpush1.xpose.msra.mxu0 %v6984
    %6986 = vmatprep.mubr.f32.mxu0 0.0
    %v6987 = vand.u32 %v6760, 4294901760
    %v6988 = vsub.f32 %v6760, %v6987
    %v6989 = vand.u32 %v6988, 4294901760
    %v6990 = vsub.f32 %v6988, %v6989
    %v6991 = vand.u32 %v6990, 4294901760
    %6992 = vmatmul.mubr.f32.gmra.mrb[0].mxu0 %v6991
    %v6993 = vpop.f32.mrb[0].mxu0
    %v6994 = vadd.f32 %v6757, %v6993
    %v6995 = vpop.f32.mrb[0].mxu0
    %v6996 = vadd.f32 %v6757, %v6995
    %6997 = vdwg.mxu0
    %6998 = vmatprep.subr.mxu0 0.0
    %v6999 = vand.u32 %v6762, 4294901760
    %v7000 = vsub.f32 %v6762, %v6999
    %v7001 = vand.u32 %v7000, 4294901760
    %v7002 = vsub.f32 %v7000, %v7001
    %v7003 = vand.u32 %v7002, 4294901760
    %7004 = vmatpush1.xpose.msra.mxu0 %v7003
    %7005 = vmatprep.subr.mxu0 0.0
    %v7006 = vand.u32 %v6764, 4294901760
    %v7007 = vsub.f32 %v6764, %v7006
    %v7008 = vand.u32 %v7007, 4294901760
    %v7009 = vsub.f32 %v7007, %v7008
    %v7010 = vand.u32 %v7009, 4294901760
    %7011 = vmatpush1.xpose.msra.mxu0 %v7010
    %7012 = vmatprep.subr.mxu0 0.0
    %v7013 = vand.u32 %v6766, 4294901760
    %v7014 = vsub.f32 %v6766, %v7013
    %v7015 = vand.u32 %v7014, 4294901760
    %v7016 = vsub.f32 %v7014, %v7015
    %v7017 = vand.u32 %v7016, 4294901760
    %7018 = vmatpush1.xpose.msra.mxu0 %v7017
    %7019 = vmatprep.subr.mxu0 0.0
    %v7020 = vand.u32 %v6768, 4294901760
    %v7021 = vsub.f32 %v6768, %v7020
    %v7022 = vand.u32 %v7021, 4294901760
    %v7023 = vsub.f32 %v7021, %v7022
    %v7024 = vand.u32 %v7023, 4294901760
    %7025 = vmatpush1.xpose.msra.mxu0 %v7024
    %7026 = vmatprep.subr.mxu0 0.0
    %v7027 = vand.u32 %v6770, 4294901760
    %v7028 = vsub.f32 %v6770, %v7027
    %v7029 = vand.u32 %v7028, 4294901760
    %v7030 = vsub.f32 %v7028, %v7029
    %v7031 = vand.u32 %v7030, 4294901760
    %7032 = vmatpush1.xpose.msra.mxu0 %v7031
    %7033 = vmatprep.subr.mxu0 0.0
    %v7034 = vand.u32 %v6772, 4294901760
    %v7035 = vsub.f32 %v6772, %v7034
    %v7036 = vand.u32 %v7035, 4294901760
    %v7037 = vsub.f32 %v7035, %v7036
    %v7038 = vand.u32 %v7037, 4294901760
    %7039 = vmatpush1.xpose.msra.mxu0 %v7038
    %7040 = vmatprep.subr.mxu0 0.0
    %v7041 = vand.u32 %v6774, 4294901760
    %v7042 = vsub.f32 %v6774, %v7041
    %v7043 = vand.u32 %v7042, 4294901760
    %v7044 = vsub.f32 %v7042, %v7043
    %v7045 = vand.u32 %v7044, 4294901760
    %7046 = vmatpush1.xpose.msra.mxu0 %v7045
    %7047 = vmatprep.subr.mxu0 0.0
    %v7048 = vand.u32 %v6776, 4294901760
    %v7049 = vsub.f32 %v6776, %v7048
    %v7050 = vand.u32 %v7049, 4294901760
    %v7051 = vsub.f32 %v7049, %v7050
    %v7052 = vand.u32 %v7051, 4294901760
    %7053 = vmatpush1.xpose.msra.mxu0 %v7052
    %7054 = vmatprep.subr.mxu0 0.0
    %v7055 = vand.u32 %v6778, 4294901760
    %v7056 = vsub.f32 %v6778, %v7055
    %v7057 = vand.u32 %v7056, 4294901760
    %v7058 = vsub.f32 %v7056, %v7057
    %v7059 = vand.u32 %v7058, 4294901760
    %7060 = vmatpush1.xpose.msra.mxu0 %v7059
    %7061 = vmatprep.subr.mxu0 0.0
    %v7062 = vand.u32 %v6780, 4294901760
    %v7063 = vsub.f32 %v6780, %v7062
    %v7064 = vand.u32 %v7063, 4294901760
    %v7065 = vsub.f32 %v7063, %v7064
    %v7066 = vand.u32 %v7065, 4294901760
    %7067 = vmatpush1.xpose.msra.mxu0 %v7066
    %7068 = vmatprep.subr.mxu0 0.0
    %v7069 = vand.u32 %v6782, 4294901760
    %v7070 = vsub.f32 %v6782, %v7069
    %v7071 = vand.u32 %v7070, 4294901760
    %v7072 = vsub.f32 %v7070, %v7071
    %v7073 = vand.u32 %v7072, 4294901760
    %7074 = vmatpush1.xpose.msra.mxu0 %v7073
    %7075 = vmatprep.subr.mxu0 0.0
    %v7076 = vand.u32 %v6784, 4294901760
    %v7077 = vsub.f32 %v6784, %v7076
    %v7078 = vand.u32 %v7077, 4294901760
    %v7079 = vsub.f32 %v7077, %v7078
    %v7080 = vand.u32 %v7079, 4294901760
    %7081 = vmatpush1.xpose.msra.mxu0 %v7080
    %7082 = vmatprep.subr.mxu0 0.0
    %v7083 = vand.u32 %v6786, 4294901760
    %v7084 = vsub.f32 %v6786, %v7083
    %v7085 = vand.u32 %v7084, 4294901760
    %v7086 = vsub.f32 %v7084, %v7085
    %v7087 = vand.u32 %v7086, 4294901760
    %7088 = vmatpush1.xpose.msra.mxu0 %v7087
    %7089 = vmatprep.subr.mxu0 0.0
    %v7090 = vand.u32 %v6788, 4294901760
    %v7091 = vsub.f32 %v6788, %v7090
    %v7092 = vand.u32 %v7091, 4294901760
    %v7093 = vsub.f32 %v7091, %v7092
    %v7094 = vand.u32 %v7093, 4294901760
    %7095 = vmatpush1.xpose.msra.mxu0 %v7094
    %7096 = vmatprep.subr.mxu0 0.0
    %v7097 = vand.u32 %v6790, 4294901760
    %v7098 = vsub.f32 %v6790, %v7097
    %v7099 = vand.u32 %v7098, 4294901760
    %v7100 = vsub.f32 %v7098, %v7099
    %v7101 = vand.u32 %v7100, 4294901760
    %7102 = vmatpush1.xpose.msra.mxu0 %v7101
    %7103 = vmatprep.subr.mxu0 0.0
    %v7104 = vand.u32 %v6792, 4294901760
    %v7105 = vsub.f32 %v6792, %v7104
    %v7106 = vand.u32 %v7105, 4294901760
    %v7107 = vsub.f32 %v7105, %v7106
    %v7108 = vand.u32 %v7107, 4294901760
    %7109 = vmatpush1.xpose.msra.mxu0 %v7108
    %7110 = vmatprep.subr.mxu0 0.0
    %v7111 = vand.u32 %v6794, 4294901760
    %v7112 = vsub.f32 %v6794, %v7111
    %v7113 = vand.u32 %v7112, 4294901760
    %v7114 = vsub.f32 %v7112, %v7113
    %v7115 = vand.u32 %v7114, 4294901760
    %7116 = vmatpush1.xpose.msra.mxu0 %v7115
    %7117 = vmatprep.subr.mxu0 0.0
    %v7118 = vand.u32 %v6796, 4294901760
    %v7119 = vsub.f32 %v6796, %v7118
    %v7120 = vand.u32 %v7119, 4294901760
    %v7121 = vsub.f32 %v7119, %v7120
    %v7122 = vand.u32 %v7121, 4294901760
    %7123 = vmatpush1.xpose.msra.mxu0 %v7122
    %7124 = vmatprep.subr.mxu0 0.0
    %v7125 = vand.u32 %v6798, 4294901760
    %v7126 = vsub.f32 %v6798, %v7125
    %v7127 = vand.u32 %v7126, 4294901760
    %v7128 = vsub.f32 %v7126, %v7127
    %v7129 = vand.u32 %v7128, 4294901760
    %7130 = vmatpush1.xpose.msra.mxu0 %v7129
    %7131 = vmatprep.subr.mxu0 0.0
    %v7132 = vand.u32 %v6800, 4294901760
    %v7133 = vsub.f32 %v6800, %v7132
    %v7134 = vand.u32 %v7133, 4294901760
    %v7135 = vsub.f32 %v7133, %v7134
    %v7136 = vand.u32 %v7135, 4294901760
    %7137 = vmatpush1.xpose.msra.mxu0 %v7136
    %7138 = vmatprep.subr.mxu0 0.0
    %v7139 = vand.u32 %v6802, 4294901760
    %v7140 = vsub.f32 %v6802, %v7139
    %v7141 = vand.u32 %v7140, 4294901760
    %v7142 = vsub.f32 %v7140, %v7141
    %v7143 = vand.u32 %v7142, 4294901760
    %7144 = vmatpush1.xpose.msra.mxu0 %v7143
    %7145 = vmatprep.subr.mxu0 0.0
    %v7146 = vand.u32 %v6804, 4294901760
    %v7147 = vsub.f32 %v6804, %v7146
    %v7148 = vand.u32 %v7147, 4294901760
    %v7149 = vsub.f32 %v7147, %v7148
    %v7150 = vand.u32 %v7149, 4294901760
    %7151 = vmatpush1.xpose.msra.mxu0 %v7150
    %7152 = vmatprep.subr.mxu0 0.0
    %v7153 = vand.u32 %v6806, 4294901760
    %v7154 = vsub.f32 %v6806, %v7153
    %v7155 = vand.u32 %v7154, 4294901760
    %v7156 = vsub.f32 %v7154, %v7155
    %v7157 = vand.u32 %v7156, 4294901760
    %7158 = vmatpush1.xpose.msra.mxu0 %v7157
    %7159 = vmatprep.subr.mxu0 0.0
    %v7160 = vand.u32 %v6808, 4294901760
    %v7161 = vsub.f32 %v6808, %v7160
    %v7162 = vand.u32 %v7161, 4294901760
    %v7163 = vsub.f32 %v7161, %v7162
    %v7164 = vand.u32 %v7163, 4294901760
    %7165 = vmatpush1.xpose.msra.mxu0 %v7164
    %7166 = vmatprep.subr.mxu0 0.0
    %v7167 = vand.u32 %v6810, 4294901760
    %v7168 = vsub.f32 %v6810, %v7167
    %v7169 = vand.u32 %v7168, 4294901760
    %v7170 = vsub.f32 %v7168, %v7169
    %v7171 = vand.u32 %v7170, 4294901760
    %7172 = vmatpush1.xpose.msra.mxu0 %v7171
    %7173 = vmatprep.subr.mxu0 0.0
    %v7174 = vand.u32 %v6812, 4294901760
    %v7175 = vsub.f32 %v6812, %v7174
    %v7176 = vand.u32 %v7175, 4294901760
    %v7177 = vsub.f32 %v7175, %v7176
    %v7178 = vand.u32 %v7177, 4294901760
    %7179 = vmatpush1.xpose.msra.mxu0 %v7178
    %7180 = vmatprep.subr.mxu0 0.0
    %v7181 = vand.u32 %v6814, 4294901760
    %v7182 = vsub.f32 %v6814, %v7181
    %v7183 = vand.u32 %v7182, 4294901760
    %v7184 = vsub.f32 %v7182, %v7183
    %v7185 = vand.u32 %v7184, 4294901760
    %7186 = vmatpush1.xpose.msra.mxu0 %v7185
    %7187 = vmatprep.subr.mxu0 0.0
    %v7188 = vand.u32 %v6816, 4294901760
    %v7189 = vsub.f32 %v6816, %v7188
    %v7190 = vand.u32 %v7189, 4294901760
    %v7191 = vsub.f32 %v7189, %v7190
    %v7192 = vand.u32 %v7191, 4294901760
    %7193 = vmatpush1.xpose.msra.mxu0 %v7192
    %7194 = vmatprep.subr.mxu0 0.0
    %v7195 = vand.u32 %v6818, 4294901760
    %v7196 = vsub.f32 %v6818, %v7195
    %v7197 = vand.u32 %v7196, 4294901760
    %v7198 = vsub.f32 %v7196, %v7197
    %v7199 = vand.u32 %v7198, 4294901760
    %7200 = vmatpush1.xpose.msra.mxu0 %v7199
    %7201 = vmatprep.subr.mxu0 0.0
    %v7202 = vand.u32 %v6820, 4294901760
    %v7203 = vsub.f32 %v6820, %v7202
    %v7204 = vand.u32 %v7203, 4294901760
    %v7205 = vsub.f32 %v7203, %v7204
    %v7206 = vand.u32 %v7205, 4294901760
    %7207 = vmatpush1.xpose.msra.mxu0 %v7206
    %7208 = vmatprep.subr.mxu0 0.0
    %v7209 = vand.u32 %v6822, 4294901760
    %v7210 = vsub.f32 %v6822, %v7209
    %v7211 = vand.u32 %v7210, 4294901760
    %v7212 = vsub.f32 %v7210, %v7211
    %v7213 = vand.u32 %v7212, 4294901760
    %7214 = vmatpush1.xpose.msra.mxu0 %v7213
    %7215 = vmatprep.subr.mxu0 0.0
    %v7216 = vand.u32 %v6824, 4294901760
    %v7217 = vsub.f32 %v6824, %v7216
    %v7218 = vand.u32 %v7217, 4294901760
    %v7219 = vsub.f32 %v7217, %v7218
    %v7220 = vand.u32 %v7219, 4294901760
    %7221 = vmatpush1.xpose.msra.mxu0 %v7220
    %7222 = vmatprep.mubr.f32.mxu0 0.0
    %v7223 = vand.u32 %v6760, 4294901760
    %7224 = vmatmul.mubr.f32.gmra.mrb[0].mxu0 %v7223
    %v7225 = vpop.f32.mrb[0].mxu0
    %v7226 = vadd.f32 %v6994, %v7225
    %v7227 = vpop.f32.mrb[0].mxu0
    %v7228 = vadd.f32 %v6996, %v7227
    %7229 = vdwg.mxu0
    %7230 = vmatprep.subr.mxu0 0.0
    %v7231 = vand.u32 %v6762, 4294901760
    %v7232 = vsub.f32 %v6762, %v7231
    %7233 = vmatpush1.xpose.msra.mxu0 %v7232
    %7234 = vmatprep.subr.mxu0 0.0
    %v7235 = vand.u32 %v6764, 4294901760
    %v7236 = vsub.f32 %v6764, %v7235
    %7237 = vmatpush1.xpose.msra.mxu0 %v7236
    %7238 = vmatprep.subr.mxu0 0.0
    %v7239 = vand.u32 %v6766, 4294901760
    %v7240 = vsub.f32 %v6766, %v7239
    %7241 = vmatpush1.xpose.msra.mxu0 %v7240
    %7242 = vmatprep.subr.mxu0 0.0
    %v7243 = vand.u32 %v6768, 4294901760
    %v7244 = vsub.f32 %v6768, %v7243
    %7245 = vmatpush1.xpose.msra.mxu0 %v7244
    %7246 = vmatprep.subr.mxu0 0.0
    %v7247 = vand.u32 %v6770, 4294901760
    %v7248 = vsub.f32 %v6770, %v7247
    %7249 = vmatpush1.xpose.msra.mxu0 %v7248
    %7250 = vmatprep.subr.mxu0 0.0
    %v7251 = vand.u32 %v6772, 4294901760
    %v7252 = vsub.f32 %v6772, %v7251
    %7253 = vmatpush1.xpose.msra.mxu0 %v7252
    %7254 = vmatprep.subr.mxu0 0.0
    %v7255 = vand.u32 %v6774, 4294901760
    %v7256 = vsub.f32 %v6774, %v7255
    %7257 = vmatpush1.xpose.msra.mxu0 %v7256
    %7258 = vmatprep.subr.mxu0 0.0
    %v7259 = vand.u32 %v6776, 4294901760
    %v7260 = vsub.f32 %v6776, %v7259
    %7261 = vmatpush1.xpose.msra.mxu0 %v7260
    %7262 = vmatprep.subr.mxu0 0.0
    %v7263 = vand.u32 %v6778, 4294901760
    %v7264 = vsub.f32 %v6778, %v7263
    %7265 = vmatpush1.xpose.msra.mxu0 %v7264
    %7266 = vmatprep.subr.mxu0 0.0
    %v7267 = vand.u32 %v6780, 4294901760
    %v7268 = vsub.f32 %v6780, %v7267
    %7269 = vmatpush1.xpose.msra.mxu0 %v7268
    %7270 = vmatprep.subr.mxu0 0.0
    %v7271 = vand.u32 %v6782, 4294901760
    %v7272 = vsub.f32 %v6782, %v7271
    %7273 = vmatpush1.xpose.msra.mxu0 %v7272
    %7274 = vmatprep.subr.mxu0 0.0
    %v7275 = vand.u32 %v6784, 4294901760
    %v7276 = vsub.f32 %v6784, %v7275
    %7277 = vmatpush1.xpose.msra.mxu0 %v7276
    %7278 = vmatprep.subr.mxu0 0.0
    %v7279 = vand.u32 %v6786, 4294901760
    %v7280 = vsub.f32 %v6786, %v7279
    %7281 = vmatpush1.xpose.msra.mxu0 %v7280
    %7282 = vmatprep.subr.mxu0 0.0
    %v7283 = vand.u32 %v6788, 4294901760
    %v7284 = vsub.f32 %v6788, %v7283
    %7285 = vmatpush1.xpose.msra.mxu0 %v7284
    %7286 = vmatprep.subr.mxu0 0.0
    %v7287 = vand.u32 %v6790, 4294901760
    %v7288 = vsub.f32 %v6790, %v7287
    %7289 = vmatpush1.xpose.msra.mxu0 %v7288
    %7290 = vmatprep.subr.mxu0 0.0
    %v7291 = vand.u32 %v6792, 4294901760
    %v7292 = vsub.f32 %v6792, %v7291
    %7293 = vmatpush1.xpose.msra.mxu0 %v7292
    %7294 = vmatprep.subr.mxu0 0.0
    %v7295 = vand.u32 %v6794, 4294901760
    %v7296 = vsub.f32 %v6794, %v7295
    %7297 = vmatpush1.xpose.msra.mxu0 %v7296
    %7298 = vmatprep.subr.mxu0 0.0
    %v7299 = vand.u32 %v6796, 4294901760
    %v7300 = vsub.f32 %v6796, %v7299
    %7301 = vmatpush1.xpose.msra.mxu0 %v7300
    %7302 = vmatprep.subr.mxu0 0.0
    %v7303 = vand.u32 %v6798, 4294901760
    %v7304 = vsub.f32 %v6798, %v7303
    %7305 = vmatpush1.xpose.msra.mxu0 %v7304
    %7306 = vmatprep.subr.mxu0 0.0
    %v7307 = vand.u32 %v6800, 4294901760
    %v7308 = vsub.f32 %v6800, %v7307
    %7309 = vmatpush1.xpose.msra.mxu0 %v7308
    %7310 = vmatprep.subr.mxu0 0.0
    %v7311 = vand.u32 %v6802, 4294901760
    %v7312 = vsub.f32 %v6802, %v7311
    %7313 = vmatpush1.xpose.msra.mxu0 %v7312
    %7314 = vmatprep.subr.mxu0 0.0
    %v7315 = vand.u32 %v6804, 4294901760
    %v7316 = vsub.f32 %v6804, %v7315
    %7317 = vmatpush1.xpose.msra.mxu0 %v7316
    %7318 = vmatprep.subr.mxu0 0.0
    %v7319 = vand.u32 %v6806, 4294901760
    %v7320 = vsub.f32 %v6806, %v7319
    %7321 = vmatpush1.xpose.msra.mxu0 %v7320
    %7322 = vmatprep.subr.mxu0 0.0
    %v7323 = vand.u32 %v6808, 4294901760
    %v7324 = vsub.f32 %v6808, %v7323
    %7325 = vmatpush1.xpose.msra.mxu0 %v7324
    %7326 = vmatprep.subr.mxu0 0.0
    %v7327 = vand.u32 %v6810, 4294901760
    %v7328 = vsub.f32 %v6810, %v7327
    %7329 = vmatpush1.xpose.msra.mxu0 %v7328
    %7330 = vmatprep.subr.mxu0 0.0
    %v7331 = vand.u32 %v6812, 4294901760
    %v7332 = vsub.f32 %v6812, %v7331
    %7333 = vmatpush1.xpose.msra.mxu0 %v7332
    %7334 = vmatprep.subr.mxu0 0.0
    %v7335 = vand.u32 %v6814, 4294901760
    %v7336 = vsub.f32 %v6814, %v7335
    %7337 = vmatpush1.xpose.msra.mxu0 %v7336
    %7338 = vmatprep.subr.mxu0 0.0
    %v7339 = vand.u32 %v6816, 4294901760
    %v7340 = vsub.f32 %v6816, %v7339
    %7341 = vmatpush1.xpose.msra.mxu0 %v7340
    %7342 = vmatprep.subr.mxu0 0.0
    %v7343 = vand.u32 %v6818, 4294901760
    %v7344 = vsub.f32 %v6818, %v7343
    %7345 = vmatpush1.xpose.msra.mxu0 %v7344
    %7346 = vmatprep.subr.mxu0 0.0
    %v7347 = vand.u32 %v6820, 4294901760
    %v7348 = vsub.f32 %v6820, %v7347
    %7349 = vmatpush1.xpose.msra.mxu0 %v7348
    %7350 = vmatprep.subr.mxu0 0.0
    %v7351 = vand.u32 %v6822, 4294901760
    %v7352 = vsub.f32 %v6822, %v7351
    %7353 = vmatpush1.xpose.msra.mxu0 %v7352
    %7354 = vmatprep.subr.mxu0 0.0
    %v7355 = vand.u32 %v6824, 4294901760
    %v7356 = vsub.f32 %v6824, %v7355
    %7357 = vmatpush1.xpose.msra.mxu0 %v7356
    %7358 = vmatprep.mubr.f32.mxu0 0.0
    %v7359 = vand.u32 %v6760, 4294901760
    %v7360 = vsub.f32 %v6760, %v7359
    %7361 = vmatmul.mubr.f32.gmra.mrb[0].mxu0 %v7360
    %v7362 = vpop.f32.mrb[0].mxu0
    %v7363 = vadd.f32 %v7226, %v7362
    %v7364 = vpop.f32.mrb[0].mxu0
    %v7365 = vadd.f32 %v7228, %v7364
    %7366 = vdwg.mxu0
    %7367 = vmatprep.subr.mxu0 0.0
    %v7368 = vand.u32 %v6762, 4294901760
    %7369 = vmatpush1.xpose.msra.mxu0 %v7368
    %7370 = vmatprep.subr.mxu0 0.0
    %v7371 = vand.u32 %v6764, 4294901760
    %7372 = vmatpush1.xpose.msra.mxu0 %v7371
    %7373 = vmatprep.subr.mxu0 0.0
    %v7374 = vand.u32 %v6766, 4294901760
    %7375 = vmatpush1.xpose.msra.mxu0 %v7374
    %7376 = vmatprep.subr.mxu0 0.0
    %v7377 = vand.u32 %v6768, 4294901760
    %7378 = vmatpush1.xpose.msra.mxu0 %v7377
    %7379 = vmatprep.subr.mxu0 0.0
    %v7380 = vand.u32 %v6770, 4294901760
    %7381 = vmatpush1.xpose.msra.mxu0 %v7380
    %7382 = vmatprep.subr.mxu0 0.0
    %v7383 = vand.u32 %v6772, 4294901760
    %7384 = vmatpush1.xpose.msra.mxu0 %v7383
    %7385 = vmatprep.subr.mxu0 0.0
    %v7386 = vand.u32 %v6774, 4294901760
    %7387 = vmatpush1.xpose.msra.mxu0 %v7386
    %7388 = vmatprep.subr.mxu0 0.0
    %v7389 = vand.u32 %v6776, 4294901760
    %7390 = vmatpush1.xpose.msra.mxu0 %v7389
    %7391 = vmatprep.subr.mxu0 0.0
    %v7392 = vand.u32 %v6778, 4294901760
    %7393 = vmatpush1.xpose.msra.mxu0 %v7392
    %7394 = vmatprep.subr.mxu0 0.0
    %v7395 = vand.u32 %v6780, 4294901760
    %7396 = vmatpush1.xpose.msra.mxu0 %v7395
    %7397 = vmatprep.subr.mxu0 0.0
    %v7398 = vand.u32 %v6782, 4294901760
    %7399 = vmatpush1.xpose.msra.mxu0 %v7398
    %7400 = vmatprep.subr.mxu0 0.0
    %v7401 = vand.u32 %v6784, 4294901760
    %7402 = vmatpush1.xpose.msra.mxu0 %v7401
    %7403 = vmatprep.subr.mxu0 0.0
    %v7404 = vand.u32 %v6786, 4294901760
    %7405 = vmatpush1.xpose.msra.mxu0 %v7404
    %7406 = vmatprep.subr.mxu0 0.0
    %v7407 = vand.u32 %v6788, 4294901760
    %7408 = vmatpush1.xpose.msra.mxu0 %v7407
    %7409 = vmatprep.subr.mxu0 0.0
    %v7410 = vand.u32 %v6790, 4294901760
    %7411 = vmatpush1.xpose.msra.mxu0 %v7410
    %7412 = vmatprep.subr.mxu0 0.0
    %v7413 = vand.u32 %v6792, 4294901760
    %7414 = vmatpush1.xpose.msra.mxu0 %v7413
    %7415 = vmatprep.subr.mxu0 0.0
    %v7416 = vand.u32 %v6794, 4294901760
    %7417 = vmatpush1.xpose.msra.mxu0 %v7416
    %7418 = vmatprep.subr.mxu0 0.0
    %v7419 = vand.u32 %v6796, 4294901760
    %7420 = vmatpush1.xpose.msra.mxu0 %v7419
    %7421 = vmatprep.subr.mxu0 0.0
    %v7422 = vand.u32 %v6798, 4294901760
    %7423 = vmatpush1.xpose.msra.mxu0 %v7422
    %7424 = vmatprep.subr.mxu0 0.0
    %v7425 = vand.u32 %v6800, 4294901760
    %7426 = vmatpush1.xpose.msra.mxu0 %v7425
    %7427 = vmatprep.subr.mxu0 0.0
    %v7428 = vand.u32 %v6802, 4294901760
    %7429 = vmatpush1.xpose.msra.mxu0 %v7428
    %7430 = vmatprep.subr.mxu0 0.0
    %v7431 = vand.u32 %v6804, 4294901760
    %7432 = vmatpush1.xpose.msra.mxu0 %v7431
    %7433 = vmatprep.subr.mxu0 0.0
    %v7434 = vand.u32 %v6806, 4294901760
    %7435 = vmatpush1.xpose.msra.mxu0 %v7434
    %7436 = vmatprep.subr.mxu0 0.0
    %v7437 = vand.u32 %v6808, 4294901760
    %7438 = vmatpush1.xpose.msra.mxu0 %v7437
    %7439 = vmatprep.subr.mxu0 0.0
    %v7440 = vand.u32 %v6810, 4294901760
    %7441 = vmatpush1.xpose.msra.mxu0 %v7440
    %7442 = vmatprep.subr.mxu0 0.0
    %v7443 = vand.u32 %v6812, 4294901760
    %7444 = vmatpush1.xpose.msra.mxu0 %v7443
    %7445 = vmatprep.subr.mxu0 0.0
    %v7446 = vand.u32 %v6814, 4294901760
    %7447 = vmatpush1.xpose.msra.mxu0 %v7446
    %7448 = vmatprep.subr.mxu0 0.0
    %v7449 = vand.u32 %v6816, 4294901760
    %7450 = vmatpush1.xpose.msra.mxu0 %v7449
    %7451 = vmatprep.subr.mxu0 0.0
    %v7452 = vand.u32 %v6818, 4294901760
    %7453 = vmatpush1.xpose.msra.mxu0 %v7452
    %7454 = vmatprep.subr.mxu0 0.0
    %v7455 = vand.u32 %v6820, 4294901760
    %7456 = vmatpush1.xpose.msra.mxu0 %v7455
    %7457 = vmatprep.subr.mxu0 0.0
    %v7458 = vand.u32 %v6822, 4294901760
    %7459 = vmatpush1.xpose.msra.mxu0 %v7458
    %7460 = vmatprep.subr.mxu0 0.0
    %v7461 = vand.u32 %v6824, 4294901760
    %7462 = vmatpush1.xpose.msra.mxu0 %v7461
    %7463 = vmatprep.mubr.f32.mxu0 0.0
    %v7464 = vand.u32 %v6760, 4294901760
    %v7465 = vsub.f32 %v6760, %v7464
    %v7466 = vand.u32 %v7465, 4294901760
    %7467 = vmatmul.mubr.f32.gmra.mrb[0].mxu0 %v7466
    %v7468 = vpop.f32.mrb[0].mxu0
    %v7469 = vadd.f32 %v7363, %v7468
    %v7470 = vpop.f32.mrb[0].mxu0
    %v7471 = vadd.f32 %v7365, %v7470
    %7472 = vdwg.mxu0
    %7473 = vmatprep.subr.mxu0 0.0
    %v7474 = vand.u32 %v6762, 4294901760
    %v7475 = vsub.f32 %v6762, %v7474
    %v7476 = vand.u32 %v7475, 4294901760
    %7477 = vmatpush1.xpose.msra.mxu0 %v7476
    %7478 = vmatprep.subr.mxu0 0.0
    %v7479 = vand.u32 %v6764, 4294901760
    %v7480 = vsub.f32 %v6764, %v7479
    %v7481 = vand.u32 %v7480, 4294901760
    %7482 = vmatpush1.xpose.msra.mxu0 %v7481
    %7483 = vmatprep.subr.mxu0 0.0
    %v7484 = vand.u32 %v6766, 4294901760
    %v7485 = vsub.f32 %v6766, %v7484
    %v7486 = vand.u32 %v7485, 4294901760
    %7487 = vmatpush1.xpose.msra.mxu0 %v7486
    %7488 = vmatprep.subr.mxu0 0.0
    %v7489 = vand.u32 %v6768, 4294901760
    %v7490 = vsub.f32 %v6768, %v7489
    %v7491 = vand.u32 %v7490, 4294901760
    %7492 = vmatpush1.xpose.msra.mxu0 %v7491
    %7493 = vmatprep.subr.mxu0 0.0
    %v7494 = vand.u32 %v6770, 4294901760
    %v7495 = vsub.f32 %v6770, %v7494
    %v7496 = vand.u32 %v7495, 4294901760
    %7497 = vmatpush1.xpose.msra.mxu0 %v7496
    %7498 = vmatprep.subr.mxu0 0.0
    %v7499 = vand.u32 %v6772, 4294901760
    %v7500 = vsub.f32 %v6772, %v7499
    %v7501 = vand.u32 %v7500, 4294901760
    %7502 = vmatpush1.xpose.msra.mxu0 %v7501
    %7503 = vmatprep.subr.mxu0 0.0
    %v7504 = vand.u32 %v6774, 4294901760
    %v7505 = vsub.f32 %v6774, %v7504
    %v7506 = vand.u32 %v7505, 4294901760
    %7507 = vmatpush1.xpose.msra.mxu0 %v7506
    %7508 = vmatprep.subr.mxu0 0.0
    %v7509 = vand.u32 %v6776, 4294901760
    %v7510 = vsub.f32 %v6776, %v7509
    %v7511 = vand.u32 %v7510, 4294901760
    %7512 = vmatpush1.xpose.msra.mxu0 %v7511
    %7513 = vmatprep.subr.mxu0 0.0
    %v7514 = vand.u32 %v6778, 4294901760
    %v7515 = vsub.f32 %v6778, %v7514
    %v7516 = vand.u32 %v7515, 4294901760
    %7517 = vmatpush1.xpose.msra.mxu0 %v7516
    %7518 = vmatprep.subr.mxu0 0.0
    %v7519 = vand.u32 %v6780, 4294901760
    %v7520 = vsub.f32 %v6780, %v7519
    %v7521 = vand.u32 %v7520, 4294901760
    %7522 = vmatpush1.xpose.msra.mxu0 %v7521
    %7523 = vmatprep.subr.mxu0 0.0
    %v7524 = vand.u32 %v6782, 4294901760
    %v7525 = vsub.f32 %v6782, %v7524
    %v7526 = vand.u32 %v7525, 4294901760
    %7527 = vmatpush1.xpose.msra.mxu0 %v7526
    %7528 = vmatprep.subr.mxu0 0.0
    %v7529 = vand.u32 %v6784, 4294901760
    %v7530 = vsub.f32 %v6784, %v7529
    %v7531 = vand.u32 %v7530, 4294901760
    %7532 = vmatpush1.xpose.msra.mxu0 %v7531
    %7533 = vmatprep.subr.mxu0 0.0
    %v7534 = vand.u32 %v6786, 4294901760
    %v7535 = vsub.f32 %v6786, %v7534
    %v7536 = vand.u32 %v7535, 4294901760
    %7537 = vmatpush1.xpose.msra.mxu0 %v7536
    %7538 = vmatprep.subr.mxu0 0.0
    %v7539 = vand.u32 %v6788, 4294901760
    %v7540 = vsub.f32 %v6788, %v7539
    %v7541 = vand.u32 %v7540, 4294901760
    %7542 = vmatpush1.xpose.msra.mxu0 %v7541
    %7543 = vmatprep.subr.mxu0 0.0
    %v7544 = vand.u32 %v6790, 4294901760
    %v7545 = vsub.f32 %v6790, %v7544
    %v7546 = vand.u32 %v7545, 4294901760
    %7547 = vmatpush1.xpose.msra.mxu0 %v7546
    %7548 = vmatprep.subr.mxu0 0.0
    %v7549 = vand.u32 %v6792, 4294901760
    %v7550 = vsub.f32 %v6792, %v7549
    %v7551 = vand.u32 %v7550, 4294901760
    %7552 = vmatpush1.xpose.msra.mxu0 %v7551
    %7553 = vmatprep.subr.mxu0 0.0
    %v7554 = vand.u32 %v6794, 4294901760
    %v7555 = vsub.f32 %v6794, %v7554
    %v7556 = vand.u32 %v7555, 4294901760
    %7557 = vmatpush1.xpose.msra.mxu0 %v7556
    %7558 = vmatprep.subr.mxu0 0.0
    %v7559 = vand.u32 %v6796, 4294901760
    %v7560 = vsub.f32 %v6796, %v7559
    %v7561 = vand.u32 %v7560, 4294901760
    %7562 = vmatpush1.xpose.msra.mxu0 %v7561
    %7563 = vmatprep.subr.mxu0 0.0
    %v7564 = vand.u32 %v6798, 4294901760
    %v7565 = vsub.f32 %v6798, %v7564
    %v7566 = vand.u32 %v7565, 4294901760
    %7567 = vmatpush1.xpose.msra.mxu0 %v7566
    %7568 = vmatprep.subr.mxu0 0.0
    %v7569 = vand.u32 %v6800, 4294901760
    %v7570 = vsub.f32 %v6800, %v7569
    %v7571 = vand.u32 %v7570, 4294901760
    %7572 = vmatpush1.xpose.msra.mxu0 %v7571
    %7573 = vmatprep.subr.mxu0 0.0
    %v7574 = vand.u32 %v6802, 4294901760
    %v7575 = vsub.f32 %v6802, %v7574
    %v7576 = vand.u32 %v7575, 4294901760
    %7577 = vmatpush1.xpose.msra.mxu0 %v7576
    %7578 = vmatprep.subr.mxu0 0.0
    %v7579 = vand.u32 %v6804, 4294901760
    %v7580 = vsub.f32 %v6804, %v7579
    %v7581 = vand.u32 %v7580, 4294901760
    %7582 = vmatpush1.xpose.msra.mxu0 %v7581
    %7583 = vmatprep.subr.mxu0 0.0
    %v7584 = vand.u32 %v6806, 4294901760
    %v7585 = vsub.f32 %v6806, %v7584
    %v7586 = vand.u32 %v7585, 4294901760
    %7587 = vmatpush1.xpose.msra.mxu0 %v7586
    %7588 = vmatprep.subr.mxu0 0.0
    %v7589 = vand.u32 %v6808, 4294901760
    %v7590 = vsub.f32 %v6808, %v7589
    %v7591 = vand.u32 %v7590, 4294901760
    %7592 = vmatpush1.xpose.msra.mxu0 %v7591
    %7593 = vmatprep.subr.mxu0 0.0
    %v7594 = vand.u32 %v6810, 4294901760
    %v7595 = vsub.f32 %v6810, %v7594
    %v7596 = vand.u32 %v7595, 4294901760
    %7597 = vmatpush1.xpose.msra.mxu0 %v7596
    %7598 = vmatprep.subr.mxu0 0.0
    %v7599 = vand.u32 %v6812, 4294901760
    %v7600 = vsub.f32 %v6812, %v7599
    %v7601 = vand.u32 %v7600, 4294901760
    %7602 = vmatpush1.xpose.msra.mxu0 %v7601
    %7603 = vmatprep.subr.mxu0 0.0
    %v7604 = vand.u32 %v6814, 4294901760
    %v7605 = vsub.f32 %v6814, %v7604
    %v7606 = vand.u32 %v7605, 4294901760
    %7607 = vmatpush1.xpose.msra.mxu0 %v7606
    %7608 = vmatprep.subr.mxu0 0.0
    %v7609 = vand.u32 %v6816, 4294901760
    %v7610 = vsub.f32 %v6816, %v7609
    %v7611 = vand.u32 %v7610, 4294901760
    %7612 = vmatpush1.xpose.msra.mxu0 %v7611
    %7613 = vmatprep.subr.mxu0 0.0
    %v7614 = vand.u32 %v6818, 4294901760
    %v7615 = vsub.f32 %v6818, %v7614
    %v7616 = vand.u32 %v7615, 4294901760
    %7617 = vmatpush1.xpose.msra.mxu0 %v7616
    %7618 = vmatprep.subr.mxu0 0.0
    %v7619 = vand.u32 %v6820, 4294901760
    %v7620 = vsub.f32 %v6820, %v7619
    %v7621 = vand.u32 %v7620, 4294901760
    %7622 = vmatpush1.xpose.msra.mxu0 %v7621
    %7623 = vmatprep.subr.mxu0 0.0
    %v7624 = vand.u32 %v6822, 4294901760
    %v7625 = vsub.f32 %v6822, %v7624
    %v7626 = vand.u32 %v7625, 4294901760
    %7627 = vmatpush1.xpose.msra.mxu0 %v7626
    %7628 = vmatprep.subr.mxu0 0.0
    %v7629 = vand.u32 %v6824, 4294901760
    %v7630 = vsub.f32 %v6824, %v7629
    %v7631 = vand.u32 %v7630, 4294901760
    %7632 = vmatpush1.xpose.msra.mxu0 %v7631
    %7633 = vmatprep.mubr.f32.mxu0 0.0
    %v7634 = vand.u32 %v6760, 4294901760
    %7635 = vmatmul.mubr.f32.gmra.mrb[0].mxu0 %v7634
    %v7636 = vpop.f32.mrb[0].mxu0
    %v7637 = vadd.f32 %v7469, %v7636
    %v7638 = vpop.f32.mrb[0].mxu0
    %v7639 = vadd.f32 %v7471, %v7638
    %7640 = vdwg.mxu0
    %7641 = vmatprep.subr.mxu0 0.0
    %v7642 = vand.u32 %v6762, 4294901760
    %7643 = vmatpush1.xpose.msra.mxu0 %v7642
    %7644 = vmatprep.subr.mxu0 0.0
    %v7645 = vand.u32 %v6764, 4294901760
    %7646 = vmatpush1.xpose.msra.mxu0 %v7645
    %7647 = vmatprep.subr.mxu0 0.0
    %v7648 = vand.u32 %v6766, 4294901760
    %7649 = vmatpush1.xpose.msra.mxu0 %v7648
    %7650 = vmatprep.subr.mxu0 0.0
    %v7651 = vand.u32 %v6768, 4294901760
    %7652 = vmatpush1.xpose.msra.mxu0 %v7651
    %7653 = vmatprep.subr.mxu0 0.0
    %v7654 = vand.u32 %v6770, 4294901760
    %7655 = vmatpush1.xpose.msra.mxu0 %v7654
    %7656 = vmatprep.subr.mxu0 0.0
    %v7657 = vand.u32 %v6772, 4294901760
    %7658 = vmatpush1.xpose.msra.mxu0 %v7657
    %7659 = vmatprep.subr.mxu0 0.0
    %v7660 = vand.u32 %v6774, 4294901760
    %7661 = vmatpush1.xpose.msra.mxu0 %v7660
    %7662 = vmatprep.subr.mxu0 0.0
    %v7663 = vand.u32 %v6776, 4294901760
    %7664 = vmatpush1.xpose.msra.mxu0 %v7663
    %7665 = vmatprep.subr.mxu0 0.0
    %v7666 = vand.u32 %v6778, 4294901760
    %7667 = vmatpush1.xpose.msra.mxu0 %v7666
    %7668 = vmatprep.subr.mxu0 0.0
    %v7669 = vand.u32 %v6780, 4294901760
    %7670 = vmatpush1.xpose.msra.mxu0 %v7669
    %7671 = vmatprep.subr.mxu0 0.0
    %v7672 = vand.u32 %v6782, 4294901760
    %7673 = vmatpush1.xpose.msra.mxu0 %v7672
    %7674 = vmatprep.subr.mxu0 0.0
    %v7675 = vand.u32 %v6784, 4294901760
    %7676 = vmatpush1.xpose.msra.mxu0 %v7675
    %7677 = vmatprep.subr.mxu0 0.0
    %v7678 = vand.u32 %v6786, 4294901760
    %7679 = vmatpush1.xpose.msra.mxu0 %v7678
    %7680 = vmatprep.subr.mxu0 0.0
    %v7681 = vand.u32 %v6788, 4294901760
    %7682 = vmatpush1.xpose.msra.mxu0 %v7681
    %7683 = vmatprep.subr.mxu0 0.0
    %v7684 = vand.u32 %v6790, 4294901760
    %7685 = vmatpush1.xpose.msra.mxu0 %v7684
    %7686 = vmatprep.subr.mxu0 0.0
    %v7687 = vand.u32 %v6792, 4294901760
    %7688 = vmatpush1.xpose.msra.mxu0 %v7687
    %7689 = vmatprep.subr.mxu0 0.0
    %v7690 = vand.u32 %v6794, 4294901760
    %7691 = vmatpush1.xpose.msra.mxu0 %v7690
    %7692 = vmatprep.subr.mxu0 0.0
    %v7693 = vand.u32 %v6796, 4294901760
    %7694 = vmatpush1.xpose.msra.mxu0 %v7693
    %7695 = vmatprep.subr.mxu0 0.0
    %v7696 = vand.u32 %v6798, 4294901760
    %7697 = vmatpush1.xpose.msra.mxu0 %v7696
    %7698 = vmatprep.subr.mxu0 0.0
    %v7699 = vand.u32 %v6800, 4294901760
    %7700 = vmatpush1.xpose.msra.mxu0 %v7699
    %7701 = vmatprep.subr.mxu0 0.0
    %v7702 = vand.u32 %v6802, 4294901760
    %7703 = vmatpush1.xpose.msra.mxu0 %v7702
    %7704 = vmatprep.subr.mxu0 0.0
    %v7705 = vand.u32 %v6804, 4294901760
    %7706 = vmatpush1.xpose.msra.mxu0 %v7705
    %7707 = vmatprep.subr.mxu0 0.0
    %v7708 = vand.u32 %v6806, 4294901760
    %7709 = vmatpush1.xpose.msra.mxu0 %v7708
    %7710 = vmatprep.subr.mxu0 0.0
    %v7711 = vand.u32 %v6808, 4294901760
    %7712 = vmatpush1.xpose.msra.mxu0 %v7711
    %7713 = vmatprep.subr.mxu0 0.0
    %v7714 = vand.u32 %v6810, 4294901760
    %7715 = vmatpush1.xpose.msra.mxu0 %v7714
    %7716 = vmatprep.subr.mxu0 0.0
    %v7717 = vand.u32 %v6812, 4294901760
    %7718 = vmatpush1.xpose.msra.mxu0 %v7717
    %7719 = vmatprep.subr.mxu0 0.0
    %v7720 = vand.u32 %v6814, 4294901760
    %7721 = vmatpush1.xpose.msra.mxu0 %v7720
    %7722 = vmatprep.subr.mxu0 0.0
    %v7723 = vand.u32 %v6816, 4294901760
    %7724 = vmatpush1.xpose.msra.mxu0 %v7723
    %7725 = vmatprep.subr.mxu0 0.0
    %v7726 = vand.u32 %v6818, 4294901760
    %7727 = vmatpush1.xpose.msra.mxu0 %v7726
    %7728 = vmatprep.subr.mxu0 0.0
    %v7729 = vand.u32 %v6820, 4294901760
    %7730 = vmatpush1.xpose.msra.mxu0 %v7729
    %7731 = vmatprep.subr.mxu0 0.0
    %v7732 = vand.u32 %v6822, 4294901760
    %7733 = vmatpush1.xpose.msra.mxu0 %v7732
    %7734 = vmatprep.subr.mxu0 0.0
    %v7735 = vand.u32 %v6824, 4294901760
    %7736 = vmatpush1.xpose.msra.mxu0 %v7735
    %7737 = vmatprep.mubr.f32.mxu0 0.0
    %v7738 = vand.u32 %v6760, 4294901760
    %7739 = vmatmul.mubr.f32.gmra.mrb[0].mxu0 %v7738
    %v7740 = vpop.f32.mrb[0].mxu0
    %v7741 = vadd.f32 %v7637, %v7740
    %v7742 = vpop.f32.mrb[0].mxu0
    %v7743 = vadd.f32 %v7639, %v7742
    %7744 = vdwg.mxu0
    %7745 = vmatprep.subr.mxu0 0.0
    %v7746 = vand.u32 %v6826, 4294901760
    %7747 = vmatpush1.xpose.msra.mxu0 %v7746
    %7748 = vmatprep.subr.mxu0 0.0
    %v7749 = vand.u32 %v6828, 4294901760
    %7750 = vmatpush1.xpose.msra.mxu0 %v7749
    %7751 = vmatprep.subr.mxu0 0.0
    %v7752 = vand.u32 %v6830, 4294901760
    %7753 = vmatpush1.xpose.msra.mxu0 %v7752
    %7754 = vmatprep.subr.mxu0 0.0
    %v7755 = vand.u32 %v6832, 4294901760
    %7756 = vmatpush1.xpose.msra.mxu0 %v7755
    %7757 = vmatprep.subr.mxu0 0.0
    %v7758 = vand.u32 %v6834, 4294901760
    %7759 = vmatpush1.xpose.msra.mxu0 %v7758
    %7760 = vmatprep.subr.mxu0 0.0
    %v7761 = vand.u32 %v6836, 4294901760
    %7762 = vmatpush1.xpose.msra.mxu0 %v7761
    %7763 = vmatprep.subr.mxu0 0.0
    %v7764 = vand.u32 %v6838, 4294901760
    %7765 = vmatpush1.xpose.msra.mxu0 %v7764
    %7766 = vmatprep.subr.mxu0 0.0
    %v7767 = vand.u32 %v6840, 4294901760
    %7768 = vmatpush1.xpose.msra.mxu0 %v7767
    %7769 = vmatprep.subr.mxu0 0.0
    %v7770 = vand.u32 %v6842, 4294901760
    %7771 = vmatpush1.xpose.msra.mxu0 %v7770
    %7772 = vmatprep.subr.mxu0 0.0
    %v7773 = vand.u32 %v6844, 4294901760
    %7774 = vmatpush1.xpose.msra.mxu0 %v7773
    %7775 = vmatprep.subr.mxu0 0.0
    %v7776 = vand.u32 %v6846, 4294901760
    %7777 = vmatpush1.xpose.msra.mxu0 %v7776
    %7778 = vmatprep.subr.mxu0 0.0
    %v7779 = vand.u32 %v6848, 4294901760
    %7780 = vmatpush1.xpose.msra.mxu0 %v7779
    %7781 = vmatprep.subr.mxu0 0.0
    %v7782 = vand.u32 %v6850, 4294901760
    %7783 = vmatpush1.xpose.msra.mxu0 %v7782
    %7784 = vmatprep.subr.mxu0 0.0
    %v7785 = vand.u32 %v6852, 4294901760
    %7786 = vmatpush1.xpose.msra.mxu0 %v7785
    %7787 = vmatprep.subr.mxu0 0.0
    %v7788 = vand.u32 %v6854, 4294901760
    %7789 = vmatpush1.xpose.msra.mxu0 %v7788
    %7790 = vmatprep.subr.mxu0 0.0
    %v7791 = vand.u32 %v6856, 4294901760
    %7792 = vmatpush1.xpose.msra.mxu0 %v7791
    %7793 = vmatprep.subr.mxu0 0.0
    %v7794 = vand.u32 %v6858, 4294901760
    %7795 = vmatpush1.xpose.msra.mxu0 %v7794
    %7796 = vmatprep.subr.mxu0 0.0
    %v7797 = vand.u32 %v6860, 4294901760
    %7798 = vmatpush1.xpose.msra.mxu0 %v7797
    %7799 = vmatprep.subr.mxu0 0.0
    %v7800 = vand.u32 %v6862, 4294901760
    %7801 = vmatpush1.xpose.msra.mxu0 %v7800
    %7802 = vmatprep.subr.mxu0 0.0
    %v7803 = vand.u32 %v6864, 4294901760
    %7804 = vmatpush1.xpose.msra.mxu0 %v7803
    %7805 = vmatprep.subr.mxu0 0.0
    %v7806 = vand.u32 %v6866, 4294901760
    %7807 = vmatpush1.xpose.msra.mxu0 %v7806
    %7808 = vmatprep.subr.mxu0 0.0
    %v7809 = vand.u32 %v6868, 4294901760
    %7810 = vmatpush1.xpose.msra.mxu0 %v7809
    %7811 = vmatprep.subr.mxu0 0.0
    %v7812 = vand.u32 %v6870, 4294901760
    %7813 = vmatpush1.xpose.msra.mxu0 %v7812
    %7814 = vmatprep.subr.mxu0 0.0
    %v7815 = vand.u32 %v6872, 4294901760
    %7816 = vmatpush1.xpose.msra.mxu0 %v7815
    %7817 = vmatprep.subr.mxu0 0.0
    %v7818 = vand.u32 %v6874, 4294901760
    %7819 = vmatpush1.xpose.msra.mxu0 %v7818
    %7820 = vmatprep.subr.mxu0 0.0
    %v7821 = vand.u32 %v6876, 4294901760
    %7822 = vmatpush1.xpose.msra.mxu0 %v7821
    %7823 = vmatprep.subr.mxu0 0.0
    %v7824 = vand.u32 %v6878, 4294901760
    %7825 = vmatpush1.xpose.msra.mxu0 %v7824
    %7826 = vmatprep.subr.mxu0 0.0
    %v7827 = vand.u32 %v6880, 4294901760
    %7828 = vmatpush1.xpose.msra.mxu0 %v7827
    %7829 = vmatprep.subr.mxu0 0.0
    %v7830 = vand.u32 %v6882, 4294901760
    %7831 = vmatpush1.xpose.msra.mxu0 %v7830
    %7832 = vmatprep.subr.mxu0 0.0
    %v7833 = vand.u32 %v6884, 4294901760
    %7834 = vmatpush1.xpose.msra.mxu0 %v7833
    %7835 = vmatprep.subr.mxu0 0.0
    %v7836 = vand.u32 %v6886, 4294901760
    %7837 = vmatpush1.xpose.msra.mxu0 %v7836
    %7838 = vmatprep.subr.mxu0 0.0
    %v7839 = vand.u32 %v6888, 4294901760
    %7840 = vmatpush1.xpose.msra.mxu0 %v7839
    %7841 = vmatprep.mubr.f32.mxu0 0.0
    %v7842 = vand.u32 %v6760, 4294901760
    %v7843 = vsub.f32 %v6760, %v7842
    %v7844 = vand.u32 %v7843, 4294901760
    %v7845 = vsub.f32 %v7843, %v7844
    %v7846 = vand.u32 %v7845, 4294901760
    %7847 = vmatmul.mubr.f32.gmra.mrb[0].mxu0 %v7846
    %v7848 = vpop.f32.mrb[0].mxu0
    %v7849 = vadd.f32 %v6757, %v7848
    %v7850 = vpop.f32.mrb[0].mxu0
    %v7851 = vadd.f32 %v6757, %v7850
    %7852 = vdwg.mxu0
    %7853 = vmatprep.subr.mxu0 0.0
    %v7854 = vand.u32 %v6826, 4294901760
    %v7855 = vsub.f32 %v6826, %v7854
    %v7856 = vand.u32 %v7855, 4294901760
    %v7857 = vsub.f32 %v7855, %v7856
    %v7858 = vand.u32 %v7857, 4294901760
    %7859 = vmatpush1.xpose.msra.mxu0 %v7858
    %7860 = vmatprep.subr.mxu0 0.0
    %v7861 = vand.u32 %v6828, 4294901760
    %v7862 = vsub.f32 %v6828, %v7861
    %v7863 = vand.u32 %v7862, 4294901760
    %v7864 = vsub.f32 %v7862, %v7863
    %v7865 = vand.u32 %v7864, 4294901760
    %7866 = vmatpush1.xpose.msra.mxu0 %v7865
    %7867 = vmatprep.subr.mxu0 0.0
    %v7868 = vand.u32 %v6830, 4294901760
    %v7869 = vsub.f32 %v6830, %v7868
    %v7870 = vand.u32 %v7869, 4294901760
    %v7871 = vsub.f32 %v7869, %v7870
    %v7872 = vand.u32 %v7871, 4294901760
    %7873 = vmatpush1.xpose.msra.mxu0 %v7872
    %7874 = vmatprep.subr.mxu0 0.0
    %v7875 = vand.u32 %v6832, 4294901760
    %v7876 = vsub.f32 %v6832, %v7875
    %v7877 = vand.u32 %v7876, 4294901760
    %v7878 = vsub.f32 %v7876, %v7877
    %v7879 = vand.u32 %v7878, 4294901760
    %7880 = vmatpush1.xpose.msra.mxu0 %v7879
    %7881 = vmatprep.subr.mxu0 0.0
    %v7882 = vand.u32 %v6834, 4294901760
    %v7883 = vsub.f32 %v6834, %v7882
    %v7884 = vand.u32 %v7883, 4294901760
    %v7885 = vsub.f32 %v7883, %v7884
    %v7886 = vand.u32 %v7885, 4294901760
    %7887 = vmatpush1.xpose.msra.mxu0 %v7886
    %7888 = vmatprep.subr.mxu0 0.0
    %v7889 = vand.u32 %v6836, 4294901760
    %v7890 = vsub.f32 %v6836, %v7889
    %v7891 = vand.u32 %v7890, 4294901760
    %v7892 = vsub.f32 %v7890, %v7891
    %v7893 = vand.u32 %v7892, 4294901760
    %7894 = vmatpush1.xpose.msra.mxu0 %v7893
    %7895 = vmatprep.subr.mxu0 0.0
    %v7896 = vand.u32 %v6838, 4294901760
    %v7897 = vsub.f32 %v6838, %v7896
    %v7898 = vand.u32 %v7897, 4294901760
    %v7899 = vsub.f32 %v7897, %v7898
    %v7900 = vand.u32 %v7899, 4294901760
    %7901 = vmatpush1.xpose.msra.mxu0 %v7900
    %7902 = vmatprep.subr.mxu0 0.0
    %v7903 = vand.u32 %v6840, 4294901760
    %v7904 = vsub.f32 %v6840, %v7903
    %v7905 = vand.u32 %v7904, 4294901760
    %v7906 = vsub.f32 %v7904, %v7905
    %v7907 = vand.u32 %v7906, 4294901760
    %7908 = vmatpush1.xpose.msra.mxu0 %v7907
    %7909 = vmatprep.subr.mxu0 0.0
    %v7910 = vand.u32 %v6842, 4294901760
    %v7911 = vsub.f32 %v6842, %v7910
    %v7912 = vand.u32 %v7911, 4294901760
    %v7913 = vsub.f32 %v7911, %v7912
    %v7914 = vand.u32 %v7913, 4294901760
    %7915 = vmatpush1.xpose.msra.mxu0 %v7914
    %7916 = vmatprep.subr.mxu0 0.0
    %v7917 = vand.u32 %v6844, 4294901760
    %v7918 = vsub.f32 %v6844, %v7917
    %v7919 = vand.u32 %v7918, 4294901760
    %v7920 = vsub.f32 %v7918, %v7919
    %v7921 = vand.u32 %v7920, 4294901760
    %7922 = vmatpush1.xpose.msra.mxu0 %v7921
    %7923 = vmatprep.subr.mxu0 0.0
    %v7924 = vand.u32 %v6846, 4294901760
    %v7925 = vsub.f32 %v6846, %v7924
    %v7926 = vand.u32 %v7925, 4294901760
    %v7927 = vsub.f32 %v7925, %v7926
    %v7928 = vand.u32 %v7927, 4294901760
    %7929 = vmatpush1.xpose.msra.mxu0 %v7928
    %7930 = vmatprep.subr.mxu0 0.0
    %v7931 = vand.u32 %v6848, 4294901760
    %v7932 = vsub.f32 %v6848, %v7931
    %v7933 = vand.u32 %v7932, 4294901760
    %v7934 = vsub.f32 %v7932, %v7933
    %v7935 = vand.u32 %v7934, 4294901760
    %7936 = vmatpush1.xpose.msra.mxu0 %v7935
    %7937 = vmatprep.subr.mxu0 0.0
    %v7938 = vand.u32 %v6850, 4294901760
    %v7939 = vsub.f32 %v6850, %v7938
    %v7940 = vand.u32 %v7939, 4294901760
    %v7941 = vsub.f32 %v7939, %v7940
    %v7942 = vand.u32 %v7941, 4294901760
    %7943 = vmatpush1.xpose.msra.mxu0 %v7942
    %7944 = vmatprep.subr.mxu0 0.0
    %v7945 = vand.u32 %v6852, 4294901760
    %v7946 = vsub.f32 %v6852, %v7945
    %v7947 = vand.u32 %v7946, 4294901760
    %v7948 = vsub.f32 %v7946, %v7947
    %v7949 = vand.u32 %v7948, 4294901760
    %7950 = vmatpush1.xpose.msra.mxu0 %v7949
    %7951 = vmatprep.subr.mxu0 0.0
    %v7952 = vand.u32 %v6854, 4294901760
    %v7953 = vsub.f32 %v6854, %v7952
    %v7954 = vand.u32 %v7953, 4294901760
    %v7955 = vsub.f32 %v7953, %v7954
    %v7956 = vand.u32 %v7955, 4294901760
    %7957 = vmatpush1.xpose.msra.mxu0 %v7956
    %7958 = vmatprep.subr.mxu0 0.0
    %v7959 = vand.u32 %v6856, 4294901760
    %v7960 = vsub.f32 %v6856, %v7959
    %v7961 = vand.u32 %v7960, 4294901760
    %v7962 = vsub.f32 %v7960, %v7961
    %v7963 = vand.u32 %v7962, 4294901760
    %7964 = vmatpush1.xpose.msra.mxu0 %v7963
    %7965 = vmatprep.subr.mxu0 0.0
    %v7966 = vand.u32 %v6858, 4294901760
    %v7967 = vsub.f32 %v6858, %v7966
    %v7968 = vand.u32 %v7967, 4294901760
    %v7969 = vsub.f32 %v7967, %v7968
    %v7970 = vand.u32 %v7969, 4294901760
    %7971 = vmatpush1.xpose.msra.mxu0 %v7970
    %7972 = vmatprep.subr.mxu0 0.0
    %v7973 = vand.u32 %v6860, 4294901760
    %v7974 = vsub.f32 %v6860, %v7973
    %v7975 = vand.u32 %v7974, 4294901760
    %v7976 = vsub.f32 %v7974, %v7975
    %v7977 = vand.u32 %v7976, 4294901760
    %7978 = vmatpush1.xpose.msra.mxu0 %v7977
    %7979 = vmatprep.subr.mxu0 0.0
    %v7980 = vand.u32 %v6862, 4294901760
    %v7981 = vsub.f32 %v6862, %v7980
    %v7982 = vand.u32 %v7981, 4294901760
    %v7983 = vsub.f32 %v7981, %v7982
    %v7984 = vand.u32 %v7983, 4294901760
    %7985 = vmatpush1.xpose.msra.mxu0 %v7984
    %7986 = vmatprep.subr.mxu0 0.0
    %v7987 = vand.u32 %v6864, 4294901760
    %v7988 = vsub.f32 %v6864, %v7987
    %v7989 = vand.u32 %v7988, 4294901760
    %v7990 = vsub.f32 %v7988, %v7989
    %v7991 = vand.u32 %v7990, 4294901760
    %7992 = vmatpush1.xpose.msra.mxu0 %v7991
    %7993 = vmatprep.subr.mxu0 0.0
    %v7994 = vand.u32 %v6866, 4294901760
    %v7995 = vsub.f32 %v6866, %v7994
    %v7996 = vand.u32 %v7995, 4294901760
    %v7997 = vsub.f32 %v7995, %v7996
    %v7998 = vand.u32 %v7997, 4294901760
    %7999 = vmatpush1.xpose.msra.mxu0 %v7998
    %8000 = vmatprep.subr.mxu0 0.0
    %v8001 = vand.u32 %v6868, 4294901760
    %v8002 = vsub.f32 %v6868, %v8001
    %v8003 = vand.u32 %v8002, 4294901760
    %v8004 = vsub.f32 %v8002, %v8003
    %v8005 = vand.u32 %v8004, 4294901760
    %8006 = vmatpush1.xpose.msra.mxu0 %v8005
    %8007 = vmatprep.subr.mxu0 0.0
    %v8008 = vand.u32 %v6870, 4294901760
    %v8009 = vsub.f32 %v6870, %v8008
    %v8010 = vand.u32 %v8009, 4294901760
    %v8011 = vsub.f32 %v8009, %v8010
    %v8012 = vand.u32 %v8011, 4294901760
    %8013 = vmatpush1.xpose.msra.mxu0 %v8012
    %8014 = vmatprep.subr.mxu0 0.0
    %v8015 = vand.u32 %v6872, 4294901760
    %v8016 = vsub.f32 %v6872, %v8015
    %v8017 = vand.u32 %v8016, 4294901760
    %v8018 = vsub.f32 %v8016, %v8017
    %v8019 = vand.u32 %v8018, 4294901760
    %8020 = vmatpush1.xpose.msra.mxu0 %v8019
    %8021 = vmatprep.subr.mxu0 0.0
    %v8022 = vand.u32 %v6874, 4294901760
    %v8023 = vsub.f32 %v6874, %v8022
    %v8024 = vand.u32 %v8023, 4294901760
    %v8025 = vsub.f32 %v8023, %v8024
    %v8026 = vand.u32 %v8025, 4294901760
    %8027 = vmatpush1.xpose.msra.mxu0 %v8026
    %8028 = vmatprep.subr.mxu0 0.0
    %v8029 = vand.u32 %v6876, 4294901760
    %v8030 = vsub.f32 %v6876, %v8029
    %v8031 = vand.u32 %v8030, 4294901760
    %v8032 = vsub.f32 %v8030, %v8031
    %v8033 = vand.u32 %v8032, 4294901760
    %8034 = vmatpush1.xpose.msra.mxu0 %v8033
    %8035 = vmatprep.subr.mxu0 0.0
    %v8036 = vand.u32 %v6878, 4294901760
    %v8037 = vsub.f32 %v6878, %v8036
    %v8038 = vand.u32 %v8037, 4294901760
    %v8039 = vsub.f32 %v8037, %v8038
    %v8040 = vand.u32 %v8039, 4294901760
    %8041 = vmatpush1.xpose.msra.mxu0 %v8040
    %8042 = vmatprep.subr.mxu0 0.0
    %v8043 = vand.u32 %v6880, 4294901760
    %v8044 = vsub.f32 %v6880, %v8043
    %v8045 = vand.u32 %v8044, 4294901760
    %v8046 = vsub.f32 %v8044, %v8045
    %v8047 = vand.u32 %v8046, 4294901760
    %8048 = vmatpush1.xpose.msra.mxu0 %v8047
    %8049 = vmatprep.subr.mxu0 0.0
    %v8050 = vand.u32 %v6882, 4294901760
    %v8051 = vsub.f32 %v6882, %v8050
    %v8052 = vand.u32 %v8051, 4294901760
    %v8053 = vsub.f32 %v8051, %v8052
    %v8054 = vand.u32 %v8053, 4294901760
    %8055 = vmatpush1.xpose.msra.mxu0 %v8054
    %8056 = vmatprep.subr.mxu0 0.0
    %v8057 = vand.u32 %v6884, 4294901760
    %v8058 = vsub.f32 %v6884, %v8057
    %v8059 = vand.u32 %v8058, 4294901760
    %v8060 = vsub.f32 %v8058, %v8059
    %v8061 = vand.u32 %v8060, 4294901760
    %8062 = vmatpush1.xpose.msra.mxu0 %v8061
    %8063 = vmatprep.subr.mxu0 0.0
    %v8064 = vand.u32 %v6886, 4294901760
    %v8065 = vsub.f32 %v6886, %v8064
    %v8066 = vand.u32 %v8065, 4294901760
    %v8067 = vsub.f32 %v8065, %v8066
    %v8068 = vand.u32 %v8067, 4294901760
    %8069 = vmatpush1.xpose.msra.mxu0 %v8068
    %8070 = vmatprep.subr.mxu0 0.0
    %v8071 = vand.u32 %v6888, 4294901760
    %v8072 = vsub.f32 %v6888, %v8071
    %v8073 = vand.u32 %v8072, 4294901760
    %v8074 = vsub.f32 %v8072, %v8073
    %v8075 = vand.u32 %v8074, 4294901760
    %8076 = vmatpush1.xpose.msra.mxu0 %v8075
    %8077 = vmatprep.mubr.f32.mxu0 0.0
    %v8078 = vand.u32 %v6760, 4294901760
    %8079 = vmatmul.mubr.f32.gmra.mrb[0].mxu0 %v8078
    %v8080 = vpop.f32.mrb[0].mxu0
    %v8081 = vadd.f32 %v7849, %v8080
    %v8082 = vpop.f32.mrb[0].mxu0
    %v8083 = vadd.f32 %v7851, %v8082
    %8084 = vdwg.mxu0
    %8085 = vmatprep.subr.mxu0 0.0
    %v8086 = vand.u32 %v6826, 4294901760
    %v8087 = vsub.f32 %v6826, %v8086
    %8088 = vmatpush1.xpose.msra.mxu0 %v8087
    %8089 = vmatprep.subr.mxu0 0.0
    %v8090 = vand.u32 %v6828, 4294901760
    %v8091 = vsub.f32 %v6828, %v8090
    %8092 = vmatpush1.xpose.msra.mxu0 %v8091
    %8093 = vmatprep.subr.mxu0 0.0
    %v8094 = vand.u32 %v6830, 4294901760
    %v8095 = vsub.f32 %v6830, %v8094
    %8096 = vmatpush1.xpose.msra.mxu0 %v8095
    %8097 = vmatprep.subr.mxu0 0.0
    %v8098 = vand.u32 %v6832, 4294901760
    %v8099 = vsub.f32 %v6832, %v8098
    %8100 = vmatpush1.xpose.msra.mxu0 %v8099
    %8101 = vmatprep.subr.mxu0 0.0
    %v8102 = vand.u32 %v6834, 4294901760
    %v8103 = vsub.f32 %v6834, %v8102
    %8104 = vmatpush1.xpose.msra.mxu0 %v8103
    %8105 = vmatprep.subr.mxu0 0.0
    %v8106 = vand.u32 %v6836, 4294901760
    %v8107 = vsub.f32 %v6836, %v8106
    %8108 = vmatpush1.xpose.msra.mxu0 %v8107
    %8109 = vmatprep.subr.mxu0 0.0
    %v8110 = vand.u32 %v6838, 4294901760
    %v8111 = vsub.f32 %v6838, %v8110
    %8112 = vmatpush1.xpose.msra.mxu0 %v8111
    %8113 = vmatprep.subr.mxu0 0.0
    %v8114 = vand.u32 %v6840, 4294901760
    %v8115 = vsub.f32 %v6840, %v8114
    %8116 = vmatpush1.xpose.msra.mxu0 %v8115
    %8117 = vmatprep.subr.mxu0 0.0
    %v8118 = vand.u32 %v6842, 4294901760
    %v8119 = vsub.f32 %v6842, %v8118
    %8120 = vmatpush1.xpose.msra.mxu0 %v8119
    %8121 = vmatprep.subr.mxu0 0.0
    %v8122 = vand.u32 %v6844, 4294901760
    %v8123 = vsub.f32 %v6844, %v8122
    %8124 = vmatpush1.xpose.msra.mxu0 %v8123
    %8125 = vmatprep.subr.mxu0 0.0
    %v8126 = vand.u32 %v6846, 4294901760
    %v8127 = vsub.f32 %v6846, %v8126
    %8128 = vmatpush1.xpose.msra.mxu0 %v8127
    %8129 = vmatprep.subr.mxu0 0.0
    %v8130 = vand.u32 %v6848, 4294901760
    %v8131 = vsub.f32 %v6848, %v8130
    %8132 = vmatpush1.xpose.msra.mxu0 %v8131
    %8133 = vmatprep.subr.mxu0 0.0
    %v8134 = vand.u32 %v6850, 4294901760
    %v8135 = vsub.f32 %v6850, %v8134
    %8136 = vmatpush1.xpose.msra.mxu0 %v8135
    %8137 = vmatprep.subr.mxu0 0.0
    %v8138 = vand.u32 %v6852, 4294901760
    %v8139 = vsub.f32 %v6852, %v8138
    %8140 = vmatpush1.xpose.msra.mxu0 %v8139
    %8141 = vmatprep.subr.mxu0 0.0
    %v8142 = vand.u32 %v6854, 4294901760
    %v8143 = vsub.f32 %v6854, %v8142
    %8144 = vmatpush1.xpose.msra.mxu0 %v8143
    %8145 = vmatprep.subr.mxu0 0.0
    %v8146 = vand.u32 %v6856, 4294901760
    %v8147 = vsub.f32 %v6856, %v8146
    %8148 = vmatpush1.xpose.msra.mxu0 %v8147
    %8149 = vmatprep.subr.mxu0 0.0
    %v8150 = vand.u32 %v6858, 4294901760
    %v8151 = vsub.f32 %v6858, %v8150
    %8152 = vmatpush1.xpose.msra.mxu0 %v8151
    %8153 = vmatprep.subr.mxu0 0.0
    %v8154 = vand.u32 %v6860, 4294901760
    %v8155 = vsub.f32 %v6860, %v8154
    %8156 = vmatpush1.xpose.msra.mxu0 %v8155
    %8157 = vmatprep.subr.mxu0 0.0
    %v8158 = vand.u32 %v6862, 4294901760
    %v8159 = vsub.f32 %v6862, %v8158
    %8160 = vmatpush1.xpose.msra.mxu0 %v8159
    %8161 = vmatprep.subr.mxu0 0.0
    %v8162 = vand.u32 %v6864, 4294901760
    %v8163 = vsub.f32 %v6864, %v8162
    %8164 = vmatpush1.xpose.msra.mxu0 %v8163
    %8165 = vmatprep.subr.mxu0 0.0
    %v8166 = vand.u32 %v6866, 4294901760
    %v8167 = vsub.f32 %v6866, %v8166
    %8168 = vmatpush1.xpose.msra.mxu0 %v8167
    %8169 = vmatprep.subr.mxu0 0.0
    %v8170 = vand.u32 %v6868, 4294901760
    %v8171 = vsub.f32 %v6868, %v8170
    %8172 = vmatpush1.xpose.msra.mxu0 %v8171
    %8173 = vmatprep.subr.mxu0 0.0
    %v8174 = vand.u32 %v6870, 4294901760
    %v8175 = vsub.f32 %v6870, %v8174
    %8176 = vmatpush1.xpose.msra.mxu0 %v8175
    %8177 = vmatprep.subr.mxu0 0.0
    %v8178 = vand.u32 %v6872, 4294901760
    %v8179 = vsub.f32 %v6872, %v8178
    %8180 = vmatpush1.xpose.msra.mxu0 %v8179
    %8181 = vmatprep.subr.mxu0 0.0
    %v8182 = vand.u32 %v6874, 4294901760
    %v8183 = vsub.f32 %v6874, %v8182
    %8184 = vmatpush1.xpose.msra.mxu0 %v8183
    %8185 = vmatprep.subr.mxu0 0.0
    %v8186 = vand.u32 %v6876, 4294901760
    %v8187 = vsub.f32 %v6876, %v8186
    %8188 = vmatpush1.xpose.msra.mxu0 %v8187
    %8189 = vmatprep.subr.mxu0 0.0
    %v8190 = vand.u32 %v6878, 4294901760
    %v8191 = vsub.f32 %v6878, %v8190
    %8192 = vmatpush1.xpose.msra.mxu0 %v8191
    %8193 = vmatprep.subr.mxu0 0.0
    %v8194 = vand.u32 %v6880, 4294901760
    %v8195 = vsub.f32 %v6880, %v8194
    %8196 = vmatpush1.xpose.msra.mxu0 %v8195
    %8197 = vmatprep.subr.mxu0 0.0
    %v8198 = vand.u32 %v6882, 4294901760
    %v8199 = vsub.f32 %v6882, %v8198
    %8200 = vmatpush1.xpose.msra.mxu0 %v8199
    %8201 = vmatprep.subr.mxu0 0.0
    %v8202 = vand.u32 %v6884, 4294901760
    %v8203 = vsub.f32 %v6884, %v8202
    %8204 = vmatpush1.xpose.msra.mxu0 %v8203
    %8205 = vmatprep.subr.mxu0 0.0
    %v8206 = vand.u32 %v6886, 4294901760
    %v8207 = vsub.f32 %v6886, %v8206
    %8208 = vmatpush1.xpose.msra.mxu0 %v8207
    %8209 = vmatprep.subr.mxu0 0.0
    %v8210 = vand.u32 %v6888, 4294901760
    %v8211 = vsub.f32 %v6888, %v8210
    %8212 = vmatpush1.xpose.msra.mxu0 %v8211
    %8213 = vmatprep.mubr.f32.mxu0 0.0
    %v8214 = vand.u32 %v6760, 4294901760
    %v8215 = vsub.f32 %v6760, %v8214
    %8216 = vmatmul.mubr.f32.gmra.mrb[0].mxu0 %v8215
    %v8217 = vpop.f32.mrb[0].mxu0
    %v8218 = vadd.f32 %v8081, %v8217
    %v8219 = vpop.f32.mrb[0].mxu0
    %v8220 = vadd.f32 %v8083, %v8219
    %8221 = vdwg.mxu0
    %8222 = vmatprep.subr.mxu0 0.0
    %v8223 = vand.u32 %v6826, 4294901760
    %8224 = vmatpush1.xpose.msra.mxu0 %v8223
    %8225 = vmatprep.subr.mxu0 0.0
    %v8226 = vand.u32 %v6828, 4294901760
    %8227 = vmatpush1.xpose.msra.mxu0 %v8226
    %8228 = vmatprep.subr.mxu0 0.0
    %v8229 = vand.u32 %v6830, 4294901760
    %8230 = vmatpush1.xpose.msra.mxu0 %v8229
    %8231 = vmatprep.subr.mxu0 0.0
    %v8232 = vand.u32 %v6832, 4294901760
    %8233 = vmatpush1.xpose.msra.mxu0 %v8232
    %8234 = vmatprep.subr.mxu0 0.0
    %v8235 = vand.u32 %v6834, 4294901760
    %8236 = vmatpush1.xpose.msra.mxu0 %v8235
    %8237 = vmatprep.subr.mxu0 0.0
    %v8238 = vand.u32 %v6836, 4294901760
    %8239 = vmatpush1.xpose.msra.mxu0 %v8238
    %8240 = vmatprep.subr.mxu0 0.0
    %v8241 = vand.u32 %v6838, 4294901760
    %8242 = vmatpush1.xpose.msra.mxu0 %v8241
    %8243 = vmatprep.subr.mxu0 0.0
    %v8244 = vand.u32 %v6840, 4294901760
    %8245 = vmatpush1.xpose.msra.mxu0 %v8244
    %8246 = vmatprep.subr.mxu0 0.0
    %v8247 = vand.u32 %v6842, 4294901760
    %8248 = vmatpush1.xpose.msra.mxu0 %v8247
    %8249 = vmatprep.subr.mxu0 0.0
    %v8250 = vand.u32 %v6844, 4294901760
    %8251 = vmatpush1.xpose.msra.mxu0 %v8250
    %8252 = vmatprep.subr.mxu0 0.0
    %v8253 = vand.u32 %v6846, 4294901760
    %8254 = vmatpush1.xpose.msra.mxu0 %v8253
    %8255 = vmatprep.subr.mxu0 0.0
    %v8256 = vand.u32 %v6848, 4294901760
    %8257 = vmatpush1.xpose.msra.mxu0 %v8256
    %8258 = vmatprep.subr.mxu0 0.0
    %v8259 = vand.u32 %v6850, 4294901760
    %8260 = vmatpush1.xpose.msra.mxu0 %v8259
    %8261 = vmatprep.subr.mxu0 0.0
    %v8262 = vand.u32 %v6852, 4294901760
    %8263 = vmatpush1.xpose.msra.mxu0 %v8262
    %8264 = vmatprep.subr.mxu0 0.0
    %v8265 = vand.u32 %v6854, 4294901760
    %8266 = vmatpush1.xpose.msra.mxu0 %v8265
    %8267 = vmatprep.subr.mxu0 0.0
    %v8268 = vand.u32 %v6856, 4294901760
    %8269 = vmatpush1.xpose.msra.mxu0 %v8268
    %8270 = vmatprep.subr.mxu0 0.0
    %v8271 = vand.u32 %v6858, 4294901760
    %8272 = vmatpush1.xpose.msra.mxu0 %v8271
    %8273 = vmatprep.subr.mxu0 0.0
    %v8274 = vand.u32 %v6860, 4294901760
    %8275 = vmatpush1.xpose.msra.mxu0 %v8274
    %8276 = vmatprep.subr.mxu0 0.0
    %v8277 = vand.u32 %v6862, 4294901760
    %8278 = vmatpush1.xpose.msra.mxu0 %v8277
    %8279 = vmatprep.subr.mxu0 0.0
    %v8280 = vand.u32 %v6864, 4294901760
    %8281 = vmatpush1.xpose.msra.mxu0 %v8280
    %8282 = vmatprep.subr.mxu0 0.0
    %v8283 = vand.u32 %v6866, 4294901760
    %8284 = vmatpush1.xpose.msra.mxu0 %v8283
    %8285 = vmatprep.subr.mxu0 0.0
    %v8286 = vand.u32 %v6868, 4294901760
    %8287 = vmatpush1.xpose.msra.mxu0 %v8286
    %8288 = vmatprep.subr.mxu0 0.0
    %v8289 = vand.u32 %v6870, 4294901760
    %8290 = vmatpush1.xpose.msra.mxu0 %v8289
    %8291 = vmatprep.subr.mxu0 0.0
    %v8292 = vand.u32 %v6872, 4294901760
    %8293 = vmatpush1.xpose.msra.mxu0 %v8292
    %8294 = vmatprep.subr.mxu0 0.0
    %v8295 = vand.u32 %v6874, 4294901760
    %8296 = vmatpush1.xpose.msra.mxu0 %v8295
    %8297 = vmatprep.subr.mxu0 0.0
    %v8298 = vand.u32 %v6876, 4294901760
    %8299 = vmatpush1.xpose.msra.mxu0 %v8298
    %8300 = vmatprep.subr.mxu0 0.0
    %v8301 = vand.u32 %v6878, 4294901760
    %8302 = vmatpush1.xpose.msra.mxu0 %v8301
    %8303 = vmatprep.subr.mxu0 0.0
    %v8304 = vand.u32 %v6880, 4294901760
    %8305 = vmatpush1.xpose.msra.mxu0 %v8304
    %8306 = vmatprep.subr.mxu0 0.0
    %v8307 = vand.u32 %v6882, 4294901760
    %8308 = vmatpush1.xpose.msra.mxu0 %v8307
    %8309 = vmatprep.subr.mxu0 0.0
    %v8310 = vand.u32 %v6884, 4294901760
    %8311 = vmatpush1.xpose.msra.mxu0 %v8310
    %8312 = vmatprep.subr.mxu0 0.0
    %v8313 = vand.u32 %v6886, 4294901760
    %8314 = vmatpush1.xpose.msra.mxu0 %v8313
    %8315 = vmatprep.subr.mxu0 0.0
    %v8316 = vand.u32 %v6888, 4294901760
    %8317 = vmatpush1.xpose.msra.mxu0 %v8316
    %8318 = vmatprep.mubr.f32.mxu0 0.0
    %v8319 = vand.u32 %v6760, 4294901760
    %v8320 = vsub.f32 %v6760, %v8319
    %v8321 = vand.u32 %v8320, 4294901760
    %8322 = vmatmul.mubr.f32.gmra.mrb[0].mxu0 %v8321
    %v8323 = vpop.f32.mrb[0].mxu0
    %v8324 = vadd.f32 %v8218, %v8323
    %v8325 = vpop.f32.mrb[0].mxu0
    %v8326 = vadd.f32 %v8220, %v8325
    %8327 = vdwg.mxu0
    %8328 = vmatprep.subr.mxu0 0.0
    %v8329 = vand.u32 %v6826, 4294901760
    %v8330 = vsub.f32 %v6826, %v8329
    %v8331 = vand.u32 %v8330, 4294901760
    %8332 = vmatpush1.xpose.msra.mxu0 %v8331
    %8333 = vmatprep.subr.mxu0 0.0
    %v8334 = vand.u32 %v6828, 4294901760
    %v8335 = vsub.f32 %v6828, %v8334
    %v8336 = vand.u32 %v8335, 4294901760
    %8337 = vmatpush1.xpose.msra.mxu0 %v8336
    %8338 = vmatprep.subr.mxu0 0.0
    %v8339 = vand.u32 %v6830, 4294901760
    %v8340 = vsub.f32 %v6830, %v8339
    %v8341 = vand.u32 %v8340, 4294901760
    %8342 = vmatpush1.xpose.msra.mxu0 %v8341
    %8343 = vmatprep.subr.mxu0 0.0
    %v8344 = vand.u32 %v6832, 4294901760
    %v8345 = vsub.f32 %v6832, %v8344
    %v8346 = vand.u32 %v8345, 4294901760
    %8347 = vmatpush1.xpose.msra.mxu0 %v8346
    %8348 = vmatprep.subr.mxu0 0.0
    %v8349 = vand.u32 %v6834, 4294901760
    %v8350 = vsub.f32 %v6834, %v8349
    %v8351 = vand.u32 %v8350, 4294901760
    %8352 = vmatpush1.xpose.msra.mxu0 %v8351
    %8353 = vmatprep.subr.mxu0 0.0
    %v8354 = vand.u32 %v6836, 4294901760
    %v8355 = vsub.f32 %v6836, %v8354
    %v8356 = vand.u32 %v8355, 4294901760
    %8357 = vmatpush1.xpose.msra.mxu0 %v8356
    %8358 = vmatprep.subr.mxu0 0.0
    %v8359 = vand.u32 %v6838, 4294901760
    %v8360 = vsub.f32 %v6838, %v8359
    %v8361 = vand.u32 %v8360, 4294901760
    %8362 = vmatpush1.xpose.msra.mxu0 %v8361
    %8363 = vmatprep.subr.mxu0 0.0
    %v8364 = vand.u32 %v6840, 4294901760
    %v8365 = vsub.f32 %v6840, %v8364
    %v8366 = vand.u32 %v8365, 4294901760
    %8367 = vmatpush1.xpose.msra.mxu0 %v8366
    %8368 = vmatprep.subr.mxu0 0.0
    %v8369 = vand.u32 %v6842, 4294901760
    %v8370 = vsub.f32 %v6842, %v8369
    %v8371 = vand.u32 %v8370, 4294901760
    %8372 = vmatpush1.xpose.msra.mxu0 %v8371
    %8373 = vmatprep.subr.mxu0 0.0
    %v8374 = vand.u32 %v6844, 4294901760
    %v8375 = vsub.f32 %v6844, %v8374
    %v8376 = vand.u32 %v8375, 4294901760
    %8377 = vmatpush1.xpose.msra.mxu0 %v8376
    %8378 = vmatprep.subr.mxu0 0.0
    %v8379 = vand.u32 %v6846, 4294901760
    %v8380 = vsub.f32 %v6846, %v8379
    %v8381 = vand.u32 %v8380, 4294901760
    %8382 = vmatpush1.xpose.msra.mxu0 %v8381
    %8383 = vmatprep.subr.mxu0 0.0
    %v8384 = vand.u32 %v6848, 4294901760
    %v8385 = vsub.f32 %v6848, %v8384
    %v8386 = vand.u32 %v8385, 4294901760
    %8387 = vmatpush1.xpose.msra.mxu0 %v8386
    %8388 = vmatprep.subr.mxu0 0.0
    %v8389 = vand.u32 %v6850, 4294901760
    %v8390 = vsub.f32 %v6850, %v8389
    %v8391 = vand.u32 %v8390, 4294901760
    %8392 = vmatpush1.xpose.msra.mxu0 %v8391
    %8393 = vmatprep.subr.mxu0 0.0
    %v8394 = vand.u32 %v6852, 4294901760
    %v8395 = vsub.f32 %v6852, %v8394
    %v8396 = vand.u32 %v8395, 4294901760
    %8397 = vmatpush1.xpose.msra.mxu0 %v8396
    %8398 = vmatprep.subr.mxu0 0.0
    %v8399 = vand.u32 %v6854, 4294901760
    %v8400 = vsub.f32 %v6854, %v8399
    %v8401 = vand.u32 %v8400, 4294901760
    %8402 = vmatpush1.xpose.msra.mxu0 %v8401
    %8403 = vmatprep.subr.mxu0 0.0
    %v8404 = vand.u32 %v6856, 4294901760
    %v8405 = vsub.f32 %v6856, %v8404
    %v8406 = vand.u32 %v8405, 4294901760
    %8407 = vmatpush1.xpose.msra.mxu0 %v8406
    %8408 = vmatprep.subr.mxu0 0.0
    %v8409 = vand.u32 %v6858, 4294901760
    %v8410 = vsub.f32 %v6858, %v8409
    %v8411 = vand.u32 %v8410, 4294901760
    %8412 = vmatpush1.xpose.msra.mxu0 %v8411
    %8413 = vmatprep.subr.mxu0 0.0
    %v8414 = vand.u32 %v6860, 4294901760
    %v8415 = vsub.f32 %v6860, %v8414
    %v8416 = vand.u32 %v8415, 4294901760
    %8417 = vmatpush1.xpose.msra.mxu0 %v8416
    %8418 = vmatprep.subr.mxu0 0.0
    %v8419 = vand.u32 %v6862, 4294901760
    %v8420 = vsub.f32 %v6862, %v8419
    %v8421 = vand.u32 %v8420, 4294901760
    %8422 = vmatpush1.xpose.msra.mxu0 %v8421
    %8423 = vmatprep.subr.mxu0 0.0
    %v8424 = vand.u32 %v6864, 4294901760
    %v8425 = vsub.f32 %v6864, %v8424
    %v8426 = vand.u32 %v8425, 4294901760
    %8427 = vmatpush1.xpose.msra.mxu0 %v8426
    %8428 = vmatprep.subr.mxu0 0.0
    %v8429 = vand.u32 %v6866, 4294901760
    %v8430 = vsub.f32 %v6866, %v8429
    %v8431 = vand.u32 %v8430, 4294901760
    %8432 = vmatpush1.xpose.msra.mxu0 %v8431
    %8433 = vmatprep.subr.mxu0 0.0
    %v8434 = vand.u32 %v6868, 4294901760
    %v8435 = vsub.f32 %v6868, %v8434
    %v8436 = vand.u32 %v8435, 4294901760
    %8437 = vmatpush1.xpose.msra.mxu0 %v8436
    %8438 = vmatprep.subr.mxu0 0.0
    %v8439 = vand.u32 %v6870, 4294901760
    %v8440 = vsub.f32 %v6870, %v8439
    %v8441 = vand.u32 %v8440, 4294901760
    %8442 = vmatpush1.xpose.msra.mxu0 %v8441
    %8443 = vmatprep.subr.mxu0 0.0
    %v8444 = vand.u32 %v6872, 4294901760
    %v8445 = vsub.f32 %v6872, %v8444
    %v8446 = vand.u32 %v8445, 4294901760
    %8447 = vmatpush1.xpose.msra.mxu0 %v8446
    %8448 = vmatprep.subr.mxu0 0.0
    %v8449 = vand.u32 %v6874, 4294901760
    %v8450 = vsub.f32 %v6874, %v8449
    %v8451 = vand.u32 %v8450, 4294901760
    %8452 = vmatpush1.xpose.msra.mxu0 %v8451
    %8453 = vmatprep.subr.mxu0 0.0
    %v8454 = vand.u32 %v6876, 4294901760
    %v8455 = vsub.f32 %v6876, %v8454
    %v8456 = vand.u32 %v8455, 4294901760
    %8457 = vmatpush1.xpose.msra.mxu0 %v8456
    %8458 = vmatprep.subr.mxu0 0.0
    %v8459 = vand.u32 %v6878, 4294901760
    %v8460 = vsub.f32 %v6878, %v8459
    %v8461 = vand.u32 %v8460, 4294901760
    %8462 = vmatpush1.xpose.msra.mxu0 %v8461
    %8463 = vmatprep.subr.mxu0 0.0
    %v8464 = vand.u32 %v6880, 4294901760
    %v8465 = vsub.f32 %v6880, %v8464
    %v8466 = vand.u32 %v8465, 4294901760
    %8467 = vmatpush1.xpose.msra.mxu0 %v8466
    %8468 = vmatprep.subr.mxu0 0.0
    %v8469 = vand.u32 %v6882, 4294901760
    %v8470 = vsub.f32 %v6882, %v8469
    %v8471 = vand.u32 %v8470, 4294901760
    %8472 = vmatpush1.xpose.msra.mxu0 %v8471
    %8473 = vmatprep.subr.mxu0 0.0
    %v8474 = vand.u32 %v6884, 4294901760
    %v8475 = vsub.f32 %v6884, %v8474
    %v8476 = vand.u32 %v8475, 4294901760
    %8477 = vmatpush1.xpose.msra.mxu0 %v8476
    %8478 = vmatprep.subr.mxu0 0.0
    %v8479 = vand.u32 %v6886, 4294901760
    %v8480 = vsub.f32 %v6886, %v8479
    %v8481 = vand.u32 %v8480, 4294901760
    %8482 = vmatpush1.xpose.msra.mxu0 %v8481
    %8483 = vmatprep.subr.mxu0 0.0
    %v8484 = vand.u32 %v6888, 4294901760
    %v8485 = vsub.f32 %v6888, %v8484
    %v8486 = vand.u32 %v8485, 4294901760
    %8487 = vmatpush1.xpose.msra.mxu0 %v8486
    %8488 = vmatprep.mubr.f32.mxu0 0.0
    %v8489 = vand.u32 %v6760, 4294901760
    %8490 = vmatmul.mubr.f32.gmra.mrb[0].mxu0 %v8489
    %v8491 = vpop.f32.mrb[0].mxu0
    %v8492 = vadd.f32 %v8324, %v8491
    %v8493 = vpop.f32.mrb[0].mxu0
    %v8494 = vadd.f32 %v8326, %v8493
    %8495 = vdwg.mxu0
    %8496 = vmatprep.subr.mxu0 0.0
    %v8497 = vand.u32 %v6826, 4294901760
    %8498 = vmatpush1.xpose.msra.mxu0 %v8497
    %8499 = vmatprep.subr.mxu0 0.0
    %v8500 = vand.u32 %v6828, 4294901760
    %8501 = vmatpush1.xpose.msra.mxu0 %v8500
    %8502 = vmatprep.subr.mxu0 0.0
    %v8503 = vand.u32 %v6830, 4294901760
    %8504 = vmatpush1.xpose.msra.mxu0 %v8503
    %8505 = vmatprep.subr.mxu0 0.0
    %v8506 = vand.u32 %v6832, 4294901760
    %8507 = vmatpush1.xpose.msra.mxu0 %v8506
    %8508 = vmatprep.subr.mxu0 0.0
    %v8509 = vand.u32 %v6834, 4294901760
    %8510 = vmatpush1.xpose.msra.mxu0 %v8509
    %8511 = vmatprep.subr.mxu0 0.0
    %v8512 = vand.u32 %v6836, 4294901760
    %8513 = vmatpush1.xpose.msra.mxu0 %v8512
    %8514 = vmatprep.subr.mxu0 0.0
    %v8515 = vand.u32 %v6838, 4294901760
    %8516 = vmatpush1.xpose.msra.mxu0 %v8515
    %8517 = vmatprep.subr.mxu0 0.0
    %v8518 = vand.u32 %v6840, 4294901760
    %8519 = vmatpush1.xpose.msra.mxu0 %v8518
    %8520 = vmatprep.subr.mxu0 0.0
    %v8521 = vand.u32 %v6842, 4294901760
    %8522 = vmatpush1.xpose.msra.mxu0 %v8521
    %8523 = vmatprep.subr.mxu0 0.0
    %v8524 = vand.u32 %v6844, 4294901760
    %8525 = vmatpush1.xpose.msra.mxu0 %v8524
    %8526 = vmatprep.subr.mxu0 0.0
    %v8527 = vand.u32 %v6846, 4294901760
    %8528 = vmatpush1.xpose.msra.mxu0 %v8527
    %8529 = vmatprep.subr.mxu0 0.0
    %v8530 = vand.u32 %v6848, 4294901760
    %8531 = vmatpush1.xpose.msra.mxu0 %v8530
    %8532 = vmatprep.subr.mxu0 0.0
    %v8533 = vand.u32 %v6850, 4294901760
    %8534 = vmatpush1.xpose.msra.mxu0 %v8533
    %8535 = vmatprep.subr.mxu0 0.0
    %v8536 = vand.u32 %v6852, 4294901760
    %8537 = vmatpush1.xpose.msra.mxu0 %v8536
    %8538 = vmatprep.subr.mxu0 0.0
    %v8539 = vand.u32 %v6854, 4294901760
    %8540 = vmatpush1.xpose.msra.mxu0 %v8539
    %8541 = vmatprep.subr.mxu0 0.0
    %v8542 = vand.u32 %v6856, 4294901760
    %8543 = vmatpush1.xpose.msra.mxu0 %v8542
    %8544 = vmatprep.subr.mxu0 0.0
    %v8545 = vand.u32 %v6858, 4294901760
    %8546 = vmatpush1.xpose.msra.mxu0 %v8545
    %8547 = vmatprep.subr.mxu0 0.0
    %v8548 = vand.u32 %v6860, 4294901760
    %8549 = vmatpush1.xpose.msra.mxu0 %v8548
    %8550 = vmatprep.subr.mxu0 0.0
    %v8551 = vand.u32 %v6862, 4294901760
    %8552 = vmatpush1.xpose.msra.mxu0 %v8551
    %8553 = vmatprep.subr.mxu0 0.0
    %v8554 = vand.u32 %v6864, 4294901760
    %8555 = vmatpush1.xpose.msra.mxu0 %v8554
    %8556 = vmatprep.subr.mxu0 0.0
    %v8557 = vand.u32 %v6866, 4294901760
    %8558 = vmatpush1.xpose.msra.mxu0 %v8557
    %8559 = vmatprep.subr.mxu0 0.0
    %v8560 = vand.u32 %v6868, 4294901760
    %8561 = vmatpush1.xpose.msra.mxu0 %v8560
    %8562 = vmatprep.subr.mxu0 0.0
    %v8563 = vand.u32 %v6870, 4294901760
    %8564 = vmatpush1.xpose.msra.mxu0 %v8563
    %8565 = vmatprep.subr.mxu0 0.0
    %v8566 = vand.u32 %v6872, 4294901760
    %8567 = vmatpush1.xpose.msra.mxu0 %v8566
    %8568 = vmatprep.subr.mxu0 0.0
    %v8569 = vand.u32 %v6874, 4294901760
    %8570 = vmatpush1.xpose.msra.mxu0 %v8569
    %8571 = vmatprep.subr.mxu0 0.0
    %v8572 = vand.u32 %v6876, 4294901760
    %8573 = vmatpush1.xpose.msra.mxu0 %v8572
    %8574 = vmatprep.subr.mxu0 0.0
    %v8575 = vand.u32 %v6878, 4294901760
    %8576 = vmatpush1.xpose.msra.mxu0 %v8575
    %8577 = vmatprep.subr.mxu0 0.0
    %v8578 = vand.u32 %v6880, 4294901760
    %8579 = vmatpush1.xpose.msra.mxu0 %v8578
    %8580 = vmatprep.subr.mxu0 0.0
    %v8581 = vand.u32 %v6882, 4294901760
    %8582 = vmatpush1.xpose.msra.mxu0 %v8581
    %8583 = vmatprep.subr.mxu0 0.0
    %v8584 = vand.u32 %v6884, 4294901760
    %8585 = vmatpush1.xpose.msra.mxu0 %v8584
    %8586 = vmatprep.subr.mxu0 0.0
    %v8587 = vand.u32 %v6886, 4294901760
    %8588 = vmatpush1.xpose.msra.mxu0 %v8587
    %8589 = vmatprep.subr.mxu0 0.0
    %v8590 = vand.u32 %v6888, 4294901760
    %8591 = vmatpush1.xpose.msra.mxu0 %v8590
    %8592 = vmatprep.mubr.f32.mxu0 0.0
    %v8593 = vand.u32 %v6760, 4294901760
    %8594 = vmatmul.mubr.f32.gmra.mrb[0].mxu0 %v8593
    %v8595 = vpop.f32.mrb[0].mxu0
    %v8596 = vadd.f32 %v8492, %v8595
    %v8597 = vpop.f32.mrb[0].mxu0
    %v8598 = vadd.f32 %v8494, %v8597
    %8599 = vdwg.mxu0
    %v8600 = vadd.f32 %v6750, %v7741
    %v8601 = vadd.f32 %v6751, %v7743
    %v8602 = vadd.f32 %v6752, %v8596
    %v8603 = vadd.f32 %v6753, %v8598
    %v8604 = vmax.f32 %v8600, 0.0
    %v8605 = vmax.f32 %v8601, 0.0
    %v8606 = vmax.f32 %v8602, 0.0
    %v8607 = vmax.f32 %v8603, 0.0
    %v8612 = vcombine.low %v8604, %v8605
    %v8613 = vcombine.low %v8606, %v8607
    %8616 = vst [vmem:[#allocation3] sm:$0xff] %v8612
    %8617 = vst [vmem:[#allocation3 + $0x8] sm:$0xff] %v8613
    // Predicated region
    $region30: #{tpu_custom_call.1} parent=1 // pred_check
      _
    $region31: #{tpu_custom_call.1} parent=1 // pred_check_branch
      %8619 = sbr.rel (0) target = $region33
    $region32: #{tpu_custom_call.1} parent=1 // pred_region
      %s8621 = ssub.s32 256, 256
      %8622 = vsyncadd [#allocation4], %s8621
      %s8624 = sshll.u32 [#allocation3], 4
      %s8625 = int_to_ptr.vmem [resolvable:$true] %s8624
      %8627 = dma.vmem_to_hbm [thread:$0]  %s8625, 256, %s7, [#allocation4]
    $region33: #{tpu_custom_call.1} parent=1 // pred_fallthru
      _
    // Predicated region
    $region34: #{tpu_custom_call.1} parent=1 // pred_check
      _
    $region35: #{tpu_custom_call.1} parent=1 // pred_check_branch
      %8629 = sbr.rel (0) target = $region37
    $region36: #{tpu_custom_call.1} parent=1 // pred_region
      %8630 = dma.done [#allocation4], 256
    $region37: #{tpu_custom_call.1} parent=1 // pred_fallthru
      _
    %8631 = vsyncpa [#allocation4], 1

</llo_original>
